<compile_context>
chip_gen: v6e
topology: v6e:2x2x1
jax: 0.10.0
libtpu: 0.0.40
codegen_flags: <defaults>
</compile_context>

<pallas_src>
import functools

import jax
import jax.numpy as jnp
from jax.experimental import pallas as pl
from jax.experimental.pallas import tpu as pltpu


# ----------------------------- Pallas kernel --------------------------------

def _lstm_fc_kernel(num_layers, seq_len, tb, h_pad, *refs):
    """Fused multi-layer LSTM recurrence + final Linear for one batch tile.

    refs = (x_ref,
            w_ih_t_0, w_hh_t_0, b_0, ..., w_ih_t_{L-1}, w_hh_t_{L-1}, b_{L-1},
            fc_w_t, fc_b,
            out_ref,
            acts_scratch, gates_scratch)
    Shapes (per grid step; all padded so each gate is a full 128-lane block):
      x_ref        : (T, TB, D_pad)        bf16
      w_ih_t_l     : (D_pad_l, 4*h_pad)    bf16
      w_hh_t_l     : (h_pad,   4*h_pad)    bf16
      b_l          : (1, 4*h_pad)          f32
      fc_w_t       : (h_pad, C_pad)        bf16
      fc_b         : (1, C_pad)            f32
      out_ref      : (TB, C_pad)           f32
      acts_scratch : (T, TB, h_pad)        bf16   (inter-layer activations)
      gates_scratch: (T, TB, 4*h_pad)      f32    (hoisted input projection)
    """
    x_ref = refs[0]
    layer_refs = refs[1:1 + 3 * num_layers]
    fc_w_ref, fc_b_ref, out_ref, acts_ref, gates_ref = refs[1 + 3 * num_layers:]

    rows = seq_len * tb
    four_h = 4 * h_pad

    h = jnp.zeros((tb, h_pad), jnp.float32)
    for layer in range(num_layers):
        w_ih_ref = layer_refs[3 * layer + 0]
        w_hh_ref = layer_refs[3 * layer + 1]
        b_ref = layer_refs[3 * layer + 2]

        # Hoisted, time-invariant input projection: one well-shaped MXU matmul per
        # layer, staged to VMEM scratch so the time loop only does h @ W_hh + gates.
        if layer == 0:
            x2d = x_ref[...].reshape(rows, x_ref.shape[-1])          # bf16
        else:
            x2d = acts_ref[...].reshape(rows, h_pad)                 # bf16
        gates_ref[...] = (
            jnp.dot(x2d, w_ih_ref[...], preferred_element_type=jnp.float32)
            + b_ref[...]
        ).reshape(seq_len, tb, four_h)

        def step(t, carry, w_hh_ref=w_hh_ref):
            h, c = carry
            g = gates_ref[t] + jnp.dot(h.astype(jnp.bfloat16), w_hh_ref[...],
                                       preferred_element_type=jnp.float32)
            # Gate order [i, f, g, o]; each slice is a full 128-lane-aligned block.
            # sigmoid(x) = 0.5*tanh(0.5*x) + 0.5  -> single EUP push per gate.
            i_g = 0.5 * jnp.tanh(0.5 * g[:, 0 * h_pad:1 * h_pad]) + 0.5
            f_g = 0.5 * jnp.tanh(0.5 * g[:, 1 * h_pad:2 * h_pad]) + 0.5
            g_g = jnp.tanh(g[:, 2 * h_pad:3 * h_pad])
            o_g = 0.5 * jnp.tanh(0.5 * g[:, 3 * h_pad:4 * h_pad]) + 0.5
            c = f_g * c + i_g * g_g
            h = o_g * jnp.tanh(c)
            acts_ref[t] = h.astype(jnp.bfloat16)   # next layer's input; bounds live ranges
            return h, c

        h, _ = jax.lax.fori_loop(
            0, seq_len, step,
            (jnp.zeros((tb, h_pad), jnp.float32),
             jnp.zeros((tb, h_pad), jnp.float32)),
            unroll=True)

    # output[:, -1, :] of the top layer == final h.  Dropout is the inference identity.
    # TODO(synk): nn.Dropout stochastic mask not applied (forward/inference parity only).
    out_ref[...] = (jnp.dot(h.astype(jnp.bfloat16), fc_w_ref[...],
                            preferred_element_type=jnp.float32) + fc_b_ref[...])


# ------------------------------- Wrappers ------------------------------------

def _round_up(n, m):
    return ((n + m - 1) // m) * m


def _prep_gate_matrix(w, hidden, h_pad, d_pad):
    """PyTorch (4H, D_in) -> transposed, per-gate lane-padded (d_pad, 4*h_pad)."""
    d_in = w.shape[1]
    wt = w.T                                              # (D_in, 4H)
    blocks = []
    for g in range(4):
        gw = wt[:, g * hidden:(g + 1) * hidden]           # (D_in, H)
        blocks.append(jnp.pad(gw, ((0, d_pad - d_in), (0, h_pad - hidden))))
    return jnp.concatenate(blocks, axis=1)                # (d_pad, 4*h_pad)


def _prep_bias(b_ih, b_hh, hidden, h_pad):
    b = (b_ih + b_hh).reshape(4, hidden)
    b = jnp.pad(b, ((0, 0), (0, h_pad - hidden)))
    return b.reshape(1, 4 * h_pad).astype(jnp.float32)


def init_params(key, num_classes, input_size, hidden_size, num_layers):
    """Parameter init mimicking PyTorch nn.LSTM / nn.Linear shapes & conventions."""
    h_pad = _round_up(hidden_size, 128)
    d_pad0 = _round_up(input_size, 128)
    c_pad = _round_up(num_classes, 128)
    stdv = 1.0 / float(hidden_size) ** 0.5

    layers = []
    for layer_idx in range(num_layers):
        d_in = input_size if layer_idx == 0 else hidden_size
        d_pad = d_pad0 if layer_idx == 0 else h_pad
        key, k1, k2, k3, k4 = jax.random.split(key, 5)
        w_ih = jax.random.uniform(k1, (4 * hidden_size, d_in), jnp.float32, -stdv, stdv)
        w_hh = jax.random.uniform(k2, (4 * hidden_size, hidden_size), jnp.float32, -stdv, stdv)
        b_ih = jax.random.uniform(k3, (4 * hidden_size,), jnp.float32, -stdv, stdv)
        b_hh = jax.random.uniform(k4, (4 * hidden_size,), jnp.float32, -stdv, stdv)
        layers.append({
            "w_ih_t": _prep_gate_matrix(w_ih, hidden_size, h_pad, d_pad).astype(jnp.bfloat16),
            "w_hh_t": _prep_gate_matrix(w_hh, hidden_size, h_pad, h_pad).astype(jnp.bfloat16),
            "b": _prep_bias(b_ih, b_hh, hidden_size, h_pad),
        })

    # TODO(synk): the spec's init_weights() is a no-op in PyTorch (wrong signature /
    # called before fc exists), so fc uses default-Linear-style uniform init here.
    key, kw = jax.random.split(key)
    bound = 1.0 / float(hidden_size) ** 0.5
    fc_w = jax.random.uniform(kw, (num_classes, hidden_size), jnp.float32, -bound, bound)
    fc_b = jnp.full((num_classes,), 0.01, jnp.float32)
    fc_w_t = jnp.pad(fc_w.T, ((0, h_pad - hidden_size),
                              (0, c_pad - num_classes))).astype(jnp.bfloat16)
    fc_b_p = jnp.pad(fc_b, (0, c_pad - num_classes)).reshape(1, c_pad)

    return {
        "num_classes": num_classes,
        "hidden_size": hidden_size,
        "num_layers": num_layers,
        "h_pad": h_pad,
        "d_pad": d_pad0,
        "c_pad": c_pad,
        "layers": layers,
        "fc_w_t": fc_w_t,
        "fc_b": fc_b_p,
    }


def lstm_forward(params, x, batch_tile=16):
    """Equivalent of LSTM.forward. x: (B, T, input_size), batch_first like PyTorch."""
    B, T, D = x.shape
    h_pad = params["h_pad"]
    d_pad = params["d_pad"]
    c_pad = params["c_pad"]
    num_layers = params["num_layers"]
    num_classes = params["num_classes"]

    tb = batch_tile                       # 16: sublane-aligned for f32 (8) and bf16 (16)
    b_pad = _round_up(max(B, tb), tb)

    # Time-major, batch-/lane-padded bf16 input: (T, B_pad, D_pad).
    x_tm = jnp.transpose(x, (1, 0, 2)).astype(jnp.bfloat16)
    x_tm = jnp.pad(x_tm, ((0, 0), (0, b_pad - B), (0, d_pad - D)))

    weight_args = []
    for lyr in params["layers"]:
        weight_args += [lyr["w_ih_t"], lyr["w_hh_t"], lyr["b"]]
    weight_args += [params["fc_w_t"], params["fc_b"]]

    args = [x_tm] + weight_args
    in_specs = [pl.BlockSpec((T, tb, d_pad), lambda b: (0, b, 0))]
    in_specs += [pl.BlockSpec(w.shape, lambda b, n=w.ndim: (0,) * n) for w in weight_args]

    grid = (b_pad // tb,)

    # Explicit VMEM budget: double-buffered x/out blocks + resident weights + scratch,
    # with 2x headroom; stays far under the v7x 64 MiB ceiling at these sizes.
    weight_bytes = sum(int(w.size) * w.dtype.itemsize for w in weight_args)
    block_bytes = 2 * (T * tb * d_pad * 2 + tb * c_pad * 4)
    scratch_bytes = T * tb * h_pad * 2 + T * tb * 4 * h_pad * 4
    vmem_limit = int(min(max(2 * (weight_bytes + block_bytes + scratch_bytes),
                             4 << 20), 64 << 20))

    d_ins = [d_pad] + [h_pad] * (num_layers - 1)
    flops = grid[0] * (sum(2 * T * tb * di * 4 * h_pad            # input projections
                           + 2 * T * tb * h_pad * 4 * h_pad       # recurrent matmuls
                           for di in d_ins)
                       + 2 * tb * h_pad * c_pad)                   # fc
    transcendentals = grid[0] * num_layers * T * tb * 5 * h_pad    # 5 tanh per step
    bytes_accessed = int(x_tm.size * 2 + weight_bytes + b_pad * c_pad * 4)

    kernel = functools.partial(_lstm_fc_kernel, num_layers, T, tb, h_pad)
    out = pl.pallas_call(
        kernel,
        grid=grid,
        out_shape=jax.ShapeDtypeStruct((b_pad, c_pad), jnp.float32),
        in_specs=in_specs,
        out_specs=pl.BlockSpec((tb, c_pad), lambda b: (b, 0)),
        scratch_shapes=[pltpu.VMEM((T, tb, h_pad), jnp.bfloat16),      # inter-layer acts
                        pltpu.VMEM((T, tb, 4 * h_pad), jnp.float32)],  # hoisted gates
        compiler_params=pltpu.CompilerParams(
            dimension_semantics=("parallel",),          # batch grid -> v7x megacore
            vmem_limit_bytes=vmem_limit),
        cost_estimate=pl.CostEstimate(flops=flops,
                                      transcendentals=transcendentals,
                                      bytes_accessed=bytes_accessed),
    )(*args)
    return out[:B, :num_classes]


# ------------------------ Pure-JAX reference (sanity) -------------------------

def lstm_reference(params, x):
    """f32 reference using the same (bf16-rounded) padded weights."""
    B, T, _ = x.shape
    h_pad = params["h_pad"]
    num_classes = params["num_classes"]
    hidden = params["hidden_size"]
    acts = x.astype(jnp.bfloat16).astype(jnp.float32)          # (B, T, D)
    h = jnp.zeros((B, h_pad), jnp.float32)
    for lyr in params["layers"]:
        w_ih = lyr["w_ih_t"].astype(jnp.float32)               # (d_pad, 4*h_pad)
        w_hh = lyr["w_hh_t"].astype(jnp.float32)               # (h_pad, 4*h_pad)
        b = lyr["b"]
        d_in = acts.shape[-1]
        h = jnp.zeros((B, h_pad), jnp.float32)
        c = jnp.zeros((B, h_pad), jnp.float32)
        ys = []
        for t in range(T):
            xt = jnp.pad(acts[:, t, :], ((0, 0), (0, w_ih.shape[0] - d_in)))
            g = xt @ w_ih + h @ w_hh + b
            i_g = jax.nn.sigmoid(g[:, 0 * h_pad:1 * h_pad])
            f_g = jax.nn.sigmoid(g[:, 1 * h_pad:2 * h_pad])
            g_g = jnp.tanh(g[:, 2 * h_pad:3 * h_pad])
            o_g = jax.nn.sigmoid(g[:, 3 * h_pad:4 * h_pad])
            c = f_g * c + i_g * g_g
            h = o_g * jnp.tanh(c)
            ys.append(h[:, :hidden])
        acts = jnp.stack(ys, axis=1)                           # (B, T, H)
    fc_w = params["fc_w_t"].astype(jnp.float32)
    out = h @ fc_w + params["fc_b"]
    return out[:, :num_classes]


# --------------------------------- Main ---------------------------------------

if __name__ == "__main__":
    num_classes = 4
    input_size = 16
    hidden_size = 32
    num_layers = 2
    dropout = 0.25      # inference-mode identity
    B, T = 2, 8

    key = jax.random.PRNGKey(0)
    key_x, key_p = jax.random.split(key)
    x = jax.random.normal(key_x, (B, T, input_size), jnp.float32)
    params = init_params(key_p, num_classes, input_size, hidden_size, num_layers)

    out = lstm_forward(params, x)
    out = jax.block_until_ready(out)

    assert out.shape == (B, num_classes), out.shape
    assert bool(jnp.all(jnp.isfinite(out)))

    ref = lstm_reference(params, x)
    max_err = float(jnp.max(jnp.abs(out - ref)))
    assert max_err < 5e-2, f"max abs error vs reference: {max_err}"

    print("KERNEL_OK")
</pallas_src>

<mosaic_0001>
module attributes {stable_mosaic.version = 11 : i64} {
  func.func @_lstm_fc_kernel(%arg0: i32, %arg1: memref<8x16x128xbf16, #tpu.memory_space<vmem>>, %arg2: memref<128x512xbf16, #tpu.memory_space<vmem>>, %arg3: memref<128x512xbf16, #tpu.memory_space<vmem>>, %arg4: memref<1x512xf32, #tpu.memory_space<vmem>>, %arg5: memref<128x512xbf16, #tpu.memory_space<vmem>>, %arg6: memref<128x512xbf16, #tpu.memory_space<vmem>>, %arg7: memref<1x512xf32, #tpu.memory_space<vmem>>, %arg8: memref<128x128xbf16, #tpu.memory_space<vmem>>, %arg9: memref<1x128xf32, #tpu.memory_space<vmem>>, %arg10: memref<16x128xf32, #tpu.memory_space<vmem>>, %arg11: memref<8x16x128xbf16, #tpu.memory_space<vmem>>, %arg12: memref<8x16x512xf32, #tpu.memory_space<vmem>>) attributes {dimension_semantics = [#tpu.dimension_semantics<parallel>], iteration_bounds = array<i64: 1>, scalar_prefetch = 0 : i64, scratch_operands = 2 : i64, tpu.core_type = #tpu.core_type<tc>, window_params = [{transform_indices = @transform_0, window_bounds = array<i64: 8, 16, 128>}, {pipeline_mode = #tpu.pipeline_mode<synchronous>, transform_indices = @transform_1, window_bounds = array<i64: 128, 512>}, {pipeline_mode = #tpu.pipeline_mode<synchronous>, transform_indices = @transform_2, window_bounds = array<i64: 128, 512>}, {pipeline_mode = #tpu.pipeline_mode<synchronous>, transform_indices = @transform_3, window_bounds = array<i64: 1, 512>}, {pipeline_mode = #tpu.pipeline_mode<synchronous>, transform_indices = @transform_4, window_bounds = array<i64: 128, 512>}, {pipeline_mode = #tpu.pipeline_mode<synchronous>, transform_indices = @transform_5, window_bounds = array<i64: 128, 512>}, {pipeline_mode = #tpu.pipeline_mode<synchronous>, transform_indices = @transform_6, window_bounds = array<i64: 1, 512>}, {pipeline_mode = #tpu.pipeline_mode<synchronous>, transform_indices = @transform_7, window_bounds = array<i64: 128, 128>}, {pipeline_mode = #tpu.pipeline_mode<synchronous>, transform_indices = @transform_8, window_bounds = array<i64: 1, 128>}, {transform_indices = @transform_9, window_bounds = array<i64: 16, 128>}]} {
    %c0 = arith.constant 0 : index
    %c0_0 = arith.constant 0 : index
    %c0_1 = arith.constant 0 : index
    %0 = vector.load %arg1[%c0, %c0_0, %c0_1] : memref<8x16x128xbf16, #tpu.memory_space<vmem>>, vector<8x16x128xbf16>
    %1 = vector.shape_cast %0 : vector<8x16x128xbf16> to vector<128x128xbf16>
    %c0_2 = arith.constant 0 : index
    %c0_3 = arith.constant 0 : index
    %2 = vector.load %arg2[%c0_2, %c0_3] : memref<128x512xbf16, #tpu.memory_space<vmem>>, vector<128x512xbf16>
    %cst = arith.constant dense<0.000000e+00> : vector<128x512xf32>
    %3 = tpu.matmul %1, %2, %cst {dimension_numbers = #tpu.dot_dimension_numbers<[1], [0], [0], [1], [0, 0, 1, 1], [], []>} : vector<128x128xbf16>, vector<128x512xbf16>, vector<128x512xf32> -> vector<128x512xf32>
    %c0_4 = arith.constant 0 : index
    %c0_5 = arith.constant 0 : index
    %4 = vector.load %arg4[%c0_4, %c0_5] : memref<1x512xf32, #tpu.memory_space<vmem>>, vector<1x512xf32>
    %5 = vector.broadcast %4 : vector<1x512xf32> to vector<128x512xf32>
    %6 = arith.addf %3, %5 : vector<128x512xf32>
    %7 = vector.shape_cast %6 : vector<128x512xf32> to vector<8x16x512xf32>
    %c0_6 = arith.constant 0 : index
    %c0_7 = arith.constant 0 : index
    %c0_8 = arith.constant 0 : index
    %8 = vector.load %arg12[%c0_6, %c0_7, %c0_8] : memref<8x16x512xf32, #tpu.memory_space<vmem>>, vector<8x16x512xf32>
    tpu.vector_store %arg12[%c0_6, %c0_7, %c0_8], %7 {strides = array<i32>} : memref<8x16x512xf32, #tpu.memory_space<vmem>>, vector<8x16x512xf32>,
    %cst_9 = arith.constant 0.000000e+00 : f32
    %9 = vector.broadcast %cst_9 : f32 to vector<16x128xf32>
    %cst_10 = arith.constant 0.000000e+00 : f32
    %10 = vector.broadcast %cst_10 : f32 to vector<16x128xf32>
    %c0_i32 = arith.constant 0 : i32
    %11 = arith.index_cast %c0_i32 : i32 to index
    %c0_11 = arith.constant 0 : index
    %c0_12 = arith.constant 0 : index
    %12 = vector.load %arg12[%11, %c0_11, %c0_12] : memref<8x16x512xf32, #tpu.memory_space<vmem>>, vector<1x16x512xf32>
    %13 = vector.shape_cast %12 : vector<1x16x512xf32> to vector<16x512xf32>
    %14 = arith.truncf %9 : vector<16x128xf32> to vector<16x128xbf16>
    %c0_13 = arith.constant 0 : index
    %c0_14 = arith.constant 0 : index
    %15 = vector.load %arg3[%c0_13, %c0_14] : memref<128x512xbf16, #tpu.memory_space<vmem>>, vector<128x512xbf16>
    %cst_15 = arith.constant dense<0.000000e+00> : vector<16x512xf32>
    %16 = tpu.matmul %14, %15, %cst_15 {dimension_numbers = #tpu.dot_dimension_numbers<[1], [0], [0], [1], [0, 0, 1, 1], [], []>} : vector<16x128xbf16>, vector<128x512xbf16>, vector<16x512xf32> -> vector<16x512xf32>
    %17 = arith.addf %13, %16 : vector<16x512xf32>
    %18 = vector.extract_strided_slice %17 {offsets = [0, 0], sizes = [16, 128], strides = [1, 1]} : vector<16x512xf32> to vector<16x128xf32>
    %cst_16 = arith.constant 5.000000e-01 : f32
    %19 = vector.broadcast %cst_16 : f32 to vector<16x128xf32>
    %20 = arith.mulf %19, %18 : vector<16x128xf32>
    %21 = math.tanh %20 : vector<16x128xf32>
    %cst_17 = arith.constant 5.000000e-01 : f32
    %22 = vector.broadcast %cst_17 : f32 to vector<16x128xf32>
    %23 = arith.mulf %22, %21 : vector<16x128xf32>
    %cst_18 = arith.constant 5.000000e-01 : f32
    %24 = vector.broadcast %cst_18 : f32 to vector<16x128xf32>
    %25 = arith.addf %23, %24 : vector<16x128xf32>
    %26 = vector.extract_strided_slice %17 {offsets = [0, 128], sizes = [16, 128], strides = [1, 1]} : vector<16x512xf32> to vector<16x128xf32>
    %cst_19 = arith.constant 5.000000e-01 : f32
    %27 = vector.broadcast %cst_19 : f32 to vector<16x128xf32>
    %28 = arith.mulf %27, %26 : vector<16x128xf32>
    %29 = math.tanh %28 : vector<16x128xf32>
    %cst_20 = arith.constant 5.000000e-01 : f32
    %30 = vector.broadcast %cst_20 : f32 to vector<16x128xf32>
    %31 = arith.mulf %30, %29 : vector<16x128xf32>
    %cst_21 = arith.constant 5.000000e-01 : f32
    %32 = vector.broadcast %cst_21 : f32 to vector<16x128xf32>
    %33 = arith.addf %31, %32 : vector<16x128xf32>
    %34 = vector.extract_strided_slice %17 {offsets = [0, 256], sizes = [16, 128], strides = [1, 1]} : vector<16x512xf32> to vector<16x128xf32>
    %35 = math.tanh %34 : vector<16x128xf32>
    %36 = vector.extract_strided_slice %17 {offsets = [0, 384], sizes = [16, 128], strides = [1, 1]} : vector<16x512xf32> to vector<16x128xf32>
    %cst_22 = arith.constant 5.000000e-01 : f32
    %37 = vector.broadcast %cst_22 : f32 to vector<16x128xf32>
    %38 = arith.mulf %37, %36 : vector<16x128xf32>
    %39 = math.tanh %38 : vector<16x128xf32>
    %cst_23 = arith.constant 5.000000e-01 : f32
    %40 = vector.broadcast %cst_23 : f32 to vector<16x128xf32>
    %41 = arith.mulf %40, %39 : vector<16x128xf32>
    %cst_24 = arith.constant 5.000000e-01 : f32
    %42 = vector.broadcast %cst_24 : f32 to vector<16x128xf32>
    %43 = arith.addf %41, %42 : vector<16x128xf32>
    %44 = arith.mulf %33, %10 : vector<16x128xf32>
    %45 = arith.mulf %25, %35 : vector<16x128xf32>
    %46 = arith.addf %44, %45 : vector<16x128xf32>
    %47 = math.tanh %46 : vector<16x128xf32>
    %48 = arith.mulf %43, %47 : vector<16x128xf32>
    %49 = arith.truncf %48 : vector<16x128xf32> to vector<16x128xbf16>
    %50 = arith.index_cast %c0_i32 : i32 to index
    %c0_25 = arith.constant 0 : index
    %c0_26 = arith.constant 0 : index
    %51 = vector.load %arg11[%50, %c0_25, %c0_26] : memref<8x16x128xbf16, #tpu.memory_space<vmem>>, vector<1x16x128xbf16>
    %52 = vector.shape_cast %51 : vector<1x16x128xbf16> to vector<16x128xbf16>
    %53 = vector.shape_cast %49 : vector<16x128xbf16> to vector<1x16x128xbf16>
    tpu.vector_store %arg11[%50, %c0_25, %c0_26], %53 {strides = array<i32>} : memref<8x16x128xbf16, #tpu.memory_space<vmem>>, vector<1x16x128xbf16>,
    %c1_i32 = arith.constant 1 : i32
    %54 = arith.index_cast %c1_i32 : i32 to index
    %c0_27 = arith.constant 0 : index
    %c0_28 = arith.constant 0 : index
    %55 = vector.load %arg12[%54, %c0_27, %c0_28] : memref<8x16x512xf32, #tpu.memory_space<vmem>>, vector<1x16x512xf32>
    %56 = vector.shape_cast %55 : vector<1x16x512xf32> to vector<16x512xf32>
    %57 = arith.truncf %48 : vector<16x128xf32> to vector<16x128xbf16>
    %c0_29 = arith.constant 0 : index
    %c0_30 = arith.constant 0 : index
    %58 = vector.load %arg3[%c0_29, %c0_30] : memref<128x512xbf16, #tpu.memory_space<vmem>>, vector<128x512xbf16>
    %cst_31 = arith.constant dense<0.000000e+00> : vector<16x512xf32>
    %59 = tpu.matmul %57, %58, %cst_31 {dimension_numbers = #tpu.dot_dimension_numbers<[1], [0], [0], [1], [0, 0, 1, 1], [], []>} : vector<16x128xbf16>, vector<128x512xbf16>, vector<16x512xf32> -> vector<16x512xf32>
    %60 = arith.addf %56, %59 : vector<16x512xf32>
    %61 = vector.extract_strided_slice %60 {offsets = [0, 0], sizes = [16, 128], strides = [1, 1]} : vector<16x512xf32> to vector<16x128xf32>
    %cst_32 = arith.constant 5.000000e-01 : f32
    %62 = vector.broadcast %cst_32 : f32 to vector<16x128xf32>
    %63 = arith.mulf %62, %61 : vector<16x128xf32>
    %64 = math.tanh %63 : vector<16x128xf32>
    %cst_33 = arith.constant 5.000000e-01 : f32
    %65 = vector.broadcast %cst_33 : f32 to vector<16x128xf32>
    %66 = arith.mulf %65, %64 : vector<16x128xf32>
    %cst_34 = arith.constant 5.000000e-01 : f32
    %67 = vector.broadcast %cst_34 : f32 to vector<16x128xf32>
    %68 = arith.addf %66, %67 : vector<16x128xf32>
    %69 = vector.extract_strided_slice %60 {offsets = [0, 128], sizes = [16, 128], strides = [1, 1]} : vector<16x512xf32> to vector<16x128xf32>
    %cst_35 = arith.constant 5.000000e-01 : f32
    %70 = vector.broadcast %cst_35 : f32 to vector<16x128xf32>
    %71 = arith.mulf %70, %69 : vector<16x128xf32>
    %72 = math.tanh %71 : vector<16x128xf32>
    %cst_36 = arith.constant 5.000000e-01 : f32
    %73 = vector.broadcast %cst_36 : f32 to vector<16x128xf32>
    %74 = arith.mulf %73, %72 : vector<16x128xf32>
    %cst_37 = arith.constant 5.000000e-01 : f32
    %75 = vector.broadcast %cst_37 : f32 to vector<16x128xf32>
    %76 = arith.addf %74, %75 : vector<16x128xf32>
    %77 = vector.extract_strided_slice %60 {offsets = [0, 256], sizes = [16, 128], strides = [1, 1]} : vector<16x512xf32> to vector<16x128xf32>
    %78 = math.tanh %77 : vector<16x128xf32>
    %79 = vector.extract_strided_slice %60 {offsets = [0, 384], sizes = [16, 128], strides = [1, 1]} : vector<16x512xf32> to vector<16x128xf32>
    %cst_38 = arith.constant 5.000000e-01 : f32
    %80 = vector.broadcast %cst_38 : f32 to vector<16x128xf32>
    %81 = arith.mulf %80, %79 : vector<16x128xf32>
    %82 = math.tanh %81 : vector<16x128xf32>
    %cst_39 = arith.constant 5.000000e-01 : f32
    %83 = vector.broadcast %cst_39 : f32 to vector<16x128xf32>
    %84 = arith.mulf %83, %82 : vector<16x128xf32>
    %cst_40 = arith.constant 5.000000e-01 : f32
    %85 = vector.broadcast %cst_40 : f32 to vector<16x128xf32>
    %86 = arith.addf %84, %85 : vector<16x128xf32>
    %87 = arith.mulf %76, %46 : vector<16x128xf32>
    %88 = arith.mulf %68, %78 : vector<16x128xf32>
    %89 = arith.addf %87, %88 : vector<16x128xf32>
    %90 = math.tanh %89 : vector<16x128xf32>
    %91 = arith.mulf %86, %90 : vector<16x128xf32>
    %92 = arith.truncf %91 : vector<16x128xf32> to vector<16x128xbf16>
    %93 = arith.index_cast %c1_i32 : i32 to index
    %c0_41 = arith.constant 0 : index
    %c0_42 = arith.constant 0 : index
    %94 = vector.load %arg11[%93, %c0_41, %c0_42] : memref<8x16x128xbf16, #tpu.memory_space<vmem>>, vector<1x16x128xbf16>
    %95 = vector.shape_cast %94 : vector<1x16x128xbf16> to vector<16x128xbf16>
    %96 = vector.shape_cast %92 : vector<16x128xbf16> to vector<1x16x128xbf16>
    tpu.vector_store %arg11[%93, %c0_41, %c0_42], %96 {strides = array<i32>} : memref<8x16x128xbf16, #tpu.memory_space<vmem>>, vector<1x16x128xbf16>,
    %c2_i32 = arith.constant 2 : i32
    %97 = arith.index_cast %c2_i32 : i32 to index
    %c0_43 = arith.constant 0 : index
    %c0_44 = arith.constant 0 : index
    %98 = vector.load %arg12[%97, %c0_43, %c0_44] : memref<8x16x512xf32, #tpu.memory_space<vmem>>, vector<1x16x512xf32>
    %99 = vector.shape_cast %98 : vector<1x16x512xf32> to vector<16x512xf32>
    %100 = arith.truncf %91 : vector<16x128xf32> to vector<16x128xbf16>
    %c0_45 = arith.constant 0 : index
    %c0_46 = arith.constant 0 : index
    %101 = vector.load %arg3[%c0_45, %c0_46] : memref<128x512xbf16, #tpu.memory_space<vmem>>, vector<128x512xbf16>
    %cst_47 = arith.constant dense<0.000000e+00> : vector<16x512xf32>
    %102 = tpu.matmul %100, %101, %cst_47 {dimension_numbers = #tpu.dot_dimension_numbers<[1], [0], [0], [1], [0, 0, 1, 1], [], []>} : vector<16x128xbf16>, vector<128x512xbf16>, vector<16x512xf32> -> vector<16x512xf32>
    %103 = arith.addf %99, %102 : vector<16x512xf32>
    %104 = vector.extract_strided_slice %103 {offsets = [0, 0], sizes = [16, 128], strides = [1, 1]} : vector<16x512xf32> to vector<16x128xf32>
    %cst_48 = arith.constant 5.000000e-01 : f32
    %105 = vector.broadcast %cst_48 : f32 to vector<16x128xf32>
    %106 = arith.mulf %105, %104 : vector<16x128xf32>
    %107 = math.tanh %106 : vector<16x128xf32>
    %cst_49 = arith.constant 5.000000e-01 : f32
    %108 = vector.broadcast %cst_49 : f32 to vector<16x128xf32>
    %109 = arith.mulf %108, %107 : vector<16x128xf32>
    %cst_50 = arith.constant 5.000000e-01 : f32
    %110 = vector.broadcast %cst_50 : f32 to vector<16x128xf32>
    %111 = arith.addf %109, %110 : vector<16x128xf32>
    %112 = vector.extract_strided_slice %103 {offsets = [0, 128], sizes = [16, 128], strides = [1, 1]} : vector<16x512xf32> to vector<16x128xf32>
    %cst_51 = arith.constant 5.000000e-01 : f32
    %113 = vector.broadcast %cst_51 : f32 to vector<16x128xf32>
    %114 = arith.mulf %113, %112 : vector<16x128xf32>
    %115 = math.tanh %114 : vector<16x128xf32>
    %cst_52 = arith.constant 5.000000e-01 : f32
    %116 = vector.broadcast %cst_52 : f32 to vector<16x128xf32>
    %117 = arith.mulf %116, %115 : vector<16x128xf32>
    %cst_53 = arith.constant 5.000000e-01 : f32
    %118 = vector.broadcast %cst_53 : f32 to vector<16x128xf32>
    %119 = arith.addf %117, %118 : vector<16x128xf32>
    %120 = vector.extract_strided_slice %103 {offsets = [0, 256], sizes = [16, 128], strides = [1, 1]} : vector<16x512xf32> to vector<16x128xf32>
    %121 = math.tanh %120 : vector<16x128xf32>
    %122 = vector.extract_strided_slice %103 {offsets = [0, 384], sizes = [16, 128], strides = [1, 1]} : vector<16x512xf32> to vector<16x128xf32>
    %cst_54 = arith.constant 5.000000e-01 : f32
    %123 = vector.broadcast %cst_54 : f32 to vector<16x128xf32>
    %124 = arith.mulf %123, %122 : vector<16x128xf32>
    %125 = math.tanh %124 : vector<16x128xf32>
    %cst_55 = arith.constant 5.000000e-01 : f32
    %126 = vector.broadcast %cst_55 : f32 to vector<16x128xf32>
    %127 = arith.mulf %126, %125 : vector<16x128xf32>
    %cst_56 = arith.constant 5.000000e-01 : f32
    %128 = vector.broadcast %cst_56 : f32 to vector<16x128xf32>
    %129 = arith.addf %127, %128 : vector<16x128xf32>
    %130 = arith.mulf %119, %89 : vector<16x128xf32>
    %131 = arith.mulf %111, %121 : vector<16x128xf32>
    %132 = arith.addf %130, %131 : vector<16x128xf32>
    %133 = math.tanh %132 : vector<16x128xf32>
    %134 = arith.mulf %129, %133 : vector<16x128xf32>
    %135 = arith.truncf %134 : vector<16x128xf32> to vector<16x128xbf16>
    %136 = arith.index_cast %c2_i32 : i32 to index
    %c0_57 = arith.constant 0 : index
    %c0_58 = arith.constant 0 : index
    %137 = vector.load %arg11[%136, %c0_57, %c0_58] : memref<8x16x128xbf16, #tpu.memory_space<vmem>>, vector<1x16x128xbf16>
    %138 = vector.shape_cast %137 : vector<1x16x128xbf16> to vector<16x128xbf16>
    %139 = vector.shape_cast %135 : vector<16x128xbf16> to vector<1x16x128xbf16>
    tpu.vector_store %arg11[%136, %c0_57, %c0_58], %139 {strides = array<i32>} : memref<8x16x128xbf16, #tpu.memory_space<vmem>>, vector<1x16x128xbf16>,
    %c3_i32 = arith.constant 3 : i32
    %140 = arith.index_cast %c3_i32 : i32 to index
    %c0_59 = arith.constant 0 : index
    %c0_60 = arith.constant 0 : index
    %141 = vector.load %arg12[%140, %c0_59, %c0_60] : memref<8x16x512xf32, #tpu.memory_space<vmem>>, vector<1x16x512xf32>
    %142 = vector.shape_cast %141 : vector<1x16x512xf32> to vector<16x512xf32>
    %143 = arith.truncf %134 : vector<16x128xf32> to vector<16x128xbf16>
    %c0_61 = arith.constant 0 : index
    %c0_62 = arith.constant 0 : index
    %144 = vector.load %arg3[%c0_61, %c0_62] : memref<128x512xbf16, #tpu.memory_space<vmem>>, vector<128x512xbf16>
    %cst_63 = arith.constant dense<0.000000e+00> : vector<16x512xf32>
    %145 = tpu.matmul %143, %144, %cst_63 {dimension_numbers = #tpu.dot_dimension_numbers<[1], [0], [0], [1], [0, 0, 1, 1], [], []>} : vector<16x128xbf16>, vector<128x512xbf16>, vector<16x512xf32> -> vector<16x512xf32>
    %146 = arith.addf %142, %145 : vector<16x512xf32>
    %147 = vector.extract_strided_slice %146 {offsets = [0, 0], sizes = [16, 128], strides = [1, 1]} : vector<16x512xf32> to vector<16x128xf32>
    %cst_64 = arith.constant 5.000000e-01 : f32
    %148 = vector.broadcast %cst_64 : f32 to vector<16x128xf32>
    %149 = arith.mulf %148, %147 : vector<16x128xf32>
    %150 = math.tanh %149 : vector<16x128xf32>
    %cst_65 = arith.constant 5.000000e-01 : f32
    %151 = vector.broadcast %cst_65 : f32 to vector<16x128xf32>
    %152 = arith.mulf %151, %150 : vector<16x128xf32>
    %cst_66 = arith.constant 5.000000e-01 : f32
    %153 = vector.broadcast %cst_66 : f32 to vector<16x128xf32>
    %154 = arith.addf %152, %153 : vector<16x128xf32>
    %155 = vector.extract_strided_slice %146 {offsets = [0, 128], sizes = [16, 128], strides = [1, 1]} : vector<16x512xf32> to vector<16x128xf32>
    %cst_67 = arith.constant 5.000000e-01 : f32
    %156 = vector.broadcast %cst_67 : f32 to vector<16x128xf32>
    %157 = arith.mulf %156, %155 : vector<16x128xf32>
    %158 = math.tanh %157 : vector<16x128xf32>
    %cst_68 = arith.constant 5.000000e-01 : f32
    %159 = vector.broadcast %cst_68 : f32 to vector<16x128xf32>
    %160 = arith.mulf %159, %158 : vector<16x128xf32>
    %cst_69 = arith.constant 5.000000e-01 : f32
    %161 = vector.broadcast %cst_69 : f32 to vector<16x128xf32>
    %162 = arith.addf %160, %161 : vector<16x128xf32>
    %163 = vector.extract_strided_slice %146 {offsets = [0, 256], sizes = [16, 128], strides = [1, 1]} : vector<16x512xf32> to vector<16x128xf32>
    %164 = math.tanh %163 : vector<16x128xf32>
    %165 = vector.extract_strided_slice %146 {offsets = [0, 384], sizes = [16, 128], strides = [1, 1]} : vector<16x512xf32> to vector<16x128xf32>
    %cst_70 = arith.constant 5.000000e-01 : f32
    %166 = vector.broadcast %cst_70 : f32 to vector<16x128xf32>
    %167 = arith.mulf %166, %165 : vector<16x128xf32>
    %168 = math.tanh %167 : vector<16x128xf32>
    %cst_71 = arith.constant 5.000000e-01 : f32
    %169 = vector.broadcast %cst_71 : f32 to vector<16x128xf32>
    %170 = arith.mulf %169, %168 : vector<16x128xf32>
    %cst_72 = arith.constant 5.000000e-01 : f32
    %171 = vector.broadcast %cst_72 : f32 to vector<16x128xf32>
    %172 = arith.addf %170, %171 : vector<16x128xf32>
    %173 = arith.mulf %162, %132 : vector<16x128xf32>
    %174 = arith.mulf %154, %164 : vector<16x128xf32>
    %175 = arith.addf %173, %174 : vector<16x128xf32>
    %176 = math.tanh %175 : vector<16x128xf32>
    %177 = arith.mulf %172, %176 : vector<16x128xf32>
    %178 = arith.truncf %177 : vector<16x128xf32> to vector<16x128xbf16>
    %179 = arith.index_cast %c3_i32 : i32 to index
    %c0_73 = arith.constant 0 : index
    %c0_74 = arith.constant 0 : index
    %180 = vector.load %arg11[%179, %c0_73, %c0_74] : memref<8x16x128xbf16, #tpu.memory_space<vmem>>, vector<1x16x128xbf16>
    %181 = vector.shape_cast %180 : vector<1x16x128xbf16> to vector<16x128xbf16>
    %182 = vector.shape_cast %178 : vector<16x128xbf16> to vector<1x16x128xbf16>
    tpu.vector_store %arg11[%179, %c0_73, %c0_74], %182 {strides = array<i32>} : memref<8x16x128xbf16, #tpu.memory_space<vmem>>, vector<1x16x128xbf16>,
    %c4_i32 = arith.constant 4 : i32
    %183 = arith.index_cast %c4_i32 : i32 to index
    %c0_75 = arith.constant 0 : index
    %c0_76 = arith.constant 0 : index
    %184 = vector.load %arg12[%183, %c0_75, %c0_76] : memref<8x16x512xf32, #tpu.memory_space<vmem>>, vector<1x16x512xf32>
    %185 = vector.shape_cast %184 : vector<1x16x512xf32> to vector<16x512xf32>
    %186 = arith.truncf %177 : vector<16x128xf32> to vector<16x128xbf16>
    %c0_77 = arith.constant 0 : index
    %c0_78 = arith.constant 0 : index
    %187 = vector.load %arg3[%c0_77, %c0_78] : memref<128x512xbf16, #tpu.memory_space<vmem>>, vector<128x512xbf16>
    %cst_79 = arith.constant dense<0.000000e+00> : vector<16x512xf32>
    %188 = tpu.matmul %186, %187, %cst_79 {dimension_numbers = #tpu.dot_dimension_numbers<[1], [0], [0], [1], [0, 0, 1, 1], [], []>} : vector<16x128xbf16>, vector<128x512xbf16>, vector<16x512xf32> -> vector<16x512xf32>
    %189 = arith.addf %185, %188 : vector<16x512xf32>
    %190 = vector.extract_strided_slice %189 {offsets = [0, 0], sizes = [16, 128], strides = [1, 1]} : vector<16x512xf32> to vector<16x128xf32>
    %cst_80 = arith.constant 5.000000e-01 : f32
    %191 = vector.broadcast %cst_80 : f32 to vector<16x128xf32>
    %192 = arith.mulf %191, %190 : vector<16x128xf32>
    %193 = math.tanh %192 : vector<16x128xf32>
    %cst_81 = arith.constant 5.000000e-01 : f32
    %194 = vector.broadcast %cst_81 : f32 to vector<16x128xf32>
    %195 = arith.mulf %194, %193 : vector<16x128xf32>
    %cst_82 = arith.constant 5.000000e-01 : f32
    %196 = vector.broadcast %cst_82 : f32 to vector<16x128xf32>
    %197 = arith.addf %195, %196 : vector<16x128xf32>
    %198 = vector.extract_strided_slice %189 {offsets = [0, 128], sizes = [16, 128], strides = [1, 1]} : vector<16x512xf32> to vector<16x128xf32>
    %cst_83 = arith.constant 5.000000e-01 : f32
    %199 = vector.broadcast %cst_83 : f32 to vector<16x128xf32>
    %200 = arith.mulf %199, %198 : vector<16x128xf32>
    %201 = math.tanh %200 : vector<16x128xf32>
    %cst_84 = arith.constant 5.000000e-01 : f32
    %202 = vector.broadcast %cst_84 : f32 to vector<16x128xf32>
    %203 = arith.mulf %202, %201 : vector<16x128xf32>
    %cst_85 = arith.constant 5.000000e-01 : f32
    %204 = vector.broadcast %cst_85 : f32 to vector<16x128xf32>
    %205 = arith.addf %203, %204 : vector<16x128xf32>
    %206 = vector.extract_strided_slice %189 {offsets = [0, 256], sizes = [16, 128], strides = [1, 1]} : vector<16x512xf32> to vector<16x128xf32>
    %207 = math.tanh %206 : vector<16x128xf32>
    %208 = vector.extract_strided_slice %189 {offsets = [0, 384], sizes = [16, 128], strides = [1, 1]} : vector<16x512xf32> to vector<16x128xf32>
    %cst_86 = arith.constant 5.000000e-01 : f32
    %209 = vector.broadcast %cst_86 : f32 to vector<16x128xf32>
    %210 = arith.mulf %209, %208 : vector<16x128xf32>
    %211 = math.tanh %210 : vector<16x128xf32>
    %cst_87 = arith.constant 5.000000e-01 : f32
    %212 = vector.broadcast %cst_87 : f32 to vector<16x128xf32>
    %213 = arith.mulf %212, %211 : vector<16x128xf32>
    %cst_88 = arith.constant 5.000000e-01 : f32
    %214 = vector.broadcast %cst_88 : f32 to vector<16x128xf32>
    %215 = arith.addf %213, %214 : vector<16x128xf32>
    %216 = arith.mulf %205, %175 : vector<16x128xf32>
    %217 = arith.mulf %197, %207 : vector<16x128xf32>
    %218 = arith.addf %216, %217 : vector<16x128xf32>
    %219 = math.tanh %218 : vector<16x128xf32>
    %220 = arith.mulf %215, %219 : vector<16x128xf32>
    %221 = arith.truncf %220 : vector<16x128xf32> to vector<16x128xbf16>
    %222 = arith.index_cast %c4_i32 : i32 to index
    %c0_89 = arith.constant 0 : index
    %c0_90 = arith.constant 0 : index
    %223 = vector.load %arg11[%222, %c0_89, %c0_90] : memref<8x16x128xbf16, #tpu.memory_space<vmem>>, vector<1x16x128xbf16>
    %224 = vector.shape_cast %223 : vector<1x16x128xbf16> to vector<16x128xbf16>
    %225 = vector.shape_cast %221 : vector<16x128xbf16> to vector<1x16x128xbf16>
    tpu.vector_store %arg11[%222, %c0_89, %c0_90], %225 {strides = array<i32>} : memref<8x16x128xbf16, #tpu.memory_space<vmem>>, vector<1x16x128xbf16>,
    %c5_i32 = arith.constant 5 : i32
    %226 = arith.index_cast %c5_i32 : i32 to index
    %c0_91 = arith.constant 0 : index
    %c0_92 = arith.constant 0 : index
    %227 = vector.load %arg12[%226, %c0_91, %c0_92] : memref<8x16x512xf32, #tpu.memory_space<vmem>>, vector<1x16x512xf32>
    %228 = vector.shape_cast %227 : vector<1x16x512xf32> to vector<16x512xf32>
    %229 = arith.truncf %220 : vector<16x128xf32> to vector<16x128xbf16>
    %c0_93 = arith.constant 0 : index
    %c0_94 = arith.constant 0 : index
    %230 = vector.load %arg3[%c0_93, %c0_94] : memref<128x512xbf16, #tpu.memory_space<vmem>>, vector<128x512xbf16>
    %cst_95 = arith.constant dense<0.000000e+00> : vector<16x512xf32>
    %231 = tpu.matmul %229, %230, %cst_95 {dimension_numbers = #tpu.dot_dimension_numbers<[1], [0], [0], [1], [0, 0, 1, 1], [], []>} : vector<16x128xbf16>, vector<128x512xbf16>, vector<16x512xf32> -> vector<16x512xf32>
    %232 = arith.addf %228, %231 : vector<16x512xf32>
    %233 = vector.extract_strided_slice %232 {offsets = [0, 0], sizes = [16, 128], strides = [1, 1]} : vector<16x512xf32> to vector<16x128xf32>
    %cst_96 = arith.constant 5.000000e-01 : f32
    %234 = vector.broadcast %cst_96 : f32 to vector<16x128xf32>
    %235 = arith.mulf %234, %233 : vector<16x128xf32>
    %236 = math.tanh %235 : vector<16x128xf32>
    %cst_97 = arith.constant 5.000000e-01 : f32
    %237 = vector.broadcast %cst_97 : f32 to vector<16x128xf32>
    %238 = arith.mulf %237, %236 : vector<16x128xf32>
    %cst_98 = arith.constant 5.000000e-01 : f32
    %239 = vector.broadcast %cst_98 : f32 to vector<16x128xf32>
    %240 = arith.addf %238, %239 : vector<16x128xf32>
    %241 = vector.extract_strided_slice %232 {offsets = [0, 128], sizes = [16, 128], strides = [1, 1]} : vector<16x512xf32> to vector<16x128xf32>
    %cst_99 = arith.constant 5.000000e-01 : f32
    %242 = vector.broadcast %cst_99 : f32 to vector<16x128xf32>
    %243 = arith.mulf %242, %241 : vector<16x128xf32>
    %244 = math.tanh %243 : vector<16x128xf32>
    %cst_100 = arith.constant 5.000000e-01 : f32
    %245 = vector.broadcast %cst_100 : f32 to vector<16x128xf32>
    %246 = arith.mulf %245, %244 : vector<16x128xf32>
    %cst_101 = arith.constant 5.000000e-01 : f32
    %247 = vector.broadcast %cst_101 : f32 to vector<16x128xf32>
    %248 = arith.addf %246, %247 : vector<16x128xf32>
    %249 = vector.extract_strided_slice %232 {offsets = [0, 256], sizes = [16, 128], strides = [1, 1]} : vector<16x512xf32> to vector<16x128xf32>
    %250 = math.tanh %249 : vector<16x128xf32>
    %251 = vector.extract_strided_slice %232 {offsets = [0, 384], sizes = [16, 128], strides = [1, 1]} : vector<16x512xf32> to vector<16x128xf32>
    %cst_102 = arith.constant 5.000000e-01 : f32
    %252 = vector.broadcast %cst_102 : f32 to vector<16x128xf32>
    %253 = arith.mulf %252, %251 : vector<16x128xf32>
    %254 = math.tanh %253 : vector<16x128xf32>
    %cst_103 = arith.constant 5.000000e-01 : f32
    %255 = vector.broadcast %cst_103 : f32 to vector<16x128xf32>
    %256 = arith.mulf %255, %254 : vector<16x128xf32>
    %cst_104 = arith.constant 5.000000e-01 : f32
    %257 = vector.broadcast %cst_104 : f32 to vector<16x128xf32>
    %258 = arith.addf %256, %257 : vector<16x128xf32>
    %259 = arith.mulf %248, %218 : vector<16x128xf32>
    %260 = arith.mulf %240, %250 : vector<16x128xf32>
    %261 = arith.addf %259, %260 : vector<16x128xf32>
    %262 = math.tanh %261 : vector<16x128xf32>
    %263 = arith.mulf %258, %262 : vector<16x128xf32>
    %264 = arith.truncf %263 : vector<16x128xf32> to vector<16x128xbf16>
    %265 = arith.index_cast %c5_i32 : i32 to index
    %c0_105 = arith.constant 0 : index
    %c0_106 = arith.constant 0 : index
    %266 = vector.load %arg11[%265, %c0_105, %c0_106] : memref<8x16x128xbf16, #tpu.memory_space<vmem>>, vector<1x16x128xbf16>
    %267 = vector.shape_cast %266 : vector<1x16x128xbf16> to vector<16x128xbf16>
    %268 = vector.shape_cast %264 : vector<16x128xbf16> to vector<1x16x128xbf16>
    tpu.vector_store %arg11[%265, %c0_105, %c0_106], %268 {strides = array<i32>} : memref<8x16x128xbf16, #tpu.memory_space<vmem>>, vector<1x16x128xbf16>,
    %c6_i32 = arith.constant 6 : i32
    %269 = arith.index_cast %c6_i32 : i32 to index
    %c0_107 = arith.constant 0 : index
    %c0_108 = arith.constant 0 : index
    %270 = vector.load %arg12[%269, %c0_107, %c0_108] : memref<8x16x512xf32, #tpu.memory_space<vmem>>, vector<1x16x512xf32>
    %271 = vector.shape_cast %270 : vector<1x16x512xf32> to vector<16x512xf32>
    %272 = arith.truncf %263 : vector<16x128xf32> to vector<16x128xbf16>
    %c0_109 = arith.constant 0 : index
    %c0_110 = arith.constant 0 : index
    %273 = vector.load %arg3[%c0_109, %c0_110] : memref<128x512xbf16, #tpu.memory_space<vmem>>, vector<128x512xbf16>
    %cst_111 = arith.constant dense<0.000000e+00> : vector<16x512xf32>
    %274 = tpu.matmul %272, %273, %cst_111 {dimension_numbers = #tpu.dot_dimension_numbers<[1], [0], [0], [1], [0, 0, 1, 1], [], []>} : vector<16x128xbf16>, vector<128x512xbf16>, vector<16x512xf32> -> vector<16x512xf32>
    %275 = arith.addf %271, %274 : vector<16x512xf32>
    %276 = vector.extract_strided_slice %275 {offsets = [0, 0], sizes = [16, 128], strides = [1, 1]} : vector<16x512xf32> to vector<16x128xf32>
    %cst_112 = arith.constant 5.000000e-01 : f32
    %277 = vector.broadcast %cst_112 : f32 to vector<16x128xf32>
    %278 = arith.mulf %277, %276 : vector<16x128xf32>
    %279 = math.tanh %278 : vector<16x128xf32>
    %cst_113 = arith.constant 5.000000e-01 : f32
    %280 = vector.broadcast %cst_113 : f32 to vector<16x128xf32>
    %281 = arith.mulf %280, %279 : vector<16x128xf32>
    %cst_114 = arith.constant 5.000000e-01 : f32
    %282 = vector.broadcast %cst_114 : f32 to vector<16x128xf32>
    %283 = arith.addf %281, %282 : vector<16x128xf32>
    %284 = vector.extract_strided_slice %275 {offsets = [0, 128], sizes = [16, 128], strides = [1, 1]} : vector<16x512xf32> to vector<16x128xf32>
    %cst_115 = arith.constant 5.000000e-01 : f32
    %285 = vector.broadcast %cst_115 : f32 to vector<16x128xf32>
    %286 = arith.mulf %285, %284 : vector<16x128xf32>
    %287 = math.tanh %286 : vector<16x128xf32>
    %cst_116 = arith.constant 5.000000e-01 : f32
    %288 = vector.broadcast %cst_116 : f32 to vector<16x128xf32>
    %289 = arith.mulf %288, %287 : vector<16x128xf32>
    %cst_117 = arith.constant 5.000000e-01 : f32
    %290 = vector.broadcast %cst_117 : f32 to vector<16x128xf32>
    %291 = arith.addf %289, %290 : vector<16x128xf32>
    %292 = vector.extract_strided_slice %275 {offsets = [0, 256], sizes = [16, 128], strides = [1, 1]} : vector<16x512xf32> to vector<16x128xf32>
    %293 = math.tanh %292 : vector<16x128xf32>
    %294 = vector.extract_strided_slice %275 {offsets = [0, 384], sizes = [16, 128], strides = [1, 1]} : vector<16x512xf32> to vector<16x128xf32>
    %cst_118 = arith.constant 5.000000e-01 : f32
    %295 = vector.broadcast %cst_118 : f32 to vector<16x128xf32>
    %296 = arith.mulf %295, %294 : vector<16x128xf32>
    %297 = math.tanh %296 : vector<16x128xf32>
    %cst_119 = arith.constant 5.000000e-01 : f32
    %298 = vector.broadcast %cst_119 : f32 to vector<16x128xf32>
    %299 = arith.mulf %298, %297 : vector<16x128xf32>
    %cst_120 = arith.constant 5.000000e-01 : f32
    %300 = vector.broadcast %cst_120 : f32 to vector<16x128xf32>
    %301 = arith.addf %299, %300 : vector<16x128xf32>
    %302 = arith.mulf %291, %261 : vector<16x128xf32>
    %303 = arith.mulf %283, %293 : vector<16x128xf32>
    %304 = arith.addf %302, %303 : vector<16x128xf32>
    %305 = math.tanh %304 : vector<16x128xf32>
    %306 = arith.mulf %301, %305 : vector<16x128xf32>
    %307 = arith.truncf %306 : vector<16x128xf32> to vector<16x128xbf16>
    %308 = arith.index_cast %c6_i32 : i32 to index
    %c0_121 = arith.constant 0 : index
    %c0_122 = arith.constant 0 : index
    %309 = vector.load %arg11[%308, %c0_121, %c0_122] : memref<8x16x128xbf16, #tpu.memory_space<vmem>>, vector<1x16x128xbf16>
    %310 = vector.shape_cast %309 : vector<1x16x128xbf16> to vector<16x128xbf16>
    %311 = vector.shape_cast %307 : vector<16x128xbf16> to vector<1x16x128xbf16>
    tpu.vector_store %arg11[%308, %c0_121, %c0_122], %311 {strides = array<i32>} : memref<8x16x128xbf16, #tpu.memory_space<vmem>>, vector<1x16x128xbf16>,
    %c7_i32 = arith.constant 7 : i32
    %312 = arith.index_cast %c7_i32 : i32 to index
    %c0_123 = arith.constant 0 : index
    %c0_124 = arith.constant 0 : index
    %313 = vector.load %arg12[%312, %c0_123, %c0_124] : memref<8x16x512xf32, #tpu.memory_space<vmem>>, vector<1x16x512xf32>
    %314 = vector.shape_cast %313 : vector<1x16x512xf32> to vector<16x512xf32>
    %315 = arith.truncf %306 : vector<16x128xf32> to vector<16x128xbf16>
    %c0_125 = arith.constant 0 : index
    %c0_126 = arith.constant 0 : index
    %316 = vector.load %arg3[%c0_125, %c0_126] : memref<128x512xbf16, #tpu.memory_space<vmem>>, vector<128x512xbf16>
    %cst_127 = arith.constant dense<0.000000e+00> : vector<16x512xf32>
    %317 = tpu.matmul %315, %316, %cst_127 {dimension_numbers = #tpu.dot_dimension_numbers<[1], [0], [0], [1], [0, 0, 1, 1], [], []>} : vector<16x128xbf16>, vector<128x512xbf16>, vector<16x512xf32> -> vector<16x512xf32>
    %318 = arith.addf %314, %317 : vector<16x512xf32>
    %319 = vector.extract_strided_slice %318 {offsets = [0, 0], sizes = [16, 128], strides = [1, 1]} : vector<16x512xf32> to vector<16x128xf32>
    %cst_128 = arith.constant 5.000000e-01 : f32
    %320 = vector.broadcast %cst_128 : f32 to vector<16x128xf32>
    %321 = arith.mulf %320, %319 : vector<16x128xf32>
    %322 = math.tanh %321 : vector<16x128xf32>
    %cst_129 = arith.constant 5.000000e-01 : f32
    %323 = vector.broadcast %cst_129 : f32 to vector<16x128xf32>
    %324 = arith.mulf %323, %322 : vector<16x128xf32>
    %cst_130 = arith.constant 5.000000e-01 : f32
    %325 = vector.broadcast %cst_130 : f32 to vector<16x128xf32>
    %326 = arith.addf %324, %325 : vector<16x128xf32>
    %327 = vector.extract_strided_slice %318 {offsets = [0, 128], sizes = [16, 128], strides = [1, 1]} : vector<16x512xf32> to vector<16x128xf32>
    %cst_131 = arith.constant 5.000000e-01 : f32
    %328 = vector.broadcast %cst_131 : f32 to vector<16x128xf32>
    %329 = arith.mulf %328, %327 : vector<16x128xf32>
    %330 = math.tanh %329 : vector<16x128xf32>
    %cst_132 = arith.constant 5.000000e-01 : f32
    %331 = vector.broadcast %cst_132 : f32 to vector<16x128xf32>
    %332 = arith.mulf %331, %330 : vector<16x128xf32>
    %cst_133 = arith.constant 5.000000e-01 : f32
    %333 = vector.broadcast %cst_133 : f32 to vector<16x128xf32>
    %334 = arith.addf %332, %333 : vector<16x128xf32>
    %335 = vector.extract_strided_slice %318 {offsets = [0, 256], sizes = [16, 128], strides = [1, 1]} : vector<16x512xf32> to vector<16x128xf32>
    %336 = math.tanh %335 : vector<16x128xf32>
    %337 = vector.extract_strided_slice %318 {offsets = [0, 384], sizes = [16, 128], strides = [1, 1]} : vector<16x512xf32> to vector<16x128xf32>
    %cst_134 = arith.constant 5.000000e-01 : f32
    %338 = vector.broadcast %cst_134 : f32 to vector<16x128xf32>
    %339 = arith.mulf %338, %337 : vector<16x128xf32>
    %340 = math.tanh %339 : vector<16x128xf32>
    %cst_135 = arith.constant 5.000000e-01 : f32
    %341 = vector.broadcast %cst_135 : f32 to vector<16x128xf32>
    %342 = arith.mulf %341, %340 : vector<16x128xf32>
    %cst_136 = arith.constant 5.000000e-01 : f32
    %343 = vector.broadcast %cst_136 : f32 to vector<16x128xf32>
    %344 = arith.addf %342, %343 : vector<16x128xf32>
    %345 = arith.mulf %334, %304 : vector<16x128xf32>
    %346 = arith.mulf %326, %336 : vector<16x128xf32>
    %347 = arith.addf %345, %346 : vector<16x128xf32>
    %348 = math.tanh %347 : vector<16x128xf32>
    %349 = arith.mulf %344, %348 : vector<16x128xf32>
    %350 = arith.truncf %349 : vector<16x128xf32> to vector<16x128xbf16>
    %351 = arith.index_cast %c7_i32 : i32 to index
    %c0_137 = arith.constant 0 : index
    %c0_138 = arith.constant 0 : index
    %352 = vector.load %arg11[%351, %c0_137, %c0_138] : memref<8x16x128xbf16, #tpu.memory_space<vmem>>, vector<1x16x128xbf16>
    %353 = vector.shape_cast %352 : vector<1x16x128xbf16> to vector<16x128xbf16>
    %354 = vector.shape_cast %350 : vector<16x128xbf16> to vector<1x16x128xbf16>
    tpu.vector_store %arg11[%351, %c0_137, %c0_138], %354 {strides = array<i32>} : memref<8x16x128xbf16, #tpu.memory_space<vmem>>, vector<1x16x128xbf16>,
    %c8_i32 = arith.constant 8 : i32
    %c0_139 = arith.constant 0 : index
    %c0_140 = arith.constant 0 : index
    %c0_141 = arith.constant 0 : index
    %355 = vector.load %arg11[%c0_139, %c0_140, %c0_141] : memref<8x16x128xbf16, #tpu.memory_space<vmem>>, vector<8x16x128xbf16>
    %356 = vector.shape_cast %355 : vector<8x16x128xbf16> to vector<128x128xbf16>
    %c0_142 = arith.constant 0 : index
    %c0_143 = arith.constant 0 : index
    %357 = vector.load %arg5[%c0_142, %c0_143] : memref<128x512xbf16, #tpu.memory_space<vmem>>, vector<128x512xbf16>
    %cst_144 = arith.constant dense<0.000000e+00> : vector<128x512xf32>
    %358 = tpu.matmul %356, %357, %cst_144 {dimension_numbers = #tpu.dot_dimension_numbers<[1], [0], [0], [1], [0, 0, 1, 1], [], []>} : vector<128x128xbf16>, vector<128x512xbf16>, vector<128x512xf32> -> vector<128x512xf32>
    %c0_145 = arith.constant 0 : index
    %c0_146 = arith.constant 0 : index
    %359 = vector.load %arg7[%c0_145, %c0_146] : memref<1x512xf32, #tpu.memory_space<vmem>>, vector<1x512xf32>
    %360 = vector.broadcast %359 : vector<1x512xf32> to vector<128x512xf32>
    %361 = arith.addf %358, %360 : vector<128x512xf32>
    %362 = vector.shape_cast %361 : vector<128x512xf32> to vector<8x16x512xf32>
    %c0_147 = arith.constant 0 : index
    %c0_148 = arith.constant 0 : index
    %c0_149 = arith.constant 0 : index
    %363 = vector.load %arg12[%c0_147, %c0_148, %c0_149] : memref<8x16x512xf32, #tpu.memory_space<vmem>>, vector<8x16x512xf32>
    tpu.vector_store %arg12[%c0_147, %c0_148, %c0_149], %362 {strides = array<i32>} : memref<8x16x512xf32, #tpu.memory_space<vmem>>, vector<8x16x512xf32>,
    %cst_150 = arith.constant 0.000000e+00 : f32
    %364 = vector.broadcast %cst_150 : f32 to vector<16x128xf32>
    %cst_151 = arith.constant 0.000000e+00 : f32
    %365 = vector.broadcast %cst_151 : f32 to vector<16x128xf32>
    %c0_i32_152 = arith.constant 0 : i32
    %366 = arith.index_cast %c0_i32_152 : i32 to index
    %c0_153 = arith.constant 0 : index
    %c0_154 = arith.constant 0 : index
    %367 = vector.load %arg12[%366, %c0_153, %c0_154] : memref<8x16x512xf32, #tpu.memory_space<vmem>>, vector<1x16x512xf32>
    %368 = vector.shape_cast %367 : vector<1x16x512xf32> to vector<16x512xf32>
    %369 = arith.truncf %364 : vector<16x128xf32> to vector<16x128xbf16>
    %c0_155 = arith.constant 0 : index
    %c0_156 = arith.constant 0 : index
    %370 = vector.load %arg6[%c0_155, %c0_156] : memref<128x512xbf16, #tpu.memory_space<vmem>>, vector<128x512xbf16>
    %cst_157 = arith.constant dense<0.000000e+00> : vector<16x512xf32>
    %371 = tpu.matmul %369, %370, %cst_157 {dimension_numbers = #tpu.dot_dimension_numbers<[1], [0], [0], [1], [0, 0, 1, 1], [], []>} : vector<16x128xbf16>, vector<128x512xbf16>, vector<16x512xf32> -> vector<16x512xf32>
    %372 = arith.addf %368, %371 : vector<16x512xf32>
    %373 = vector.extract_strided_slice %372 {offsets = [0, 0], sizes = [16, 128], strides = [1, 1]} : vector<16x512xf32> to vector<16x128xf32>
    %cst_158 = arith.constant 5.000000e-01 : f32
    %374 = vector.broadcast %cst_158 : f32 to vector<16x128xf32>
    %375 = arith.mulf %374, %373 : vector<16x128xf32>
    %376 = math.tanh %375 : vector<16x128xf32>
    %cst_159 = arith.constant 5.000000e-01 : f32
    %377 = vector.broadcast %cst_159 : f32 to vector<16x128xf32>
    %378 = arith.mulf %377, %376 : vector<16x128xf32>
    %cst_160 = arith.constant 5.000000e-01 : f32
    %379 = vector.broadcast %cst_160 : f32 to vector<16x128xf32>
    %380 = arith.addf %378, %379 : vector<16x128xf32>
    %381 = vector.extract_strided_slice %372 {offsets = [0, 128], sizes = [16, 128], strides = [1, 1]} : vector<16x512xf32> to vector<16x128xf32>
    %cst_161 = arith.constant 5.000000e-01 : f32
    %382 = vector.broadcast %cst_161 : f32 to vector<16x128xf32>
    %383 = arith.mulf %382, %381 : vector<16x128xf32>
    %384 = math.tanh %383 : vector<16x128xf32>
    %cst_162 = arith.constant 5.000000e-01 : f32
    %385 = vector.broadcast %cst_162 : f32 to vector<16x128xf32>
    %386 = arith.mulf %385, %384 : vector<16x128xf32>
    %cst_163 = arith.constant 5.000000e-01 : f32
    %387 = vector.broadcast %cst_163 : f32 to vector<16x128xf32>
    %388 = arith.addf %386, %387 : vector<16x128xf32>
    %389 = vector.extract_strided_slice %372 {offsets = [0, 256], sizes = [16, 128], strides = [1, 1]} : vector<16x512xf32> to vector<16x128xf32>
    %390 = math.tanh %389 : vector<16x128xf32>
    %391 = vector.extract_strided_slice %372 {offsets = [0, 384], sizes = [16, 128], strides = [1, 1]} : vector<16x512xf32> to vector<16x128xf32>
    %cst_164 = arith.constant 5.000000e-01 : f32
    %392 = vector.broadcast %cst_164 : f32 to vector<16x128xf32>
    %393 = arith.mulf %392, %391 : vector<16x128xf32>
    %394 = math.tanh %393 : vector<16x128xf32>
    %cst_165 = arith.constant 5.000000e-01 : f32
    %395 = vector.broadcast %cst_165 : f32 to vector<16x128xf32>
    %396 = arith.mulf %395, %394 : vector<16x128xf32>
    %cst_166 = arith.constant 5.000000e-01 : f32
    %397 = vector.broadcast %cst_166 : f32 to vector<16x128xf32>
    %398 = arith.addf %396, %397 : vector<16x128xf32>
    %399 = arith.mulf %388, %365 : vector<16x128xf32>
    %400 = arith.mulf %380, %390 : vector<16x128xf32>
    %401 = arith.addf %399, %400 : vector<16x128xf32>
    %402 = math.tanh %401 : vector<16x128xf32>
    %403 = arith.mulf %398, %402 : vector<16x128xf32>
    %404 = arith.truncf %403 : vector<16x128xf32> to vector<16x128xbf16>
    %405 = arith.index_cast %c0_i32_152 : i32 to index
    %c0_167 = arith.constant 0 : index
    %c0_168 = arith.constant 0 : index
    %406 = vector.load %arg11[%405, %c0_167, %c0_168] : memref<8x16x128xbf16, #tpu.memory_space<vmem>>, vector<1x16x128xbf16>
    %407 = vector.shape_cast %406 : vector<1x16x128xbf16> to vector<16x128xbf16>
    %408 = vector.shape_cast %404 : vector<16x128xbf16> to vector<1x16x128xbf16>
    tpu.vector_store %arg11[%405, %c0_167, %c0_168], %408 {strides = array<i32>} : memref<8x16x128xbf16, #tpu.memory_space<vmem>>, vector<1x16x128xbf16>,
    %c1_i32_169 = arith.constant 1 : i32
    %409 = arith.index_cast %c1_i32_169 : i32 to index
    %c0_170 = arith.constant 0 : index
    %c0_171 = arith.constant 0 : index
    %410 = vector.load %arg12[%409, %c0_170, %c0_171] : memref<8x16x512xf32, #tpu.memory_space<vmem>>, vector<1x16x512xf32>
    %411 = vector.shape_cast %410 : vector<1x16x512xf32> to vector<16x512xf32>
    %412 = arith.truncf %403 : vector<16x128xf32> to vector<16x128xbf16>
    %c0_172 = arith.constant 0 : index
    %c0_173 = arith.constant 0 : index
    %413 = vector.load %arg6[%c0_172, %c0_173] : memref<128x512xbf16, #tpu.memory_space<vmem>>, vector<128x512xbf16>
    %cst_174 = arith.constant dense<0.000000e+00> : vector<16x512xf32>
    %414 = tpu.matmul %412, %413, %cst_174 {dimension_numbers = #tpu.dot_dimension_numbers<[1], [0], [0], [1], [0, 0, 1, 1], [], []>} : vector<16x128xbf16>, vector<128x512xbf16>, vector<16x512xf32> -> vector<16x512xf32>
    %415 = arith.addf %411, %414 : vector<16x512xf32>
    %416 = vector.extract_strided_slice %415 {offsets = [0, 0], sizes = [16, 128], strides = [1, 1]} : vector<16x512xf32> to vector<16x128xf32>
    %cst_175 = arith.constant 5.000000e-01 : f32
    %417 = vector.broadcast %cst_175 : f32 to vector<16x128xf32>
    %418 = arith.mulf %417, %416 : vector<16x128xf32>
    %419 = math.tanh %418 : vector<16x128xf32>
    %cst_176 = arith.constant 5.000000e-01 : f32
    %420 = vector.broadcast %cst_176 : f32 to vector<16x128xf32>
    %421 = arith.mulf %420, %419 : vector<16x128xf32>
    %cst_177 = arith.constant 5.000000e-01 : f32
    %422 = vector.broadcast %cst_177 : f32 to vector<16x128xf32>
    %423 = arith.addf %421, %422 : vector<16x128xf32>
    %424 = vector.extract_strided_slice %415 {offsets = [0, 128], sizes = [16, 128], strides = [1, 1]} : vector<16x512xf32> to vector<16x128xf32>
    %cst_178 = arith.constant 5.000000e-01 : f32
    %425 = vector.broadcast %cst_178 : f32 to vector<16x128xf32>
    %426 = arith.mulf %425, %424 : vector<16x128xf32>
    %427 = math.tanh %426 : vector<16x128xf32>
    %cst_179 = arith.constant 5.000000e-01 : f32
    %428 = vector.broadcast %cst_179 : f32 to vector<16x128xf32>
    %429 = arith.mulf %428, %427 : vector<16x128xf32>
    %cst_180 = arith.constant 5.000000e-01 : f32
    %430 = vector.broadcast %cst_180 : f32 to vector<16x128xf32>
    %431 = arith.addf %429, %430 : vector<16x128xf32>
    %432 = vector.extract_strided_slice %415 {offsets = [0, 256], sizes = [16, 128], strides = [1, 1]} : vector<16x512xf32> to vector<16x128xf32>
    %433 = math.tanh %432 : vector<16x128xf32>
    %434 = vector.extract_strided_slice %415 {offsets = [0, 384], sizes = [16, 128], strides = [1, 1]} : vector<16x512xf32> to vector<16x128xf32>
    %cst_181 = arith.constant 5.000000e-01 : f32
    %435 = vector.broadcast %cst_181 : f32 to vector<16x128xf32>
    %436 = arith.mulf %435, %434 : vector<16x128xf32>
    %437 = math.tanh %436 : vector<16x128xf32>
    %cst_182 = arith.constant 5.000000e-01 : f32
    %438 = vector.broadcast %cst_182 : f32 to vector<16x128xf32>
    %439 = arith.mulf %438, %437 : vector<16x128xf32>
    %cst_183 = arith.constant 5.000000e-01 : f32
    %440 = vector.broadcast %cst_183 : f32 to vector<16x128xf32>
    %441 = arith.addf %439, %440 : vector<16x128xf32>
    %442 = arith.mulf %431, %401 : vector<16x128xf32>
    %443 = arith.mulf %423, %433 : vector<16x128xf32>
    %444 = arith.addf %442, %443 : vector<16x128xf32>
    %445 = math.tanh %444 : vector<16x128xf32>
    %446 = arith.mulf %441, %445 : vector<16x128xf32>
    %447 = arith.truncf %446 : vector<16x128xf32> to vector<16x128xbf16>
    %448 = arith.index_cast %c1_i32_169 : i32 to index
    %c0_184 = arith.constant 0 : index
    %c0_185 = arith.constant 0 : index
    %449 = vector.load %arg11[%448, %c0_184, %c0_185] : memref<8x16x128xbf16, #tpu.memory_space<vmem>>, vector<1x16x128xbf16>
    %450 = vector.shape_cast %449 : vector<1x16x128xbf16> to vector<16x128xbf16>
    %451 = vector.shape_cast %447 : vector<16x128xbf16> to vector<1x16x128xbf16>
    tpu.vector_store %arg11[%448, %c0_184, %c0_185], %451 {strides = array<i32>} : memref<8x16x128xbf16, #tpu.memory_space<vmem>>, vector<1x16x128xbf16>,
    %c2_i32_186 = arith.constant 2 : i32
    %452 = arith.index_cast %c2_i32_186 : i32 to index
    %c0_187 = arith.constant 0 : index
    %c0_188 = arith.constant 0 : index
    %453 = vector.load %arg12[%452, %c0_187, %c0_188] : memref<8x16x512xf32, #tpu.memory_space<vmem>>, vector<1x16x512xf32>
    %454 = vector.shape_cast %453 : vector<1x16x512xf32> to vector<16x512xf32>
    %455 = arith.truncf %446 : vector<16x128xf32> to vector<16x128xbf16>
    %c0_189 = arith.constant 0 : index
    %c0_190 = arith.constant 0 : index
    %456 = vector.load %arg6[%c0_189, %c0_190] : memref<128x512xbf16, #tpu.memory_space<vmem>>, vector<128x512xbf16>
    %cst_191 = arith.constant dense<0.000000e+00> : vector<16x512xf32>
    %457 = tpu.matmul %455, %456, %cst_191 {dimension_numbers = #tpu.dot_dimension_numbers<[1], [0], [0], [1], [0, 0, 1, 1], [], []>} : vector<16x128xbf16>, vector<128x512xbf16>, vector<16x512xf32> -> vector<16x512xf32>
    %458 = arith.addf %454, %457 : vector<16x512xf32>
    %459 = vector.extract_strided_slice %458 {offsets = [0, 0], sizes = [16, 128], strides = [1, 1]} : vector<16x512xf32> to vector<16x128xf32>
    %cst_192 = arith.constant 5.000000e-01 : f32
    %460 = vector.broadcast %cst_192 : f32 to vector<16x128xf32>
    %461 = arith.mulf %460, %459 : vector<16x128xf32>
    %462 = math.tanh %461 : vector<16x128xf32>
    %cst_193 = arith.constant 5.000000e-01 : f32
    %463 = vector.broadcast %cst_193 : f32 to vector<16x128xf32>
    %464 = arith.mulf %463, %462 : vector<16x128xf32>
    %cst_194 = arith.constant 5.000000e-01 : f32
    %465 = vector.broadcast %cst_194 : f32 to vector<16x128xf32>
    %466 = arith.addf %464, %465 : vector<16x128xf32>
    %467 = vector.extract_strided_slice %458 {offsets = [0, 128], sizes = [16, 128], strides = [1, 1]} : vector<16x512xf32> to vector<16x128xf32>
    %cst_195 = arith.constant 5.000000e-01 : f32
    %468 = vector.broadcast %cst_195 : f32 to vector<16x128xf32>
    %469 = arith.mulf %468, %467 : vector<16x128xf32>
    %470 = math.tanh %469 : vector<16x128xf32>
    %cst_196 = arith.constant 5.000000e-01 : f32
    %471 = vector.broadcast %cst_196 : f32 to vector<16x128xf32>
    %472 = arith.mulf %471, %470 : vector<16x128xf32>
    %cst_197 = arith.constant 5.000000e-01 : f32
    %473 = vector.broadcast %cst_197 : f32 to vector<16x128xf32>
    %474 = arith.addf %472, %473 : vector<16x128xf32>
    %475 = vector.extract_strided_slice %458 {offsets = [0, 256], sizes = [16, 128], strides = [1, 1]} : vector<16x512xf32> to vector<16x128xf32>
    %476 = math.tanh %475 : vector<16x128xf32>
    %477 = vector.extract_strided_slice %458 {offsets = [0, 384], sizes = [16, 128], strides = [1, 1]} : vector<16x512xf32> to vector<16x128xf32>
    %cst_198 = arith.constant 5.000000e-01 : f32
    %478 = vector.broadcast %cst_198 : f32 to vector<16x128xf32>
    %479 = arith.mulf %478, %477 : vector<16x128xf32>
    %480 = math.tanh %479 : vector<16x128xf32>
    %cst_199 = arith.constant 5.000000e-01 : f32
    %481 = vector.broadcast %cst_199 : f32 to vector<16x128xf32>
    %482 = arith.mulf %481, %480 : vector<16x128xf32>
    %cst_200 = arith.constant 5.000000e-01 : f32
    %483 = vector.broadcast %cst_200 : f32 to vector<16x128xf32>
    %484 = arith.addf %482, %483 : vector<16x128xf32>
    %485 = arith.mulf %474, %444 : vector<16x128xf32>
    %486 = arith.mulf %466, %476 : vector<16x128xf32>
    %487 = arith.addf %485, %486 : vector<16x128xf32>
    %488 = math.tanh %487 : vector<16x128xf32>
    %489 = arith.mulf %484, %488 : vector<16x128xf32>
    %490 = arith.truncf %489 : vector<16x128xf32> to vector<16x128xbf16>
    %491 = arith.index_cast %c2_i32_186 : i32 to index
    %c0_201 = arith.constant 0 : index
    %c0_202 = arith.constant 0 : index
    %492 = vector.load %arg11[%491, %c0_201, %c0_202] : memref<8x16x128xbf16, #tpu.memory_space<vmem>>, vector<1x16x128xbf16>
    %493 = vector.shape_cast %492 : vector<1x16x128xbf16> to vector<16x128xbf16>
    %494 = vector.shape_cast %490 : vector<16x128xbf16> to vector<1x16x128xbf16>
    tpu.vector_store %arg11[%491, %c0_201, %c0_202], %494 {strides = array<i32>} : memref<8x16x128xbf16, #tpu.memory_space<vmem>>, vector<1x16x128xbf16>,
    %c3_i32_203 = arith.constant 3 : i32
    %495 = arith.index_cast %c3_i32_203 : i32 to index
    %c0_204 = arith.constant 0 : index
    %c0_205 = arith.constant 0 : index
    %496 = vector.load %arg12[%495, %c0_204, %c0_205] : memref<8x16x512xf32, #tpu.memory_space<vmem>>, vector<1x16x512xf32>
    %497 = vector.shape_cast %496 : vector<1x16x512xf32> to vector<16x512xf32>
    %498 = arith.truncf %489 : vector<16x128xf32> to vector<16x128xbf16>
    %c0_206 = arith.constant 0 : index
    %c0_207 = arith.constant 0 : index
    %499 = vector.load %arg6[%c0_206, %c0_207] : memref<128x512xbf16, #tpu.memory_space<vmem>>, vector<128x512xbf16>
    %cst_208 = arith.constant dense<0.000000e+00> : vector<16x512xf32>
    %500 = tpu.matmul %498, %499, %cst_208 {dimension_numbers = #tpu.dot_dimension_numbers<[1], [0], [0], [1], [0, 0, 1, 1], [], []>} : vector<16x128xbf16>, vector<128x512xbf16>, vector<16x512xf32> -> vector<16x512xf32>
    %501 = arith.addf %497, %500 : vector<16x512xf32>
    %502 = vector.extract_strided_slice %501 {offsets = [0, 0], sizes = [16, 128], strides = [1, 1]} : vector<16x512xf32> to vector<16x128xf32>
    %cst_209 = arith.constant 5.000000e-01 : f32
    %503 = vector.broadcast %cst_209 : f32 to vector<16x128xf32>
    %504 = arith.mulf %503, %502 : vector<16x128xf32>
    %505 = math.tanh %504 : vector<16x128xf32>
    %cst_210 = arith.constant 5.000000e-01 : f32
    %506 = vector.broadcast %cst_210 : f32 to vector<16x128xf32>
    %507 = arith.mulf %506, %505 : vector<16x128xf32>
    %cst_211 = arith.constant 5.000000e-01 : f32
    %508 = vector.broadcast %cst_211 : f32 to vector<16x128xf32>
    %509 = arith.addf %507, %508 : vector<16x128xf32>
    %510 = vector.extract_strided_slice %501 {offsets = [0, 128], sizes = [16, 128], strides = [1, 1]} : vector<16x512xf32> to vector<16x128xf32>
    %cst_212 = arith.constant 5.000000e-01 : f32
    %511 = vector.broadcast %cst_212 : f32 to vector<16x128xf32>
    %512 = arith.mulf %511, %510 : vector<16x128xf32>
    %513 = math.tanh %512 : vector<16x128xf32>
    %cst_213 = arith.constant 5.000000e-01 : f32
    %514 = vector.broadcast %cst_213 : f32 to vector<16x128xf32>
    %515 = arith.mulf %514, %513 : vector<16x128xf32>
    %cst_214 = arith.constant 5.000000e-01 : f32
    %516 = vector.broadcast %cst_214 : f32 to vector<16x128xf32>
    %517 = arith.addf %515, %516 : vector<16x128xf32>
    %518 = vector.extract_strided_slice %501 {offsets = [0, 256], sizes = [16, 128], strides = [1, 1]} : vector<16x512xf32> to vector<16x128xf32>
    %519 = math.tanh %518 : vector<16x128xf32>
    %520 = vector.extract_strided_slice %501 {offsets = [0, 384], sizes = [16, 128], strides = [1, 1]} : vector<16x512xf32> to vector<16x128xf32>
    %cst_215 = arith.constant 5.000000e-01 : f32
    %521 = vector.broadcast %cst_215 : f32 to vector<16x128xf32>
    %522 = arith.mulf %521, %520 : vector<16x128xf32>
    %523 = math.tanh %522 : vector<16x128xf32>
    %cst_216 = arith.constant 5.000000e-01 : f32
    %524 = vector.broadcast %cst_216 : f32 to vector<16x128xf32>
    %525 = arith.mulf %524, %523 : vector<16x128xf32>
    %cst_217 = arith.constant 5.000000e-01 : f32
    %526 = vector.broadcast %cst_217 : f32 to vector<16x128xf32>
    %527 = arith.addf %525, %526 : vector<16x128xf32>
    %528 = arith.mulf %517, %487 : vector<16x128xf32>
    %529 = arith.mulf %509, %519 : vector<16x128xf32>
    %530 = arith.addf %528, %529 : vector<16x128xf32>
    %531 = math.tanh %530 : vector<16x128xf32>
    %532 = arith.mulf %527, %531 : vector<16x128xf32>
    %533 = arith.truncf %532 : vector<16x128xf32> to vector<16x128xbf16>
    %534 = arith.index_cast %c3_i32_203 : i32 to index
    %c0_218 = arith.constant 0 : index
    %c0_219 = arith.constant 0 : index
    %535 = vector.load %arg11[%534, %c0_218, %c0_219] : memref<8x16x128xbf16, #tpu.memory_space<vmem>>, vector<1x16x128xbf16>
    %536 = vector.shape_cast %535 : vector<1x16x128xbf16> to vector<16x128xbf16>
    %537 = vector.shape_cast %533 : vector<16x128xbf16> to vector<1x16x128xbf16>
    tpu.vector_store %arg11[%534, %c0_218, %c0_219], %537 {strides = array<i32>} : memref<8x16x128xbf16, #tpu.memory_space<vmem>>, vector<1x16x128xbf16>,
    %c4_i32_220 = arith.constant 4 : i32
    %538 = arith.index_cast %c4_i32_220 : i32 to index
    %c0_221 = arith.constant 0 : index
    %c0_222 = arith.constant 0 : index
    %539 = vector.load %arg12[%538, %c0_221, %c0_222] : memref<8x16x512xf32, #tpu.memory_space<vmem>>, vector<1x16x512xf32>
    %540 = vector.shape_cast %539 : vector<1x16x512xf32> to vector<16x512xf32>
    %541 = arith.truncf %532 : vector<16x128xf32> to vector<16x128xbf16>
    %c0_223 = arith.constant 0 : index
    %c0_224 = arith.constant 0 : index
    %542 = vector.load %arg6[%c0_223, %c0_224] : memref<128x512xbf16, #tpu.memory_space<vmem>>, vector<128x512xbf16>
    %cst_225 = arith.constant dense<0.000000e+00> : vector<16x512xf32>
    %543 = tpu.matmul %541, %542, %cst_225 {dimension_numbers = #tpu.dot_dimension_numbers<[1], [0], [0], [1], [0, 0, 1, 1], [], []>} : vector<16x128xbf16>, vector<128x512xbf16>, vector<16x512xf32> -> vector<16x512xf32>
    %544 = arith.addf %540, %543 : vector<16x512xf32>
    %545 = vector.extract_strided_slice %544 {offsets = [0, 0], sizes = [16, 128], strides = [1, 1]} : vector<16x512xf32> to vector<16x128xf32>
    %cst_226 = arith.constant 5.000000e-01 : f32
    %546 = vector.broadcast %cst_226 : f32 to vector<16x128xf32>
    %547 = arith.mulf %546, %545 : vector<16x128xf32>
    %548 = math.tanh %547 : vector<16x128xf32>
    %cst_227 = arith.constant 5.000000e-01 : f32
    %549 = vector.broadcast %cst_227 : f32 to vector<16x128xf32>
    %550 = arith.mulf %549, %548 : vector<16x128xf32>
    %cst_228 = arith.constant 5.000000e-01 : f32
    %551 = vector.broadcast %cst_228 : f32 to vector<16x128xf32>
    %552 = arith.addf %550, %551 : vector<16x128xf32>
    %553 = vector.extract_strided_slice %544 {offsets = [0, 128], sizes = [16, 128], strides = [1, 1]} : vector<16x512xf32> to vector<16x128xf32>
    %cst_229 = arith.constant 5.000000e-01 : f32
    %554 = vector.broadcast %cst_229 : f32 to vector<16x128xf32>
    %555 = arith.mulf %554, %553 : vector<16x128xf32>
    %556 = math.tanh %555 : vector<16x128xf32>
    %cst_230 = arith.constant 5.000000e-01 : f32
    %557 = vector.broadcast %cst_230 : f32 to vector<16x128xf32>
    %558 = arith.mulf %557, %556 : vector<16x128xf32>
    %cst_231 = arith.constant 5.000000e-01 : f32
    %559 = vector.broadcast %cst_231 : f32 to vector<16x128xf32>
    %560 = arith.addf %558, %559 : vector<16x128xf32>
    %561 = vector.extract_strided_slice %544 {offsets = [0, 256], sizes = [16, 128], strides = [1, 1]} : vector<16x512xf32> to vector<16x128xf32>
    %562 = math.tanh %561 : vector<16x128xf32>
    %563 = vector.extract_strided_slice %544 {offsets = [0, 384], sizes = [16, 128], strides = [1, 1]} : vector<16x512xf32> to vector<16x128xf32>
    %cst_232 = arith.constant 5.000000e-01 : f32
    %564 = vector.broadcast %cst_232 : f32 to vector<16x128xf32>
    %565 = arith.mulf %564, %563 : vector<16x128xf32>
    %566 = math.tanh %565 : vector<16x128xf32>
    %cst_233 = arith.constant 5.000000e-01 : f32
    %567 = vector.broadcast %cst_233 : f32 to vector<16x128xf32>
    %568 = arith.mulf %567, %566 : vector<16x128xf32>
    %cst_234 = arith.constant 5.000000e-01 : f32
    %569 = vector.broadcast %cst_234 : f32 to vector<16x128xf32>
    %570 = arith.addf %568, %569 : vector<16x128xf32>
    %571 = arith.mulf %560, %530 : vector<16x128xf32>
    %572 = arith.mulf %552, %562 : vector<16x128xf32>
    %573 = arith.addf %571, %572 : vector<16x128xf32>
    %574 = math.tanh %573 : vector<16x128xf32>
    %575 = arith.mulf %570, %574 : vector<16x128xf32>
    %576 = arith.truncf %575 : vector<16x128xf32> to vector<16x128xbf16>
    %577 = arith.index_cast %c4_i32_220 : i32 to index
    %c0_235 = arith.constant 0 : index
    %c0_236 = arith.constant 0 : index
    %578 = vector.load %arg11[%577, %c0_235, %c0_236] : memref<8x16x128xbf16, #tpu.memory_space<vmem>>, vector<1x16x128xbf16>
    %579 = vector.shape_cast %578 : vector<1x16x128xbf16> to vector<16x128xbf16>
    %580 = vector.shape_cast %576 : vector<16x128xbf16> to vector<1x16x128xbf16>
    tpu.vector_store %arg11[%577, %c0_235, %c0_236], %580 {strides = array<i32>} : memref<8x16x128xbf16, #tpu.memory_space<vmem>>, vector<1x16x128xbf16>,
    %c5_i32_237 = arith.constant 5 : i32
    %581 = arith.index_cast %c5_i32_237 : i32 to index
    %c0_238 = arith.constant 0 : index
    %c0_239 = arith.constant 0 : index
    %582 = vector.load %arg12[%581, %c0_238, %c0_239] : memref<8x16x512xf32, #tpu.memory_space<vmem>>, vector<1x16x512xf32>
    %583 = vector.shape_cast %582 : vector<1x16x512xf32> to vector<16x512xf32>
    %584 = arith.truncf %575 : vector<16x128xf32> to vector<16x128xbf16>
    %c0_240 = arith.constant 0 : index
    %c0_241 = arith.constant 0 : index
    %585 = vector.load %arg6[%c0_240, %c0_241] : memref<128x512xbf16, #tpu.memory_space<vmem>>, vector<128x512xbf16>
    %cst_242 = arith.constant dense<0.000000e+00> : vector<16x512xf32>
    %586 = tpu.matmul %584, %585, %cst_242 {dimension_numbers = #tpu.dot_dimension_numbers<[1], [0], [0], [1], [0, 0, 1, 1], [], []>} : vector<16x128xbf16>, vector<128x512xbf16>, vector<16x512xf32> -> vector<16x512xf32>
    %587 = arith.addf %583, %586 : vector<16x512xf32>
    %588 = vector.extract_strided_slice %587 {offsets = [0, 0], sizes = [16, 128], strides = [1, 1]} : vector<16x512xf32> to vector<16x128xf32>
    %cst_243 = arith.constant 5.000000e-01 : f32
    %589 = vector.broadcast %cst_243 : f32 to vector<16x128xf32>
    %590 = arith.mulf %589, %588 : vector<16x128xf32>
    %591 = math.tanh %590 : vector<16x128xf32>
    %cst_244 = arith.constant 5.000000e-01 : f32
    %592 = vector.broadcast %cst_244 : f32 to vector<16x128xf32>
    %593 = arith.mulf %592, %591 : vector<16x128xf32>
    %cst_245 = arith.constant 5.000000e-01 : f32
    %594 = vector.broadcast %cst_245 : f32 to vector<16x128xf32>
    %595 = arith.addf %593, %594 : vector<16x128xf32>
    %596 = vector.extract_strided_slice %587 {offsets = [0, 128], sizes = [16, 128], strides = [1, 1]} : vector<16x512xf32> to vector<16x128xf32>
    %cst_246 = arith.constant 5.000000e-01 : f32
    %597 = vector.broadcast %cst_246 : f32 to vector<16x128xf32>
    %598 = arith.mulf %597, %596 : vector<16x128xf32>
    %599 = math.tanh %598 : vector<16x128xf32>
    %cst_247 = arith.constant 5.000000e-01 : f32
    %600 = vector.broadcast %cst_247 : f32 to vector<16x128xf32>
    %601 = arith.mulf %600, %599 : vector<16x128xf32>
    %cst_248 = arith.constant 5.000000e-01 : f32
    %602 = vector.broadcast %cst_248 : f32 to vector<16x128xf32>
    %603 = arith.addf %601, %602 : vector<16x128xf32>
    %604 = vector.extract_strided_slice %587 {offsets = [0, 256], sizes = [16, 128], strides = [1, 1]} : vector<16x512xf32> to vector<16x128xf32>
    %605 = math.tanh %604 : vector<16x128xf32>
    %606 = vector.extract_strided_slice %587 {offsets = [0, 384], sizes = [16, 128], strides = [1, 1]} : vector<16x512xf32> to vector<16x128xf32>
    %cst_249 = arith.constant 5.000000e-01 : f32
    %607 = vector.broadcast %cst_249 : f32 to vector<16x128xf32>
    %608 = arith.mulf %607, %606 : vector<16x128xf32>
    %609 = math.tanh %608 : vector<16x128xf32>
    %cst_250 = arith.constant 5.000000e-01 : f32
    %610 = vector.broadcast %cst_250 : f32 to vector<16x128xf32>
    %611 = arith.mulf %610, %609 : vector<16x128xf32>
    %cst_251 = arith.constant 5.000000e-01 : f32
    %612 = vector.broadcast %cst_251 : f32 to vector<16x128xf32>
    %613 = arith.addf %611, %612 : vector<16x128xf32>
    %614 = arith.mulf %603, %573 : vector<16x128xf32>
    %615 = arith.mulf %595, %605 : vector<16x128xf32>
    %616 = arith.addf %614, %615 : vector<16x128xf32>
    %617 = math.tanh %616 : vector<16x128xf32>
    %618 = arith.mulf %613, %617 : vector<16x128xf32>
    %619 = arith.truncf %618 : vector<16x128xf32> to vector<16x128xbf16>
    %620 = arith.index_cast %c5_i32_237 : i32 to index
    %c0_252 = arith.constant 0 : index
    %c0_253 = arith.constant 0 : index
    %621 = vector.load %arg11[%620, %c0_252, %c0_253] : memref<8x16x128xbf16, #tpu.memory_space<vmem>>, vector<1x16x128xbf16>
    %622 = vector.shape_cast %621 : vector<1x16x128xbf16> to vector<16x128xbf16>
    %623 = vector.shape_cast %619 : vector<16x128xbf16> to vector<1x16x128xbf16>
    tpu.vector_store %arg11[%620, %c0_252, %c0_253], %623 {strides = array<i32>} : memref<8x16x128xbf16, #tpu.memory_space<vmem>>, vector<1x16x128xbf16>,
    %c6_i32_254 = arith.constant 6 : i32
    %624 = arith.index_cast %c6_i32_254 : i32 to index
    %c0_255 = arith.constant 0 : index
    %c0_256 = arith.constant 0 : index
    %625 = vector.load %arg12[%624, %c0_255, %c0_256] : memref<8x16x512xf32, #tpu.memory_space<vmem>>, vector<1x16x512xf32>
    %626 = vector.shape_cast %625 : vector<1x16x512xf32> to vector<16x512xf32>
    %627 = arith.truncf %618 : vector<16x128xf32> to vector<16x128xbf16>
    %c0_257 = arith.constant 0 : index
    %c0_258 = arith.constant 0 : index
    %628 = vector.load %arg6[%c0_257, %c0_258] : memref<128x512xbf16, #tpu.memory_space<vmem>>, vector<128x512xbf16>
    %cst_259 = arith.constant dense<0.000000e+00> : vector<16x512xf32>
    %629 = tpu.matmul %627, %628, %cst_259 {dimension_numbers = #tpu.dot_dimension_numbers<[1], [0], [0], [1], [0, 0, 1, 1], [], []>} : vector<16x128xbf16>, vector<128x512xbf16>, vector<16x512xf32> -> vector<16x512xf32>
    %630 = arith.addf %626, %629 : vector<16x512xf32>
    %631 = vector.extract_strided_slice %630 {offsets = [0, 0], sizes = [16, 128], strides = [1, 1]} : vector<16x512xf32> to vector<16x128xf32>
    %cst_260 = arith.constant 5.000000e-01 : f32
    %632 = vector.broadcast %cst_260 : f32 to vector<16x128xf32>
    %633 = arith.mulf %632, %631 : vector<16x128xf32>
    %634 = math.tanh %633 : vector<16x128xf32>
    %cst_261 = arith.constant 5.000000e-01 : f32
    %635 = vector.broadcast %cst_261 : f32 to vector<16x128xf32>
    %636 = arith.mulf %635, %634 : vector<16x128xf32>
    %cst_262 = arith.constant 5.000000e-01 : f32
    %637 = vector.broadcast %cst_262 : f32 to vector<16x128xf32>
    %638 = arith.addf %636, %637 : vector<16x128xf32>
    %639 = vector.extract_strided_slice %630 {offsets = [0, 128], sizes = [16, 128], strides = [1, 1]} : vector<16x512xf32> to vector<16x128xf32>
    %cst_263 = arith.constant 5.000000e-01 : f32
    %640 = vector.broadcast %cst_263 : f32 to vector<16x128xf32>
    %641 = arith.mulf %640, %639 : vector<16x128xf32>
    %642 = math.tanh %641 : vector<16x128xf32>
    %cst_264 = arith.constant 5.000000e-01 : f32
    %643 = vector.broadcast %cst_264 : f32 to vector<16x128xf32>
    %644 = arith.mulf %643, %642 : vector<16x128xf32>
    %cst_265 = arith.constant 5.000000e-01 : f32
    %645 = vector.broadcast %cst_265 : f32 to vector<16x128xf32>
    %646 = arith.addf %644, %645 : vector<16x128xf32>
    %647 = vector.extract_strided_slice %630 {offsets = [0, 256], sizes = [16, 128], strides = [1, 1]} : vector<16x512xf32> to vector<16x128xf32>
    %648 = math.tanh %647 : vector<16x128xf32>
    %649 = vector.extract_strided_slice %630 {offsets = [0, 384], sizes = [16, 128], strides = [1, 1]} : vector<16x512xf32> to vector<16x128xf32>
    %cst_266 = arith.constant 5.000000e-01 : f32
    %650 = vector.broadcast %cst_266 : f32 to vector<16x128xf32>
    %651 = arith.mulf %650, %649 : vector<16x128xf32>
    %652 = math.tanh %651 : vector<16x128xf32>
    %cst_267 = arith.constant 5.000000e-01 : f32
    %653 = vector.broadcast %cst_267 : f32 to vector<16x128xf32>
    %654 = arith.mulf %653, %652 : vector<16x128xf32>
    %cst_268 = arith.constant 5.000000e-01 : f32
    %655 = vector.broadcast %cst_268 : f32 to vector<16x128xf32>
    %656 = arith.addf %654, %655 : vector<16x128xf32>
    %657 = arith.mulf %646, %616 : vector<16x128xf32>
    %658 = arith.mulf %638, %648 : vector<16x128xf32>
    %659 = arith.addf %657, %658 : vector<16x128xf32>
    %660 = math.tanh %659 : vector<16x128xf32>
    %661 = arith.mulf %656, %660 : vector<16x128xf32>
    %662 = arith.truncf %661 : vector<16x128xf32> to vector<16x128xbf16>
    %663 = arith.index_cast %c6_i32_254 : i32 to index
    %c0_269 = arith.constant 0 : index
    %c0_270 = arith.constant 0 : index
    %664 = vector.load %arg11[%663, %c0_269, %c0_270] : memref<8x16x128xbf16, #tpu.memory_space<vmem>>, vector<1x16x128xbf16>
    %665 = vector.shape_cast %664 : vector<1x16x128xbf16> to vector<16x128xbf16>
    %666 = vector.shape_cast %662 : vector<16x128xbf16> to vector<1x16x128xbf16>
    tpu.vector_store %arg11[%663, %c0_269, %c0_270], %666 {strides = array<i32>} : memref<8x16x128xbf16, #tpu.memory_space<vmem>>, vector<1x16x128xbf16>,
    %c7_i32_271 = arith.constant 7 : i32
    %667 = arith.index_cast %c7_i32_271 : i32 to index
    %c0_272 = arith.constant 0 : index
    %c0_273 = arith.constant 0 : index
    %668 = vector.load %arg12[%667, %c0_272, %c0_273] : memref<8x16x512xf32, #tpu.memory_space<vmem>>, vector<1x16x512xf32>
    %669 = vector.shape_cast %668 : vector<1x16x512xf32> to vector<16x512xf32>
    %670 = arith.truncf %661 : vector<16x128xf32> to vector<16x128xbf16>
    %c0_274 = arith.constant 0 : index
    %c0_275 = arith.constant 0 : index
    %671 = vector.load %arg6[%c0_274, %c0_275] : memref<128x512xbf16, #tpu.memory_space<vmem>>, vector<128x512xbf16>
    %cst_276 = arith.constant dense<0.000000e+00> : vector<16x512xf32>
    %672 = tpu.matmul %670, %671, %cst_276 {dimension_numbers = #tpu.dot_dimension_numbers<[1], [0], [0], [1], [0, 0, 1, 1], [], []>} : vector<16x128xbf16>, vector<128x512xbf16>, vector<16x512xf32> -> vector<16x512xf32>
    %673 = arith.addf %669, %672 : vector<16x512xf32>
    %674 = vector.extract_strided_slice %673 {offsets = [0, 0], sizes = [16, 128], strides = [1, 1]} : vector<16x512xf32> to vector<16x128xf32>
    %cst_277 = arith.constant 5.000000e-01 : f32
    %675 = vector.broadcast %cst_277 : f32 to vector<16x128xf32>
    %676 = arith.mulf %675, %674 : vector<16x128xf32>
    %677 = math.tanh %676 : vector<16x128xf32>
    %cst_278 = arith.constant 5.000000e-01 : f32
    %678 = vector.broadcast %cst_278 : f32 to vector<16x128xf32>
    %679 = arith.mulf %678, %677 : vector<16x128xf32>
    %cst_279 = arith.constant 5.000000e-01 : f32
    %680 = vector.broadcast %cst_279 : f32 to vector<16x128xf32>
    %681 = arith.addf %679, %680 : vector<16x128xf32>
    %682 = vector.extract_strided_slice %673 {offsets = [0, 128], sizes = [16, 128], strides = [1, 1]} : vector<16x512xf32> to vector<16x128xf32>
    %cst_280 = arith.constant 5.000000e-01 : f32
    %683 = vector.broadcast %cst_280 : f32 to vector<16x128xf32>
    %684 = arith.mulf %683, %682 : vector<16x128xf32>
    %685 = math.tanh %684 : vector<16x128xf32>
    %cst_281 = arith.constant 5.000000e-01 : f32
    %686 = vector.broadcast %cst_281 : f32 to vector<16x128xf32>
    %687 = arith.mulf %686, %685 : vector<16x128xf32>
    %cst_282 = arith.constant 5.000000e-01 : f32
    %688 = vector.broadcast %cst_282 : f32 to vector<16x128xf32>
    %689 = arith.addf %687, %688 : vector<16x128xf32>
    %690 = vector.extract_strided_slice %673 {offsets = [0, 256], sizes = [16, 128], strides = [1, 1]} : vector<16x512xf32> to vector<16x128xf32>
    %691 = math.tanh %690 : vector<16x128xf32>
    %692 = vector.extract_strided_slice %673 {offsets = [0, 384], sizes = [16, 128], strides = [1, 1]} : vector<16x512xf32> to vector<16x128xf32>
    %cst_283 = arith.constant 5.000000e-01 : f32
    %693 = vector.broadcast %cst_283 : f32 to vector<16x128xf32>
    %694 = arith.mulf %693, %692 : vector<16x128xf32>
    %695 = math.tanh %694 : vector<16x128xf32>
    %cst_284 = arith.constant 5.000000e-01 : f32
    %696 = vector.broadcast %cst_284 : f32 to vector<16x128xf32>
    %697 = arith.mulf %696, %695 : vector<16x128xf32>
    %cst_285 = arith.constant 5.000000e-01 : f32
    %698 = vector.broadcast %cst_285 : f32 to vector<16x128xf32>
    %699 = arith.addf %697, %698 : vector<16x128xf32>
    %700 = arith.mulf %689, %659 : vector<16x128xf32>
    %701 = arith.mulf %681, %691 : vector<16x128xf32>
    %702 = arith.addf %700, %701 : vector<16x128xf32>
    %703 = math.tanh %702 : vector<16x128xf32>
    %704 = arith.mulf %699, %703 : vector<16x128xf32>
    %705 = arith.truncf %704 : vector<16x128xf32> to vector<16x128xbf16>
    %706 = arith.index_cast %c7_i32_271 : i32 to index
    %c0_286 = arith.constant 0 : index
    %c0_287 = arith.constant 0 : index
    %707 = vector.load %arg11[%706, %c0_286, %c0_287] : memref<8x16x128xbf16, #tpu.memory_space<vmem>>, vector<1x16x128xbf16>
    %708 = vector.shape_cast %707 : vector<1x16x128xbf16> to vector<16x128xbf16>
    %709 = vector.shape_cast %705 : vector<16x128xbf16> to vector<1x16x128xbf16>
    tpu.vector_store %arg11[%706, %c0_286, %c0_287], %709 {strides = array<i32>} : memref<8x16x128xbf16, #tpu.memory_space<vmem>>, vector<1x16x128xbf16>,
    %c8_i32_288 = arith.constant 8 : i32
    %710 = arith.truncf %704 : vector<16x128xf32> to vector<16x128xbf16>
    %c0_289 = arith.constant 0 : index
    %c0_290 = arith.constant 0 : index
    %711 = vector.load %arg8[%c0_289, %c0_290] : memref<128x128xbf16, #tpu.memory_space<vmem>>, vector<128x128xbf16>
    %cst_291 = arith.constant dense<0.000000e+00> : vector<16x128xf32>
    %712 = tpu.matmul %710, %711, %cst_291 {dimension_numbers = #tpu.dot_dimension_numbers<[1], [0], [0], [1], [0, 0, 1, 1], [], []>} : vector<16x128xbf16>, vector<128x128xbf16>, vector<16x128xf32> -> vector<16x128xf32>
    %c0_292 = arith.constant 0 : index
    %c0_293 = arith.constant 0 : index
    %713 = vector.load %arg9[%c0_292, %c0_293] : memref<1x128xf32, #tpu.memory_space<vmem>>, vector<1x128xf32>
    %714 = vector.broadcast %713 : vector<1x128xf32> to vector<16x128xf32>
    %715 = arith.addf %712, %714 : vector<16x128xf32>
    %c0_294 = arith.constant 0 : index
    %c0_295 = arith.constant 0 : index
    %716 = vector.load %arg10[%c0_294, %c0_295] : memref<16x128xf32, #tpu.memory_space<vmem>>, vector<16x128xf32>
    tpu.vector_store %arg10[%c0_294, %c0_295], %715 {strides = array<i32>} : memref<16x128xf32, #tpu.memory_space<vmem>>, vector<16x128xf32>,
    return
  }
  func.func @transform_0(%arg0: i32) -> (i32, i32, i32) {
    %c0_i32 = arith.constant 0 : i32
    %c0_i32_0 = arith.constant 0 : i32
    %c0_i32_1 = arith.constant 0 : i32
    return %c0_i32, %arg0, %c0_i32_0 : i32, i32, i32
  }
  func.func @transform_1(%arg0: i32) -> (i32, i32) {
    %c0_i32 = arith.constant 0 : i32
    %c0_i32_0 = arith.constant 0 : i32
    %c0_i32_1 = arith.constant 0 : i32
    return %c0_i32, %c0_i32_0 : i32, i32
  }
  func.func @transform_2(%arg0: i32) -> (i32, i32) {
    %c0_i32 = arith.constant 0 : i32
    %c0_i32_0 = arith.constant 0 : i32
    %c0_i32_1 = arith.constant 0 : i32
    return %c0_i32, %c0_i32_0 : i32, i32
  }
  func.func @transform_3(%arg0: i32) -> (i32, i32) {
    %c0_i32 = arith.constant 0 : i32
    %c0_i32_0 = arith.constant 0 : i32
    %c0_i32_1 = arith.constant 0 : i32
    return %c0_i32, %c0_i32_0 : i32, i32
  }
  func.func @transform_4(%arg0: i32) -> (i32, i32) {
    %c0_i32 = arith.constant 0 : i32
    %c0_i32_0 = arith.constant 0 : i32
    %c0_i32_1 = arith.constant 0 : i32
    return %c0_i32, %c0_i32_0 : i32, i32
  }
  func.func @transform_5(%arg0: i32) -> (i32, i32) {
    %c0_i32 = arith.constant 0 : i32
    %c0_i32_0 = arith.constant 0 : i32
    %c0_i32_1 = arith.constant 0 : i32
    return %c0_i32, %c0_i32_0 : i32, i32
  }
  func.func @transform_6(%arg0: i32) -> (i32, i32) {
    %c0_i32 = arith.constant 0 : i32
    %c0_i32_0 = arith.constant 0 : i32
    %c0_i32_1 = arith.constant 0 : i32
    return %c0_i32, %c0_i32_0 : i32, i32
  }
  func.func @transform_7(%arg0: i32) -> (i32, i32) {
    %c0_i32 = arith.constant 0 : i32
    %c0_i32_0 = arith.constant 0 : i32
    %c0_i32_1 = arith.constant 0 : i32
    return %c0_i32, %c0_i32_0 : i32, i32
  }
  func.func @transform_8(%arg0: i32) -> (i32, i32) {
    %c0_i32 = arith.constant 0 : i32
    %c0_i32_0 = arith.constant 0 : i32
    %c0_i32_1 = arith.constant 0 : i32
    return %c0_i32, %c0_i32_0 : i32, i32
  }
  func.func @transform_9(%arg0: i32) -> (i32, i32) {
    %c0_i32 = arith.constant 0 : i32
    %c0_i32_0 = arith.constant 0 : i32
    return %arg0, %c0_i32 : i32, i32
  }
}

</mosaic_0001>

<llo_original>
// kernel: tpu_custom_call.1
$region0: #{tpu_custom_call.1}
  #allocation0 [shape = 'u32[]', space=smem, size = 0x4, offset = 0x4, fixed_abs, tag = 'smem constant byte address 0x4 - core index']
  #allocation1 [shape = 'u32[144,128]{1,0:T(1,128)}', space=vmem, size = 0x12000, scoped, tag = 'internal scratch']
  #allocation2 [shape = 'bf16[8,16,128]{2,1,0:T(8,128)(2,1)}', space=vmem, size = 0x8000, scoped, tag = 'scratch operand']
  #allocation3 [shape = 'f32[8,16,512]{2,1,0:T(8,128)}', space=vmem, size = 0x40000, scoped, tag = 'scratch operand']
  %s0 = inlined_call_operand.hbm [shape: bf16[8,16,128], index: 0, kind: input, shape index: {}]
  %s1 = inlined_call_operand.hbm [shape: bf16[128,512], index: 1, kind: input, shape index: {}]
  %s2 = inlined_call_operand.hbm [shape: bf16[128,512], index: 2, kind: input, shape index: {}]
  %s3 = inlined_call_operand.vmem [shape: f32[1,512], index: 3, kind: input, shape index: {}]
  %s4 = inlined_call_operand.hbm [shape: bf16[128,512], index: 4, kind: input, shape index: {}]
  %s5 = inlined_call_operand.hbm [shape: bf16[128,512], index: 5, kind: input, shape index: {}]
  %s6 = inlined_call_operand.vmem [shape: f32[1,512], index: 6, kind: input, shape index: {}]
  %s7 = inlined_call_operand.hbm [shape: bf16[128,128], index: 7, kind: input, shape index: {}]
  %s8 = inlined_call_operand.vmem [shape: f32[1,128], index: 8, kind: input, shape index: {}]
  %s9 = inlined_call_operand.hbm [shape: f32[16,128], index: 9, kind: output, shape index: {}]
  %s10 = sld [smem:[#allocation0]]
  $region70: #{tpu_custom_call.1} parent=0
    _
  %s12 = ssub.s32 1, %s10
  %s13 = scalar_select 0, %s12, %s10
  $region1: #{tpu_custom_call.1} parent=0
    #allocation4 [shape = 'u8[32768]{0}', space=vmem, size = 0x8000, scoped, tag = 'input window, operand 0, single buffered']
    #allocation5 [shape = 's32[1]{0}', space=sflag, size = 0x4, scoped, tag = 'scoped memory for tpu_custom_call.1']
    #allocation6 [shape = 's32[1]{0}', space=sflag, size = 0x4, scoped, tag = 'scoped memory for tpu_custom_call.1']
    #allocation7 [shape = 'u8[131072]{0}', space=vmem, size = 0x20000, scoped, tag = 'input window, operand 1, single buffered']
    #allocation8 [shape = 's32[1]{0}', space=sflag, size = 0x4, scoped, tag = 'scoped memory for tpu_custom_call.1']
    #allocation9 [shape = 'u8[131072]{0}', space=vmem, size = 0x20000, scoped, tag = 'input window, operand 2, single buffered']
    #allocation10 [shape = 'u8[131072]{0}', space=vmem, size = 0x20000, scoped, tag = 'input window, operand 4, single buffered']
    #allocation11 [shape = 's32[1]{0}', space=sflag, size = 0x4, scoped, tag = 'scoped memory for tpu_custom_call.1']
    #allocation12 [shape = 'u8[131072]{0}', space=vmem, size = 0x20000, scoped, tag = 'input window, operand 5, single buffered']
    #allocation13 [shape = 'u8[32768]{0}', space=vmem, size = 0x8000, scoped, tag = 'input window, operand 7, single buffered']
    #allocation14 [shape = 's32[1]{0}', space=sflag, size = 0x4, scoped, tag = 'scoped memory for tpu_custom_call.1']
    #allocation15 [shape = 'u8[8192]{0}', space=vmem, size = 0x2000, scoped, tag = 'output window, operand 0, single buffered']
    %14 = vsyncpa [#allocation5], 0
    %15 = vsyncpa [#allocation8], 0
    %16 = vsyncpa [#allocation11], 0
    %17 = vsyncpa [#allocation14], 0
    %18 = vsyncpa [#allocation6], 0
    // Predicated region
    $region2: #{tpu_custom_call.1} parent=1 // pred_check
      _
    $region3: #{tpu_custom_call.1} parent=1 // pred_check_branch
      %20 = sbr.rel (0) target = $region5
    $region4: #{tpu_custom_call.1} parent=1 // pred_region
      %s22 = ssub.s32 1024, 1024
      %23 = vsyncadd [#allocation5], %s22
      %s24 = sshll.u32 [#allocation4], 4
      %s25 = int_to_ptr.vmem [resolvable:$true] %s24
      %30 = dma.hbm_to_vmem [thread:$0]  %s0, 1024, %s25, [#allocation5], 64, 64, 4
    $region5: #{tpu_custom_call.1} parent=1 // pred_fallthru
      _
    // Predicated region
    $region6: #{tpu_custom_call.1} parent=1 // pred_check
      _
    $region7: #{tpu_custom_call.1} parent=1 // pred_check_branch
      %32 = sbr.rel (0) target = $region9
    $region8: #{tpu_custom_call.1} parent=1 // pred_region
      %s34 = ssub.s32 4096, 4096
      %35 = vsyncadd [#allocation8], %s34
      %s36 = sshll.u32 [#allocation7], 4
      %s37 = int_to_ptr.vmem [resolvable:$true] %s36
      %42 = dma.hbm_to_vmem [thread:$0]  %s1, 4096, %s37, [#allocation8], 256, 256, 16
    $region9: #{tpu_custom_call.1} parent=1 // pred_fallthru
      _
    // Predicated region
    $region10: #{tpu_custom_call.1} parent=1 // pred_check
      _
    $region11: #{tpu_custom_call.1} parent=1 // pred_check_branch
      %44 = sbr.rel (0) target = $region13
    $region12: #{tpu_custom_call.1} parent=1 // pred_region
      %s46 = ssub.s32 4096, 4096
      %47 = vsyncadd [#allocation8], %s46
      %s48 = sshll.u32 [#allocation9], 4
      %s49 = int_to_ptr.vmem [resolvable:$true] %s48
      %54 = dma.hbm_to_vmem [thread:$0]  %s2, 4096, %s49, [#allocation8], 256, 256, 16
    $region13: #{tpu_custom_call.1} parent=1 // pred_fallthru
      _
    // Predicated region
    $region14: #{tpu_custom_call.1} parent=1 // pred_check
      _
    $region15: #{tpu_custom_call.1} parent=1 // pred_check_branch
      %56 = sbr.rel (0) target = $region17
    $region16: #{tpu_custom_call.1} parent=1 // pred_region
      _
    $region17: #{tpu_custom_call.1} parent=1 // pred_fallthru
      _
    // Predicated region
    $region18: #{tpu_custom_call.1} parent=1 // pred_check
      _
    $region19: #{tpu_custom_call.1} parent=1 // pred_check_branch
      %58 = sbr.rel (0) target = $region21
    $region20: #{tpu_custom_call.1} parent=1 // pred_region
      %s60 = ssub.s32 4096, 4096
      %61 = vsyncadd [#allocation11], %s60
      %s62 = sshll.u32 [#allocation10], 4
      %s63 = int_to_ptr.vmem [resolvable:$true] %s62
      %68 = dma.hbm_to_vmem [thread:$0]  %s4, 4096, %s63, [#allocation11], 256, 256, 16
    $region21: #{tpu_custom_call.1} parent=1 // pred_fallthru
      _
    // Predicated region
    $region22: #{tpu_custom_call.1} parent=1 // pred_check
      _
    $region23: #{tpu_custom_call.1} parent=1 // pred_check_branch
      %70 = sbr.rel (0) target = $region25
    $region24: #{tpu_custom_call.1} parent=1 // pred_region
      %s72 = ssub.s32 4096, 4096
      %73 = vsyncadd [#allocation11], %s72
      %s74 = sshll.u32 [#allocation12], 4
      %s75 = int_to_ptr.vmem [resolvable:$true] %s74
      %80 = dma.hbm_to_vmem [thread:$0]  %s5, 4096, %s75, [#allocation11], 256, 256, 16
    $region25: #{tpu_custom_call.1} parent=1 // pred_fallthru
      _
    // Predicated region
    $region26: #{tpu_custom_call.1} parent=1 // pred_check
      _
    $region27: #{tpu_custom_call.1} parent=1 // pred_check_branch
      %82 = sbr.rel (0) target = $region29
    $region28: #{tpu_custom_call.1} parent=1 // pred_region
      _
    $region29: #{tpu_custom_call.1} parent=1 // pred_fallthru
      _
    // Predicated region
    $region30: #{tpu_custom_call.1} parent=1 // pred_check
      _
    $region31: #{tpu_custom_call.1} parent=1 // pred_check_branch
      %84 = sbr.rel (0) target = $region33
    $region32: #{tpu_custom_call.1} parent=1 // pred_region
      %s86 = ssub.s32 1024, 1024
      %87 = vsyncadd [#allocation14], %s86
      %s88 = sshll.u32 [#allocation13], 4
      %s89 = int_to_ptr.vmem [resolvable:$true] %s88
      %94 = dma.hbm_to_vmem [thread:$0]  %s7, 1024, %s89, [#allocation14], 64, 64, 4
    $region33: #{tpu_custom_call.1} parent=1 // pred_fallthru
      _
    // Predicated region
    $region34: #{tpu_custom_call.1} parent=1 // pred_check
      _
    $region35: #{tpu_custom_call.1} parent=1 // pred_check_branch
      %96 = sbr.rel (0) target = $region37
    $region36: #{tpu_custom_call.1} parent=1 // pred_region
      _
    $region37: #{tpu_custom_call.1} parent=1 // pred_fallthru
      _
    // Predicated region
    $region38: #{tpu_custom_call.1} parent=1 // pred_check
      _
    $region39: #{tpu_custom_call.1} parent=1 // pred_check_branch
      %98 = sbr.rel (0) target = $region41
    $region40: #{tpu_custom_call.1} parent=1 // pred_region
      %99 = dma.done [#allocation5], 1024
    $region41: #{tpu_custom_call.1} parent=1 // pred_fallthru
      _
    // Predicated region
    $region42: #{tpu_custom_call.1} parent=1 // pred_check
      _
    $region43: #{tpu_custom_call.1} parent=1 // pred_check_branch
      %101 = sbr.rel (0) target = $region45
    $region44: #{tpu_custom_call.1} parent=1 // pred_region
      %102 = dma.done [#allocation8], 4096
    $region45: #{tpu_custom_call.1} parent=1 // pred_fallthru
      _
    // Predicated region
    $region46: #{tpu_custom_call.1} parent=1 // pred_check
      _
    $region47: #{tpu_custom_call.1} parent=1 // pred_check_branch
      %104 = sbr.rel (0) target = $region49
    $region48: #{tpu_custom_call.1} parent=1 // pred_region
      %105 = dma.done [#allocation8], 4096
    $region49: #{tpu_custom_call.1} parent=1 // pred_fallthru
      _
    // Predicated region
    $region50: #{tpu_custom_call.1} parent=1 // pred_check
      _
    $region51: #{tpu_custom_call.1} parent=1 // pred_check_branch
      %107 = sbr.rel (0) target = $region53
    $region52: #{tpu_custom_call.1} parent=1 // pred_region
      %108 = dma.done [#allocation11], 4096
    $region53: #{tpu_custom_call.1} parent=1 // pred_fallthru
      _
    // Predicated region
    $region54: #{tpu_custom_call.1} parent=1 // pred_check
      _
    $region55: #{tpu_custom_call.1} parent=1 // pred_check_branch
      %110 = sbr.rel (0) target = $region57
    $region56: #{tpu_custom_call.1} parent=1 // pred_region
      %111 = dma.done [#allocation11], 4096
    $region57: #{tpu_custom_call.1} parent=1 // pred_fallthru
      _
    // Predicated region
    $region58: #{tpu_custom_call.1} parent=1 // pred_check
      _
    $region59: #{tpu_custom_call.1} parent=1 // pred_check_branch
      %113 = sbr.rel (0) target = $region61
    $region60: #{tpu_custom_call.1} parent=1 // pred_region
      %114 = dma.done [#allocation14], 1024
    $region61: #{tpu_custom_call.1} parent=1 // pred_fallthru
      _
    %v116 = vld [vmem:[#allocation4] sm:$0xf]
    %v117 = vld [vmem:[#allocation4 + $0x4] sm:$0xf]
    %v118 = vld [vmem:[#allocation4 + $0x8] sm:$0xf]
    %v119 = vld [vmem:[#allocation4 + $0xc] sm:$0xf]
    %v120 = vld [vmem:[#allocation4 + $0x10] sm:$0xf]
    %v121 = vld [vmem:[#allocation4 + $0x14] sm:$0xf]
    %v122 = vld [vmem:[#allocation4 + $0x18] sm:$0xf]
    %v123 = vld [vmem:[#allocation4 + $0x1c] sm:$0xf]
    %v124 = vld [vmem:[#allocation4 + $0x20] sm:$0xf]
    %v125 = vld [vmem:[#allocation4 + $0x24] sm:$0xf]
    %v126 = vld [vmem:[#allocation4 + $0x28] sm:$0xf]
    %v127 = vld [vmem:[#allocation4 + $0x2c] sm:$0xf]
    %v128 = vld [vmem:[#allocation4 + $0x30] sm:$0xf]
    %v129 = vld [vmem:[#allocation4 + $0x34] sm:$0xf]
    %v130 = vld [vmem:[#allocation4 + $0x38] sm:$0xf]
    %v131 = vld [vmem:[#allocation4 + $0x3c] sm:$0xf]
    %v132 = vld [vmem:[#allocation7] sm:$0xff]
    %v133 = vld [vmem:[#allocation7 + $0x8] sm:$0xff]
    %v134 = vld [vmem:[#allocation7 + $0x10] sm:$0xff]
    %v135 = vld [vmem:[#allocation7 + $0x18] sm:$0xff]
    %v136 = vld [vmem:[#allocation7 + $0x20] sm:$0xff]
    %v137 = vld [vmem:[#allocation7 + $0x28] sm:$0xff]
    %v138 = vld [vmem:[#allocation7 + $0x30] sm:$0xff]
    %v139 = vld [vmem:[#allocation7 + $0x38] sm:$0xff]
    %v140 = vld [vmem:[#allocation7 + $0x40] sm:$0xff]
    %v141 = vld [vmem:[#allocation7 + $0x48] sm:$0xff]
    %v142 = vld [vmem:[#allocation7 + $0x50] sm:$0xff]
    %v143 = vld [vmem:[#allocation7 + $0x58] sm:$0xff]
    %v144 = vld [vmem:[#allocation7 + $0x60] sm:$0xff]
    %v145 = vld [vmem:[#allocation7 + $0x68] sm:$0xff]
    %v146 = vld [vmem:[#allocation7 + $0x70] sm:$0xff]
    %v147 = vld [vmem:[#allocation7 + $0x78] sm:$0xff]
    %v148 = vld [vmem:[#allocation7 + $0x80] sm:$0xff]
    %v149 = vld [vmem:[#allocation7 + $0x88] sm:$0xff]
    %v150 = vld [vmem:[#allocation7 + $0x90] sm:$0xff]
    %v151 = vld [vmem:[#allocation7 + $0x98] sm:$0xff]
    %v152 = vld [vmem:[#allocation7 + $0xa0] sm:$0xff]
    %v153 = vld [vmem:[#allocation7 + $0xa8] sm:$0xff]
    %v154 = vld [vmem:[#allocation7 + $0xb0] sm:$0xff]
    %v155 = vld [vmem:[#allocation7 + $0xb8] sm:$0xff]
    %v156 = vld [vmem:[#allocation7 + $0xc0] sm:$0xff]
    %v157 = vld [vmem:[#allocation7 + $0xc8] sm:$0xff]
    %v158 = vld [vmem:[#allocation7 + $0xd0] sm:$0xff]
    %v159 = vld [vmem:[#allocation7 + $0xd8] sm:$0xff]
    %v160 = vld [vmem:[#allocation7 + $0xe0] sm:$0xff]
    %v161 = vld [vmem:[#allocation7 + $0xe8] sm:$0xff]
    %v162 = vld [vmem:[#allocation7 + $0xf0] sm:$0xff]
    %v163 = vld [vmem:[#allocation7 + $0xf8] sm:$0xff]
    %v164 = vld [vmem:[%s3] sm:$0xf]
    %v166 = vlaneseq
    %v167 = vshrl.u32 %v166, 7
    %v168 = vsub.s32 0, %v167
    %v169 = vrot.slane %v164, %v168
    %v170 = vlaneseq
    %v171 = vshrl.u32 %v170, 7
    %v172 = vsub.s32 1, %v171
    %v173 = vrot.slane %v164, %v172
    %v174 = vlaneseq
    %v175 = vshrl.u32 %v174, 7
    %v176 = vsub.s32 2, %v175
    %v177 = vrot.slane %v164, %v176
    %v178 = vlaneseq
    %v179 = vshrl.u32 %v178, 7
    %v180 = vsub.s32 3, %v179
    %v181 = vrot.slane %v164, %v180
    %v202 = vunpack.c.l.b16 %v116
    %v203 = vunpack.c.l.b16 %v117
    %v204 = vunpack.c.l.b16 %v118
    %v205 = vunpack.c.l.b16 %v119
    %v206 = vunpack.c.l.b16 %v120
    %v207 = vunpack.c.l.b16 %v121
    %v208 = vunpack.c.l.b16 %v122
    %v209 = vunpack.c.l.b16 %v123
    %v210 = vunpack.c.l.b16 %v124
    %v211 = vunpack.c.l.b16 %v125
    %v212 = vunpack.c.l.b16 %v126
    %v213 = vunpack.c.l.b16 %v127
    %v214 = vunpack.c.l.b16 %v128
    %v215 = vunpack.c.l.b16 %v129
    %v216 = vunpack.c.l.b16 %v130
    %v217 = vunpack.c.l.b16 %v131
    %v218 = vpack.c.b16 %v203, %v202
    %v219 = vpack.c.b16 %v205, %v204
    %v220 = vpack.c.b16 %v207, %v206
    %v221 = vpack.c.b16 %v209, %v208
    %v222 = vpack.c.b16 %v211, %v210
    %v223 = vpack.c.b16 %v213, %v212
    %v224 = vpack.c.b16 %v215, %v214
    %v225 = vpack.c.b16 %v217, %v216
    %v266 = vunpack.c.l.b16 %v132
    %v267 = vunpack.c.h.b16 %v132
    %v268 = vunpack.c.l.b16 %v133
    %v269 = vunpack.c.h.b16 %v133
    %v270 = vunpack.c.l.b16 %v134
    %v271 = vunpack.c.h.b16 %v134
    %v272 = vunpack.c.l.b16 %v135
    %v273 = vunpack.c.h.b16 %v135
    %v274 = vunpack.c.l.b16 %v136
    %v275 = vunpack.c.h.b16 %v136
    %v276 = vunpack.c.l.b16 %v137
    %v277 = vunpack.c.h.b16 %v137
    %v278 = vunpack.c.l.b16 %v138
    %v279 = vunpack.c.h.b16 %v138
    %v280 = vunpack.c.l.b16 %v139
    %v281 = vunpack.c.h.b16 %v139
    %v282 = vunpack.c.l.b16 %v140
    %v283 = vunpack.c.h.b16 %v140
    %v284 = vunpack.c.l.b16 %v141
    %v285 = vunpack.c.h.b16 %v141
    %v286 = vunpack.c.l.b16 %v142
    %v287 = vunpack.c.h.b16 %v142
    %v288 = vunpack.c.l.b16 %v143
    %v289 = vunpack.c.h.b16 %v143
    %v290 = vunpack.c.l.b16 %v144
    %v291 = vunpack.c.h.b16 %v144
    %v292 = vunpack.c.l.b16 %v145
    %v293 = vunpack.c.h.b16 %v145
    %v294 = vunpack.c.l.b16 %v146
    %v295 = vunpack.c.h.b16 %v146
    %v296 = vunpack.c.l.b16 %v147
    %v297 = vunpack.c.h.b16 %v147
    %v298 = vunpack.c.l.b16 %v148
    %v299 = vunpack.c.h.b16 %v148
    %v300 = vunpack.c.l.b16 %v149
    %v301 = vunpack.c.h.b16 %v149
    %v302 = vunpack.c.l.b16 %v150
    %v303 = vunpack.c.h.b16 %v150
    %v304 = vunpack.c.l.b16 %v151
    %v305 = vunpack.c.h.b16 %v151
    %v306 = vunpack.c.l.b16 %v152
    %v307 = vunpack.c.h.b16 %v152
    %v308 = vunpack.c.l.b16 %v153
    %v309 = vunpack.c.h.b16 %v153
    %v310 = vunpack.c.l.b16 %v154
    %v311 = vunpack.c.h.b16 %v154
    %v312 = vunpack.c.l.b16 %v155
    %v313 = vunpack.c.h.b16 %v155
    %v314 = vunpack.c.l.b16 %v156
    %v315 = vunpack.c.h.b16 %v156
    %v316 = vunpack.c.l.b16 %v157
    %v317 = vunpack.c.h.b16 %v157
    %v318 = vunpack.c.l.b16 %v158
    %v319 = vunpack.c.h.b16 %v158
    %v320 = vunpack.c.l.b16 %v159
    %v321 = vunpack.c.h.b16 %v159
    %v322 = vunpack.c.l.b16 %v160
    %v323 = vunpack.c.h.b16 %v160
    %v324 = vunpack.c.l.b16 %v161
    %v325 = vunpack.c.h.b16 %v161
    %v326 = vunpack.c.l.b16 %v162
    %v327 = vunpack.c.h.b16 %v162
    %v328 = vunpack.c.l.b16 %v163
    %v329 = vunpack.c.h.b16 %v163
    %v330 = vpack.c.b16 %v270, %v266
    %v331 = vpack.c.b16 %v271, %v267
    %v332 = vpack.c.b16 %v272, %v268
    %v333 = vpack.c.b16 %v273, %v269
    %v334 = vpack.c.b16 %v278, %v274
    %v335 = vpack.c.b16 %v279, %v275
    %v336 = vpack.c.b16 %v280, %v276
    %v337 = vpack.c.b16 %v281, %v277
    %v338 = vpack.c.b16 %v286, %v282
    %v339 = vpack.c.b16 %v287, %v283
    %v340 = vpack.c.b16 %v288, %v284
    %v341 = vpack.c.b16 %v289, %v285
    %v342 = vpack.c.b16 %v294, %v290
    %v343 = vpack.c.b16 %v295, %v291
    %v344 = vpack.c.b16 %v296, %v292
    %v345 = vpack.c.b16 %v297, %v293
    %v346 = vpack.c.b16 %v302, %v298
    %v347 = vpack.c.b16 %v303, %v299
    %v348 = vpack.c.b16 %v304, %v300
    %v349 = vpack.c.b16 %v305, %v301
    %v350 = vpack.c.b16 %v310, %v306
    %v351 = vpack.c.b16 %v311, %v307
    %v352 = vpack.c.b16 %v312, %v308
    %v353 = vpack.c.b16 %v313, %v309
    %v354 = vpack.c.b16 %v318, %v314
    %v355 = vpack.c.b16 %v319, %v315
    %v356 = vpack.c.b16 %v320, %v316
    %v357 = vpack.c.b16 %v321, %v317
    %v358 = vpack.c.b16 %v326, %v322
    %v359 = vpack.c.b16 %v327, %v323
    %v360 = vpack.c.b16 %v328, %v324
    %v361 = vpack.c.b16 %v329, %v325
    %394 = vmatprep.subr.bf16.mxu0 %v359
    %395 = vmatpush1.bf16.msra.mxu0 %v358
    %396 = vmatprep.subr.bf16.mxu0 %v355
    %397 = vmatpush1.bf16.msra.mxu0 %v354
    %398 = vmatprep.subr.bf16.mxu0 %v351
    %399 = vmatpush1.bf16.msra.mxu0 %v350
    %400 = vmatprep.subr.bf16.mxu0 %v347
    %401 = vmatpush1.bf16.msra.mxu0 %v346
    %402 = vmatprep.subr.bf16.mxu0 %v343
    %403 = vmatpush1.bf16.msra.mxu0 %v342
    %404 = vmatprep.subr.bf16.mxu0 %v339
    %405 = vmatpush1.bf16.msra.mxu0 %v338
    %406 = vmatprep.subr.bf16.mxu0 %v335
    %407 = vmatpush1.bf16.msra.mxu0 %v334
    %408 = vmatprep.subr.bf16.mxu0 %v331
    %409 = vmatpush1.bf16.msra.mxu0 %v330
    %410 = vmatprep.subr.bf16.mxu0 0
    %411 = vmatpush2.bf16.msra.mxu0 0
    %412 = vmatprep.subr.bf16.mxu0 0
    %413 = vmatpush2.bf16.msra.mxu0 0
    %414 = vmatprep.subr.bf16.mxu0 0
    %415 = vmatpush2.bf16.msra.mxu0 0
    %416 = vmatprep.subr.bf16.mxu0 0
    %417 = vmatpush2.bf16.msra.mxu0 0
    %418 = vmatprep.subr.bf16.mxu0 0
    %419 = vmatpush2.bf16.msra.mxu0 0
    %420 = vmatprep.subr.bf16.mxu0 0
    %421 = vmatpush2.bf16.msra.mxu0 0
    %422 = vmatprep.subr.bf16.mxu0 0
    %423 = vmatpush2.bf16.msra.mxu0 0
    %424 = vmatprep.subr.bf16.mxu0 0
    %425 = vmatpush2.bf16.msra.mxu0 0
    %426 = vmatprep.mubr.bf16.mxu0 0
    %427 = vmatmul.mubr.bf16.gmra.mxu0 %v218
    %v428 = vpop.f32.mrf.mxu0
    %v429 = vadd.f32 %v169, %v428
    %v430 = vpop.f32.mrf.mxu0
    %v431 = vadd.f32 %v173, %v430
    %v432 = vpop.f32.mrf.mxu0
    %v433 = vadd.f32 %v169, %v432
    %v434 = vpop.f32.mrf.mxu0
    %v435 = vadd.f32 %v173, %v434
    %436 = vmatprep.mubr.bf16.mxu0 0
    %437 = vmatmul.mubr.bf16.gmra.mxu0 %v219
    %v438 = vpop.f32.mrf.mxu0
    %v439 = vadd.f32 %v169, %v438
    %v440 = vpop.f32.mrf.mxu0
    %v441 = vadd.f32 %v173, %v440
    %v442 = vpop.f32.mrf.mxu0
    %v443 = vadd.f32 %v169, %v442
    %v444 = vpop.f32.mrf.mxu0
    %v445 = vadd.f32 %v173, %v444
    %446 = vmatprep.mubr.bf16.mxu0 0
    %447 = vmatmul.mubr.bf16.gmra.mxu0 %v220
    %v448 = vpop.f32.mrf.mxu0
    %v449 = vadd.f32 %v169, %v448
    %v450 = vpop.f32.mrf.mxu0
    %v451 = vadd.f32 %v173, %v450
    %v452 = vpop.f32.mrf.mxu0
    %v453 = vadd.f32 %v169, %v452
    %v454 = vpop.f32.mrf.mxu0
    %v455 = vadd.f32 %v173, %v454
    %456 = vmatprep.mubr.bf16.mxu0 0
    %457 = vmatmul.mubr.bf16.gmra.mxu0 %v221
    %v458 = vpop.f32.mrf.mxu0
    %v459 = vadd.f32 %v169, %v458
    %v460 = vpop.f32.mrf.mxu0
    %v461 = vadd.f32 %v173, %v460
    %v462 = vpop.f32.mrf.mxu0
    %v463 = vadd.f32 %v169, %v462
    %v464 = vpop.f32.mrf.mxu0
    %v465 = vadd.f32 %v173, %v464
    %466 = vmatprep.mubr.bf16.mxu0 0
    %467 = vmatmul.mubr.bf16.gmra.mxu0 %v222
    %v468 = vpop.f32.mrf.mxu0
    %v469 = vadd.f32 %v169, %v468
    %v470 = vpop.f32.mrf.mxu0
    %v471 = vadd.f32 %v173, %v470
    %v472 = vpop.f32.mrf.mxu0
    %v473 = vadd.f32 %v169, %v472
    %v474 = vpop.f32.mrf.mxu0
    %v475 = vadd.f32 %v173, %v474
    %476 = vmatprep.mubr.bf16.mxu0 0
    %477 = vmatmul.mubr.bf16.gmra.mxu0 %v223
    %v478 = vpop.f32.mrf.mxu0
    %v479 = vadd.f32 %v169, %v478
    %v480 = vpop.f32.mrf.mxu0
    %v481 = vadd.f32 %v173, %v480
    %v482 = vpop.f32.mrf.mxu0
    %v483 = vadd.f32 %v169, %v482
    %v484 = vpop.f32.mrf.mxu0
    %v485 = vadd.f32 %v173, %v484
    %486 = vmatprep.mubr.bf16.mxu0 0
    %487 = vmatmul.mubr.bf16.gmra.mxu0 %v224
    %v488 = vpop.f32.mrf.mxu0
    %v489 = vadd.f32 %v169, %v488
    %v490 = vpop.f32.mrf.mxu0
    %v491 = vadd.f32 %v173, %v490
    %v492 = vpop.f32.mrf.mxu0
    %v493 = vadd.f32 %v169, %v492
    %v494 = vpop.f32.mrf.mxu0
    %v495 = vadd.f32 %v173, %v494
    %496 = vmatprep.mubr.bf16.mxu0 0
    %497 = vmatmul.mubr.bf16.gmra.mxu0 %v225
    %v498 = vpop.f32.mrf.mxu0
    %v499 = vadd.f32 %v169, %v498
    %v500 = vpop.f32.mrf.mxu0
    %v501 = vadd.f32 %v173, %v500
    %v502 = vpop.f32.mrf.mxu0
    %v503 = vadd.f32 %v169, %v502
    %v504 = vpop.f32.mrf.mxu0
    %v505 = vadd.f32 %v173, %v504
    %506 = vdwg.mxu0
    %507 = vmatprep.subr.bf16.mxu0 %v361
    %508 = vmatpush1.bf16.msra.mxu0 %v360
    %509 = vmatprep.subr.bf16.mxu0 %v357
    %510 = vmatpush1.bf16.msra.mxu0 %v356
    %511 = vmatprep.subr.bf16.mxu0 %v353
    %512 = vmatpush1.bf16.msra.mxu0 %v352
    %513 = vmatprep.subr.bf16.mxu0 %v349
    %514 = vmatpush1.bf16.msra.mxu0 %v348
    %515 = vmatprep.subr.bf16.mxu0 %v345
    %516 = vmatpush1.bf16.msra.mxu0 %v344
    %517 = vmatprep.subr.bf16.mxu0 %v341
    %518 = vmatpush1.bf16.msra.mxu0 %v340
    %519 = vmatprep.subr.bf16.mxu0 %v337
    %520 = vmatpush1.bf16.msra.mxu0 %v336
    %521 = vmatprep.subr.bf16.mxu0 %v333
    %522 = vmatpush1.bf16.msra.mxu0 %v332
    %523 = vmatprep.subr.bf16.mxu0 0
    %524 = vmatpush2.bf16.msra.mxu0 0
    %525 = vmatprep.subr.bf16.mxu0 0
    %526 = vmatpush2.bf16.msra.mxu0 0
    %527 = vmatprep.subr.bf16.mxu0 0
    %528 = vmatpush2.bf16.msra.mxu0 0
    %529 = vmatprep.subr.bf16.mxu0 0
    %530 = vmatpush2.bf16.msra.mxu0 0
    %531 = vmatprep.subr.bf16.mxu0 0
    %532 = vmatpush2.bf16.msra.mxu0 0
    %533 = vmatprep.subr.bf16.mxu0 0
    %534 = vmatpush2.bf16.msra.mxu0 0
    %535 = vmatprep.subr.bf16.mxu0 0
    %536 = vmatpush2.bf16.msra.mxu0 0
    %537 = vmatprep.subr.bf16.mxu0 0
    %538 = vmatpush2.bf16.msra.mxu0 0
    %539 = vmatprep.mubr.bf16.mxu0 0
    %540 = vmatmul.mubr.bf16.gmra.mxu0 %v218
    %v541 = vpop.f32.mrf.mxu0
    %v542 = vadd.f32 %v177, %v541
    %v543 = vpop.f32.mrf.mxu0
    %v544 = vadd.f32 %v181, %v543
    %v545 = vpop.f32.mrf.mxu0
    %v546 = vadd.f32 %v177, %v545
    %v547 = vpop.f32.mrf.mxu0
    %v548 = vadd.f32 %v181, %v547
    %549 = vmatprep.mubr.bf16.mxu0 0
    %550 = vmatmul.mubr.bf16.gmra.mxu0 %v219
    %v551 = vpop.f32.mrf.mxu0
    %v552 = vadd.f32 %v177, %v551
    %v553 = vpop.f32.mrf.mxu0
    %v554 = vadd.f32 %v181, %v553
    %v555 = vpop.f32.mrf.mxu0
    %v556 = vadd.f32 %v177, %v555
    %v557 = vpop.f32.mrf.mxu0
    %v558 = vadd.f32 %v181, %v557
    %559 = vmatprep.mubr.bf16.mxu0 0
    %560 = vmatmul.mubr.bf16.gmra.mxu0 %v220
    %v561 = vpop.f32.mrf.mxu0
    %v562 = vadd.f32 %v177, %v561
    %v563 = vpop.f32.mrf.mxu0
    %v564 = vadd.f32 %v181, %v563
    %v565 = vpop.f32.mrf.mxu0
    %v566 = vadd.f32 %v177, %v565
    %v567 = vpop.f32.mrf.mxu0
    %v568 = vadd.f32 %v181, %v567
    %569 = vmatprep.mubr.bf16.mxu0 0
    %570 = vmatmul.mubr.bf16.gmra.mxu0 %v221
    %v571 = vpop.f32.mrf.mxu0
    %v572 = vadd.f32 %v177, %v571
    %v573 = vpop.f32.mrf.mxu0
    %v574 = vadd.f32 %v181, %v573
    %v575 = vpop.f32.mrf.mxu0
    %v576 = vadd.f32 %v177, %v575
    %v577 = vpop.f32.mrf.mxu0
    %v578 = vadd.f32 %v181, %v577
    %579 = vmatprep.mubr.bf16.mxu0 0
    %580 = vmatmul.mubr.bf16.gmra.mxu0 %v222
    %v581 = vpop.f32.mrf.mxu0
    %v582 = vadd.f32 %v177, %v581
    %v583 = vpop.f32.mrf.mxu0
    %v584 = vadd.f32 %v181, %v583
    %v585 = vpop.f32.mrf.mxu0
    %v586 = vadd.f32 %v177, %v585
    %v587 = vpop.f32.mrf.mxu0
    %v588 = vadd.f32 %v181, %v587
    %589 = vmatprep.mubr.bf16.mxu0 0
    %590 = vmatmul.mubr.bf16.gmra.mxu0 %v223
    %v591 = vpop.f32.mrf.mxu0
    %v592 = vadd.f32 %v177, %v591
    %v593 = vpop.f32.mrf.mxu0
    %v594 = vadd.f32 %v181, %v593
    %v595 = vpop.f32.mrf.mxu0
    %v596 = vadd.f32 %v177, %v595
    %v597 = vpop.f32.mrf.mxu0
    %v598 = vadd.f32 %v181, %v597
    %599 = vmatprep.mubr.bf16.mxu0 0
    %600 = vmatmul.mubr.bf16.gmra.mxu0 %v224
    %v601 = vpop.f32.mrf.mxu0
    %v602 = vadd.f32 %v177, %v601
    %v603 = vpop.f32.mrf.mxu0
    %v604 = vadd.f32 %v181, %v603
    %v605 = vpop.f32.mrf.mxu0
    %v606 = vadd.f32 %v177, %v605
    %v607 = vpop.f32.mrf.mxu0
    %v608 = vadd.f32 %v181, %v607
    %609 = vmatprep.mubr.bf16.mxu0 0
    %610 = vmatmul.mubr.bf16.gmra.mxu0 %v225
    %v611 = vpop.f32.mrf.mxu0
    %v612 = vadd.f32 %v177, %v611
    %v613 = vpop.f32.mrf.mxu0
    %v614 = vadd.f32 %v181, %v613
    %v615 = vpop.f32.mrf.mxu0
    %v616 = vadd.f32 %v177, %v615
    %v617 = vpop.f32.mrf.mxu0
    %v618 = vadd.f32 %v181, %v617
    %619 = vdwg.mxu0
    %620 = vst [vmem:[#allocation3] sm:$0xff] %v429
    %621 = vst [vmem:[#allocation3 + $0x8] sm:$0xff] %v431
    %622 = vst [vmem:[#allocation3 + $0x10] sm:$0xff] %v542
    %623 = vst [vmem:[#allocation3 + $0x18] sm:$0xff] %v544
    %624 = vst [vmem:[#allocation3 + $0x20] sm:$0xff] %v433
    %625 = vst [vmem:[#allocation3 + $0x28] sm:$0xff] %v435
    %626 = vst [vmem:[#allocation3 + $0x30] sm:$0xff] %v546
    %627 = vst [vmem:[#allocation3 + $0x38] sm:$0xff] %v548
    %628 = vst [vmem:[#allocation3 + $0x40] sm:$0xff] %v439
    %629 = vst [vmem:[#allocation3 + $0x48] sm:$0xff] %v441
    %630 = vst [vmem:[#allocation3 + $0x50] sm:$0xff] %v552
    %631 = vst [vmem:[#allocation3 + $0x58] sm:$0xff] %v554
    %632 = vst [vmem:[#allocation3 + $0x60] sm:$0xff] %v443
    %633 = vst [vmem:[#allocation3 + $0x68] sm:$0xff] %v445
    %634 = vst [vmem:[#allocation3 + $0x70] sm:$0xff] %v556
    %635 = vst [vmem:[#allocation3 + $0x78] sm:$0xff] %v558
    %636 = vst [vmem:[#allocation3 + $0x80] sm:$0xff] %v449
    %637 = vst [vmem:[#allocation3 + $0x88] sm:$0xff] %v451
    %638 = vst [vmem:[#allocation3 + $0x90] sm:$0xff] %v562
    %639 = vst [vmem:[#allocation3 + $0x98] sm:$0xff] %v564
    %640 = vst [vmem:[#allocation3 + $0xa0] sm:$0xff] %v453
    %641 = vst [vmem:[#allocation3 + $0xa8] sm:$0xff] %v455
    %642 = vst [vmem:[#allocation3 + $0xb0] sm:$0xff] %v566
    %643 = vst [vmem:[#allocation3 + $0xb8] sm:$0xff] %v568
    %644 = vst [vmem:[#allocation3 + $0xc0] sm:$0xff] %v459
    %645 = vst [vmem:[#allocation3 + $0xc8] sm:$0xff] %v461
    %646 = vst [vmem:[#allocation3 + $0xd0] sm:$0xff] %v572
    %647 = vst [vmem:[#allocation3 + $0xd8] sm:$0xff] %v574
    %648 = vst [vmem:[#allocation3 + $0xe0] sm:$0xff] %v463
    %649 = vst [vmem:[#allocation3 + $0xe8] sm:$0xff] %v465
    %650 = vst [vmem:[#allocation3 + $0xf0] sm:$0xff] %v576
    %651 = vst [vmem:[#allocation3 + $0xf8] sm:$0xff] %v578
    %652 = vst [vmem:[#allocation3 + $0x100] sm:$0xff] %v469
    %653 = vst [vmem:[#allocation3 + $0x108] sm:$0xff] %v471
    %654 = vst [vmem:[#allocation3 + $0x110] sm:$0xff] %v582
    %655 = vst [vmem:[#allocation3 + $0x118] sm:$0xff] %v584
    %656 = vst [vmem:[#allocation3 + $0x120] sm:$0xff] %v473
    %657 = vst [vmem:[#allocation3 + $0x128] sm:$0xff] %v475
    %658 = vst [vmem:[#allocation3 + $0x130] sm:$0xff] %v586
    %659 = vst [vmem:[#allocation3 + $0x138] sm:$0xff] %v588
    %660 = vst [vmem:[#allocation3 + $0x140] sm:$0xff] %v479
    %661 = vst [vmem:[#allocation3 + $0x148] sm:$0xff] %v481
    %662 = vst [vmem:[#allocation3 + $0x150] sm:$0xff] %v592
    %663 = vst [vmem:[#allocation3 + $0x158] sm:$0xff] %v594
    %664 = vst [vmem:[#allocation3 + $0x160] sm:$0xff] %v483
    %665 = vst [vmem:[#allocation3 + $0x168] sm:$0xff] %v485
    %666 = vst [vmem:[#allocation3 + $0x170] sm:$0xff] %v596
    %667 = vst [vmem:[#allocation3 + $0x178] sm:$0xff] %v598
    %668 = vst [vmem:[#allocation3 + $0x180] sm:$0xff] %v489
    %669 = vst [vmem:[#allocation3 + $0x188] sm:$0xff] %v491
    %670 = vst [vmem:[#allocation3 + $0x190] sm:$0xff] %v602
    %671 = vst [vmem:[#allocation3 + $0x198] sm:$0xff] %v604
    %672 = vst [vmem:[#allocation3 + $0x1a0] sm:$0xff] %v493
    %673 = vst [vmem:[#allocation3 + $0x1a8] sm:$0xff] %v495
    %674 = vst [vmem:[#allocation3 + $0x1b0] sm:$0xff] %v606
    %675 = vst [vmem:[#allocation3 + $0x1b8] sm:$0xff] %v608
    %676 = vst [vmem:[#allocation3 + $0x1c0] sm:$0xff] %v499
    %677 = vst [vmem:[#allocation3 + $0x1c8] sm:$0xff] %v501
    %678 = vst [vmem:[#allocation3 + $0x1d0] sm:$0xff] %v612
    %679 = vst [vmem:[#allocation3 + $0x1d8] sm:$0xff] %v614
    %680 = vst [vmem:[#allocation3 + $0x1e0] sm:$0xff] %v503
    %681 = vst [vmem:[#allocation3 + $0x1e8] sm:$0xff] %v505
    %682 = vst [vmem:[#allocation3 + $0x1f0] sm:$0xff] %v616
    %683 = vst [vmem:[#allocation3 + $0x1f8] sm:$0xff] %v618
    %v684 = vld [vmem:[#allocation3] sm:$0xff]
    %v685 = vld [vmem:[#allocation3 + $0x8] sm:$0xff]
    %v686 = vld [vmem:[#allocation3 + $0x10] sm:$0xff]
    %v687 = vld [vmem:[#allocation3 + $0x18] sm:$0xff]
    %v688 = vld [vmem:[#allocation3 + $0x20] sm:$0xff]
    %v689 = vld [vmem:[#allocation3 + $0x28] sm:$0xff]
    %v690 = vld [vmem:[#allocation3 + $0x30] sm:$0xff]
    %v691 = vld [vmem:[#allocation3 + $0x38] sm:$0xff]
    %v692 = vld [vmem:[#allocation9] sm:$0xff]
    %v693 = vld [vmem:[#allocation9 + $0x8] sm:$0xff]
    %v694 = vld [vmem:[#allocation9 + $0x10] sm:$0xff]
    %v695 = vld [vmem:[#allocation9 + $0x18] sm:$0xff]
    %v696 = vld [vmem:[#allocation9 + $0x20] sm:$0xff]
    %v697 = vld [vmem:[#allocation9 + $0x28] sm:$0xff]
    %v698 = vld [vmem:[#allocation9 + $0x30] sm:$0xff]
    %v699 = vld [vmem:[#allocation9 + $0x38] sm:$0xff]
    %v700 = vld [vmem:[#allocation9 + $0x40] sm:$0xff]
    %v701 = vld [vmem:[#allocation9 + $0x48] sm:$0xff]
    %v702 = vld [vmem:[#allocation9 + $0x50] sm:$0xff]
    %v703 = vld [vmem:[#allocation9 + $0x58] sm:$0xff]
    %v704 = vld [vmem:[#allocation9 + $0x60] sm:$0xff]
    %v705 = vld [vmem:[#allocation9 + $0x68] sm:$0xff]
    %v706 = vld [vmem:[#allocation9 + $0x70] sm:$0xff]
    %v707 = vld [vmem:[#allocation9 + $0x78] sm:$0xff]
    %v708 = vld [vmem:[#allocation9 + $0x80] sm:$0xff]
    %v709 = vld [vmem:[#allocation9 + $0x88] sm:$0xff]
    %v710 = vld [vmem:[#allocation9 + $0x90] sm:$0xff]
    %v711 = vld [vmem:[#allocation9 + $0x98] sm:$0xff]
    %v712 = vld [vmem:[#allocation9 + $0xa0] sm:$0xff]
    %v713 = vld [vmem:[#allocation9 + $0xa8] sm:$0xff]
    %v714 = vld [vmem:[#allocation9 + $0xb0] sm:$0xff]
    %v715 = vld [vmem:[#allocation9 + $0xb8] sm:$0xff]
    %v716 = vld [vmem:[#allocation9 + $0xc0] sm:$0xff]
    %v717 = vld [vmem:[#allocation9 + $0xc8] sm:$0xff]
    %v718 = vld [vmem:[#allocation9 + $0xd0] sm:$0xff]
    %v719 = vld [vmem:[#allocation9 + $0xd8] sm:$0xff]
    %v720 = vld [vmem:[#allocation9 + $0xe0] sm:$0xff]
    %v721 = vld [vmem:[#allocation9 + $0xe8] sm:$0xff]
    %v722 = vld [vmem:[#allocation9 + $0xf0] sm:$0xff]
    %v723 = vld [vmem:[#allocation9 + $0xf8] sm:$0xff]
    %v756 = vunpack.c.l.b16 %v692
    %v757 = vunpack.c.h.b16 %v692
    %v758 = vunpack.c.l.b16 %v693
    %v759 = vunpack.c.h.b16 %v693
    %v760 = vunpack.c.l.b16 %v694
    %v761 = vunpack.c.h.b16 %v694
    %v762 = vunpack.c.l.b16 %v695
    %v763 = vunpack.c.h.b16 %v695
    %v764 = vunpack.c.l.b16 %v696
    %v765 = vunpack.c.h.b16 %v696
    %v766 = vunpack.c.l.b16 %v697
    %v767 = vunpack.c.h.b16 %v697
    %v768 = vunpack.c.l.b16 %v698
    %v769 = vunpack.c.h.b16 %v698
    %v770 = vunpack.c.l.b16 %v699
    %v771 = vunpack.c.h.b16 %v699
    %v772 = vunpack.c.l.b16 %v700
    %v773 = vunpack.c.h.b16 %v700
    %v774 = vunpack.c.l.b16 %v701
    %v775 = vunpack.c.h.b16 %v701
    %v776 = vunpack.c.l.b16 %v702
    %v777 = vunpack.c.h.b16 %v702
    %v778 = vunpack.c.l.b16 %v703
    %v779 = vunpack.c.h.b16 %v703
    %v780 = vunpack.c.l.b16 %v704
    %v781 = vunpack.c.h.b16 %v704
    %v782 = vunpack.c.l.b16 %v705
    %v783 = vunpack.c.h.b16 %v705
    %v784 = vunpack.c.l.b16 %v706
    %v785 = vunpack.c.h.b16 %v706
    %v786 = vunpack.c.l.b16 %v707
    %v787 = vunpack.c.h.b16 %v707
    %v788 = vunpack.c.l.b16 %v708
    %v789 = vunpack.c.h.b16 %v708
    %v790 = vunpack.c.l.b16 %v709
    %v791 = vunpack.c.h.b16 %v709
    %v792 = vunpack.c.l.b16 %v710
    %v793 = vunpack.c.h.b16 %v710
    %v794 = vunpack.c.l.b16 %v711
    %v795 = vunpack.c.h.b16 %v711
    %v796 = vunpack.c.l.b16 %v712
    %v797 = vunpack.c.h.b16 %v712
    %v798 = vunpack.c.l.b16 %v713
    %v799 = vunpack.c.h.b16 %v713
    %v800 = vunpack.c.l.b16 %v714
    %v801 = vunpack.c.h.b16 %v714
    %v802 = vunpack.c.l.b16 %v715
    %v803 = vunpack.c.h.b16 %v715
    %v804 = vunpack.c.l.b16 %v716
    %v805 = vunpack.c.h.b16 %v716
    %v806 = vunpack.c.l.b16 %v717
    %v807 = vunpack.c.h.b16 %v717
    %v808 = vunpack.c.l.b16 %v718
    %v809 = vunpack.c.h.b16 %v718
    %v810 = vunpack.c.l.b16 %v719
    %v811 = vunpack.c.h.b16 %v719
    %v812 = vunpack.c.l.b16 %v720
    %v813 = vunpack.c.h.b16 %v720
    %v814 = vunpack.c.l.b16 %v721
    %v815 = vunpack.c.h.b16 %v721
    %v816 = vunpack.c.l.b16 %v722
    %v817 = vunpack.c.h.b16 %v722
    %v818 = vunpack.c.l.b16 %v723
    %v819 = vunpack.c.h.b16 %v723
    %v820 = vpack.c.b16 %v760, %v756
    %v821 = vpack.c.b16 %v761, %v757
    %v822 = vpack.c.b16 %v762, %v758
    %v823 = vpack.c.b16 %v763, %v759
    %v824 = vpack.c.b16 %v768, %v764
    %v825 = vpack.c.b16 %v769, %v765
    %v826 = vpack.c.b16 %v770, %v766
    %v827 = vpack.c.b16 %v771, %v767
    %v828 = vpack.c.b16 %v776, %v772
    %v829 = vpack.c.b16 %v777, %v773
    %v830 = vpack.c.b16 %v778, %v774
    %v831 = vpack.c.b16 %v779, %v775
    %v832 = vpack.c.b16 %v784, %v780
    %v833 = vpack.c.b16 %v785, %v781
    %v834 = vpack.c.b16 %v786, %v782
    %v835 = vpack.c.b16 %v787, %v783
    %v836 = vpack.c.b16 %v792, %v788
    %v837 = vpack.c.b16 %v793, %v789
    %v838 = vpack.c.b16 %v794, %v790
    %v839 = vpack.c.b16 %v795, %v791
    %v840 = vpack.c.b16 %v800, %v796
    %v841 = vpack.c.b16 %v801, %v797
    %v842 = vpack.c.b16 %v802, %v798
    %v843 = vpack.c.b16 %v803, %v799
    %v844 = vpack.c.b16 %v808, %v804
    %v845 = vpack.c.b16 %v809, %v805
    %v846 = vpack.c.b16 %v810, %v806
    %v847 = vpack.c.b16 %v811, %v807
    %v848 = vpack.c.b16 %v816, %v812
    %v849 = vpack.c.b16 %v817, %v813
    %v850 = vpack.c.b16 %v818, %v814
    %v851 = vpack.c.b16 %v819, %v815
    %884 = vmatprep.subr.bf16.mxu0 %v849
    %885 = vmatpush1.bf16.msra.mxu0 %v848
    %886 = vmatprep.subr.bf16.mxu0 %v845
    %887 = vmatpush1.bf16.msra.mxu0 %v844
    %888 = vmatprep.subr.bf16.mxu0 %v841
    %889 = vmatpush1.bf16.msra.mxu0 %v840
    %890 = vmatprep.subr.bf16.mxu0 %v837
    %891 = vmatpush1.bf16.msra.mxu0 %v836
    %892 = vmatprep.subr.bf16.mxu0 %v833
    %893 = vmatpush1.bf16.msra.mxu0 %v832
    %894 = vmatprep.subr.bf16.mxu0 %v829
    %895 = vmatpush1.bf16.msra.mxu0 %v828
    %896 = vmatprep.subr.bf16.mxu0 %v825
    %897 = vmatpush1.bf16.msra.mxu0 %v824
    %898 = vmatprep.subr.bf16.mxu0 %v821
    %899 = vmatpush1.bf16.msra.mxu0 %v820
    %900 = vmatprep.subr.bf16.mxu0 0
    %901 = vmatpush2.bf16.msra.mxu0 0
    %902 = vmatprep.subr.bf16.mxu0 0
    %903 = vmatpush2.bf16.msra.mxu0 0
    %904 = vmatprep.subr.bf16.mxu0 0
    %905 = vmatpush2.bf16.msra.mxu0 0
    %906 = vmatprep.subr.bf16.mxu0 0
    %907 = vmatpush2.bf16.msra.mxu0 0
    %908 = vmatprep.subr.bf16.mxu0 0
    %909 = vmatpush2.bf16.msra.mxu0 0
    %910 = vmatprep.subr.bf16.mxu0 0
    %911 = vmatpush2.bf16.msra.mxu0 0
    %912 = vmatprep.subr.bf16.mxu0 0
    %913 = vmatpush2.bf16.msra.mxu0 0
    %914 = vmatprep.subr.bf16.mxu0 0
    %915 = vmatpush2.bf16.msra.mxu0 0
    %916 = vmatprep.mubr.bf16.mxu0 0
    %917 = vmatmul.mubr.bf16.gmra.mxu0 0
    %v918 = vpop.f32.mrf.mxu0
    %v919 = vadd.f32 0.0, %v918
    %v920 = vpop.f32.mrf.mxu0
    %v921 = vadd.f32 0.0, %v920
    %v922 = vpop.f32.mrf.mxu0
    %v923 = vadd.f32 0.0, %v922
    %v924 = vpop.f32.mrf.mxu0
    %v925 = vadd.f32 0.0, %v924
    %926 = vdwg.mxu0
    %927 = vmatprep.subr.bf16.mxu0 %v851
    %928 = vmatpush1.bf16.msra.mxu0 %v850
    %929 = vmatprep.subr.bf16.mxu0 %v847
    %930 = vmatpush1.bf16.msra.mxu0 %v846
    %931 = vmatprep.subr.bf16.mxu0 %v843
    %932 = vmatpush1.bf16.msra.mxu0 %v842
    %933 = vmatprep.subr.bf16.mxu0 %v839
    %934 = vmatpush1.bf16.msra.mxu0 %v838
    %935 = vmatprep.subr.bf16.mxu0 %v835
    %936 = vmatpush1.bf16.msra.mxu0 %v834
    %937 = vmatprep.subr.bf16.mxu0 %v831
    %938 = vmatpush1.bf16.msra.mxu0 %v830
    %939 = vmatprep.subr.bf16.mxu0 %v827
    %940 = vmatpush1.bf16.msra.mxu0 %v826
    %941 = vmatprep.subr.bf16.mxu0 %v823
    %942 = vmatpush1.bf16.msra.mxu0 %v822
    %943 = vmatprep.subr.bf16.mxu0 0
    %944 = vmatpush2.bf16.msra.mxu0 0
    %945 = vmatprep.subr.bf16.mxu0 0
    %946 = vmatpush2.bf16.msra.mxu0 0
    %947 = vmatprep.subr.bf16.mxu0 0
    %948 = vmatpush2.bf16.msra.mxu0 0
    %949 = vmatprep.subr.bf16.mxu0 0
    %950 = vmatpush2.bf16.msra.mxu0 0
    %951 = vmatprep.subr.bf16.mxu0 0
    %952 = vmatpush2.bf16.msra.mxu0 0
    %953 = vmatprep.subr.bf16.mxu0 0
    %954 = vmatpush2.bf16.msra.mxu0 0
    %955 = vmatprep.subr.bf16.mxu0 0
    %956 = vmatpush2.bf16.msra.mxu0 0
    %957 = vmatprep.subr.bf16.mxu0 0
    %958 = vmatpush2.bf16.msra.mxu0 0
    %959 = vmatprep.mubr.bf16.mxu0 0
    %960 = vmatmul.mubr.bf16.gmra.mxu0 0
    %v961 = vpop.f32.mrf.mxu0
    %v962 = vadd.f32 0.0, %v961
    %v963 = vpop.f32.mrf.mxu0
    %v964 = vadd.f32 0.0, %v963
    %v965 = vpop.f32.mrf.mxu0
    %v966 = vadd.f32 0.0, %v965
    %v967 = vpop.f32.mrf.mxu0
    %v968 = vadd.f32 0.0, %v967
    %969 = vdwg.mxu0
    %v970 = vadd.f32 %v684, %v919
    %v971 = vadd.f32 %v685, %v921
    %v972 = vadd.f32 %v686, %v962
    %v973 = vadd.f32 %v687, %v964
    %v974 = vadd.f32 %v688, %v923
    %v975 = vadd.f32 %v689, %v925
    %v976 = vadd.f32 %v690, %v966
    %v977 = vadd.f32 %v691, %v968
    %v978 = vmul.f32 %v970, 0.5
    %v979 = vmul.f32 %v974, 0.5
    %v980 = vtanh.pop %v978
    %v981 = vtanh.pop %v979
    %v982 = vmul.f32 %v980, 0.5
    %v983 = vmul.f32 %v981, 0.5
    %v984 = vadd.f32 %v982, 0.5
    %v985 = vadd.f32 %v983, 0.5
    %v986 = vmul.f32 %v971, 0.5
    %v987 = vmul.f32 %v975, 0.5
    %v988 = vtanh.pop %v986
    %v989 = vtanh.pop %v987
    %v990 = vmul.f32 %v988, 0.5
    %v991 = vmul.f32 %v989, 0.5
    %v992 = vadd.f32 %v990, 0.5
    %v993 = vadd.f32 %v991, 0.5
    %v994 = vtanh.pop %v972
    %v995 = vtanh.pop %v976
    %v996 = vmul.f32 %v973, 0.5
    %v997 = vmul.f32 %v977, 0.5
    %v998 = vtanh.pop %v996
    %v999 = vtanh.pop %v997
    %v1000 = vmul.f32 %v998, 0.5
    %v1001 = vmul.f32 %v999, 0.5
    %v1002 = vadd.f32 %v1000, 0.5
    %v1003 = vadd.f32 %v1001, 0.5
    %v1004 = vmul.f32 %v992, 0.0
    %v1005 = vmul.f32 %v993, 0.0
    %v1006 = vmul.f32 %v984, %v994
    %v1007 = vmul.f32 %v985, %v995
    %v1008 = vadd.f32 %v1004, %v1006
    %v1009 = vadd.f32 %v1005, %v1007
    %v1010 = vtanh.pop %v1008
    %v1011 = vtanh.pop %v1009
    %v1012 = vmul.f32 %v1002, %v1010
    %v1013 = vmul.f32 %v1003, %v1011
    %v1014 = vpack.c.bf16 %v1013, %v1012
    %v1016 = vunpack.c.l.b16 %v1014
    %v1017 = vunpack.c.h.b16 %v1014
    %v1018 = vpack.c.b16 %v1016, %v1016
    %v1019 = vpack.c.b16 %v1017, %v1017
    %1022 = vst [vmem:[#allocation2] sm:$0xf] %v1018
    %1023 = vst [vmem:[#allocation2 + $0x4] sm:$0xf] %v1019
    %s1024 = scalar_lea.vmem [#allocation3], 64
    %v1025 = vld [vmem:[%s1024] sm:$0xff]
    %v1026 = vld [vmem:[%s1024 + $0x8] sm:$0xff]
    %v1027 = vld [vmem:[%s1024 + $0x10] sm:$0xff]
    %v1028 = vld [vmem:[%s1024 + $0x18] sm:$0xff]
    %v1029 = vld [vmem:[%s1024 + $0x20] sm:$0xff]
    %v1030 = vld [vmem:[%s1024 + $0x28] sm:$0xff]
    %v1031 = vld [vmem:[%s1024 + $0x30] sm:$0xff]
    %v1032 = vld [vmem:[%s1024 + $0x38] sm:$0xff]
    %v1033 = vld [vmem:[#allocation9] sm:$0xff]
    %v1034 = vld [vmem:[#allocation9 + $0x8] sm:$0xff]
    %v1035 = vld [vmem:[#allocation9 + $0x10] sm:$0xff]
    %v1036 = vld [vmem:[#allocation9 + $0x18] sm:$0xff]
    %v1037 = vld [vmem:[#allocation9 + $0x20] sm:$0xff]
    %v1038 = vld [vmem:[#allocation9 + $0x28] sm:$0xff]
    %v1039 = vld [vmem:[#allocation9 + $0x30] sm:$0xff]
    %v1040 = vld [vmem:[#allocation9 + $0x38] sm:$0xff]
    %v1041 = vld [vmem:[#allocation9 + $0x40] sm:$0xff]
    %v1042 = vld [vmem:[#allocation9 + $0x48] sm:$0xff]
    %v1043 = vld [vmem:[#allocation9 + $0x50] sm:$0xff]
    %v1044 = vld [vmem:[#allocation9 + $0x58] sm:$0xff]
    %v1045 = vld [vmem:[#allocation9 + $0x60] sm:$0xff]
    %v1046 = vld [vmem:[#allocation9 + $0x68] sm:$0xff]
    %v1047 = vld [vmem:[#allocation9 + $0x70] sm:$0xff]
    %v1048 = vld [vmem:[#allocation9 + $0x78] sm:$0xff]
    %v1049 = vld [vmem:[#allocation9 + $0x80] sm:$0xff]
    %v1050 = vld [vmem:[#allocation9 + $0x88] sm:$0xff]
    %v1051 = vld [vmem:[#allocation9 + $0x90] sm:$0xff]
    %v1052 = vld [vmem:[#allocation9 + $0x98] sm:$0xff]
    %v1053 = vld [vmem:[#allocation9 + $0xa0] sm:$0xff]
    %v1054 = vld [vmem:[#allocation9 + $0xa8] sm:$0xff]
    %v1055 = vld [vmem:[#allocation9 + $0xb0] sm:$0xff]
    %v1056 = vld [vmem:[#allocation9 + $0xb8] sm:$0xff]
    %v1057 = vld [vmem:[#allocation9 + $0xc0] sm:$0xff]
    %v1058 = vld [vmem:[#allocation9 + $0xc8] sm:$0xff]
    %v1059 = vld [vmem:[#allocation9 + $0xd0] sm:$0xff]
    %v1060 = vld [vmem:[#allocation9 + $0xd8] sm:$0xff]
    %v1061 = vld [vmem:[#allocation9 + $0xe0] sm:$0xff]
    %v1062 = vld [vmem:[#allocation9 + $0xe8] sm:$0xff]
    %v1063 = vld [vmem:[#allocation9 + $0xf0] sm:$0xff]
    %v1064 = vld [vmem:[#allocation9 + $0xf8] sm:$0xff]
    %v1097 = vunpack.c.l.b16 %v1033
    %v1098 = vunpack.c.h.b16 %v1033
    %v1099 = vunpack.c.l.b16 %v1034
    %v1100 = vunpack.c.h.b16 %v1034
    %v1101 = vunpack.c.l.b16 %v1035
    %v1102 = vunpack.c.h.b16 %v1035
    %v1103 = vunpack.c.l.b16 %v1036
    %v1104 = vunpack.c.h.b16 %v1036
    %v1105 = vunpack.c.l.b16 %v1037
    %v1106 = vunpack.c.h.b16 %v1037
    %v1107 = vunpack.c.l.b16 %v1038
    %v1108 = vunpack.c.h.b16 %v1038
    %v1109 = vunpack.c.l.b16 %v1039
    %v1110 = vunpack.c.h.b16 %v1039
    %v1111 = vunpack.c.l.b16 %v1040
    %v1112 = vunpack.c.h.b16 %v1040
    %v1113 = vunpack.c.l.b16 %v1041
    %v1114 = vunpack.c.h.b16 %v1041
    %v1115 = vunpack.c.l.b16 %v1042
    %v1116 = vunpack.c.h.b16 %v1042
    %v1117 = vunpack.c.l.b16 %v1043
    %v1118 = vunpack.c.h.b16 %v1043
    %v1119 = vunpack.c.l.b16 %v1044
    %v1120 = vunpack.c.h.b16 %v1044
    %v1121 = vunpack.c.l.b16 %v1045
    %v1122 = vunpack.c.h.b16 %v1045
    %v1123 = vunpack.c.l.b16 %v1046
    %v1124 = vunpack.c.h.b16 %v1046
    %v1125 = vunpack.c.l.b16 %v1047
    %v1126 = vunpack.c.h.b16 %v1047
    %v1127 = vunpack.c.l.b16 %v1048
    %v1128 = vunpack.c.h.b16 %v1048
    %v1129 = vunpack.c.l.b16 %v1049
    %v1130 = vunpack.c.h.b16 %v1049
    %v1131 = vunpack.c.l.b16 %v1050
    %v1132 = vunpack.c.h.b16 %v1050
    %v1133 = vunpack.c.l.b16 %v1051
    %v1134 = vunpack.c.h.b16 %v1051
    %v1135 = vunpack.c.l.b16 %v1052
    %v1136 = vunpack.c.h.b16 %v1052
    %v1137 = vunpack.c.l.b16 %v1053
    %v1138 = vunpack.c.h.b16 %v1053
    %v1139 = vunpack.c.l.b16 %v1054
    %v1140 = vunpack.c.h.b16 %v1054
    %v1141 = vunpack.c.l.b16 %v1055
    %v1142 = vunpack.c.h.b16 %v1055
    %v1143 = vunpack.c.l.b16 %v1056
    %v1144 = vunpack.c.h.b16 %v1056
    %v1145 = vunpack.c.l.b16 %v1057
    %v1146 = vunpack.c.h.b16 %v1057
    %v1147 = vunpack.c.l.b16 %v1058
    %v1148 = vunpack.c.h.b16 %v1058
    %v1149 = vunpack.c.l.b16 %v1059
    %v1150 = vunpack.c.h.b16 %v1059
    %v1151 = vunpack.c.l.b16 %v1060
    %v1152 = vunpack.c.h.b16 %v1060
    %v1153 = vunpack.c.l.b16 %v1061
    %v1154 = vunpack.c.h.b16 %v1061
    %v1155 = vunpack.c.l.b16 %v1062
    %v1156 = vunpack.c.h.b16 %v1062
    %v1157 = vunpack.c.l.b16 %v1063
    %v1158 = vunpack.c.h.b16 %v1063
    %v1159 = vunpack.c.l.b16 %v1064
    %v1160 = vunpack.c.h.b16 %v1064
    %v1161 = vpack.c.b16 %v1101, %v1097
    %v1162 = vpack.c.b16 %v1102, %v1098
    %v1163 = vpack.c.b16 %v1103, %v1099
    %v1164 = vpack.c.b16 %v1104, %v1100
    %v1165 = vpack.c.b16 %v1109, %v1105
    %v1166 = vpack.c.b16 %v1110, %v1106
    %v1167 = vpack.c.b16 %v1111, %v1107
    %v1168 = vpack.c.b16 %v1112, %v1108
    %v1169 = vpack.c.b16 %v1117, %v1113
    %v1170 = vpack.c.b16 %v1118, %v1114
    %v1171 = vpack.c.b16 %v1119, %v1115
    %v1172 = vpack.c.b16 %v1120, %v1116
    %v1173 = vpack.c.b16 %v1125, %v1121
    %v1174 = vpack.c.b16 %v1126, %v1122
    %v1175 = vpack.c.b16 %v1127, %v1123
    %v1176 = vpack.c.b16 %v1128, %v1124
    %v1177 = vpack.c.b16 %v1133, %v1129
    %v1178 = vpack.c.b16 %v1134, %v1130
    %v1179 = vpack.c.b16 %v1135, %v1131
    %v1180 = vpack.c.b16 %v1136, %v1132
    %v1181 = vpack.c.b16 %v1141, %v1137
    %v1182 = vpack.c.b16 %v1142, %v1138
    %v1183 = vpack.c.b16 %v1143, %v1139
    %v1184 = vpack.c.b16 %v1144, %v1140
    %v1185 = vpack.c.b16 %v1149, %v1145
    %v1186 = vpack.c.b16 %v1150, %v1146
    %v1187 = vpack.c.b16 %v1151, %v1147
    %v1188 = vpack.c.b16 %v1152, %v1148
    %v1189 = vpack.c.b16 %v1157, %v1153
    %v1190 = vpack.c.b16 %v1158, %v1154
    %v1191 = vpack.c.b16 %v1159, %v1155
    %v1192 = vpack.c.b16 %v1160, %v1156
    %1225 = vmatprep.subr.bf16.mxu0 %v1190
    %1226 = vmatpush1.bf16.msra.mxu0 %v1189
    %1227 = vmatprep.subr.bf16.mxu0 %v1186
    %1228 = vmatpush1.bf16.msra.mxu0 %v1185
    %1229 = vmatprep.subr.bf16.mxu0 %v1182
    %1230 = vmatpush1.bf16.msra.mxu0 %v1181
    %1231 = vmatprep.subr.bf16.mxu0 %v1178
    %1232 = vmatpush1.bf16.msra.mxu0 %v1177
    %1233 = vmatprep.subr.bf16.mxu0 %v1174
    %1234 = vmatpush1.bf16.msra.mxu0 %v1173
    %1235 = vmatprep.subr.bf16.mxu0 %v1170
    %1236 = vmatpush1.bf16.msra.mxu0 %v1169
    %1237 = vmatprep.subr.bf16.mxu0 %v1166
    %1238 = vmatpush1.bf16.msra.mxu0 %v1165
    %1239 = vmatprep.subr.bf16.mxu0 %v1162
    %1240 = vmatpush1.bf16.msra.mxu0 %v1161
    %1241 = vmatprep.subr.bf16.mxu0 0
    %1242 = vmatpush2.bf16.msra.mxu0 0
    %1243 = vmatprep.subr.bf16.mxu0 0
    %1244 = vmatpush2.bf16.msra.mxu0 0
    %1245 = vmatprep.subr.bf16.mxu0 0
    %1246 = vmatpush2.bf16.msra.mxu0 0
    %1247 = vmatprep.subr.bf16.mxu0 0
    %1248 = vmatpush2.bf16.msra.mxu0 0
    %1249 = vmatprep.subr.bf16.mxu0 0
    %1250 = vmatpush2.bf16.msra.mxu0 0
    %1251 = vmatprep.subr.bf16.mxu0 0
    %1252 = vmatpush2.bf16.msra.mxu0 0
    %1253 = vmatprep.subr.bf16.mxu0 0
    %1254 = vmatpush2.bf16.msra.mxu0 0
    %1255 = vmatprep.subr.bf16.mxu0 0
    %1256 = vmatpush2.bf16.msra.mxu0 0
    %1257 = vmatprep.mubr.bf16.mxu0 0
    %1258 = vmatmul.mubr.bf16.gmra.mxu0 %v1014
    %v1259 = vpop.f32.mrf.mxu0
    %v1260 = vadd.f32 0.0, %v1259
    %v1261 = vpop.f32.mrf.mxu0
    %v1262 = vadd.f32 0.0, %v1261
    %v1263 = vpop.f32.mrf.mxu0
    %v1264 = vadd.f32 0.0, %v1263
    %v1265 = vpop.f32.mrf.mxu0
    %v1266 = vadd.f32 0.0, %v1265
    %1267 = vdwg.mxu0
    %1268 = vmatprep.subr.bf16.mxu0 %v1192
    %1269 = vmatpush1.bf16.msra.mxu0 %v1191
    %1270 = vmatprep.subr.bf16.mxu0 %v1188
    %1271 = vmatpush1.bf16.msra.mxu0 %v1187
    %1272 = vmatprep.subr.bf16.mxu0 %v1184
    %1273 = vmatpush1.bf16.msra.mxu0 %v1183
    %1274 = vmatprep.subr.bf16.mxu0 %v1180
    %1275 = vmatpush1.bf16.msra.mxu0 %v1179
    %1276 = vmatprep.subr.bf16.mxu0 %v1176
    %1277 = vmatpush1.bf16.msra.mxu0 %v1175
    %1278 = vmatprep.subr.bf16.mxu0 %v1172
    %1279 = vmatpush1.bf16.msra.mxu0 %v1171
    %1280 = vmatprep.subr.bf16.mxu0 %v1168
    %1281 = vmatpush1.bf16.msra.mxu0 %v1167
    %1282 = vmatprep.subr.bf16.mxu0 %v1164
    %1283 = vmatpush1.bf16.msra.mxu0 %v1163
    %1284 = vmatprep.subr.bf16.mxu0 0
    %1285 = vmatpush2.bf16.msra.mxu0 0
    %1286 = vmatprep.subr.bf16.mxu0 0
    %1287 = vmatpush2.bf16.msra.mxu0 0
    %1288 = vmatprep.subr.bf16.mxu0 0
    %1289 = vmatpush2.bf16.msra.mxu0 0
    %1290 = vmatprep.subr.bf16.mxu0 0
    %1291 = vmatpush2.bf16.msra.mxu0 0
    %1292 = vmatprep.subr.bf16.mxu0 0
    %1293 = vmatpush2.bf16.msra.mxu0 0
    %1294 = vmatprep.subr.bf16.mxu0 0
    %1295 = vmatpush2.bf16.msra.mxu0 0
    %1296 = vmatprep.subr.bf16.mxu0 0
    %1297 = vmatpush2.bf16.msra.mxu0 0
    %1298 = vmatprep.subr.bf16.mxu0 0
    %1299 = vmatpush2.bf16.msra.mxu0 0
    %1300 = vmatprep.mubr.bf16.mxu0 0
    %1301 = vmatmul.mubr.bf16.gmra.mxu0 %v1014
    %v1302 = vpop.f32.mrf.mxu0
    %v1303 = vadd.f32 0.0, %v1302
    %v1304 = vpop.f32.mrf.mxu0
    %v1305 = vadd.f32 0.0, %v1304
    %v1306 = vpop.f32.mrf.mxu0
    %v1307 = vadd.f32 0.0, %v1306
    %v1308 = vpop.f32.mrf.mxu0
    %v1309 = vadd.f32 0.0, %v1308
    %1310 = vdwg.mxu0
    %v1311 = vadd.f32 %v1025, %v1260
    %v1312 = vadd.f32 %v1026, %v1262
    %v1313 = vadd.f32 %v1027, %v1303
    %v1314 = vadd.f32 %v1028, %v1305
    %v1315 = vadd.f32 %v1029, %v1264
    %v1316 = vadd.f32 %v1030, %v1266
    %v1317 = vadd.f32 %v1031, %v1307
    %v1318 = vadd.f32 %v1032, %v1309
    %v1319 = vmul.f32 %v1311, 0.5
    %v1320 = vmul.f32 %v1315, 0.5
    %v1321 = vtanh.pop %v1319
    %v1322 = vtanh.pop %v1320
    %v1323 = vmul.f32 %v1321, 0.5
    %v1324 = vmul.f32 %v1322, 0.5
    %v1325 = vadd.f32 %v1323, 0.5
    %v1326 = vadd.f32 %v1324, 0.5
    %v1327 = vmul.f32 %v1312, 0.5
    %v1328 = vmul.f32 %v1316, 0.5
    %v1329 = vtanh.pop %v1327
    %v1330 = vtanh.pop %v1328
    %v1331 = vmul.f32 %v1329, 0.5
    %v1332 = vmul.f32 %v1330, 0.5
    %v1333 = vadd.f32 %v1331, 0.5
    %v1334 = vadd.f32 %v1332, 0.5
    %v1335 = vtanh.pop %v1313
    %v1336 = vtanh.pop %v1317
    %v1337 = vmul.f32 %v1314, 0.5
    %v1338 = vmul.f32 %v1318, 0.5
    %v1339 = vtanh.pop %v1337
    %v1340 = vtanh.pop %v1338
    %v1341 = vmul.f32 %v1339, 0.5
    %v1342 = vmul.f32 %v1340, 0.5
    %v1343 = vadd.f32 %v1341, 0.5
    %v1344 = vadd.f32 %v1342, 0.5
    %v1345 = vmul.f32 %v1333, %v1008
    %v1346 = vmul.f32 %v1334, %v1009
    %v1347 = vmul.f32 %v1325, %v1335
    %v1348 = vmul.f32 %v1326, %v1336
    %v1349 = vadd.f32 %v1345, %v1347
    %v1350 = vadd.f32 %v1346, %v1348
    %v1351 = vtanh.pop %v1349
    %v1352 = vtanh.pop %v1350
    %v1353 = vmul.f32 %v1343, %v1351
    %v1354 = vmul.f32 %v1344, %v1352
    %v1355 = vpack.c.bf16 %v1354, %v1353
    %v1357 = vunpack.c.l.b16 %v1355
    %v1358 = vunpack.c.h.b16 %v1355
    %v1359 = vpack.c.b16 %v1357, %v1357
    %v1360 = vpack.c.b16 %v1358, %v1358
    %s1363 = scalar_lea.vmem [#allocation2], 8
    %1364 = vst [vmem:[%s1363] sm:$0xf] %v1359
    %1365 = vst [vmem:[%s1363 + $0x4] sm:$0xf] %v1360
    %s1366 = scalar_lea.vmem [#allocation3], 128
    %v1367 = vld [vmem:[%s1366] sm:$0xff]
    %v1368 = vld [vmem:[%s1366 + $0x8] sm:$0xff]
    %v1369 = vld [vmem:[%s1366 + $0x10] sm:$0xff]
    %v1370 = vld [vmem:[%s1366 + $0x18] sm:$0xff]
    %v1371 = vld [vmem:[%s1366 + $0x20] sm:$0xff]
    %v1372 = vld [vmem:[%s1366 + $0x28] sm:$0xff]
    %v1373 = vld [vmem:[%s1366 + $0x30] sm:$0xff]
    %v1374 = vld [vmem:[%s1366 + $0x38] sm:$0xff]
    %v1375 = vld [vmem:[#allocation9] sm:$0xff]
    %v1376 = vld [vmem:[#allocation9 + $0x8] sm:$0xff]
    %v1377 = vld [vmem:[#allocation9 + $0x10] sm:$0xff]
    %v1378 = vld [vmem:[#allocation9 + $0x18] sm:$0xff]
    %v1379 = vld [vmem:[#allocation9 + $0x20] sm:$0xff]
    %v1380 = vld [vmem:[#allocation9 + $0x28] sm:$0xff]
    %v1381 = vld [vmem:[#allocation9 + $0x30] sm:$0xff]
    %v1382 = vld [vmem:[#allocation9 + $0x38] sm:$0xff]
    %v1383 = vld [vmem:[#allocation9 + $0x40] sm:$0xff]
    %v1384 = vld [vmem:[#allocation9 + $0x48] sm:$0xff]
    %v1385 = vld [vmem:[#allocation9 + $0x50] sm:$0xff]
    %v1386 = vld [vmem:[#allocation9 + $0x58] sm:$0xff]
    %v1387 = vld [vmem:[#allocation9 + $0x60] sm:$0xff]
    %v1388 = vld [vmem:[#allocation9 + $0x68] sm:$0xff]
    %v1389 = vld [vmem:[#allocation9 + $0x70] sm:$0xff]
    %v1390 = vld [vmem:[#allocation9 + $0x78] sm:$0xff]
    %v1391 = vld [vmem:[#allocation9 + $0x80] sm:$0xff]
    %v1392 = vld [vmem:[#allocation9 + $0x88] sm:$0xff]
    %v1393 = vld [vmem:[#allocation9 + $0x90] sm:$0xff]
    %v1394 = vld [vmem:[#allocation9 + $0x98] sm:$0xff]
    %v1395 = vld [vmem:[#allocation9 + $0xa0] sm:$0xff]
    %v1396 = vld [vmem:[#allocation9 + $0xa8] sm:$0xff]
    %v1397 = vld [vmem:[#allocation9 + $0xb0] sm:$0xff]
    %v1398 = vld [vmem:[#allocation9 + $0xb8] sm:$0xff]
    %v1399 = vld [vmem:[#allocation9 + $0xc0] sm:$0xff]
    %v1400 = vld [vmem:[#allocation9 + $0xc8] sm:$0xff]
    %v1401 = vld [vmem:[#allocation9 + $0xd0] sm:$0xff]
    %v1402 = vld [vmem:[#allocation9 + $0xd8] sm:$0xff]
    %v1403 = vld [vmem:[#allocation9 + $0xe0] sm:$0xff]
    %v1404 = vld [vmem:[#allocation9 + $0xe8] sm:$0xff]
    %v1405 = vld [vmem:[#allocation9 + $0xf0] sm:$0xff]
    %v1406 = vld [vmem:[#allocation9 + $0xf8] sm:$0xff]
    %v1439 = vunpack.c.l.b16 %v1375
    %v1440 = vunpack.c.h.b16 %v1375
    %v1441 = vunpack.c.l.b16 %v1376
    %v1442 = vunpack.c.h.b16 %v1376
    %v1443 = vunpack.c.l.b16 %v1377
    %v1444 = vunpack.c.h.b16 %v1377
    %v1445 = vunpack.c.l.b16 %v1378
    %v1446 = vunpack.c.h.b16 %v1378
    %v1447 = vunpack.c.l.b16 %v1379
    %v1448 = vunpack.c.h.b16 %v1379
    %v1449 = vunpack.c.l.b16 %v1380
    %v1450 = vunpack.c.h.b16 %v1380
    %v1451 = vunpack.c.l.b16 %v1381
    %v1452 = vunpack.c.h.b16 %v1381
    %v1453 = vunpack.c.l.b16 %v1382
    %v1454 = vunpack.c.h.b16 %v1382
    %v1455 = vunpack.c.l.b16 %v1383
    %v1456 = vunpack.c.h.b16 %v1383
    %v1457 = vunpack.c.l.b16 %v1384
    %v1458 = vunpack.c.h.b16 %v1384
    %v1459 = vunpack.c.l.b16 %v1385
    %v1460 = vunpack.c.h.b16 %v1385
    %v1461 = vunpack.c.l.b16 %v1386
    %v1462 = vunpack.c.h.b16 %v1386
    %v1463 = vunpack.c.l.b16 %v1387
    %v1464 = vunpack.c.h.b16 %v1387
    %v1465 = vunpack.c.l.b16 %v1388
    %v1466 = vunpack.c.h.b16 %v1388
    %v1467 = vunpack.c.l.b16 %v1389
    %v1468 = vunpack.c.h.b16 %v1389
    %v1469 = vunpack.c.l.b16 %v1390
    %v1470 = vunpack.c.h.b16 %v1390
    %v1471 = vunpack.c.l.b16 %v1391
    %v1472 = vunpack.c.h.b16 %v1391
    %v1473 = vunpack.c.l.b16 %v1392
    %v1474 = vunpack.c.h.b16 %v1392
    %v1475 = vunpack.c.l.b16 %v1393
    %v1476 = vunpack.c.h.b16 %v1393
    %v1477 = vunpack.c.l.b16 %v1394
    %v1478 = vunpack.c.h.b16 %v1394
    %v1479 = vunpack.c.l.b16 %v1395
    %v1480 = vunpack.c.h.b16 %v1395
    %v1481 = vunpack.c.l.b16 %v1396
    %v1482 = vunpack.c.h.b16 %v1396
    %v1483 = vunpack.c.l.b16 %v1397
    %v1484 = vunpack.c.h.b16 %v1397
    %v1485 = vunpack.c.l.b16 %v1398
    %v1486 = vunpack.c.h.b16 %v1398
    %v1487 = vunpack.c.l.b16 %v1399
    %v1488 = vunpack.c.h.b16 %v1399
    %v1489 = vunpack.c.l.b16 %v1400
    %v1490 = vunpack.c.h.b16 %v1400
    %v1491 = vunpack.c.l.b16 %v1401
    %v1492 = vunpack.c.h.b16 %v1401
    %v1493 = vunpack.c.l.b16 %v1402
    %v1494 = vunpack.c.h.b16 %v1402
    %v1495 = vunpack.c.l.b16 %v1403
    %v1496 = vunpack.c.h.b16 %v1403
    %v1497 = vunpack.c.l.b16 %v1404
    %v1498 = vunpack.c.h.b16 %v1404
    %v1499 = vunpack.c.l.b16 %v1405
    %v1500 = vunpack.c.h.b16 %v1405
    %v1501 = vunpack.c.l.b16 %v1406
    %v1502 = vunpack.c.h.b16 %v1406
    %v1503 = vpack.c.b16 %v1443, %v1439
    %v1504 = vpack.c.b16 %v1444, %v1440
    %v1505 = vpack.c.b16 %v1445, %v1441
    %v1506 = vpack.c.b16 %v1446, %v1442
    %v1507 = vpack.c.b16 %v1451, %v1447
    %v1508 = vpack.c.b16 %v1452, %v1448
    %v1509 = vpack.c.b16 %v1453, %v1449
    %v1510 = vpack.c.b16 %v1454, %v1450
    %v1511 = vpack.c.b16 %v1459, %v1455
    %v1512 = vpack.c.b16 %v1460, %v1456
    %v1513 = vpack.c.b16 %v1461, %v1457
    %v1514 = vpack.c.b16 %v1462, %v1458
    %v1515 = vpack.c.b16 %v1467, %v1463
    %v1516 = vpack.c.b16 %v1468, %v1464
    %v1517 = vpack.c.b16 %v1469, %v1465
    %v1518 = vpack.c.b16 %v1470, %v1466
    %v1519 = vpack.c.b16 %v1475, %v1471
    %v1520 = vpack.c.b16 %v1476, %v1472
    %v1521 = vpack.c.b16 %v1477, %v1473
    %v1522 = vpack.c.b16 %v1478, %v1474
    %v1523 = vpack.c.b16 %v1483, %v1479
    %v1524 = vpack.c.b16 %v1484, %v1480
    %v1525 = vpack.c.b16 %v1485, %v1481
    %v1526 = vpack.c.b16 %v1486, %v1482
    %v1527 = vpack.c.b16 %v1491, %v1487
    %v1528 = vpack.c.b16 %v1492, %v1488
    %v1529 = vpack.c.b16 %v1493, %v1489
    %v1530 = vpack.c.b16 %v1494, %v1490
    %v1531 = vpack.c.b16 %v1499, %v1495
    %v1532 = vpack.c.b16 %v1500, %v1496
    %v1533 = vpack.c.b16 %v1501, %v1497
    %v1534 = vpack.c.b16 %v1502, %v1498
    %1567 = vmatprep.subr.bf16.mxu0 %v1532
    %1568 = vmatpush1.bf16.msra.mxu0 %v1531
    %1569 = vmatprep.subr.bf16.mxu0 %v1528
    %1570 = vmatpush1.bf16.msra.mxu0 %v1527
    %1571 = vmatprep.subr.bf16.mxu0 %v1524
    %1572 = vmatpush1.bf16.msra.mxu0 %v1523
    %1573 = vmatprep.subr.bf16.mxu0 %v1520
    %1574 = vmatpush1.bf16.msra.mxu0 %v1519
    %1575 = vmatprep.subr.bf16.mxu0 %v1516
    %1576 = vmatpush1.bf16.msra.mxu0 %v1515
    %1577 = vmatprep.subr.bf16.mxu0 %v1512
    %1578 = vmatpush1.bf16.msra.mxu0 %v1511
    %1579 = vmatprep.subr.bf16.mxu0 %v1508
    %1580 = vmatpush1.bf16.msra.mxu0 %v1507
    %1581 = vmatprep.subr.bf16.mxu0 %v1504
    %1582 = vmatpush1.bf16.msra.mxu0 %v1503
    %1583 = vmatprep.subr.bf16.mxu0 0
    %1584 = vmatpush2.bf16.msra.mxu0 0
    %1585 = vmatprep.subr.bf16.mxu0 0
    %1586 = vmatpush2.bf16.msra.mxu0 0
    %1587 = vmatprep.subr.bf16.mxu0 0
    %1588 = vmatpush2.bf16.msra.mxu0 0
    %1589 = vmatprep.subr.bf16.mxu0 0
    %1590 = vmatpush2.bf16.msra.mxu0 0
    %1591 = vmatprep.subr.bf16.mxu0 0
    %1592 = vmatpush2.bf16.msra.mxu0 0
    %1593 = vmatprep.subr.bf16.mxu0 0
    %1594 = vmatpush2.bf16.msra.mxu0 0
    %1595 = vmatprep.subr.bf16.mxu0 0
    %1596 = vmatpush2.bf16.msra.mxu0 0
    %1597 = vmatprep.subr.bf16.mxu0 0
    %1598 = vmatpush2.bf16.msra.mxu0 0
    %1599 = vmatprep.mubr.bf16.mxu0 0
    %1600 = vmatmul.mubr.bf16.gmra.mxu0 %v1355
    %v1601 = vpop.f32.mrf.mxu0
    %v1602 = vadd.f32 0.0, %v1601
    %v1603 = vpop.f32.mrf.mxu0
    %v1604 = vadd.f32 0.0, %v1603
    %v1605 = vpop.f32.mrf.mxu0
    %v1606 = vadd.f32 0.0, %v1605
    %v1607 = vpop.f32.mrf.mxu0
    %v1608 = vadd.f32 0.0, %v1607
    %1609 = vdwg.mxu0
    %1610 = vmatprep.subr.bf16.mxu0 %v1534
    %1611 = vmatpush1.bf16.msra.mxu0 %v1533
    %1612 = vmatprep.subr.bf16.mxu0 %v1530
    %1613 = vmatpush1.bf16.msra.mxu0 %v1529
    %1614 = vmatprep.subr.bf16.mxu0 %v1526
    %1615 = vmatpush1.bf16.msra.mxu0 %v1525
    %1616 = vmatprep.subr.bf16.mxu0 %v1522
    %1617 = vmatpush1.bf16.msra.mxu0 %v1521
    %1618 = vmatprep.subr.bf16.mxu0 %v1518
    %1619 = vmatpush1.bf16.msra.mxu0 %v1517
    %1620 = vmatprep.subr.bf16.mxu0 %v1514
    %1621 = vmatpush1.bf16.msra.mxu0 %v1513
    %1622 = vmatprep.subr.bf16.mxu0 %v1510
    %1623 = vmatpush1.bf16.msra.mxu0 %v1509
    %1624 = vmatprep.subr.bf16.mxu0 %v1506
    %1625 = vmatpush1.bf16.msra.mxu0 %v1505
    %1626 = vmatprep.subr.bf16.mxu0 0
    %1627 = vmatpush2.bf16.msra.mxu0 0
    %1628 = vmatprep.subr.bf16.mxu0 0
    %1629 = vmatpush2.bf16.msra.mxu0 0
    %1630 = vmatprep.subr.bf16.mxu0 0
    %1631 = vmatpush2.bf16.msra.mxu0 0
    %1632 = vmatprep.subr.bf16.mxu0 0
    %1633 = vmatpush2.bf16.msra.mxu0 0
    %1634 = vmatprep.subr.bf16.mxu0 0
    %1635 = vmatpush2.bf16.msra.mxu0 0
    %1636 = vmatprep.subr.bf16.mxu0 0
    %1637 = vmatpush2.bf16.msra.mxu0 0
    %1638 = vmatprep.subr.bf16.mxu0 0
    %1639 = vmatpush2.bf16.msra.mxu0 0
    %1640 = vmatprep.subr.bf16.mxu0 0
    %1641 = vmatpush2.bf16.msra.mxu0 0
    %1642 = vmatprep.mubr.bf16.mxu0 0
    %1643 = vmatmul.mubr.bf16.gmra.mxu0 %v1355
    %v1644 = vpop.f32.mrf.mxu0
    %v1645 = vadd.f32 0.0, %v1644
    %v1646 = vpop.f32.mrf.mxu0
    %v1647 = vadd.f32 0.0, %v1646
    %v1648 = vpop.f32.mrf.mxu0
    %v1649 = vadd.f32 0.0, %v1648
    %v1650 = vpop.f32.mrf.mxu0
    %v1651 = vadd.f32 0.0, %v1650
    %1652 = vdwg.mxu0
    %v1653 = vadd.f32 %v1367, %v1602
    %v1654 = vadd.f32 %v1368, %v1604
    %v1655 = vadd.f32 %v1369, %v1645
    %v1656 = vadd.f32 %v1370, %v1647
    %v1657 = vadd.f32 %v1371, %v1606
    %v1658 = vadd.f32 %v1372, %v1608
    %v1659 = vadd.f32 %v1373, %v1649
    %v1660 = vadd.f32 %v1374, %v1651
    %v1661 = vmul.f32 %v1653, 0.5
    %v1662 = vmul.f32 %v1657, 0.5
    %v1663 = vtanh.pop %v1661
    %v1664 = vtanh.pop %v1662
    %v1665 = vmul.f32 %v1663, 0.5
    %v1666 = vmul.f32 %v1664, 0.5
    %v1667 = vadd.f32 %v1665, 0.5
    %v1668 = vadd.f32 %v1666, 0.5
    %v1669 = vmul.f32 %v1654, 0.5
    %v1670 = vmul.f32 %v1658, 0.5
    %v1671 = vtanh.pop %v1669
    %v1672 = vtanh.pop %v1670
    %v1673 = vmul.f32 %v1671, 0.5
    %v1674 = vmul.f32 %v1672, 0.5
    %v1675 = vadd.f32 %v1673, 0.5
    %v1676 = vadd.f32 %v1674, 0.5
    %v1677 = vtanh.pop %v1655
    %v1678 = vtanh.pop %v1659
    %v1679 = vmul.f32 %v1656, 0.5
    %v1680 = vmul.f32 %v1660, 0.5
    %v1681 = vtanh.pop %v1679
    %v1682 = vtanh.pop %v1680
    %v1683 = vmul.f32 %v1681, 0.5
    %v1684 = vmul.f32 %v1682, 0.5
    %v1685 = vadd.f32 %v1683, 0.5
    %v1686 = vadd.f32 %v1684, 0.5
    %v1687 = vmul.f32 %v1675, %v1349
    %v1688 = vmul.f32 %v1676, %v1350
    %v1689 = vmul.f32 %v1667, %v1677
    %v1690 = vmul.f32 %v1668, %v1678
    %v1691 = vadd.f32 %v1687, %v1689
    %v1692 = vadd.f32 %v1688, %v1690
    %v1693 = vtanh.pop %v1691
    %v1694 = vtanh.pop %v1692
    %v1695 = vmul.f32 %v1685, %v1693
    %v1696 = vmul.f32 %v1686, %v1694
    %v1697 = vpack.c.bf16 %v1696, %v1695
    %v1699 = vunpack.c.l.b16 %v1697
    %v1700 = vunpack.c.h.b16 %v1697
    %v1701 = vpack.c.b16 %v1699, %v1699
    %v1702 = vpack.c.b16 %v1700, %v1700
    %s1705 = scalar_lea.vmem [#allocation2], 16
    %1706 = vst [vmem:[%s1705] sm:$0xf] %v1701
    %1707 = vst [vmem:[%s1705 + $0x4] sm:$0xf] %v1702
    %s1708 = scalar_lea.vmem [#allocation3], 192
    %v1709 = vld [vmem:[%s1708] sm:$0xff]
    %v1710 = vld [vmem:[%s1708 + $0x8] sm:$0xff]
    %v1711 = vld [vmem:[%s1708 + $0x10] sm:$0xff]
    %v1712 = vld [vmem:[%s1708 + $0x18] sm:$0xff]
    %v1713 = vld [vmem:[%s1708 + $0x20] sm:$0xff]
    %v1714 = vld [vmem:[%s1708 + $0x28] sm:$0xff]
    %v1715 = vld [vmem:[%s1708 + $0x30] sm:$0xff]
    %v1716 = vld [vmem:[%s1708 + $0x38] sm:$0xff]
    %v1717 = vld [vmem:[#allocation9] sm:$0xff]
    %v1718 = vld [vmem:[#allocation9 + $0x8] sm:$0xff]
    %v1719 = vld [vmem:[#allocation9 + $0x10] sm:$0xff]
    %v1720 = vld [vmem:[#allocation9 + $0x18] sm:$0xff]
    %v1721 = vld [vmem:[#allocation9 + $0x20] sm:$0xff]
    %v1722 = vld [vmem:[#allocation9 + $0x28] sm:$0xff]
    %v1723 = vld [vmem:[#allocation9 + $0x30] sm:$0xff]
    %v1724 = vld [vmem:[#allocation9 + $0x38] sm:$0xff]
    %v1725 = vld [vmem:[#allocation9 + $0x40] sm:$0xff]
    %v1726 = vld [vmem:[#allocation9 + $0x48] sm:$0xff]
    %v1727 = vld [vmem:[#allocation9 + $0x50] sm:$0xff]
    %v1728 = vld [vmem:[#allocation9 + $0x58] sm:$0xff]
    %v1729 = vld [vmem:[#allocation9 + $0x60] sm:$0xff]
    %v1730 = vld [vmem:[#allocation9 + $0x68] sm:$0xff]
    %v1731 = vld [vmem:[#allocation9 + $0x70] sm:$0xff]
    %v1732 = vld [vmem:[#allocation9 + $0x78] sm:$0xff]
    %v1733 = vld [vmem:[#allocation9 + $0x80] sm:$0xff]
    %v1734 = vld [vmem:[#allocation9 + $0x88] sm:$0xff]
    %v1735 = vld [vmem:[#allocation9 + $0x90] sm:$0xff]
    %v1736 = vld [vmem:[#allocation9 + $0x98] sm:$0xff]
    %v1737 = vld [vmem:[#allocation9 + $0xa0] sm:$0xff]
    %v1738 = vld [vmem:[#allocation9 + $0xa8] sm:$0xff]
    %v1739 = vld [vmem:[#allocation9 + $0xb0] sm:$0xff]
    %v1740 = vld [vmem:[#allocation9 + $0xb8] sm:$0xff]
    %v1741 = vld [vmem:[#allocation9 + $0xc0] sm:$0xff]
    %v1742 = vld [vmem:[#allocation9 + $0xc8] sm:$0xff]
    %v1743 = vld [vmem:[#allocation9 + $0xd0] sm:$0xff]
    %v1744 = vld [vmem:[#allocation9 + $0xd8] sm:$0xff]
    %v1745 = vld [vmem:[#allocation9 + $0xe0] sm:$0xff]
    %v1746 = vld [vmem:[#allocation9 + $0xe8] sm:$0xff]
    %v1747 = vld [vmem:[#allocation9 + $0xf0] sm:$0xff]
    %v1748 = vld [vmem:[#allocation9 + $0xf8] sm:$0xff]
    %v1781 = vunpack.c.l.b16 %v1717
    %v1782 = vunpack.c.h.b16 %v1717
    %v1783 = vunpack.c.l.b16 %v1718
    %v1784 = vunpack.c.h.b16 %v1718
    %v1785 = vunpack.c.l.b16 %v1719
    %v1786 = vunpack.c.h.b16 %v1719
    %v1787 = vunpack.c.l.b16 %v1720
    %v1788 = vunpack.c.h.b16 %v1720
    %v1789 = vunpack.c.l.b16 %v1721
    %v1790 = vunpack.c.h.b16 %v1721
    %v1791 = vunpack.c.l.b16 %v1722
    %v1792 = vunpack.c.h.b16 %v1722
    %v1793 = vunpack.c.l.b16 %v1723
    %v1794 = vunpack.c.h.b16 %v1723
    %v1795 = vunpack.c.l.b16 %v1724
    %v1796 = vunpack.c.h.b16 %v1724
    %v1797 = vunpack.c.l.b16 %v1725
    %v1798 = vunpack.c.h.b16 %v1725
    %v1799 = vunpack.c.l.b16 %v1726
    %v1800 = vunpack.c.h.b16 %v1726
    %v1801 = vunpack.c.l.b16 %v1727
    %v1802 = vunpack.c.h.b16 %v1727
    %v1803 = vunpack.c.l.b16 %v1728
    %v1804 = vunpack.c.h.b16 %v1728
    %v1805 = vunpack.c.l.b16 %v1729
    %v1806 = vunpack.c.h.b16 %v1729
    %v1807 = vunpack.c.l.b16 %v1730
    %v1808 = vunpack.c.h.b16 %v1730
    %v1809 = vunpack.c.l.b16 %v1731
    %v1810 = vunpack.c.h.b16 %v1731
    %v1811 = vunpack.c.l.b16 %v1732
    %v1812 = vunpack.c.h.b16 %v1732
    %v1813 = vunpack.c.l.b16 %v1733
    %v1814 = vunpack.c.h.b16 %v1733
    %v1815 = vunpack.c.l.b16 %v1734
    %v1816 = vunpack.c.h.b16 %v1734
    %v1817 = vunpack.c.l.b16 %v1735
    %v1818 = vunpack.c.h.b16 %v1735
    %v1819 = vunpack.c.l.b16 %v1736
    %v1820 = vunpack.c.h.b16 %v1736
    %v1821 = vunpack.c.l.b16 %v1737
    %v1822 = vunpack.c.h.b16 %v1737
    %v1823 = vunpack.c.l.b16 %v1738
    %v1824 = vunpack.c.h.b16 %v1738
    %v1825 = vunpack.c.l.b16 %v1739
    %v1826 = vunpack.c.h.b16 %v1739
    %v1827 = vunpack.c.l.b16 %v1740
    %v1828 = vunpack.c.h.b16 %v1740
    %v1829 = vunpack.c.l.b16 %v1741
    %v1830 = vunpack.c.h.b16 %v1741
    %v1831 = vunpack.c.l.b16 %v1742
    %v1832 = vunpack.c.h.b16 %v1742
    %v1833 = vunpack.c.l.b16 %v1743
    %v1834 = vunpack.c.h.b16 %v1743
    %v1835 = vunpack.c.l.b16 %v1744
    %v1836 = vunpack.c.h.b16 %v1744
    %v1837 = vunpack.c.l.b16 %v1745
    %v1838 = vunpack.c.h.b16 %v1745
    %v1839 = vunpack.c.l.b16 %v1746
    %v1840 = vunpack.c.h.b16 %v1746
    %v1841 = vunpack.c.l.b16 %v1747
    %v1842 = vunpack.c.h.b16 %v1747
    %v1843 = vunpack.c.l.b16 %v1748
    %v1844 = vunpack.c.h.b16 %v1748
    %v1845 = vpack.c.b16 %v1785, %v1781
    %v1846 = vpack.c.b16 %v1786, %v1782
    %v1847 = vpack.c.b16 %v1787, %v1783
    %v1848 = vpack.c.b16 %v1788, %v1784
    %v1849 = vpack.c.b16 %v1793, %v1789
    %v1850 = vpack.c.b16 %v1794, %v1790
    %v1851 = vpack.c.b16 %v1795, %v1791
    %v1852 = vpack.c.b16 %v1796, %v1792
    %v1853 = vpack.c.b16 %v1801, %v1797
    %v1854 = vpack.c.b16 %v1802, %v1798
    %v1855 = vpack.c.b16 %v1803, %v1799
    %v1856 = vpack.c.b16 %v1804, %v1800
    %v1857 = vpack.c.b16 %v1809, %v1805
    %v1858 = vpack.c.b16 %v1810, %v1806
    %v1859 = vpack.c.b16 %v1811, %v1807
    %v1860 = vpack.c.b16 %v1812, %v1808
    %v1861 = vpack.c.b16 %v1817, %v1813
    %v1862 = vpack.c.b16 %v1818, %v1814
    %v1863 = vpack.c.b16 %v1819, %v1815
    %v1864 = vpack.c.b16 %v1820, %v1816
    %v1865 = vpack.c.b16 %v1825, %v1821
    %v1866 = vpack.c.b16 %v1826, %v1822
    %v1867 = vpack.c.b16 %v1827, %v1823
    %v1868 = vpack.c.b16 %v1828, %v1824
    %v1869 = vpack.c.b16 %v1833, %v1829
    %v1870 = vpack.c.b16 %v1834, %v1830
    %v1871 = vpack.c.b16 %v1835, %v1831
    %v1872 = vpack.c.b16 %v1836, %v1832
    %v1873 = vpack.c.b16 %v1841, %v1837
    %v1874 = vpack.c.b16 %v1842, %v1838
    %v1875 = vpack.c.b16 %v1843, %v1839
    %v1876 = vpack.c.b16 %v1844, %v1840
    %1909 = vmatprep.subr.bf16.mxu0 %v1874
    %1910 = vmatpush1.bf16.msra.mxu0 %v1873
    %1911 = vmatprep.subr.bf16.mxu0 %v1870
    %1912 = vmatpush1.bf16.msra.mxu0 %v1869
    %1913 = vmatprep.subr.bf16.mxu0 %v1866
    %1914 = vmatpush1.bf16.msra.mxu0 %v1865
    %1915 = vmatprep.subr.bf16.mxu0 %v1862
    %1916 = vmatpush1.bf16.msra.mxu0 %v1861
    %1917 = vmatprep.subr.bf16.mxu0 %v1858
    %1918 = vmatpush1.bf16.msra.mxu0 %v1857
    %1919 = vmatprep.subr.bf16.mxu0 %v1854
    %1920 = vmatpush1.bf16.msra.mxu0 %v1853
    %1921 = vmatprep.subr.bf16.mxu0 %v1850
    %1922 = vmatpush1.bf16.msra.mxu0 %v1849
    %1923 = vmatprep.subr.bf16.mxu0 %v1846
    %1924 = vmatpush1.bf16.msra.mxu0 %v1845
    %1925 = vmatprep.subr.bf16.mxu0 0
    %1926 = vmatpush2.bf16.msra.mxu0 0
    %1927 = vmatprep.subr.bf16.mxu0 0
    %1928 = vmatpush2.bf16.msra.mxu0 0
    %1929 = vmatprep.subr.bf16.mxu0 0
    %1930 = vmatpush2.bf16.msra.mxu0 0
    %1931 = vmatprep.subr.bf16.mxu0 0
    %1932 = vmatpush2.bf16.msra.mxu0 0
    %1933 = vmatprep.subr.bf16.mxu0 0
    %1934 = vmatpush2.bf16.msra.mxu0 0
    %1935 = vmatprep.subr.bf16.mxu0 0
    %1936 = vmatpush2.bf16.msra.mxu0 0
    %1937 = vmatprep.subr.bf16.mxu0 0
    %1938 = vmatpush2.bf16.msra.mxu0 0
    %1939 = vmatprep.subr.bf16.mxu0 0
    %1940 = vmatpush2.bf16.msra.mxu0 0
    %1941 = vmatprep.mubr.bf16.mxu0 0
    %1942 = vmatmul.mubr.bf16.gmra.mxu0 %v1697
    %v1943 = vpop.f32.mrf.mxu0
    %v1944 = vadd.f32 0.0, %v1943
    %v1945 = vpop.f32.mrf.mxu0
    %v1946 = vadd.f32 0.0, %v1945
    %v1947 = vpop.f32.mrf.mxu0
    %v1948 = vadd.f32 0.0, %v1947
    %v1949 = vpop.f32.mrf.mxu0
    %v1950 = vadd.f32 0.0, %v1949
    %1951 = vdwg.mxu0
    %1952 = vmatprep.subr.bf16.mxu0 %v1876
    %1953 = vmatpush1.bf16.msra.mxu0 %v1875
    %1954 = vmatprep.subr.bf16.mxu0 %v1872
    %1955 = vmatpush1.bf16.msra.mxu0 %v1871
    %1956 = vmatprep.subr.bf16.mxu0 %v1868
    %1957 = vmatpush1.bf16.msra.mxu0 %v1867
    %1958 = vmatprep.subr.bf16.mxu0 %v1864
    %1959 = vmatpush1.bf16.msra.mxu0 %v1863
    %1960 = vmatprep.subr.bf16.mxu0 %v1860
    %1961 = vmatpush1.bf16.msra.mxu0 %v1859
    %1962 = vmatprep.subr.bf16.mxu0 %v1856
    %1963 = vmatpush1.bf16.msra.mxu0 %v1855
    %1964 = vmatprep.subr.bf16.mxu0 %v1852
    %1965 = vmatpush1.bf16.msra.mxu0 %v1851
    %1966 = vmatprep.subr.bf16.mxu0 %v1848
    %1967 = vmatpush1.bf16.msra.mxu0 %v1847
    %1968 = vmatprep.subr.bf16.mxu0 0
    %1969 = vmatpush2.bf16.msra.mxu0 0
    %1970 = vmatprep.subr.bf16.mxu0 0
    %1971 = vmatpush2.bf16.msra.mxu0 0
    %1972 = vmatprep.subr.bf16.mxu0 0
    %1973 = vmatpush2.bf16.msra.mxu0 0
    %1974 = vmatprep.subr.bf16.mxu0 0
    %1975 = vmatpush2.bf16.msra.mxu0 0
    %1976 = vmatprep.subr.bf16.mxu0 0
    %1977 = vmatpush2.bf16.msra.mxu0 0
    %1978 = vmatprep.subr.bf16.mxu0 0
    %1979 = vmatpush2.bf16.msra.mxu0 0
    %1980 = vmatprep.subr.bf16.mxu0 0
    %1981 = vmatpush2.bf16.msra.mxu0 0
    %1982 = vmatprep.subr.bf16.mxu0 0
    %1983 = vmatpush2.bf16.msra.mxu0 0
    %1984 = vmatprep.mubr.bf16.mxu0 0
    %1985 = vmatmul.mubr.bf16.gmra.mxu0 %v1697
    %v1986 = vpop.f32.mrf.mxu0
    %v1987 = vadd.f32 0.0, %v1986
    %v1988 = vpop.f32.mrf.mxu0
    %v1989 = vadd.f32 0.0, %v1988
    %v1990 = vpop.f32.mrf.mxu0
    %v1991 = vadd.f32 0.0, %v1990
    %v1992 = vpop.f32.mrf.mxu0
    %v1993 = vadd.f32 0.0, %v1992
    %1994 = vdwg.mxu0
    %v1995 = vadd.f32 %v1709, %v1944
    %v1996 = vadd.f32 %v1710, %v1946
    %v1997 = vadd.f32 %v1711, %v1987
    %v1998 = vadd.f32 %v1712, %v1989
    %v1999 = vadd.f32 %v1713, %v1948
    %v2000 = vadd.f32 %v1714, %v1950
    %v2001 = vadd.f32 %v1715, %v1991
    %v2002 = vadd.f32 %v1716, %v1993
    %v2003 = vmul.f32 %v1995, 0.5
    %v2004 = vmul.f32 %v1999, 0.5
    %v2005 = vtanh.pop %v2003
    %v2006 = vtanh.pop %v2004
    %v2007 = vmul.f32 %v2005, 0.5
    %v2008 = vmul.f32 %v2006, 0.5
    %v2009 = vadd.f32 %v2007, 0.5
    %v2010 = vadd.f32 %v2008, 0.5
    %v2011 = vmul.f32 %v1996, 0.5
    %v2012 = vmul.f32 %v2000, 0.5
    %v2013 = vtanh.pop %v2011
    %v2014 = vtanh.pop %v2012
    %v2015 = vmul.f32 %v2013, 0.5
    %v2016 = vmul.f32 %v2014, 0.5
    %v2017 = vadd.f32 %v2015, 0.5
    %v2018 = vadd.f32 %v2016, 0.5
    %v2019 = vtanh.pop %v1997
    %v2020 = vtanh.pop %v2001
    %v2021 = vmul.f32 %v1998, 0.5
    %v2022 = vmul.f32 %v2002, 0.5
    %v2023 = vtanh.pop %v2021
    %v2024 = vtanh.pop %v2022
    %v2025 = vmul.f32 %v2023, 0.5
    %v2026 = vmul.f32 %v2024, 0.5
    %v2027 = vadd.f32 %v2025, 0.5
    %v2028 = vadd.f32 %v2026, 0.5
    %v2029 = vmul.f32 %v2017, %v1691
    %v2030 = vmul.f32 %v2018, %v1692
    %v2031 = vmul.f32 %v2009, %v2019
    %v2032 = vmul.f32 %v2010, %v2020
    %v2033 = vadd.f32 %v2029, %v2031
    %v2034 = vadd.f32 %v2030, %v2032
    %v2035 = vtanh.pop %v2033
    %v2036 = vtanh.pop %v2034
    %v2037 = vmul.f32 %v2027, %v2035
    %v2038 = vmul.f32 %v2028, %v2036
    %v2039 = vpack.c.bf16 %v2038, %v2037
    %v2041 = vunpack.c.l.b16 %v2039
    %v2042 = vunpack.c.h.b16 %v2039
    %v2043 = vpack.c.b16 %v2041, %v2041
    %v2044 = vpack.c.b16 %v2042, %v2042
    %s2047 = scalar_lea.vmem [#allocation2], 24
    %2048 = vst [vmem:[%s2047] sm:$0xf] %v2043
    %2049 = vst [vmem:[%s2047 + $0x4] sm:$0xf] %v2044
    %s2050 = scalar_lea.vmem [#allocation3], 256
    %v2051 = vld [vmem:[%s2050] sm:$0xff]
    %v2052 = vld [vmem:[%s2050 + $0x8] sm:$0xff]
    %v2053 = vld [vmem:[%s2050 + $0x10] sm:$0xff]
    %v2054 = vld [vmem:[%s2050 + $0x18] sm:$0xff]
    %v2055 = vld [vmem:[%s2050 + $0x20] sm:$0xff]
    %v2056 = vld [vmem:[%s2050 + $0x28] sm:$0xff]
    %v2057 = vld [vmem:[%s2050 + $0x30] sm:$0xff]
    %v2058 = vld [vmem:[%s2050 + $0x38] sm:$0xff]
    %v2059 = vld [vmem:[#allocation9] sm:$0xff]
    %v2060 = vld [vmem:[#allocation9 + $0x8] sm:$0xff]
    %v2061 = vld [vmem:[#allocation9 + $0x10] sm:$0xff]
    %v2062 = vld [vmem:[#allocation9 + $0x18] sm:$0xff]
    %v2063 = vld [vmem:[#allocation9 + $0x20] sm:$0xff]
    %v2064 = vld [vmem:[#allocation9 + $0x28] sm:$0xff]
    %v2065 = vld [vmem:[#allocation9 + $0x30] sm:$0xff]
    %v2066 = vld [vmem:[#allocation9 + $0x38] sm:$0xff]
    %v2067 = vld [vmem:[#allocation9 + $0x40] sm:$0xff]
    %v2068 = vld [vmem:[#allocation9 + $0x48] sm:$0xff]
    %v2069 = vld [vmem:[#allocation9 + $0x50] sm:$0xff]
    %v2070 = vld [vmem:[#allocation9 + $0x58] sm:$0xff]
    %v2071 = vld [vmem:[#allocation9 + $0x60] sm:$0xff]
    %v2072 = vld [vmem:[#allocation9 + $0x68] sm:$0xff]
    %v2073 = vld [vmem:[#allocation9 + $0x70] sm:$0xff]
    %v2074 = vld [vmem:[#allocation9 + $0x78] sm:$0xff]
    %v2075 = vld [vmem:[#allocation9 + $0x80] sm:$0xff]
    %v2076 = vld [vmem:[#allocation9 + $0x88] sm:$0xff]
    %v2077 = vld [vmem:[#allocation9 + $0x90] sm:$0xff]
    %v2078 = vld [vmem:[#allocation9 + $0x98] sm:$0xff]
    %v2079 = vld [vmem:[#allocation9 + $0xa0] sm:$0xff]
    %v2080 = vld [vmem:[#allocation9 + $0xa8] sm:$0xff]
    %v2081 = vld [vmem:[#allocation9 + $0xb0] sm:$0xff]
    %v2082 = vld [vmem:[#allocation9 + $0xb8] sm:$0xff]
    %v2083 = vld [vmem:[#allocation9 + $0xc0] sm:$0xff]
    %v2084 = vld [vmem:[#allocation9 + $0xc8] sm:$0xff]
    %v2085 = vld [vmem:[#allocation9 + $0xd0] sm:$0xff]
    %v2086 = vld [vmem:[#allocation9 + $0xd8] sm:$0xff]
    %v2087 = vld [vmem:[#allocation9 + $0xe0] sm:$0xff]
    %v2088 = vld [vmem:[#allocation9 + $0xe8] sm:$0xff]
    %v2089 = vld [vmem:[#allocation9 + $0xf0] sm:$0xff]
    %v2090 = vld [vmem:[#allocation9 + $0xf8] sm:$0xff]
    %v2123 = vunpack.c.l.b16 %v2059
    %v2124 = vunpack.c.h.b16 %v2059
    %v2125 = vunpack.c.l.b16 %v2060
    %v2126 = vunpack.c.h.b16 %v2060
    %v2127 = vunpack.c.l.b16 %v2061
    %v2128 = vunpack.c.h.b16 %v2061
    %v2129 = vunpack.c.l.b16 %v2062
    %v2130 = vunpack.c.h.b16 %v2062
    %v2131 = vunpack.c.l.b16 %v2063
    %v2132 = vunpack.c.h.b16 %v2063
    %v2133 = vunpack.c.l.b16 %v2064
    %v2134 = vunpack.c.h.b16 %v2064
    %v2135 = vunpack.c.l.b16 %v2065
    %v2136 = vunpack.c.h.b16 %v2065
    %v2137 = vunpack.c.l.b16 %v2066
    %v2138 = vunpack.c.h.b16 %v2066
    %v2139 = vunpack.c.l.b16 %v2067
    %v2140 = vunpack.c.h.b16 %v2067
    %v2141 = vunpack.c.l.b16 %v2068
    %v2142 = vunpack.c.h.b16 %v2068
    %v2143 = vunpack.c.l.b16 %v2069
    %v2144 = vunpack.c.h.b16 %v2069
    %v2145 = vunpack.c.l.b16 %v2070
    %v2146 = vunpack.c.h.b16 %v2070
    %v2147 = vunpack.c.l.b16 %v2071
    %v2148 = vunpack.c.h.b16 %v2071
    %v2149 = vunpack.c.l.b16 %v2072
    %v2150 = vunpack.c.h.b16 %v2072
    %v2151 = vunpack.c.l.b16 %v2073
    %v2152 = vunpack.c.h.b16 %v2073
    %v2153 = vunpack.c.l.b16 %v2074
    %v2154 = vunpack.c.h.b16 %v2074
    %v2155 = vunpack.c.l.b16 %v2075
    %v2156 = vunpack.c.h.b16 %v2075
    %v2157 = vunpack.c.l.b16 %v2076
    %v2158 = vunpack.c.h.b16 %v2076
    %v2159 = vunpack.c.l.b16 %v2077
    %v2160 = vunpack.c.h.b16 %v2077
    %v2161 = vunpack.c.l.b16 %v2078
    %v2162 = vunpack.c.h.b16 %v2078
    %v2163 = vunpack.c.l.b16 %v2079
    %v2164 = vunpack.c.h.b16 %v2079
    %v2165 = vunpack.c.l.b16 %v2080
    %v2166 = vunpack.c.h.b16 %v2080
    %v2167 = vunpack.c.l.b16 %v2081
    %v2168 = vunpack.c.h.b16 %v2081
    %v2169 = vunpack.c.l.b16 %v2082
    %v2170 = vunpack.c.h.b16 %v2082
    %v2171 = vunpack.c.l.b16 %v2083
    %v2172 = vunpack.c.h.b16 %v2083
    %v2173 = vunpack.c.l.b16 %v2084
    %v2174 = vunpack.c.h.b16 %v2084
    %v2175 = vunpack.c.l.b16 %v2085
    %v2176 = vunpack.c.h.b16 %v2085
    %v2177 = vunpack.c.l.b16 %v2086
    %v2178 = vunpack.c.h.b16 %v2086
    %v2179 = vunpack.c.l.b16 %v2087
    %v2180 = vunpack.c.h.b16 %v2087
    %v2181 = vunpack.c.l.b16 %v2088
    %v2182 = vunpack.c.h.b16 %v2088
    %v2183 = vunpack.c.l.b16 %v2089
    %v2184 = vunpack.c.h.b16 %v2089
    %v2185 = vunpack.c.l.b16 %v2090
    %v2186 = vunpack.c.h.b16 %v2090
    %v2187 = vpack.c.b16 %v2127, %v2123
    %v2188 = vpack.c.b16 %v2128, %v2124
    %v2189 = vpack.c.b16 %v2129, %v2125
    %v2190 = vpack.c.b16 %v2130, %v2126
    %v2191 = vpack.c.b16 %v2135, %v2131
    %v2192 = vpack.c.b16 %v2136, %v2132
    %v2193 = vpack.c.b16 %v2137, %v2133
    %v2194 = vpack.c.b16 %v2138, %v2134
    %v2195 = vpack.c.b16 %v2143, %v2139
    %v2196 = vpack.c.b16 %v2144, %v2140
    %v2197 = vpack.c.b16 %v2145, %v2141
    %v2198 = vpack.c.b16 %v2146, %v2142
    %v2199 = vpack.c.b16 %v2151, %v2147
    %v2200 = vpack.c.b16 %v2152, %v2148
    %v2201 = vpack.c.b16 %v2153, %v2149
    %v2202 = vpack.c.b16 %v2154, %v2150
    %v2203 = vpack.c.b16 %v2159, %v2155
    %v2204 = vpack.c.b16 %v2160, %v2156
    %v2205 = vpack.c.b16 %v2161, %v2157
    %v2206 = vpack.c.b16 %v2162, %v2158
    %v2207 = vpack.c.b16 %v2167, %v2163
    %v2208 = vpack.c.b16 %v2168, %v2164
    %v2209 = vpack.c.b16 %v2169, %v2165
    %v2210 = vpack.c.b16 %v2170, %v2166
    %v2211 = vpack.c.b16 %v2175, %v2171
    %v2212 = vpack.c.b16 %v2176, %v2172
    %v2213 = vpack.c.b16 %v2177, %v2173
    %v2214 = vpack.c.b16 %v2178, %v2174
    %v2215 = vpack.c.b16 %v2183, %v2179
    %v2216 = vpack.c.b16 %v2184, %v2180
    %v2217 = vpack.c.b16 %v2185, %v2181
    %v2218 = vpack.c.b16 %v2186, %v2182
    %2251 = vmatprep.subr.bf16.mxu0 %v2216
    %2252 = vmatpush1.bf16.msra.mxu0 %v2215
    %2253 = vmatprep.subr.bf16.mxu0 %v2212
    %2254 = vmatpush1.bf16.msra.mxu0 %v2211
    %2255 = vmatprep.subr.bf16.mxu0 %v2208
    %2256 = vmatpush1.bf16.msra.mxu0 %v2207
    %2257 = vmatprep.subr.bf16.mxu0 %v2204
    %2258 = vmatpush1.bf16.msra.mxu0 %v2203
    %2259 = vmatprep.subr.bf16.mxu0 %v2200
    %2260 = vmatpush1.bf16.msra.mxu0 %v2199
    %2261 = vmatprep.subr.bf16.mxu0 %v2196
    %2262 = vmatpush1.bf16.msra.mxu0 %v2195
    %2263 = vmatprep.subr.bf16.mxu0 %v2192
    %2264 = vmatpush1.bf16.msra.mxu0 %v2191
    %2265 = vmatprep.subr.bf16.mxu0 %v2188
    %2266 = vmatpush1.bf16.msra.mxu0 %v2187
    %2267 = vmatprep.subr.bf16.mxu0 0
    %2268 = vmatpush2.bf16.msra.mxu0 0
    %2269 = vmatprep.subr.bf16.mxu0 0
    %2270 = vmatpush2.bf16.msra.mxu0 0
    %2271 = vmatprep.subr.bf16.mxu0 0
    %2272 = vmatpush2.bf16.msra.mxu0 0
    %2273 = vmatprep.subr.bf16.mxu0 0
    %2274 = vmatpush2.bf16.msra.mxu0 0
    %2275 = vmatprep.subr.bf16.mxu0 0
    %2276 = vmatpush2.bf16.msra.mxu0 0
    %2277 = vmatprep.subr.bf16.mxu0 0
    %2278 = vmatpush2.bf16.msra.mxu0 0
    %2279 = vmatprep.subr.bf16.mxu0 0
    %2280 = vmatpush2.bf16.msra.mxu0 0
    %2281 = vmatprep.subr.bf16.mxu0 0
    %2282 = vmatpush2.bf16.msra.mxu0 0
    %2283 = vmatprep.mubr.bf16.mxu0 0
    %2284 = vmatmul.mubr.bf16.gmra.mxu0 %v2039
    %v2285 = vpop.f32.mrf.mxu0
    %v2286 = vadd.f32 0.0, %v2285
    %v2287 = vpop.f32.mrf.mxu0
    %v2288 = vadd.f32 0.0, %v2287
    %v2289 = vpop.f32.mrf.mxu0
    %v2290 = vadd.f32 0.0, %v2289
    %v2291 = vpop.f32.mrf.mxu0
    %v2292 = vadd.f32 0.0, %v2291
    %2293 = vdwg.mxu0
    %2294 = vmatprep.subr.bf16.mxu0 %v2218
    %2295 = vmatpush1.bf16.msra.mxu0 %v2217
    %2296 = vmatprep.subr.bf16.mxu0 %v2214
    %2297 = vmatpush1.bf16.msra.mxu0 %v2213
    %2298 = vmatprep.subr.bf16.mxu0 %v2210
    %2299 = vmatpush1.bf16.msra.mxu0 %v2209
    %2300 = vmatprep.subr.bf16.mxu0 %v2206
    %2301 = vmatpush1.bf16.msra.mxu0 %v2205
    %2302 = vmatprep.subr.bf16.mxu0 %v2202
    %2303 = vmatpush1.bf16.msra.mxu0 %v2201
    %2304 = vmatprep.subr.bf16.mxu0 %v2198
    %2305 = vmatpush1.bf16.msra.mxu0 %v2197
    %2306 = vmatprep.subr.bf16.mxu0 %v2194
    %2307 = vmatpush1.bf16.msra.mxu0 %v2193
    %2308 = vmatprep.subr.bf16.mxu0 %v2190
    %2309 = vmatpush1.bf16.msra.mxu0 %v2189
    %2310 = vmatprep.subr.bf16.mxu0 0
    %2311 = vmatpush2.bf16.msra.mxu0 0
    %2312 = vmatprep.subr.bf16.mxu0 0
    %2313 = vmatpush2.bf16.msra.mxu0 0
    %2314 = vmatprep.subr.bf16.mxu0 0
    %2315 = vmatpush2.bf16.msra.mxu0 0
    %2316 = vmatprep.subr.bf16.mxu0 0
    %2317 = vmatpush2.bf16.msra.mxu0 0
    %2318 = vmatprep.subr.bf16.mxu0 0
    %2319 = vmatpush2.bf16.msra.mxu0 0
    %2320 = vmatprep.subr.bf16.mxu0 0
    %2321 = vmatpush2.bf16.msra.mxu0 0
    %2322 = vmatprep.subr.bf16.mxu0 0
    %2323 = vmatpush2.bf16.msra.mxu0 0
    %2324 = vmatprep.subr.bf16.mxu0 0
    %2325 = vmatpush2.bf16.msra.mxu0 0
    %2326 = vmatprep.mubr.bf16.mxu0 0
    %2327 = vmatmul.mubr.bf16.gmra.mxu0 %v2039
    %v2328 = vpop.f32.mrf.mxu0
    %v2329 = vadd.f32 0.0, %v2328
    %v2330 = vpop.f32.mrf.mxu0
    %v2331 = vadd.f32 0.0, %v2330
    %v2332 = vpop.f32.mrf.mxu0
    %v2333 = vadd.f32 0.0, %v2332
    %v2334 = vpop.f32.mrf.mxu0
    %v2335 = vadd.f32 0.0, %v2334
    %2336 = vdwg.mxu0
    %v2337 = vadd.f32 %v2051, %v2286
    %v2338 = vadd.f32 %v2052, %v2288
    %v2339 = vadd.f32 %v2053, %v2329
    %v2340 = vadd.f32 %v2054, %v2331
    %v2341 = vadd.f32 %v2055, %v2290
    %v2342 = vadd.f32 %v2056, %v2292
    %v2343 = vadd.f32 %v2057, %v2333
    %v2344 = vadd.f32 %v2058, %v2335
    %v2345 = vmul.f32 %v2337, 0.5
    %v2346 = vmul.f32 %v2341, 0.5
    %v2347 = vtanh.pop %v2345
    %v2348 = vtanh.pop %v2346
    %v2349 = vmul.f32 %v2347, 0.5
    %v2350 = vmul.f32 %v2348, 0.5
    %v2351 = vadd.f32 %v2349, 0.5
    %v2352 = vadd.f32 %v2350, 0.5
    %v2353 = vmul.f32 %v2338, 0.5
    %v2354 = vmul.f32 %v2342, 0.5
    %v2355 = vtanh.pop %v2353
    %v2356 = vtanh.pop %v2354
    %v2357 = vmul.f32 %v2355, 0.5
    %v2358 = vmul.f32 %v2356, 0.5
    %v2359 = vadd.f32 %v2357, 0.5
    %v2360 = vadd.f32 %v2358, 0.5
    %v2361 = vtanh.pop %v2339
    %v2362 = vtanh.pop %v2343
    %v2363 = vmul.f32 %v2340, 0.5
    %v2364 = vmul.f32 %v2344, 0.5
    %v2365 = vtanh.pop %v2363
    %v2366 = vtanh.pop %v2364
    %v2367 = vmul.f32 %v2365, 0.5
    %v2368 = vmul.f32 %v2366, 0.5
    %v2369 = vadd.f32 %v2367, 0.5
    %v2370 = vadd.f32 %v2368, 0.5
    %v2371 = vmul.f32 %v2359, %v2033
    %v2372 = vmul.f32 %v2360, %v2034
    %v2373 = vmul.f32 %v2351, %v2361
    %v2374 = vmul.f32 %v2352, %v2362
    %v2375 = vadd.f32 %v2371, %v2373
    %v2376 = vadd.f32 %v2372, %v2374
    %v2377 = vtanh.pop %v2375
    %v2378 = vtanh.pop %v2376
    %v2379 = vmul.f32 %v2369, %v2377
    %v2380 = vmul.f32 %v2370, %v2378
    %v2381 = vpack.c.bf16 %v2380, %v2379
    %v2383 = vunpack.c.l.b16 %v2381
    %v2384 = vunpack.c.h.b16 %v2381
    %v2385 = vpack.c.b16 %v2383, %v2383
    %v2386 = vpack.c.b16 %v2384, %v2384
    %s2389 = scalar_lea.vmem [#allocation2], 32
    %2390 = vst [vmem:[%s2389] sm:$0xf] %v2385
    %2391 = vst [vmem:[%s2389 + $0x4] sm:$0xf] %v2386
    %s2392 = scalar_lea.vmem [#allocation3], 320
    %v2393 = vld [vmem:[%s2392] sm:$0xff]
    %v2394 = vld [vmem:[%s2392 + $0x8] sm:$0xff]
    %v2395 = vld [vmem:[%s2392 + $0x10] sm:$0xff]
    %v2396 = vld [vmem:[%s2392 + $0x18] sm:$0xff]
    %v2397 = vld [vmem:[%s2392 + $0x20] sm:$0xff]
    %v2398 = vld [vmem:[%s2392 + $0x28] sm:$0xff]
    %v2399 = vld [vmem:[%s2392 + $0x30] sm:$0xff]
    %v2400 = vld [vmem:[%s2392 + $0x38] sm:$0xff]
    %v2401 = vld [vmem:[#allocation9] sm:$0xff]
    %v2402 = vld [vmem:[#allocation9 + $0x8] sm:$0xff]
    %v2403 = vld [vmem:[#allocation9 + $0x10] sm:$0xff]
    %v2404 = vld [vmem:[#allocation9 + $0x18] sm:$0xff]
    %v2405 = vld [vmem:[#allocation9 + $0x20] sm:$0xff]
    %v2406 = vld [vmem:[#allocation9 + $0x28] sm:$0xff]
    %v2407 = vld [vmem:[#allocation9 + $0x30] sm:$0xff]
    %v2408 = vld [vmem:[#allocation9 + $0x38] sm:$0xff]
    %v2409 = vld [vmem:[#allocation9 + $0x40] sm:$0xff]
    %v2410 = vld [vmem:[#allocation9 + $0x48] sm:$0xff]
    %v2411 = vld [vmem:[#allocation9 + $0x50] sm:$0xff]
    %v2412 = vld [vmem:[#allocation9 + $0x58] sm:$0xff]
    %v2413 = vld [vmem:[#allocation9 + $0x60] sm:$0xff]
    %v2414 = vld [vmem:[#allocation9 + $0x68] sm:$0xff]
    %v2415 = vld [vmem:[#allocation9 + $0x70] sm:$0xff]
    %v2416 = vld [vmem:[#allocation9 + $0x78] sm:$0xff]
    %v2417 = vld [vmem:[#allocation9 + $0x80] sm:$0xff]
    %v2418 = vld [vmem:[#allocation9 + $0x88] sm:$0xff]
    %v2419 = vld [vmem:[#allocation9 + $0x90] sm:$0xff]
    %v2420 = vld [vmem:[#allocation9 + $0x98] sm:$0xff]
    %v2421 = vld [vmem:[#allocation9 + $0xa0] sm:$0xff]
    %v2422 = vld [vmem:[#allocation9 + $0xa8] sm:$0xff]
    %v2423 = vld [vmem:[#allocation9 + $0xb0] sm:$0xff]
    %v2424 = vld [vmem:[#allocation9 + $0xb8] sm:$0xff]
    %v2425 = vld [vmem:[#allocation9 + $0xc0] sm:$0xff]
    %v2426 = vld [vmem:[#allocation9 + $0xc8] sm:$0xff]
    %v2427 = vld [vmem:[#allocation9 + $0xd0] sm:$0xff]
    %v2428 = vld [vmem:[#allocation9 + $0xd8] sm:$0xff]
    %v2429 = vld [vmem:[#allocation9 + $0xe0] sm:$0xff]
    %v2430 = vld [vmem:[#allocation9 + $0xe8] sm:$0xff]
    %v2431 = vld [vmem:[#allocation9 + $0xf0] sm:$0xff]
    %v2432 = vld [vmem:[#allocation9 + $0xf8] sm:$0xff]
    %v2465 = vunpack.c.l.b16 %v2401
    %v2466 = vunpack.c.h.b16 %v2401
    %v2467 = vunpack.c.l.b16 %v2402
    %v2468 = vunpack.c.h.b16 %v2402
    %v2469 = vunpack.c.l.b16 %v2403
    %v2470 = vunpack.c.h.b16 %v2403
    %v2471 = vunpack.c.l.b16 %v2404
    %v2472 = vunpack.c.h.b16 %v2404
    %v2473 = vunpack.c.l.b16 %v2405
    %v2474 = vunpack.c.h.b16 %v2405
    %v2475 = vunpack.c.l.b16 %v2406
    %v2476 = vunpack.c.h.b16 %v2406
    %v2477 = vunpack.c.l.b16 %v2407
    %v2478 = vunpack.c.h.b16 %v2407
    %v2479 = vunpack.c.l.b16 %v2408
    %v2480 = vunpack.c.h.b16 %v2408
    %v2481 = vunpack.c.l.b16 %v2409
    %v2482 = vunpack.c.h.b16 %v2409
    %v2483 = vunpack.c.l.b16 %v2410
    %v2484 = vunpack.c.h.b16 %v2410
    %v2485 = vunpack.c.l.b16 %v2411
    %v2486 = vunpack.c.h.b16 %v2411
    %v2487 = vunpack.c.l.b16 %v2412
    %v2488 = vunpack.c.h.b16 %v2412
    %v2489 = vunpack.c.l.b16 %v2413
    %v2490 = vunpack.c.h.b16 %v2413
    %v2491 = vunpack.c.l.b16 %v2414
    %v2492 = vunpack.c.h.b16 %v2414
    %v2493 = vunpack.c.l.b16 %v2415
    %v2494 = vunpack.c.h.b16 %v2415
    %v2495 = vunpack.c.l.b16 %v2416
    %v2496 = vunpack.c.h.b16 %v2416
    %v2497 = vunpack.c.l.b16 %v2417
    %v2498 = vunpack.c.h.b16 %v2417
    %v2499 = vunpack.c.l.b16 %v2418
    %v2500 = vunpack.c.h.b16 %v2418
    %v2501 = vunpack.c.l.b16 %v2419
    %v2502 = vunpack.c.h.b16 %v2419
    %v2503 = vunpack.c.l.b16 %v2420
    %v2504 = vunpack.c.h.b16 %v2420
    %v2505 = vunpack.c.l.b16 %v2421
    %v2506 = vunpack.c.h.b16 %v2421
    %v2507 = vunpack.c.l.b16 %v2422
    %v2508 = vunpack.c.h.b16 %v2422
    %v2509 = vunpack.c.l.b16 %v2423
    %v2510 = vunpack.c.h.b16 %v2423
    %v2511 = vunpack.c.l.b16 %v2424
    %v2512 = vunpack.c.h.b16 %v2424
    %v2513 = vunpack.c.l.b16 %v2425
    %v2514 = vunpack.c.h.b16 %v2425
    %v2515 = vunpack.c.l.b16 %v2426
    %v2516 = vunpack.c.h.b16 %v2426
    %v2517 = vunpack.c.l.b16 %v2427
    %v2518 = vunpack.c.h.b16 %v2427
    %v2519 = vunpack.c.l.b16 %v2428
    %v2520 = vunpack.c.h.b16 %v2428
    %v2521 = vunpack.c.l.b16 %v2429
    %v2522 = vunpack.c.h.b16 %v2429
    %v2523 = vunpack.c.l.b16 %v2430
    %v2524 = vunpack.c.h.b16 %v2430
    %v2525 = vunpack.c.l.b16 %v2431
    %v2526 = vunpack.c.h.b16 %v2431
    %v2527 = vunpack.c.l.b16 %v2432
    %v2528 = vunpack.c.h.b16 %v2432
    %v2529 = vpack.c.b16 %v2469, %v2465
    %v2530 = vpack.c.b16 %v2470, %v2466
    %v2531 = vpack.c.b16 %v2471, %v2467
    %v2532 = vpack.c.b16 %v2472, %v2468
    %v2533 = vpack.c.b16 %v2477, %v2473
    %v2534 = vpack.c.b16 %v2478, %v2474
    %v2535 = vpack.c.b16 %v2479, %v2475
    %v2536 = vpack.c.b16 %v2480, %v2476
    %v2537 = vpack.c.b16 %v2485, %v2481
    %v2538 = vpack.c.b16 %v2486, %v2482
    %v2539 = vpack.c.b16 %v2487, %v2483
    %v2540 = vpack.c.b16 %v2488, %v2484
    %v2541 = vpack.c.b16 %v2493, %v2489
    %v2542 = vpack.c.b16 %v2494, %v2490
    %v2543 = vpack.c.b16 %v2495, %v2491
    %v2544 = vpack.c.b16 %v2496, %v2492
    %v2545 = vpack.c.b16 %v2501, %v2497
    %v2546 = vpack.c.b16 %v2502, %v2498
    %v2547 = vpack.c.b16 %v2503, %v2499
    %v2548 = vpack.c.b16 %v2504, %v2500
    %v2549 = vpack.c.b16 %v2509, %v2505
    %v2550 = vpack.c.b16 %v2510, %v2506
    %v2551 = vpack.c.b16 %v2511, %v2507
    %v2552 = vpack.c.b16 %v2512, %v2508
    %v2553 = vpack.c.b16 %v2517, %v2513
    %v2554 = vpack.c.b16 %v2518, %v2514
    %v2555 = vpack.c.b16 %v2519, %v2515
    %v2556 = vpack.c.b16 %v2520, %v2516
    %v2557 = vpack.c.b16 %v2525, %v2521
    %v2558 = vpack.c.b16 %v2526, %v2522
    %v2559 = vpack.c.b16 %v2527, %v2523
    %v2560 = vpack.c.b16 %v2528, %v2524
    %2593 = vmatprep.subr.bf16.mxu0 %v2558
    %2594 = vmatpush1.bf16.msra.mxu0 %v2557
    %2595 = vmatprep.subr.bf16.mxu0 %v2554
    %2596 = vmatpush1.bf16.msra.mxu0 %v2553
    %2597 = vmatprep.subr.bf16.mxu0 %v2550
    %2598 = vmatpush1.bf16.msra.mxu0 %v2549
    %2599 = vmatprep.subr.bf16.mxu0 %v2546
    %2600 = vmatpush1.bf16.msra.mxu0 %v2545
    %2601 = vmatprep.subr.bf16.mxu0 %v2542
    %2602 = vmatpush1.bf16.msra.mxu0 %v2541
    %2603 = vmatprep.subr.bf16.mxu0 %v2538
    %2604 = vmatpush1.bf16.msra.mxu0 %v2537
    %2605 = vmatprep.subr.bf16.mxu0 %v2534
    %2606 = vmatpush1.bf16.msra.mxu0 %v2533
    %2607 = vmatprep.subr.bf16.mxu0 %v2530
    %2608 = vmatpush1.bf16.msra.mxu0 %v2529
    %2609 = vmatprep.subr.bf16.mxu0 0
    %2610 = vmatpush2.bf16.msra.mxu0 0
    %2611 = vmatprep.subr.bf16.mxu0 0
    %2612 = vmatpush2.bf16.msra.mxu0 0
    %2613 = vmatprep.subr.bf16.mxu0 0
    %2614 = vmatpush2.bf16.msra.mxu0 0
    %2615 = vmatprep.subr.bf16.mxu0 0
    %2616 = vmatpush2.bf16.msra.mxu0 0
    %2617 = vmatprep.subr.bf16.mxu0 0
    %2618 = vmatpush2.bf16.msra.mxu0 0
    %2619 = vmatprep.subr.bf16.mxu0 0
    %2620 = vmatpush2.bf16.msra.mxu0 0
    %2621 = vmatprep.subr.bf16.mxu0 0
    %2622 = vmatpush2.bf16.msra.mxu0 0
    %2623 = vmatprep.subr.bf16.mxu0 0
    %2624 = vmatpush2.bf16.msra.mxu0 0
    %2625 = vmatprep.mubr.bf16.mxu0 0
    %2626 = vmatmul.mubr.bf16.gmra.mxu0 %v2381
    %v2627 = vpop.f32.mrf.mxu0
    %v2628 = vadd.f32 0.0, %v2627
    %v2629 = vpop.f32.mrf.mxu0
    %v2630 = vadd.f32 0.0, %v2629
    %v2631 = vpop.f32.mrf.mxu0
    %v2632 = vadd.f32 0.0, %v2631
    %v2633 = vpop.f32.mrf.mxu0
    %v2634 = vadd.f32 0.0, %v2633
    %2635 = vdwg.mxu0
    %2636 = vmatprep.subr.bf16.mxu0 %v2560
    %2637 = vmatpush1.bf16.msra.mxu0 %v2559
    %2638 = vmatprep.subr.bf16.mxu0 %v2556
    %2639 = vmatpush1.bf16.msra.mxu0 %v2555
    %2640 = vmatprep.subr.bf16.mxu0 %v2552
    %2641 = vmatpush1.bf16.msra.mxu0 %v2551
    %2642 = vmatprep.subr.bf16.mxu0 %v2548
    %2643 = vmatpush1.bf16.msra.mxu0 %v2547
    %2644 = vmatprep.subr.bf16.mxu0 %v2544
    %2645 = vmatpush1.bf16.msra.mxu0 %v2543
    %2646 = vmatprep.subr.bf16.mxu0 %v2540
    %2647 = vmatpush1.bf16.msra.mxu0 %v2539
    %2648 = vmatprep.subr.bf16.mxu0 %v2536
    %2649 = vmatpush1.bf16.msra.mxu0 %v2535
    %2650 = vmatprep.subr.bf16.mxu0 %v2532
    %2651 = vmatpush1.bf16.msra.mxu0 %v2531
    %2652 = vmatprep.subr.bf16.mxu0 0
    %2653 = vmatpush2.bf16.msra.mxu0 0
    %2654 = vmatprep.subr.bf16.mxu0 0
    %2655 = vmatpush2.bf16.msra.mxu0 0
    %2656 = vmatprep.subr.bf16.mxu0 0
    %2657 = vmatpush2.bf16.msra.mxu0 0
    %2658 = vmatprep.subr.bf16.mxu0 0
    %2659 = vmatpush2.bf16.msra.mxu0 0
    %2660 = vmatprep.subr.bf16.mxu0 0
    %2661 = vmatpush2.bf16.msra.mxu0 0
    %2662 = vmatprep.subr.bf16.mxu0 0
    %2663 = vmatpush2.bf16.msra.mxu0 0
    %2664 = vmatprep.subr.bf16.mxu0 0
    %2665 = vmatpush2.bf16.msra.mxu0 0
    %2666 = vmatprep.subr.bf16.mxu0 0
    %2667 = vmatpush2.bf16.msra.mxu0 0
    %2668 = vmatprep.mubr.bf16.mxu0 0
    %2669 = vmatmul.mubr.bf16.gmra.mxu0 %v2381
    %v2670 = vpop.f32.mrf.mxu0
    %v2671 = vadd.f32 0.0, %v2670
    %v2672 = vpop.f32.mrf.mxu0
    %v2673 = vadd.f32 0.0, %v2672
    %v2674 = vpop.f32.mrf.mxu0
    %v2675 = vadd.f32 0.0, %v2674
    %v2676 = vpop.f32.mrf.mxu0
    %v2677 = vadd.f32 0.0, %v2676
    %2678 = vdwg.mxu0
    %v2679 = vadd.f32 %v2393, %v2628
    %v2680 = vadd.f32 %v2394, %v2630
    %v2681 = vadd.f32 %v2395, %v2671
    %v2682 = vadd.f32 %v2396, %v2673
    %v2683 = vadd.f32 %v2397, %v2632
    %v2684 = vadd.f32 %v2398, %v2634
    %v2685 = vadd.f32 %v2399, %v2675
    %v2686 = vadd.f32 %v2400, %v2677
    %v2687 = vmul.f32 %v2679, 0.5
    %v2688 = vmul.f32 %v2683, 0.5
    %v2689 = vtanh.pop %v2687
    %v2690 = vtanh.pop %v2688
    %v2691 = vmul.f32 %v2689, 0.5
    %v2692 = vmul.f32 %v2690, 0.5
    %v2693 = vadd.f32 %v2691, 0.5
    %v2694 = vadd.f32 %v2692, 0.5
    %v2695 = vmul.f32 %v2680, 0.5
    %v2696 = vmul.f32 %v2684, 0.5
    %v2697 = vtanh.pop %v2695
    %v2698 = vtanh.pop %v2696
    %v2699 = vmul.f32 %v2697, 0.5
    %v2700 = vmul.f32 %v2698, 0.5
    %v2701 = vadd.f32 %v2699, 0.5
    %v2702 = vadd.f32 %v2700, 0.5
    %v2703 = vtanh.pop %v2681
    %v2704 = vtanh.pop %v2685
    %v2705 = vmul.f32 %v2682, 0.5
    %v2706 = vmul.f32 %v2686, 0.5
    %v2707 = vtanh.pop %v2705
    %v2708 = vtanh.pop %v2706
    %v2709 = vmul.f32 %v2707, 0.5
    %v2710 = vmul.f32 %v2708, 0.5
    %v2711 = vadd.f32 %v2709, 0.5
    %v2712 = vadd.f32 %v2710, 0.5
    %v2713 = vmul.f32 %v2701, %v2375
    %v2714 = vmul.f32 %v2702, %v2376
    %v2715 = vmul.f32 %v2693, %v2703
    %v2716 = vmul.f32 %v2694, %v2704
    %v2717 = vadd.f32 %v2713, %v2715
    %v2718 = vadd.f32 %v2714, %v2716
    %v2719 = vtanh.pop %v2717
    %v2720 = vtanh.pop %v2718
    %v2721 = vmul.f32 %v2711, %v2719
    %v2722 = vmul.f32 %v2712, %v2720
    %v2723 = vpack.c.bf16 %v2722, %v2721
    %v2725 = vunpack.c.l.b16 %v2723
    %v2726 = vunpack.c.h.b16 %v2723
    %v2727 = vpack.c.b16 %v2725, %v2725
    %v2728 = vpack.c.b16 %v2726, %v2726
    %s2731 = scalar_lea.vmem [#allocation2], 40
    %2732 = vst [vmem:[%s2731] sm:$0xf] %v2727
    %2733 = vst [vmem:[%s2731 + $0x4] sm:$0xf] %v2728
    %s2734 = scalar_lea.vmem [#allocation3], 384
    %v2735 = vld [vmem:[%s2734] sm:$0xff]
    %v2736 = vld [vmem:[%s2734 + $0x8] sm:$0xff]
    %v2737 = vld [vmem:[%s2734 + $0x10] sm:$0xff]
    %v2738 = vld [vmem:[%s2734 + $0x18] sm:$0xff]
    %v2739 = vld [vmem:[%s2734 + $0x20] sm:$0xff]
    %v2740 = vld [vmem:[%s2734 + $0x28] sm:$0xff]
    %v2741 = vld [vmem:[%s2734 + $0x30] sm:$0xff]
    %v2742 = vld [vmem:[%s2734 + $0x38] sm:$0xff]
    %v2743 = vld [vmem:[#allocation9] sm:$0xff]
    %v2744 = vld [vmem:[#allocation9 + $0x8] sm:$0xff]
    %v2745 = vld [vmem:[#allocation9 + $0x10] sm:$0xff]
    %v2746 = vld [vmem:[#allocation9 + $0x18] sm:$0xff]
    %v2747 = vld [vmem:[#allocation9 + $0x20] sm:$0xff]
    %v2748 = vld [vmem:[#allocation9 + $0x28] sm:$0xff]
    %v2749 = vld [vmem:[#allocation9 + $0x30] sm:$0xff]
    %v2750 = vld [vmem:[#allocation9 + $0x38] sm:$0xff]
    %v2751 = vld [vmem:[#allocation9 + $0x40] sm:$0xff]
    %v2752 = vld [vmem:[#allocation9 + $0x48] sm:$0xff]
    %v2753 = vld [vmem:[#allocation9 + $0x50] sm:$0xff]
    %v2754 = vld [vmem:[#allocation9 + $0x58] sm:$0xff]
    %v2755 = vld [vmem:[#allocation9 + $0x60] sm:$0xff]
    %v2756 = vld [vmem:[#allocation9 + $0x68] sm:$0xff]
    %v2757 = vld [vmem:[#allocation9 + $0x70] sm:$0xff]
    %v2758 = vld [vmem:[#allocation9 + $0x78] sm:$0xff]
    %v2759 = vld [vmem:[#allocation9 + $0x80] sm:$0xff]
    %v2760 = vld [vmem:[#allocation9 + $0x88] sm:$0xff]
    %v2761 = vld [vmem:[#allocation9 + $0x90] sm:$0xff]
    %v2762 = vld [vmem:[#allocation9 + $0x98] sm:$0xff]
    %v2763 = vld [vmem:[#allocation9 + $0xa0] sm:$0xff]
    %v2764 = vld [vmem:[#allocation9 + $0xa8] sm:$0xff]
    %v2765 = vld [vmem:[#allocation9 + $0xb0] sm:$0xff]
    %v2766 = vld [vmem:[#allocation9 + $0xb8] sm:$0xff]
    %v2767 = vld [vmem:[#allocation9 + $0xc0] sm:$0xff]
    %v2768 = vld [vmem:[#allocation9 + $0xc8] sm:$0xff]
    %v2769 = vld [vmem:[#allocation9 + $0xd0] sm:$0xff]
    %v2770 = vld [vmem:[#allocation9 + $0xd8] sm:$0xff]
    %v2771 = vld [vmem:[#allocation9 + $0xe0] sm:$0xff]
    %v2772 = vld [vmem:[#allocation9 + $0xe8] sm:$0xff]
    %v2773 = vld [vmem:[#allocation9 + $0xf0] sm:$0xff]
    %v2774 = vld [vmem:[#allocation9 + $0xf8] sm:$0xff]
    %v2807 = vunpack.c.l.b16 %v2743
    %v2808 = vunpack.c.h.b16 %v2743
    %v2809 = vunpack.c.l.b16 %v2744
    %v2810 = vunpack.c.h.b16 %v2744
    %v2811 = vunpack.c.l.b16 %v2745
    %v2812 = vunpack.c.h.b16 %v2745
    %v2813 = vunpack.c.l.b16 %v2746
    %v2814 = vunpack.c.h.b16 %v2746
    %v2815 = vunpack.c.l.b16 %v2747
    %v2816 = vunpack.c.h.b16 %v2747
    %v2817 = vunpack.c.l.b16 %v2748
    %v2818 = vunpack.c.h.b16 %v2748
    %v2819 = vunpack.c.l.b16 %v2749
    %v2820 = vunpack.c.h.b16 %v2749
    %v2821 = vunpack.c.l.b16 %v2750
    %v2822 = vunpack.c.h.b16 %v2750
    %v2823 = vunpack.c.l.b16 %v2751
    %v2824 = vunpack.c.h.b16 %v2751
    %v2825 = vunpack.c.l.b16 %v2752
    %v2826 = vunpack.c.h.b16 %v2752
    %v2827 = vunpack.c.l.b16 %v2753
    %v2828 = vunpack.c.h.b16 %v2753
    %v2829 = vunpack.c.l.b16 %v2754
    %v2830 = vunpack.c.h.b16 %v2754
    %v2831 = vunpack.c.l.b16 %v2755
    %v2832 = vunpack.c.h.b16 %v2755
    %v2833 = vunpack.c.l.b16 %v2756
    %v2834 = vunpack.c.h.b16 %v2756
    %v2835 = vunpack.c.l.b16 %v2757
    %v2836 = vunpack.c.h.b16 %v2757
    %v2837 = vunpack.c.l.b16 %v2758
    %v2838 = vunpack.c.h.b16 %v2758
    %v2839 = vunpack.c.l.b16 %v2759
    %v2840 = vunpack.c.h.b16 %v2759
    %v2841 = vunpack.c.l.b16 %v2760
    %v2842 = vunpack.c.h.b16 %v2760
    %v2843 = vunpack.c.l.b16 %v2761
    %v2844 = vunpack.c.h.b16 %v2761
    %v2845 = vunpack.c.l.b16 %v2762
    %v2846 = vunpack.c.h.b16 %v2762
    %v2847 = vunpack.c.l.b16 %v2763
    %v2848 = vunpack.c.h.b16 %v2763
    %v2849 = vunpack.c.l.b16 %v2764
    %v2850 = vunpack.c.h.b16 %v2764
    %v2851 = vunpack.c.l.b16 %v2765
    %v2852 = vunpack.c.h.b16 %v2765
    %v2853 = vunpack.c.l.b16 %v2766
    %v2854 = vunpack.c.h.b16 %v2766
    %v2855 = vunpack.c.l.b16 %v2767
    %v2856 = vunpack.c.h.b16 %v2767
    %v2857 = vunpack.c.l.b16 %v2768
    %v2858 = vunpack.c.h.b16 %v2768
    %v2859 = vunpack.c.l.b16 %v2769
    %v2860 = vunpack.c.h.b16 %v2769
    %v2861 = vunpack.c.l.b16 %v2770
    %v2862 = vunpack.c.h.b16 %v2770
    %v2863 = vunpack.c.l.b16 %v2771
    %v2864 = vunpack.c.h.b16 %v2771
    %v2865 = vunpack.c.l.b16 %v2772
    %v2866 = vunpack.c.h.b16 %v2772
    %v2867 = vunpack.c.l.b16 %v2773
    %v2868 = vunpack.c.h.b16 %v2773
    %v2869 = vunpack.c.l.b16 %v2774
    %v2870 = vunpack.c.h.b16 %v2774
    %v2871 = vpack.c.b16 %v2811, %v2807
    %v2872 = vpack.c.b16 %v2812, %v2808
    %v2873 = vpack.c.b16 %v2813, %v2809
    %v2874 = vpack.c.b16 %v2814, %v2810
    %v2875 = vpack.c.b16 %v2819, %v2815
    %v2876 = vpack.c.b16 %v2820, %v2816
    %v2877 = vpack.c.b16 %v2821, %v2817
    %v2878 = vpack.c.b16 %v2822, %v2818
    %v2879 = vpack.c.b16 %v2827, %v2823
    %v2880 = vpack.c.b16 %v2828, %v2824
    %v2881 = vpack.c.b16 %v2829, %v2825
    %v2882 = vpack.c.b16 %v2830, %v2826
    %v2883 = vpack.c.b16 %v2835, %v2831
    %v2884 = vpack.c.b16 %v2836, %v2832
    %v2885 = vpack.c.b16 %v2837, %v2833
    %v2886 = vpack.c.b16 %v2838, %v2834
    %v2887 = vpack.c.b16 %v2843, %v2839
    %v2888 = vpack.c.b16 %v2844, %v2840
    %v2889 = vpack.c.b16 %v2845, %v2841
    %v2890 = vpack.c.b16 %v2846, %v2842
    %v2891 = vpack.c.b16 %v2851, %v2847
    %v2892 = vpack.c.b16 %v2852, %v2848
    %v2893 = vpack.c.b16 %v2853, %v2849
    %v2894 = vpack.c.b16 %v2854, %v2850
    %v2895 = vpack.c.b16 %v2859, %v2855
    %v2896 = vpack.c.b16 %v2860, %v2856
    %v2897 = vpack.c.b16 %v2861, %v2857
    %v2898 = vpack.c.b16 %v2862, %v2858
    %v2899 = vpack.c.b16 %v2867, %v2863
    %v2900 = vpack.c.b16 %v2868, %v2864
    %v2901 = vpack.c.b16 %v2869, %v2865
    %v2902 = vpack.c.b16 %v2870, %v2866
    %2935 = vmatprep.subr.bf16.mxu0 %v2900
    %2936 = vmatpush1.bf16.msra.mxu0 %v2899
    %2937 = vmatprep.subr.bf16.mxu0 %v2896
    %2938 = vmatpush1.bf16.msra.mxu0 %v2895
    %2939 = vmatprep.subr.bf16.mxu0 %v2892
    %2940 = vmatpush1.bf16.msra.mxu0 %v2891
    %2941 = vmatprep.subr.bf16.mxu0 %v2888
    %2942 = vmatpush1.bf16.msra.mxu0 %v2887
    %2943 = vmatprep.subr.bf16.mxu0 %v2884
    %2944 = vmatpush1.bf16.msra.mxu0 %v2883
    %2945 = vmatprep.subr.bf16.mxu0 %v2880
    %2946 = vmatpush1.bf16.msra.mxu0 %v2879
    %2947 = vmatprep.subr.bf16.mxu0 %v2876
    %2948 = vmatpush1.bf16.msra.mxu0 %v2875
    %2949 = vmatprep.subr.bf16.mxu0 %v2872
    %2950 = vmatpush1.bf16.msra.mxu0 %v2871
    %2951 = vmatprep.subr.bf16.mxu0 0
    %2952 = vmatpush2.bf16.msra.mxu0 0
    %2953 = vmatprep.subr.bf16.mxu0 0
    %2954 = vmatpush2.bf16.msra.mxu0 0
    %2955 = vmatprep.subr.bf16.mxu0 0
    %2956 = vmatpush2.bf16.msra.mxu0 0
    %2957 = vmatprep.subr.bf16.mxu0 0
    %2958 = vmatpush2.bf16.msra.mxu0 0
    %2959 = vmatprep.subr.bf16.mxu0 0
    %2960 = vmatpush2.bf16.msra.mxu0 0
    %2961 = vmatprep.subr.bf16.mxu0 0
    %2962 = vmatpush2.bf16.msra.mxu0 0
    %2963 = vmatprep.subr.bf16.mxu0 0
    %2964 = vmatpush2.bf16.msra.mxu0 0
    %2965 = vmatprep.subr.bf16.mxu0 0
    %2966 = vmatpush2.bf16.msra.mxu0 0
    %2967 = vmatprep.mubr.bf16.mxu0 0
    %2968 = vmatmul.mubr.bf16.gmra.mxu0 %v2723
    %v2969 = vpop.f32.mrf.mxu0
    %v2970 = vadd.f32 0.0, %v2969
    %v2971 = vpop.f32.mrf.mxu0
    %v2972 = vadd.f32 0.0, %v2971
    %v2973 = vpop.f32.mrf.mxu0
    %v2974 = vadd.f32 0.0, %v2973
    %v2975 = vpop.f32.mrf.mxu0
    %v2976 = vadd.f32 0.0, %v2975
    %2977 = vdwg.mxu0
    %2978 = vmatprep.subr.bf16.mxu0 %v2902
    %2979 = vmatpush1.bf16.msra.mxu0 %v2901
    %2980 = vmatprep.subr.bf16.mxu0 %v2898
    %2981 = vmatpush1.bf16.msra.mxu0 %v2897
    %2982 = vmatprep.subr.bf16.mxu0 %v2894
    %2983 = vmatpush1.bf16.msra.mxu0 %v2893
    %2984 = vmatprep.subr.bf16.mxu0 %v2890
    %2985 = vmatpush1.bf16.msra.mxu0 %v2889
    %2986 = vmatprep.subr.bf16.mxu0 %v2886
    %2987 = vmatpush1.bf16.msra.mxu0 %v2885
    %2988 = vmatprep.subr.bf16.mxu0 %v2882
    %2989 = vmatpush1.bf16.msra.mxu0 %v2881
    %2990 = vmatprep.subr.bf16.mxu0 %v2878
    %2991 = vmatpush1.bf16.msra.mxu0 %v2877
    %2992 = vmatprep.subr.bf16.mxu0 %v2874
    %2993 = vmatpush1.bf16.msra.mxu0 %v2873
    %2994 = vmatprep.subr.bf16.mxu0 0
    %2995 = vmatpush2.bf16.msra.mxu0 0
    %2996 = vmatprep.subr.bf16.mxu0 0
    %2997 = vmatpush2.bf16.msra.mxu0 0
    %2998 = vmatprep.subr.bf16.mxu0 0
    %2999 = vmatpush2.bf16.msra.mxu0 0
    %3000 = vmatprep.subr.bf16.mxu0 0
    %3001 = vmatpush2.bf16.msra.mxu0 0
    %3002 = vmatprep.subr.bf16.mxu0 0
    %3003 = vmatpush2.bf16.msra.mxu0 0
    %3004 = vmatprep.subr.bf16.mxu0 0
    %3005 = vmatpush2.bf16.msra.mxu0 0
    %3006 = vmatprep.subr.bf16.mxu0 0
    %3007 = vmatpush2.bf16.msra.mxu0 0
    %3008 = vmatprep.subr.bf16.mxu0 0
    %3009 = vmatpush2.bf16.msra.mxu0 0
    %3010 = vmatprep.mubr.bf16.mxu0 0
    %3011 = vmatmul.mubr.bf16.gmra.mxu0 %v2723
    %v3012 = vpop.f32.mrf.mxu0
    %v3013 = vadd.f32 0.0, %v3012
    %v3014 = vpop.f32.mrf.mxu0
    %v3015 = vadd.f32 0.0, %v3014
    %v3016 = vpop.f32.mrf.mxu0
    %v3017 = vadd.f32 0.0, %v3016
    %v3018 = vpop.f32.mrf.mxu0
    %v3019 = vadd.f32 0.0, %v3018
    %3020 = vdwg.mxu0
    %v3021 = vadd.f32 %v2735, %v2970
    %v3022 = vadd.f32 %v2736, %v2972
    %v3023 = vadd.f32 %v2737, %v3013
    %v3024 = vadd.f32 %v2738, %v3015
    %v3025 = vadd.f32 %v2739, %v2974
    %v3026 = vadd.f32 %v2740, %v2976
    %v3027 = vadd.f32 %v2741, %v3017
    %v3028 = vadd.f32 %v2742, %v3019
    %v3029 = vmul.f32 %v3021, 0.5
    %v3030 = vmul.f32 %v3025, 0.5
    %v3031 = vtanh.pop %v3029
    %v3032 = vtanh.pop %v3030
    %v3033 = vmul.f32 %v3031, 0.5
    %v3034 = vmul.f32 %v3032, 0.5
    %v3035 = vadd.f32 %v3033, 0.5
    %v3036 = vadd.f32 %v3034, 0.5
    %v3037 = vmul.f32 %v3022, 0.5
    %v3038 = vmul.f32 %v3026, 0.5
    %v3039 = vtanh.pop %v3037
    %v3040 = vtanh.pop %v3038
    %v3041 = vmul.f32 %v3039, 0.5
    %v3042 = vmul.f32 %v3040, 0.5
    %v3043 = vadd.f32 %v3041, 0.5
    %v3044 = vadd.f32 %v3042, 0.5
    %v3045 = vtanh.pop %v3023
    %v3046 = vtanh.pop %v3027
    %v3047 = vmul.f32 %v3024, 0.5
    %v3048 = vmul.f32 %v3028, 0.5
    %v3049 = vtanh.pop %v3047
    %v3050 = vtanh.pop %v3048
    %v3051 = vmul.f32 %v3049, 0.5
    %v3052 = vmul.f32 %v3050, 0.5
    %v3053 = vadd.f32 %v3051, 0.5
    %v3054 = vadd.f32 %v3052, 0.5
    %v3055 = vmul.f32 %v3043, %v2717
    %v3056 = vmul.f32 %v3044, %v2718
    %v3057 = vmul.f32 %v3035, %v3045
    %v3058 = vmul.f32 %v3036, %v3046
    %v3059 = vadd.f32 %v3055, %v3057
    %v3060 = vadd.f32 %v3056, %v3058
    %v3061 = vtanh.pop %v3059
    %v3062 = vtanh.pop %v3060
    %v3063 = vmul.f32 %v3053, %v3061
    %v3064 = vmul.f32 %v3054, %v3062
    %v3065 = vpack.c.bf16 %v3064, %v3063
    %v3067 = vunpack.c.l.b16 %v3065
    %v3068 = vunpack.c.h.b16 %v3065
    %v3069 = vpack.c.b16 %v3067, %v3067
    %v3070 = vpack.c.b16 %v3068, %v3068
    %s3073 = scalar_lea.vmem [#allocation2], 48
    %3074 = vst [vmem:[%s3073] sm:$0xf] %v3069
    %3075 = vst [vmem:[%s3073 + $0x4] sm:$0xf] %v3070
    %s3076 = scalar_lea.vmem [#allocation3], 448
    %v3077 = vld [vmem:[%s3076] sm:$0xff]
    %v3078 = vld [vmem:[%s3076 + $0x8] sm:$0xff]
    %v3079 = vld [vmem:[%s3076 + $0x10] sm:$0xff]
    %v3080 = vld [vmem:[%s3076 + $0x18] sm:$0xff]
    %v3081 = vld [vmem:[%s3076 + $0x20] sm:$0xff]
    %v3082 = vld [vmem:[%s3076 + $0x28] sm:$0xff]
    %v3083 = vld [vmem:[%s3076 + $0x30] sm:$0xff]
    %v3084 = vld [vmem:[%s3076 + $0x38] sm:$0xff]
    %v3085 = vld [vmem:[#allocation9] sm:$0xff]
    %v3086 = vld [vmem:[#allocation9 + $0x8] sm:$0xff]
    %v3087 = vld [vmem:[#allocation9 + $0x10] sm:$0xff]
    %v3088 = vld [vmem:[#allocation9 + $0x18] sm:$0xff]
    %v3089 = vld [vmem:[#allocation9 + $0x20] sm:$0xff]
    %v3090 = vld [vmem:[#allocation9 + $0x28] sm:$0xff]
    %v3091 = vld [vmem:[#allocation9 + $0x30] sm:$0xff]
    %v3092 = vld [vmem:[#allocation9 + $0x38] sm:$0xff]
    %v3093 = vld [vmem:[#allocation9 + $0x40] sm:$0xff]
    %v3094 = vld [vmem:[#allocation9 + $0x48] sm:$0xff]
    %v3095 = vld [vmem:[#allocation9 + $0x50] sm:$0xff]
    %v3096 = vld [vmem:[#allocation9 + $0x58] sm:$0xff]
    %v3097 = vld [vmem:[#allocation9 + $0x60] sm:$0xff]
    %v3098 = vld [vmem:[#allocation9 + $0x68] sm:$0xff]
    %v3099 = vld [vmem:[#allocation9 + $0x70] sm:$0xff]
    %v3100 = vld [vmem:[#allocation9 + $0x78] sm:$0xff]
    %v3101 = vld [vmem:[#allocation9 + $0x80] sm:$0xff]
    %v3102 = vld [vmem:[#allocation9 + $0x88] sm:$0xff]
    %v3103 = vld [vmem:[#allocation9 + $0x90] sm:$0xff]
    %v3104 = vld [vmem:[#allocation9 + $0x98] sm:$0xff]
    %v3105 = vld [vmem:[#allocation9 + $0xa0] sm:$0xff]
    %v3106 = vld [vmem:[#allocation9 + $0xa8] sm:$0xff]
    %v3107 = vld [vmem:[#allocation9 + $0xb0] sm:$0xff]
    %v3108 = vld [vmem:[#allocation9 + $0xb8] sm:$0xff]
    %v3109 = vld [vmem:[#allocation9 + $0xc0] sm:$0xff]
    %v3110 = vld [vmem:[#allocation9 + $0xc8] sm:$0xff]
    %v3111 = vld [vmem:[#allocation9 + $0xd0] sm:$0xff]
    %v3112 = vld [vmem:[#allocation9 + $0xd8] sm:$0xff]
    %v3113 = vld [vmem:[#allocation9 + $0xe0] sm:$0xff]
    %v3114 = vld [vmem:[#allocation9 + $0xe8] sm:$0xff]
    %v3115 = vld [vmem:[#allocation9 + $0xf0] sm:$0xff]
    %v3116 = vld [vmem:[#allocation9 + $0xf8] sm:$0xff]
    %v3149 = vunpack.c.l.b16 %v3085
    %v3150 = vunpack.c.h.b16 %v3085
    %v3151 = vunpack.c.l.b16 %v3086
    %v3152 = vunpack.c.h.b16 %v3086
    %v3153 = vunpack.c.l.b16 %v3087
    %v3154 = vunpack.c.h.b16 %v3087
    %v3155 = vunpack.c.l.b16 %v3088
    %v3156 = vunpack.c.h.b16 %v3088
    %v3157 = vunpack.c.l.b16 %v3089
    %v3158 = vunpack.c.h.b16 %v3089
    %v3159 = vunpack.c.l.b16 %v3090
    %v3160 = vunpack.c.h.b16 %v3090
    %v3161 = vunpack.c.l.b16 %v3091
    %v3162 = vunpack.c.h.b16 %v3091
    %v3163 = vunpack.c.l.b16 %v3092
    %v3164 = vunpack.c.h.b16 %v3092
    %v3165 = vunpack.c.l.b16 %v3093
    %v3166 = vunpack.c.h.b16 %v3093
    %v3167 = vunpack.c.l.b16 %v3094
    %v3168 = vunpack.c.h.b16 %v3094
    %v3169 = vunpack.c.l.b16 %v3095
    %v3170 = vunpack.c.h.b16 %v3095
    %v3171 = vunpack.c.l.b16 %v3096
    %v3172 = vunpack.c.h.b16 %v3096
    %v3173 = vunpack.c.l.b16 %v3097
    %v3174 = vunpack.c.h.b16 %v3097
    %v3175 = vunpack.c.l.b16 %v3098
    %v3176 = vunpack.c.h.b16 %v3098
    %v3177 = vunpack.c.l.b16 %v3099
    %v3178 = vunpack.c.h.b16 %v3099
    %v3179 = vunpack.c.l.b16 %v3100
    %v3180 = vunpack.c.h.b16 %v3100
    %v3181 = vunpack.c.l.b16 %v3101
    %v3182 = vunpack.c.h.b16 %v3101
    %v3183 = vunpack.c.l.b16 %v3102
    %v3184 = vunpack.c.h.b16 %v3102
    %v3185 = vunpack.c.l.b16 %v3103
    %v3186 = vunpack.c.h.b16 %v3103
    %v3187 = vunpack.c.l.b16 %v3104
    %v3188 = vunpack.c.h.b16 %v3104
    %v3189 = vunpack.c.l.b16 %v3105
    %v3190 = vunpack.c.h.b16 %v3105
    %v3191 = vunpack.c.l.b16 %v3106
    %v3192 = vunpack.c.h.b16 %v3106
    %v3193 = vunpack.c.l.b16 %v3107
    %v3194 = vunpack.c.h.b16 %v3107
    %v3195 = vunpack.c.l.b16 %v3108
    %v3196 = vunpack.c.h.b16 %v3108
    %v3197 = vunpack.c.l.b16 %v3109
    %v3198 = vunpack.c.h.b16 %v3109
    %v3199 = vunpack.c.l.b16 %v3110
    %v3200 = vunpack.c.h.b16 %v3110
    %v3201 = vunpack.c.l.b16 %v3111
    %v3202 = vunpack.c.h.b16 %v3111
    %v3203 = vunpack.c.l.b16 %v3112
    %v3204 = vunpack.c.h.b16 %v3112
    %v3205 = vunpack.c.l.b16 %v3113
    %v3206 = vunpack.c.h.b16 %v3113
    %v3207 = vunpack.c.l.b16 %v3114
    %v3208 = vunpack.c.h.b16 %v3114
    %v3209 = vunpack.c.l.b16 %v3115
    %v3210 = vunpack.c.h.b16 %v3115
    %v3211 = vunpack.c.l.b16 %v3116
    %v3212 = vunpack.c.h.b16 %v3116
    %v3213 = vpack.c.b16 %v3153, %v3149
    %v3214 = vpack.c.b16 %v3154, %v3150
    %v3215 = vpack.c.b16 %v3155, %v3151
    %v3216 = vpack.c.b16 %v3156, %v3152
    %v3217 = vpack.c.b16 %v3161, %v3157
    %v3218 = vpack.c.b16 %v3162, %v3158
    %v3219 = vpack.c.b16 %v3163, %v3159
    %v3220 = vpack.c.b16 %v3164, %v3160
    %v3221 = vpack.c.b16 %v3169, %v3165
    %v3222 = vpack.c.b16 %v3170, %v3166
    %v3223 = vpack.c.b16 %v3171, %v3167
    %v3224 = vpack.c.b16 %v3172, %v3168
    %v3225 = vpack.c.b16 %v3177, %v3173
    %v3226 = vpack.c.b16 %v3178, %v3174
    %v3227 = vpack.c.b16 %v3179, %v3175
    %v3228 = vpack.c.b16 %v3180, %v3176
    %v3229 = vpack.c.b16 %v3185, %v3181
    %v3230 = vpack.c.b16 %v3186, %v3182
    %v3231 = vpack.c.b16 %v3187, %v3183
    %v3232 = vpack.c.b16 %v3188, %v3184
    %v3233 = vpack.c.b16 %v3193, %v3189
    %v3234 = vpack.c.b16 %v3194, %v3190
    %v3235 = vpack.c.b16 %v3195, %v3191
    %v3236 = vpack.c.b16 %v3196, %v3192
    %v3237 = vpack.c.b16 %v3201, %v3197
    %v3238 = vpack.c.b16 %v3202, %v3198
    %v3239 = vpack.c.b16 %v3203, %v3199
    %v3240 = vpack.c.b16 %v3204, %v3200
    %v3241 = vpack.c.b16 %v3209, %v3205
    %v3242 = vpack.c.b16 %v3210, %v3206
    %v3243 = vpack.c.b16 %v3211, %v3207
    %v3244 = vpack.c.b16 %v3212, %v3208
    %3277 = vmatprep.subr.bf16.mxu0 %v3242
    %3278 = vmatpush1.bf16.msra.mxu0 %v3241
    %3279 = vmatprep.subr.bf16.mxu0 %v3238
    %3280 = vmatpush1.bf16.msra.mxu0 %v3237
    %3281 = vmatprep.subr.bf16.mxu0 %v3234
    %3282 = vmatpush1.bf16.msra.mxu0 %v3233
    %3283 = vmatprep.subr.bf16.mxu0 %v3230
    %3284 = vmatpush1.bf16.msra.mxu0 %v3229
    %3285 = vmatprep.subr.bf16.mxu0 %v3226
    %3286 = vmatpush1.bf16.msra.mxu0 %v3225
    %3287 = vmatprep.subr.bf16.mxu0 %v3222
    %3288 = vmatpush1.bf16.msra.mxu0 %v3221
    %3289 = vmatprep.subr.bf16.mxu0 %v3218
    %3290 = vmatpush1.bf16.msra.mxu0 %v3217
    %3291 = vmatprep.subr.bf16.mxu0 %v3214
    %3292 = vmatpush1.bf16.msra.mxu0 %v3213
    %3293 = vmatprep.subr.bf16.mxu0 0
    %3294 = vmatpush2.bf16.msra.mxu0 0
    %3295 = vmatprep.subr.bf16.mxu0 0
    %3296 = vmatpush2.bf16.msra.mxu0 0
    %3297 = vmatprep.subr.bf16.mxu0 0
    %3298 = vmatpush2.bf16.msra.mxu0 0
    %3299 = vmatprep.subr.bf16.mxu0 0
    %3300 = vmatpush2.bf16.msra.mxu0 0
    %3301 = vmatprep.subr.bf16.mxu0 0
    %3302 = vmatpush2.bf16.msra.mxu0 0
    %3303 = vmatprep.subr.bf16.mxu0 0
    %3304 = vmatpush2.bf16.msra.mxu0 0
    %3305 = vmatprep.subr.bf16.mxu0 0
    %3306 = vmatpush2.bf16.msra.mxu0 0
    %3307 = vmatprep.subr.bf16.mxu0 0
    %3308 = vmatpush2.bf16.msra.mxu0 0
    %3309 = vmatprep.mubr.bf16.mxu0 0
    %3310 = vmatmul.mubr.bf16.gmra.mxu0 %v3065
    %v3311 = vpop.f32.mrf.mxu0
    %v3312 = vadd.f32 0.0, %v3311
    %v3313 = vpop.f32.mrf.mxu0
    %v3314 = vadd.f32 0.0, %v3313
    %v3315 = vpop.f32.mrf.mxu0
    %v3316 = vadd.f32 0.0, %v3315
    %v3317 = vpop.f32.mrf.mxu0
    %v3318 = vadd.f32 0.0, %v3317
    %3319 = vdwg.mxu0
    %3320 = vmatprep.subr.bf16.mxu0 %v3244
    %3321 = vmatpush1.bf16.msra.mxu0 %v3243
    %3322 = vmatprep.subr.bf16.mxu0 %v3240
    %3323 = vmatpush1.bf16.msra.mxu0 %v3239
    %3324 = vmatprep.subr.bf16.mxu0 %v3236
    %3325 = vmatpush1.bf16.msra.mxu0 %v3235
    %3326 = vmatprep.subr.bf16.mxu0 %v3232
    %3327 = vmatpush1.bf16.msra.mxu0 %v3231
    %3328 = vmatprep.subr.bf16.mxu0 %v3228
    %3329 = vmatpush1.bf16.msra.mxu0 %v3227
    %3330 = vmatprep.subr.bf16.mxu0 %v3224
    %3331 = vmatpush1.bf16.msra.mxu0 %v3223
    %3332 = vmatprep.subr.bf16.mxu0 %v3220
    %3333 = vmatpush1.bf16.msra.mxu0 %v3219
    %3334 = vmatprep.subr.bf16.mxu0 %v3216
    %3335 = vmatpush1.bf16.msra.mxu0 %v3215
    %3336 = vmatprep.subr.bf16.mxu0 0
    %3337 = vmatpush2.bf16.msra.mxu0 0
    %3338 = vmatprep.subr.bf16.mxu0 0
    %3339 = vmatpush2.bf16.msra.mxu0 0
    %3340 = vmatprep.subr.bf16.mxu0 0
    %3341 = vmatpush2.bf16.msra.mxu0 0
    %3342 = vmatprep.subr.bf16.mxu0 0
    %3343 = vmatpush2.bf16.msra.mxu0 0
    %3344 = vmatprep.subr.bf16.mxu0 0
    %3345 = vmatpush2.bf16.msra.mxu0 0
    %3346 = vmatprep.subr.bf16.mxu0 0
    %3347 = vmatpush2.bf16.msra.mxu0 0
    %3348 = vmatprep.subr.bf16.mxu0 0
    %3349 = vmatpush2.bf16.msra.mxu0 0
    %3350 = vmatprep.subr.bf16.mxu0 0
    %3351 = vmatpush2.bf16.msra.mxu0 0
    %3352 = vmatprep.mubr.bf16.mxu0 0
    %3353 = vmatmul.mubr.bf16.gmra.mxu0 %v3065
    %v3354 = vpop.f32.mrf.mxu0
    %v3355 = vadd.f32 0.0, %v3354
    %v3356 = vpop.f32.mrf.mxu0
    %v3357 = vadd.f32 0.0, %v3356
    %v3358 = vpop.f32.mrf.mxu0
    %v3359 = vadd.f32 0.0, %v3358
    %v3360 = vpop.f32.mrf.mxu0
    %v3361 = vadd.f32 0.0, %v3360
    %3362 = vdwg.mxu0
    %v3363 = vadd.f32 %v3077, %v3312
    %v3364 = vadd.f32 %v3078, %v3314
    %v3365 = vadd.f32 %v3079, %v3355
    %v3366 = vadd.f32 %v3080, %v3357
    %v3367 = vadd.f32 %v3081, %v3316
    %v3368 = vadd.f32 %v3082, %v3318
    %v3369 = vadd.f32 %v3083, %v3359
    %v3370 = vadd.f32 %v3084, %v3361
    %v3371 = vmul.f32 %v3363, 0.5
    %v3372 = vmul.f32 %v3367, 0.5
    %v3373 = vtanh.pop %v3371
    %v3374 = vtanh.pop %v3372
    %v3375 = vmul.f32 %v3373, 0.5
    %v3376 = vmul.f32 %v3374, 0.5
    %v3377 = vadd.f32 %v3375, 0.5
    %v3378 = vadd.f32 %v3376, 0.5
    %v3379 = vmul.f32 %v3364, 0.5
    %v3380 = vmul.f32 %v3368, 0.5
    %v3381 = vtanh.pop %v3379
    %v3382 = vtanh.pop %v3380
    %v3383 = vmul.f32 %v3381, 0.5
    %v3384 = vmul.f32 %v3382, 0.5
    %v3385 = vadd.f32 %v3383, 0.5
    %v3386 = vadd.f32 %v3384, 0.5
    %v3387 = vtanh.pop %v3365
    %v3388 = vtanh.pop %v3369
    %v3389 = vmul.f32 %v3366, 0.5
    %v3390 = vmul.f32 %v3370, 0.5
    %v3391 = vtanh.pop %v3389
    %v3392 = vtanh.pop %v3390
    %v3393 = vmul.f32 %v3391, 0.5
    %v3394 = vmul.f32 %v3392, 0.5
    %v3395 = vadd.f32 %v3393, 0.5
    %v3396 = vadd.f32 %v3394, 0.5
    %v3397 = vmul.f32 %v3385, %v3059
    %v3398 = vmul.f32 %v3386, %v3060
    %v3399 = vmul.f32 %v3377, %v3387
    %v3400 = vmul.f32 %v3378, %v3388
    %v3401 = vadd.f32 %v3397, %v3399
    %v3402 = vadd.f32 %v3398, %v3400
    %v3403 = vtanh.pop %v3401
    %v3404 = vtanh.pop %v3402
    %v3405 = vmul.f32 %v3395, %v3403
    %v3406 = vmul.f32 %v3396, %v3404
    %v3407 = vpack.c.bf16 %v3406, %v3405
    %v3409 = vunpack.c.l.b16 %v3407
    %v3410 = vunpack.c.h.b16 %v3407
    %v3411 = vpack.c.b16 %v3409, %v3409
    %v3412 = vpack.c.b16 %v3410, %v3410
    %s3415 = scalar_lea.vmem [#allocation2], 56
    %3416 = vst [vmem:[%s3415] sm:$0xf] %v3411
    %3417 = vst [vmem:[%s3415 + $0x4] sm:$0xf] %v3412
    %v3418 = vld [vmem:[#allocation2] sm:$0xf]
    %v3419 = vld [vmem:[#allocation2 + $0x4] sm:$0xf]
    %v3420 = vld [vmem:[#allocation2 + $0x8] sm:$0xf]
    %v3421 = vld [vmem:[#allocation2 + $0xc] sm:$0xf]
    %v3422 = vld [vmem:[#allocation2 + $0x10] sm:$0xf]
    %v3423 = vld [vmem:[#allocation2 + $0x14] sm:$0xf]
    %v3424 = vld [vmem:[#allocation2 + $0x18] sm:$0xf]
    %v3425 = vld [vmem:[#allocation2 + $0x1c] sm:$0xf]
    %v3426 = vld [vmem:[#allocation2 + $0x20] sm:$0xf]
    %v3427 = vld [vmem:[#allocation2 + $0x24] sm:$0xf]
    %v3428 = vld [vmem:[#allocation2 + $0x28] sm:$0xf]
    %v3429 = vld [vmem:[#allocation2 + $0x2c] sm:$0xf]
    %v3430 = vld [vmem:[#allocation2 + $0x30] sm:$0xf]
    %v3431 = vld [vmem:[#allocation2 + $0x34] sm:$0xf]
    %v3432 = vld [vmem:[#allocation2 + $0x38] sm:$0xf]
    %v3433 = vld [vmem:[#allocation2 + $0x3c] sm:$0xf]
    %v3434 = vld [vmem:[#allocation10] sm:$0xff]
    %v3435 = vld [vmem:[#allocation10 + $0x8] sm:$0xff]
    %v3436 = vld [vmem:[#allocation10 + $0x10] sm:$0xff]
    %v3437 = vld [vmem:[#allocation10 + $0x18] sm:$0xff]
    %v3438 = vld [vmem:[#allocation10 + $0x20] sm:$0xff]
    %v3439 = vld [vmem:[#allocation10 + $0x28] sm:$0xff]
    %v3440 = vld [vmem:[#allocation10 + $0x30] sm:$0xff]
    %v3441 = vld [vmem:[#allocation10 + $0x38] sm:$0xff]
    %v3442 = vld [vmem:[#allocation10 + $0x40] sm:$0xff]
    %v3443 = vld [vmem:[#allocation10 + $0x48] sm:$0xff]
    %v3444 = vld [vmem:[#allocation10 + $0x50] sm:$0xff]
    %v3445 = vld [vmem:[#allocation10 + $0x58] sm:$0xff]
    %v3446 = vld [vmem:[#allocation10 + $0x60] sm:$0xff]
    %v3447 = vld [vmem:[#allocation10 + $0x68] sm:$0xff]
    %v3448 = vld [vmem:[#allocation10 + $0x70] sm:$0xff]
    %v3449 = vld [vmem:[#allocation10 + $0x78] sm:$0xff]
    %v3450 = vld [vmem:[#allocation10 + $0x80] sm:$0xff]
    %v3451 = vld [vmem:[#allocation10 + $0x88] sm:$0xff]
    %v3452 = vld [vmem:[#allocation10 + $0x90] sm:$0xff]
    %v3453 = vld [vmem:[#allocation10 + $0x98] sm:$0xff]
    %v3454 = vld [vmem:[#allocation10 + $0xa0] sm:$0xff]
    %v3455 = vld [vmem:[#allocation10 + $0xa8] sm:$0xff]
    %v3456 = vld [vmem:[#allocation10 + $0xb0] sm:$0xff]
    %v3457 = vld [vmem:[#allocation10 + $0xb8] sm:$0xff]
    %v3458 = vld [vmem:[#allocation10 + $0xc0] sm:$0xff]
    %v3459 = vld [vmem:[#allocation10 + $0xc8] sm:$0xff]
    %v3460 = vld [vmem:[#allocation10 + $0xd0] sm:$0xff]
    %v3461 = vld [vmem:[#allocation10 + $0xd8] sm:$0xff]
    %v3462 = vld [vmem:[#allocation10 + $0xe0] sm:$0xff]
    %v3463 = vld [vmem:[#allocation10 + $0xe8] sm:$0xff]
    %v3464 = vld [vmem:[#allocation10 + $0xf0] sm:$0xff]
    %v3465 = vld [vmem:[#allocation10 + $0xf8] sm:$0xff]
    %v3466 = vld [vmem:[%s6] sm:$0xf]
    %v3468 = vlaneseq
    %v3469 = vshrl.u32 %v3468, 7
    %v3470 = vsub.s32 0, %v3469
    %v3471 = vrot.slane %v3466, %v3470
    %v3472 = vlaneseq
    %v3473 = vshrl.u32 %v3472, 7
    %v3474 = vsub.s32 1, %v3473
    %v3475 = vrot.slane %v3466, %v3474
    %v3476 = vlaneseq
    %v3477 = vshrl.u32 %v3476, 7
    %v3478 = vsub.s32 2, %v3477
    %v3479 = vrot.slane %v3466, %v3478
    %v3480 = vlaneseq
    %v3481 = vshrl.u32 %v3480, 7
    %v3482 = vsub.s32 3, %v3481
    %v3483 = vrot.slane %v3466, %v3482
    %v3504 = vunpack.c.l.b16 %v3418
    %v3505 = vunpack.c.l.b16 %v3419
    %v3506 = vunpack.c.l.b16 %v3420
    %v3507 = vunpack.c.l.b16 %v3421
    %v3508 = vunpack.c.l.b16 %v3422
    %v3509 = vunpack.c.l.b16 %v3423
    %v3510 = vunpack.c.l.b16 %v3424
    %v3511 = vunpack.c.l.b16 %v3425
    %v3512 = vunpack.c.l.b16 %v3426
    %v3513 = vunpack.c.l.b16 %v3427
    %v3514 = vunpack.c.l.b16 %v3428
    %v3515 = vunpack.c.l.b16 %v3429
    %v3516 = vunpack.c.l.b16 %v3430
    %v3517 = vunpack.c.l.b16 %v3431
    %v3518 = vunpack.c.l.b16 %v3432
    %v3519 = vunpack.c.l.b16 %v3433
    %v3520 = vpack.c.b16 %v3505, %v3504
    %v3521 = vpack.c.b16 %v3507, %v3506
    %v3522 = vpack.c.b16 %v3509, %v3508
    %v3523 = vpack.c.b16 %v3511, %v3510
    %v3524 = vpack.c.b16 %v3513, %v3512
    %v3525 = vpack.c.b16 %v3515, %v3514
    %v3526 = vpack.c.b16 %v3517, %v3516
    %v3527 = vpack.c.b16 %v3519, %v3518
    %v3568 = vunpack.c.l.b16 %v3434
    %v3569 = vunpack.c.h.b16 %v3434
    %v3570 = vunpack.c.l.b16 %v3435
    %v3571 = vunpack.c.h.b16 %v3435
    %v3572 = vunpack.c.l.b16 %v3436
    %v3573 = vunpack.c.h.b16 %v3436
    %v3574 = vunpack.c.l.b16 %v3437
    %v3575 = vunpack.c.h.b16 %v3437
    %v3576 = vunpack.c.l.b16 %v3438
    %v3577 = vunpack.c.h.b16 %v3438
    %v3578 = vunpack.c.l.b16 %v3439
    %v3579 = vunpack.c.h.b16 %v3439
    %v3580 = vunpack.c.l.b16 %v3440
    %v3581 = vunpack.c.h.b16 %v3440
    %v3582 = vunpack.c.l.b16 %v3441
    %v3583 = vunpack.c.h.b16 %v3441
    %v3584 = vunpack.c.l.b16 %v3442
    %v3585 = vunpack.c.h.b16 %v3442
    %v3586 = vunpack.c.l.b16 %v3443
    %v3587 = vunpack.c.h.b16 %v3443
    %v3588 = vunpack.c.l.b16 %v3444
    %v3589 = vunpack.c.h.b16 %v3444
    %v3590 = vunpack.c.l.b16 %v3445
    %v3591 = vunpack.c.h.b16 %v3445
    %v3592 = vunpack.c.l.b16 %v3446
    %v3593 = vunpack.c.h.b16 %v3446
    %v3594 = vunpack.c.l.b16 %v3447
    %v3595 = vunpack.c.h.b16 %v3447
    %v3596 = vunpack.c.l.b16 %v3448
    %v3597 = vunpack.c.h.b16 %v3448
    %v3598 = vunpack.c.l.b16 %v3449
    %v3599 = vunpack.c.h.b16 %v3449
    %v3600 = vunpack.c.l.b16 %v3450
    %v3601 = vunpack.c.h.b16 %v3450
    %v3602 = vunpack.c.l.b16 %v3451
    %v3603 = vunpack.c.h.b16 %v3451
    %v3604 = vunpack.c.l.b16 %v3452
    %v3605 = vunpack.c.h.b16 %v3452
    %v3606 = vunpack.c.l.b16 %v3453
    %v3607 = vunpack.c.h.b16 %v3453
    %v3608 = vunpack.c.l.b16 %v3454
    %v3609 = vunpack.c.h.b16 %v3454
    %v3610 = vunpack.c.l.b16 %v3455
    %v3611 = vunpack.c.h.b16 %v3455
    %v3612 = vunpack.c.l.b16 %v3456
    %v3613 = vunpack.c.h.b16 %v3456
    %v3614 = vunpack.c.l.b16 %v3457
    %v3615 = vunpack.c.h.b16 %v3457
    %v3616 = vunpack.c.l.b16 %v3458
    %v3617 = vunpack.c.h.b16 %v3458
    %v3618 = vunpack.c.l.b16 %v3459
    %v3619 = vunpack.c.h.b16 %v3459
    %v3620 = vunpack.c.l.b16 %v3460
    %v3621 = vunpack.c.h.b16 %v3460
    %v3622 = vunpack.c.l.b16 %v3461
    %v3623 = vunpack.c.h.b16 %v3461
    %v3624 = vunpack.c.l.b16 %v3462
    %v3625 = vunpack.c.h.b16 %v3462
    %v3626 = vunpack.c.l.b16 %v3463
    %v3627 = vunpack.c.h.b16 %v3463
    %v3628 = vunpack.c.l.b16 %v3464
    %v3629 = vunpack.c.h.b16 %v3464
    %v3630 = vunpack.c.l.b16 %v3465
    %v3631 = vunpack.c.h.b16 %v3465
    %v3632 = vpack.c.b16 %v3572, %v3568
    %v3633 = vpack.c.b16 %v3573, %v3569
    %v3634 = vpack.c.b16 %v3574, %v3570
    %v3635 = vpack.c.b16 %v3575, %v3571
    %v3636 = vpack.c.b16 %v3580, %v3576
    %v3637 = vpack.c.b16 %v3581, %v3577
    %v3638 = vpack.c.b16 %v3582, %v3578
    %v3639 = vpack.c.b16 %v3583, %v3579
    %v3640 = vpack.c.b16 %v3588, %v3584
    %v3641 = vpack.c.b16 %v3589, %v3585
    %v3642 = vpack.c.b16 %v3590, %v3586
    %v3643 = vpack.c.b16 %v3591, %v3587
    %v3644 = vpack.c.b16 %v3596, %v3592
    %v3645 = vpack.c.b16 %v3597, %v3593
    %v3646 = vpack.c.b16 %v3598, %v3594
    %v3647 = vpack.c.b16 %v3599, %v3595
    %v3648 = vpack.c.b16 %v3604, %v3600
    %v3649 = vpack.c.b16 %v3605, %v3601
    %v3650 = vpack.c.b16 %v3606, %v3602
    %v3651 = vpack.c.b16 %v3607, %v3603
    %v3652 = vpack.c.b16 %v3612, %v3608
    %v3653 = vpack.c.b16 %v3613, %v3609
    %v3654 = vpack.c.b16 %v3614, %v3610
    %v3655 = vpack.c.b16 %v3615, %v3611
    %v3656 = vpack.c.b16 %v3620, %v3616
    %v3657 = vpack.c.b16 %v3621, %v3617
    %v3658 = vpack.c.b16 %v3622, %v3618
    %v3659 = vpack.c.b16 %v3623, %v3619
    %v3660 = vpack.c.b16 %v3628, %v3624
    %v3661 = vpack.c.b16 %v3629, %v3625
    %v3662 = vpack.c.b16 %v3630, %v3626
    %v3663 = vpack.c.b16 %v3631, %v3627
    %3696 = vmatprep.subr.bf16.mxu0 %v3661
    %3697 = vmatpush1.bf16.msra.mxu0 %v3660
    %3698 = vmatprep.subr.bf16.mxu0 %v3657
    %3699 = vmatpush1.bf16.msra.mxu0 %v3656
    %3700 = vmatprep.subr.bf16.mxu0 %v3653
    %3701 = vmatpush1.bf16.msra.mxu0 %v3652
    %3702 = vmatprep.subr.bf16.mxu0 %v3649
    %3703 = vmatpush1.bf16.msra.mxu0 %v3648
    %3704 = vmatprep.subr.bf16.mxu0 %v3645
    %3705 = vmatpush1.bf16.msra.mxu0 %v3644
    %3706 = vmatprep.subr.bf16.mxu0 %v3641
    %3707 = vmatpush1.bf16.msra.mxu0 %v3640
    %3708 = vmatprep.subr.bf16.mxu0 %v3637
    %3709 = vmatpush1.bf16.msra.mxu0 %v3636
    %3710 = vmatprep.subr.bf16.mxu0 %v3633
    %3711 = vmatpush1.bf16.msra.mxu0 %v3632
    %3712 = vmatprep.subr.bf16.mxu0 0
    %3713 = vmatpush2.bf16.msra.mxu0 0
    %3714 = vmatprep.subr.bf16.mxu0 0
    %3715 = vmatpush2.bf16.msra.mxu0 0
    %3716 = vmatprep.subr.bf16.mxu0 0
    %3717 = vmatpush2.bf16.msra.mxu0 0
    %3718 = vmatprep.subr.bf16.mxu0 0
    %3719 = vmatpush2.bf16.msra.mxu0 0
    %3720 = vmatprep.subr.bf16.mxu0 0
    %3721 = vmatpush2.bf16.msra.mxu0 0
    %3722 = vmatprep.subr.bf16.mxu0 0
    %3723 = vmatpush2.bf16.msra.mxu0 0
    %3724 = vmatprep.subr.bf16.mxu0 0
    %3725 = vmatpush2.bf16.msra.mxu0 0
    %3726 = vmatprep.subr.bf16.mxu0 0
    %3727 = vmatpush2.bf16.msra.mxu0 0
    %3728 = vmatprep.mubr.bf16.mxu0 0
    %3729 = vmatmul.mubr.bf16.gmra.mxu0 %v3520
    %v3730 = vpop.f32.mrf.mxu0
    %v3731 = vadd.f32 %v3471, %v3730
    %v3732 = vpop.f32.mrf.mxu0
    %v3733 = vadd.f32 %v3475, %v3732
    %v3734 = vpop.f32.mrf.mxu0
    %v3735 = vadd.f32 %v3471, %v3734
    %v3736 = vpop.f32.mrf.mxu0
    %v3737 = vadd.f32 %v3475, %v3736
    %3738 = vmatprep.mubr.bf16.mxu0 0
    %3739 = vmatmul.mubr.bf16.gmra.mxu0 %v3521
    %v3740 = vpop.f32.mrf.mxu0
    %v3741 = vadd.f32 %v3471, %v3740
    %v3742 = vpop.f32.mrf.mxu0
    %v3743 = vadd.f32 %v3475, %v3742
    %v3744 = vpop.f32.mrf.mxu0
    %v3745 = vadd.f32 %v3471, %v3744
    %v3746 = vpop.f32.mrf.mxu0
    %v3747 = vadd.f32 %v3475, %v3746
    %3748 = vmatprep.mubr.bf16.mxu0 0
    %3749 = vmatmul.mubr.bf16.gmra.mxu0 %v3522
    %v3750 = vpop.f32.mrf.mxu0
    %v3751 = vadd.f32 %v3471, %v3750
    %v3752 = vpop.f32.mrf.mxu0
    %v3753 = vadd.f32 %v3475, %v3752
    %v3754 = vpop.f32.mrf.mxu0
    %v3755 = vadd.f32 %v3471, %v3754
    %v3756 = vpop.f32.mrf.mxu0
    %v3757 = vadd.f32 %v3475, %v3756
    %3758 = vmatprep.mubr.bf16.mxu0 0
    %3759 = vmatmul.mubr.bf16.gmra.mxu0 %v3523
    %v3760 = vpop.f32.mrf.mxu0
    %v3761 = vadd.f32 %v3471, %v3760
    %v3762 = vpop.f32.mrf.mxu0
    %v3763 = vadd.f32 %v3475, %v3762
    %v3764 = vpop.f32.mrf.mxu0
    %v3765 = vadd.f32 %v3471, %v3764
    %v3766 = vpop.f32.mrf.mxu0
    %v3767 = vadd.f32 %v3475, %v3766
    %3768 = vmatprep.mubr.bf16.mxu0 0
    %3769 = vmatmul.mubr.bf16.gmra.mxu0 %v3524
    %v3770 = vpop.f32.mrf.mxu0
    %v3771 = vadd.f32 %v3471, %v3770
    %v3772 = vpop.f32.mrf.mxu0
    %v3773 = vadd.f32 %v3475, %v3772
    %v3774 = vpop.f32.mrf.mxu0
    %v3775 = vadd.f32 %v3471, %v3774
    %v3776 = vpop.f32.mrf.mxu0
    %v3777 = vadd.f32 %v3475, %v3776
    %3778 = vmatprep.mubr.bf16.mxu0 0
    %3779 = vmatmul.mubr.bf16.gmra.mxu0 %v3525
    %v3780 = vpop.f32.mrf.mxu0
    %v3781 = vadd.f32 %v3471, %v3780
    %v3782 = vpop.f32.mrf.mxu0
    %v3783 = vadd.f32 %v3475, %v3782
    %v3784 = vpop.f32.mrf.mxu0
    %v3785 = vadd.f32 %v3471, %v3784
    %v3786 = vpop.f32.mrf.mxu0
    %v3787 = vadd.f32 %v3475, %v3786
    %3788 = vmatprep.mubr.bf16.mxu0 0
    %3789 = vmatmul.mubr.bf16.gmra.mxu0 %v3526
    %v3790 = vpop.f32.mrf.mxu0
    %v3791 = vadd.f32 %v3471, %v3790
    %v3792 = vpop.f32.mrf.mxu0
    %v3793 = vadd.f32 %v3475, %v3792
    %v3794 = vpop.f32.mrf.mxu0
    %v3795 = vadd.f32 %v3471, %v3794
    %v3796 = vpop.f32.mrf.mxu0
    %v3797 = vadd.f32 %v3475, %v3796
    %3798 = vmatprep.mubr.bf16.mxu0 0
    %3799 = vmatmul.mubr.bf16.gmra.mxu0 %v3527
    %v3800 = vpop.f32.mrf.mxu0
    %v3801 = vadd.f32 %v3471, %v3800
    %v3802 = vpop.f32.mrf.mxu0
    %v3803 = vadd.f32 %v3475, %v3802
    %v3804 = vpop.f32.mrf.mxu0
    %v3805 = vadd.f32 %v3471, %v3804
    %v3806 = vpop.f32.mrf.mxu0
    %v3807 = vadd.f32 %v3475, %v3806
    %3808 = vdwg.mxu0
    %3809 = vmatprep.subr.bf16.mxu0 %v3663
    %3810 = vmatpush1.bf16.msra.mxu0 %v3662
    %3811 = vmatprep.subr.bf16.mxu0 %v3659
    %3812 = vmatpush1.bf16.msra.mxu0 %v3658
    %3813 = vmatprep.subr.bf16.mxu0 %v3655
    %3814 = vmatpush1.bf16.msra.mxu0 %v3654
    %3815 = vmatprep.subr.bf16.mxu0 %v3651
    %3816 = vmatpush1.bf16.msra.mxu0 %v3650
    %3817 = vmatprep.subr.bf16.mxu0 %v3647
    %3818 = vmatpush1.bf16.msra.mxu0 %v3646
    %3819 = vmatprep.subr.bf16.mxu0 %v3643
    %3820 = vmatpush1.bf16.msra.mxu0 %v3642
    %3821 = vmatprep.subr.bf16.mxu0 %v3639
    %3822 = vmatpush1.bf16.msra.mxu0 %v3638
    %3823 = vmatprep.subr.bf16.mxu0 %v3635
    %3824 = vmatpush1.bf16.msra.mxu0 %v3634
    %3825 = vmatprep.subr.bf16.mxu0 0
    %3826 = vmatpush2.bf16.msra.mxu0 0
    %3827 = vmatprep.subr.bf16.mxu0 0
    %3828 = vmatpush2.bf16.msra.mxu0 0
    %3829 = vmatprep.subr.bf16.mxu0 0
    %3830 = vmatpush2.bf16.msra.mxu0 0
    %3831 = vmatprep.subr.bf16.mxu0 0
    %3832 = vmatpush2.bf16.msra.mxu0 0
    %3833 = vmatprep.subr.bf16.mxu0 0
    %3834 = vmatpush2.bf16.msra.mxu0 0
    %3835 = vmatprep.subr.bf16.mxu0 0
    %3836 = vmatpush2.bf16.msra.mxu0 0
    %3837 = vmatprep.subr.bf16.mxu0 0
    %3838 = vmatpush2.bf16.msra.mxu0 0
    %3839 = vmatprep.subr.bf16.mxu0 0
    %3840 = vmatpush2.bf16.msra.mxu0 0
    %3841 = vmatprep.mubr.bf16.mxu0 0
    %3842 = vmatmul.mubr.bf16.gmra.mxu0 %v3520
    %v3843 = vpop.f32.mrf.mxu0
    %v3844 = vadd.f32 %v3479, %v3843
    %v3845 = vpop.f32.mrf.mxu0
    %v3846 = vadd.f32 %v3483, %v3845
    %v3847 = vpop.f32.mrf.mxu0
    %v3848 = vadd.f32 %v3479, %v3847
    %v3849 = vpop.f32.mrf.mxu0
    %v3850 = vadd.f32 %v3483, %v3849
    %3851 = vmatprep.mubr.bf16.mxu0 0
    %3852 = vmatmul.mubr.bf16.gmra.mxu0 %v3521
    %v3853 = vpop.f32.mrf.mxu0
    %v3854 = vadd.f32 %v3479, %v3853
    %v3855 = vpop.f32.mrf.mxu0
    %v3856 = vadd.f32 %v3483, %v3855
    %v3857 = vpop.f32.mrf.mxu0
    %v3858 = vadd.f32 %v3479, %v3857
    %v3859 = vpop.f32.mrf.mxu0
    %v3860 = vadd.f32 %v3483, %v3859
    %3861 = vmatprep.mubr.bf16.mxu0 0
    %3862 = vmatmul.mubr.bf16.gmra.mxu0 %v3522
    %v3863 = vpop.f32.mrf.mxu0
    %v3864 = vadd.f32 %v3479, %v3863
    %v3865 = vpop.f32.mrf.mxu0
    %v3866 = vadd.f32 %v3483, %v3865
    %v3867 = vpop.f32.mrf.mxu0
    %v3868 = vadd.f32 %v3479, %v3867
    %v3869 = vpop.f32.mrf.mxu0
    %v3870 = vadd.f32 %v3483, %v3869
    %3871 = vmatprep.mubr.bf16.mxu0 0
    %3872 = vmatmul.mubr.bf16.gmra.mxu0 %v3523
    %v3873 = vpop.f32.mrf.mxu0
    %v3874 = vadd.f32 %v3479, %v3873
    %v3875 = vpop.f32.mrf.mxu0
    %v3876 = vadd.f32 %v3483, %v3875
    %v3877 = vpop.f32.mrf.mxu0
    %v3878 = vadd.f32 %v3479, %v3877
    %v3879 = vpop.f32.mrf.mxu0
    %v3880 = vadd.f32 %v3483, %v3879
    %3881 = vmatprep.mubr.bf16.mxu0 0
    %3882 = vmatmul.mubr.bf16.gmra.mxu0 %v3524
    %v3883 = vpop.f32.mrf.mxu0
    %v3884 = vadd.f32 %v3479, %v3883
    %v3885 = vpop.f32.mrf.mxu0
    %v3886 = vadd.f32 %v3483, %v3885
    %v3887 = vpop.f32.mrf.mxu0
    %v3888 = vadd.f32 %v3479, %v3887
    %v3889 = vpop.f32.mrf.mxu0
    %v3890 = vadd.f32 %v3483, %v3889
    %3891 = vmatprep.mubr.bf16.mxu0 0
    %3892 = vmatmul.mubr.bf16.gmra.mxu0 %v3525
    %v3893 = vpop.f32.mrf.mxu0
    %v3894 = vadd.f32 %v3479, %v3893
    %v3895 = vpop.f32.mrf.mxu0
    %v3896 = vadd.f32 %v3483, %v3895
    %v3897 = vpop.f32.mrf.mxu0
    %v3898 = vadd.f32 %v3479, %v3897
    %v3899 = vpop.f32.mrf.mxu0
    %v3900 = vadd.f32 %v3483, %v3899
    %3901 = vmatprep.mubr.bf16.mxu0 0
    %3902 = vmatmul.mubr.bf16.gmra.mxu0 %v3526
    %v3903 = vpop.f32.mrf.mxu0
    %v3904 = vadd.f32 %v3479, %v3903
    %v3905 = vpop.f32.mrf.mxu0
    %v3906 = vadd.f32 %v3483, %v3905
    %v3907 = vpop.f32.mrf.mxu0
    %v3908 = vadd.f32 %v3479, %v3907
    %v3909 = vpop.f32.mrf.mxu0
    %v3910 = vadd.f32 %v3483, %v3909
    %3911 = vmatprep.mubr.bf16.mxu0 0
    %3912 = vmatmul.mubr.bf16.gmra.mxu0 %v3527
    %v3913 = vpop.f32.mrf.mxu0
    %v3914 = vadd.f32 %v3479, %v3913
    %v3915 = vpop.f32.mrf.mxu0
    %v3916 = vadd.f32 %v3483, %v3915
    %v3917 = vpop.f32.mrf.mxu0
    %v3918 = vadd.f32 %v3479, %v3917
    %v3919 = vpop.f32.mrf.mxu0
    %v3920 = vadd.f32 %v3483, %v3919
    %3921 = vdwg.mxu0
    %3922 = vst [vmem:[#allocation3] sm:$0xff] %v3731
    %3923 = vst [vmem:[#allocation3 + $0x8] sm:$0xff] %v3733
    %3924 = vst [vmem:[#allocation3 + $0x10] sm:$0xff] %v3844
    %3925 = vst [vmem:[#allocation3 + $0x18] sm:$0xff] %v3846
    %3926 = vst [vmem:[#allocation3 + $0x20] sm:$0xff] %v3735
    %3927 = vst [vmem:[#allocation3 + $0x28] sm:$0xff] %v3737
    %3928 = vst [vmem:[#allocation3 + $0x30] sm:$0xff] %v3848
    %3929 = vst [vmem:[#allocation3 + $0x38] sm:$0xff] %v3850
    %3930 = vst [vmem:[#allocation3 + $0x40] sm:$0xff] %v3741
    %3931 = vst [vmem:[#allocation3 + $0x48] sm:$0xff] %v3743
    %3932 = vst [vmem:[#allocation3 + $0x50] sm:$0xff] %v3854
    %3933 = vst [vmem:[#allocation3 + $0x58] sm:$0xff] %v3856
    %3934 = vst [vmem:[#allocation3 + $0x60] sm:$0xff] %v3745
    %3935 = vst [vmem:[#allocation3 + $0x68] sm:$0xff] %v3747
    %3936 = vst [vmem:[#allocation3 + $0x70] sm:$0xff] %v3858
    %3937 = vst [vmem:[#allocation3 + $0x78] sm:$0xff] %v3860
    %3938 = vst [vmem:[#allocation3 + $0x80] sm:$0xff] %v3751
    %3939 = vst [vmem:[#allocation3 + $0x88] sm:$0xff] %v3753
    %3940 = vst [vmem:[#allocation3 + $0x90] sm:$0xff] %v3864
    %3941 = vst [vmem:[#allocation3 + $0x98] sm:$0xff] %v3866
    %3942 = vst [vmem:[#allocation3 + $0xa0] sm:$0xff] %v3755
    %3943 = vst [vmem:[#allocation3 + $0xa8] sm:$0xff] %v3757
    %3944 = vst [vmem:[#allocation3 + $0xb0] sm:$0xff] %v3868
    %3945 = vst [vmem:[#allocation3 + $0xb8] sm:$0xff] %v3870
    %3946 = vst [vmem:[#allocation3 + $0xc0] sm:$0xff] %v3761
    %3947 = vst [vmem:[#allocation3 + $0xc8] sm:$0xff] %v3763
    %3948 = vst [vmem:[#allocation3 + $0xd0] sm:$0xff] %v3874
    %3949 = vst [vmem:[#allocation3 + $0xd8] sm:$0xff] %v3876
    %3950 = vst [vmem:[#allocation3 + $0xe0] sm:$0xff] %v3765
    %3951 = vst [vmem:[#allocation3 + $0xe8] sm:$0xff] %v3767
    %3952 = vst [vmem:[#allocation3 + $0xf0] sm:$0xff] %v3878
    %3953 = vst [vmem:[#allocation3 + $0xf8] sm:$0xff] %v3880
    %3954 = vst [vmem:[#allocation3 + $0x100] sm:$0xff] %v3771
    %3955 = vst [vmem:[#allocation3 + $0x108] sm:$0xff] %v3773
    %3956 = vst [vmem:[#allocation3 + $0x110] sm:$0xff] %v3884
    %3957 = vst [vmem:[#allocation3 + $0x118] sm:$0xff] %v3886
    %3958 = vst [vmem:[#allocation3 + $0x120] sm:$0xff] %v3775
    %3959 = vst [vmem:[#allocation3 + $0x128] sm:$0xff] %v3777
    %3960 = vst [vmem:[#allocation3 + $0x130] sm:$0xff] %v3888
    %3961 = vst [vmem:[#allocation3 + $0x138] sm:$0xff] %v3890
    %3962 = vst [vmem:[#allocation3 + $0x140] sm:$0xff] %v3781
    %3963 = vst [vmem:[#allocation3 + $0x148] sm:$0xff] %v3783
    %3964 = vst [vmem:[#allocation3 + $0x150] sm:$0xff] %v3894
    %3965 = vst [vmem:[#allocation3 + $0x158] sm:$0xff] %v3896
    %3966 = vst [vmem:[#allocation3 + $0x160] sm:$0xff] %v3785
    %3967 = vst [vmem:[#allocation3 + $0x168] sm:$0xff] %v3787
    %3968 = vst [vmem:[#allocation3 + $0x170] sm:$0xff] %v3898
    %3969 = vst [vmem:[#allocation3 + $0x178] sm:$0xff] %v3900
    %3970 = vst [vmem:[#allocation3 + $0x180] sm:$0xff] %v3791
    %3971 = vst [vmem:[#allocation3 + $0x188] sm:$0xff] %v3793
    %3972 = vst [vmem:[#allocation3 + $0x190] sm:$0xff] %v3904
    %3973 = vst [vmem:[#allocation3 + $0x198] sm:$0xff] %v3906
    %3974 = vst [vmem:[#allocation3 + $0x1a0] sm:$0xff] %v3795
    %3975 = vst [vmem:[#allocation3 + $0x1a8] sm:$0xff] %v3797
    %3976 = vst [vmem:[#allocation3 + $0x1b0] sm:$0xff] %v3908
    %3977 = vst [vmem:[#allocation3 + $0x1b8] sm:$0xff] %v3910
    %3978 = vst [vmem:[#allocation3 + $0x1c0] sm:$0xff] %v3801
    %3979 = vst [vmem:[#allocation3 + $0x1c8] sm:$0xff] %v3803
    %3980 = vst [vmem:[#allocation3 + $0x1d0] sm:$0xff] %v3914
    %3981 = vst [vmem:[#allocation3 + $0x1d8] sm:$0xff] %v3916
    %3982 = vst [vmem:[#allocation3 + $0x1e0] sm:$0xff] %v3805
    %3983 = vst [vmem:[#allocation3 + $0x1e8] sm:$0xff] %v3807
    %3984 = vst [vmem:[#allocation3 + $0x1f0] sm:$0xff] %v3918
    %3985 = vst [vmem:[#allocation3 + $0x1f8] sm:$0xff] %v3920
    %v3986 = vld [vmem:[#allocation3] sm:$0xff]
    %v3987 = vld [vmem:[#allocation3 + $0x8] sm:$0xff]
    %v3988 = vld [vmem:[#allocation3 + $0x10] sm:$0xff]
    %v3989 = vld [vmem:[#allocation3 + $0x18] sm:$0xff]
    %v3990 = vld [vmem:[#allocation3 + $0x20] sm:$0xff]
    %v3991 = vld [vmem:[#allocation3 + $0x28] sm:$0xff]
    %v3992 = vld [vmem:[#allocation3 + $0x30] sm:$0xff]
    %v3993 = vld [vmem:[#allocation3 + $0x38] sm:$0xff]
    %v3994 = vld [vmem:[#allocation12] sm:$0xff]
    %v3995 = vld [vmem:[#allocation12 + $0x8] sm:$0xff]
    %v3996 = vld [vmem:[#allocation12 + $0x10] sm:$0xff]
    %v3997 = vld [vmem:[#allocation12 + $0x18] sm:$0xff]
    %v3998 = vld [vmem:[#allocation12 + $0x20] sm:$0xff]
    %v3999 = vld [vmem:[#allocation12 + $0x28] sm:$0xff]
    %v4000 = vld [vmem:[#allocation12 + $0x30] sm:$0xff]
    %v4001 = vld [vmem:[#allocation12 + $0x38] sm:$0xff]
    %v4002 = vld [vmem:[#allocation12 + $0x40] sm:$0xff]
    %v4003 = vld [vmem:[#allocation12 + $0x48] sm:$0xff]
    %v4004 = vld [vmem:[#allocation12 + $0x50] sm:$0xff]
    %v4005 = vld [vmem:[#allocation12 + $0x58] sm:$0xff]
    %v4006 = vld [vmem:[#allocation12 + $0x60] sm:$0xff]
    %v4007 = vld [vmem:[#allocation12 + $0x68] sm:$0xff]
    %v4008 = vld [vmem:[#allocation12 + $0x70] sm:$0xff]
    %v4009 = vld [vmem:[#allocation12 + $0x78] sm:$0xff]
    %v4010 = vld [vmem:[#allocation12 + $0x80] sm:$0xff]
    %v4011 = vld [vmem:[#allocation12 + $0x88] sm:$0xff]
    %v4012 = vld [vmem:[#allocation12 + $0x90] sm:$0xff]
    %v4013 = vld [vmem:[#allocation12 + $0x98] sm:$0xff]
    %v4014 = vld [vmem:[#allocation12 + $0xa0] sm:$0xff]
    %v4015 = vld [vmem:[#allocation12 + $0xa8] sm:$0xff]
    %v4016 = vld [vmem:[#allocation12 + $0xb0] sm:$0xff]
    %v4017 = vld [vmem:[#allocation12 + $0xb8] sm:$0xff]
    %v4018 = vld [vmem:[#allocation12 + $0xc0] sm:$0xff]
    %v4019 = vld [vmem:[#allocation12 + $0xc8] sm:$0xff]
    %v4020 = vld [vmem:[#allocation12 + $0xd0] sm:$0xff]
    %v4021 = vld [vmem:[#allocation12 + $0xd8] sm:$0xff]
    %v4022 = vld [vmem:[#allocation12 + $0xe0] sm:$0xff]
    %v4023 = vld [vmem:[#allocation12 + $0xe8] sm:$0xff]
    %v4024 = vld [vmem:[#allocation12 + $0xf0] sm:$0xff]
    %v4025 = vld [vmem:[#allocation12 + $0xf8] sm:$0xff]
    %v4058 = vunpack.c.l.b16 %v3994
    %v4059 = vunpack.c.h.b16 %v3994
    %v4060 = vunpack.c.l.b16 %v3995
    %v4061 = vunpack.c.h.b16 %v3995
    %v4062 = vunpack.c.l.b16 %v3996
    %v4063 = vunpack.c.h.b16 %v3996
    %v4064 = vunpack.c.l.b16 %v3997
    %v4065 = vunpack.c.h.b16 %v3997
    %v4066 = vunpack.c.l.b16 %v3998
    %v4067 = vunpack.c.h.b16 %v3998
    %v4068 = vunpack.c.l.b16 %v3999
    %v4069 = vunpack.c.h.b16 %v3999
    %v4070 = vunpack.c.l.b16 %v4000
    %v4071 = vunpack.c.h.b16 %v4000
    %v4072 = vunpack.c.l.b16 %v4001
    %v4073 = vunpack.c.h.b16 %v4001
    %v4074 = vunpack.c.l.b16 %v4002
    %v4075 = vunpack.c.h.b16 %v4002
    %v4076 = vunpack.c.l.b16 %v4003
    %v4077 = vunpack.c.h.b16 %v4003
    %v4078 = vunpack.c.l.b16 %v4004
    %v4079 = vunpack.c.h.b16 %v4004
    %v4080 = vunpack.c.l.b16 %v4005
    %v4081 = vunpack.c.h.b16 %v4005
    %v4082 = vunpack.c.l.b16 %v4006
    %v4083 = vunpack.c.h.b16 %v4006
    %v4084 = vunpack.c.l.b16 %v4007
    %v4085 = vunpack.c.h.b16 %v4007
    %v4086 = vunpack.c.l.b16 %v4008
    %v4087 = vunpack.c.h.b16 %v4008
    %v4088 = vunpack.c.l.b16 %v4009
    %v4089 = vunpack.c.h.b16 %v4009
    %v4090 = vunpack.c.l.b16 %v4010
    %v4091 = vunpack.c.h.b16 %v4010
    %v4092 = vunpack.c.l.b16 %v4011
    %v4093 = vunpack.c.h.b16 %v4011
    %v4094 = vunpack.c.l.b16 %v4012
    %v4095 = vunpack.c.h.b16 %v4012
    %v4096 = vunpack.c.l.b16 %v4013
    %v4097 = vunpack.c.h.b16 %v4013
    %v4098 = vunpack.c.l.b16 %v4014
    %v4099 = vunpack.c.h.b16 %v4014
    %v4100 = vunpack.c.l.b16 %v4015
    %v4101 = vunpack.c.h.b16 %v4015
    %v4102 = vunpack.c.l.b16 %v4016
    %v4103 = vunpack.c.h.b16 %v4016
    %v4104 = vunpack.c.l.b16 %v4017
    %v4105 = vunpack.c.h.b16 %v4017
    %v4106 = vunpack.c.l.b16 %v4018
    %v4107 = vunpack.c.h.b16 %v4018
    %v4108 = vunpack.c.l.b16 %v4019
    %v4109 = vunpack.c.h.b16 %v4019
    %v4110 = vunpack.c.l.b16 %v4020
    %v4111 = vunpack.c.h.b16 %v4020
    %v4112 = vunpack.c.l.b16 %v4021
    %v4113 = vunpack.c.h.b16 %v4021
    %v4114 = vunpack.c.l.b16 %v4022
    %v4115 = vunpack.c.h.b16 %v4022
    %v4116 = vunpack.c.l.b16 %v4023
    %v4117 = vunpack.c.h.b16 %v4023
    %v4118 = vunpack.c.l.b16 %v4024
    %v4119 = vunpack.c.h.b16 %v4024
    %v4120 = vunpack.c.l.b16 %v4025
    %v4121 = vunpack.c.h.b16 %v4025
    %v4122 = vpack.c.b16 %v4062, %v4058
    %v4123 = vpack.c.b16 %v4063, %v4059
    %v4124 = vpack.c.b16 %v4064, %v4060
    %v4125 = vpack.c.b16 %v4065, %v4061
    %v4126 = vpack.c.b16 %v4070, %v4066
    %v4127 = vpack.c.b16 %v4071, %v4067
    %v4128 = vpack.c.b16 %v4072, %v4068
    %v4129 = vpack.c.b16 %v4073, %v4069
    %v4130 = vpack.c.b16 %v4078, %v4074
    %v4131 = vpack.c.b16 %v4079, %v4075
    %v4132 = vpack.c.b16 %v4080, %v4076
    %v4133 = vpack.c.b16 %v4081, %v4077
    %v4134 = vpack.c.b16 %v4086, %v4082
    %v4135 = vpack.c.b16 %v4087, %v4083
    %v4136 = vpack.c.b16 %v4088, %v4084
    %v4137 = vpack.c.b16 %v4089, %v4085
    %v4138 = vpack.c.b16 %v4094, %v4090
    %v4139 = vpack.c.b16 %v4095, %v4091
    %v4140 = vpack.c.b16 %v4096, %v4092
    %v4141 = vpack.c.b16 %v4097, %v4093
    %v4142 = vpack.c.b16 %v4102, %v4098
    %v4143 = vpack.c.b16 %v4103, %v4099
    %v4144 = vpack.c.b16 %v4104, %v4100
    %v4145 = vpack.c.b16 %v4105, %v4101
    %v4146 = vpack.c.b16 %v4110, %v4106
    %v4147 = vpack.c.b16 %v4111, %v4107
    %v4148 = vpack.c.b16 %v4112, %v4108
    %v4149 = vpack.c.b16 %v4113, %v4109
    %v4150 = vpack.c.b16 %v4118, %v4114
    %v4151 = vpack.c.b16 %v4119, %v4115
    %v4152 = vpack.c.b16 %v4120, %v4116
    %v4153 = vpack.c.b16 %v4121, %v4117
    %4186 = vmatprep.subr.bf16.mxu0 %v4151
    %4187 = vmatpush1.bf16.msra.mxu0 %v4150
    %4188 = vmatprep.subr.bf16.mxu0 %v4147
    %4189 = vmatpush1.bf16.msra.mxu0 %v4146
    %4190 = vmatprep.subr.bf16.mxu0 %v4143
    %4191 = vmatpush1.bf16.msra.mxu0 %v4142
    %4192 = vmatprep.subr.bf16.mxu0 %v4139
    %4193 = vmatpush1.bf16.msra.mxu0 %v4138
    %4194 = vmatprep.subr.bf16.mxu0 %v4135
    %4195 = vmatpush1.bf16.msra.mxu0 %v4134
    %4196 = vmatprep.subr.bf16.mxu0 %v4131
    %4197 = vmatpush1.bf16.msra.mxu0 %v4130
    %4198 = vmatprep.subr.bf16.mxu0 %v4127
    %4199 = vmatpush1.bf16.msra.mxu0 %v4126
    %4200 = vmatprep.subr.bf16.mxu0 %v4123
    %4201 = vmatpush1.bf16.msra.mxu0 %v4122
    %4202 = vmatprep.subr.bf16.mxu0 0
    %4203 = vmatpush2.bf16.msra.mxu0 0
    %4204 = vmatprep.subr.bf16.mxu0 0
    %4205 = vmatpush2.bf16.msra.mxu0 0
    %4206 = vmatprep.subr.bf16.mxu0 0
    %4207 = vmatpush2.bf16.msra.mxu0 0
    %4208 = vmatprep.subr.bf16.mxu0 0
    %4209 = vmatpush2.bf16.msra.mxu0 0
    %4210 = vmatprep.subr.bf16.mxu0 0
    %4211 = vmatpush2.bf16.msra.mxu0 0
    %4212 = vmatprep.subr.bf16.mxu0 0
    %4213 = vmatpush2.bf16.msra.mxu0 0
    %4214 = vmatprep.subr.bf16.mxu0 0
    %4215 = vmatpush2.bf16.msra.mxu0 0
    %4216 = vmatprep.subr.bf16.mxu0 0
    %4217 = vmatpush2.bf16.msra.mxu0 0
    %4218 = vmatprep.mubr.bf16.mxu0 0
    %4219 = vmatmul.mubr.bf16.gmra.mxu0 0
    %v4220 = vpop.f32.mrf.mxu0
    %v4221 = vadd.f32 0.0, %v4220
    %v4222 = vpop.f32.mrf.mxu0
    %v4223 = vadd.f32 0.0, %v4222
    %v4224 = vpop.f32.mrf.mxu0
    %v4225 = vadd.f32 0.0, %v4224
    %v4226 = vpop.f32.mrf.mxu0
    %v4227 = vadd.f32 0.0, %v4226
    %4228 = vdwg.mxu0
    %4229 = vmatprep.subr.bf16.mxu0 %v4153
    %4230 = vmatpush1.bf16.msra.mxu0 %v4152
    %4231 = vmatprep.subr.bf16.mxu0 %v4149
    %4232 = vmatpush1.bf16.msra.mxu0 %v4148
    %4233 = vmatprep.subr.bf16.mxu0 %v4145
    %4234 = vmatpush1.bf16.msra.mxu0 %v4144
    %4235 = vmatprep.subr.bf16.mxu0 %v4141
    %4236 = vmatpush1.bf16.msra.mxu0 %v4140
    %4237 = vmatprep.subr.bf16.mxu0 %v4137
    %4238 = vmatpush1.bf16.msra.mxu0 %v4136
    %4239 = vmatprep.subr.bf16.mxu0 %v4133
    %4240 = vmatpush1.bf16.msra.mxu0 %v4132
    %4241 = vmatprep.subr.bf16.mxu0 %v4129
    %4242 = vmatpush1.bf16.msra.mxu0 %v4128
    %4243 = vmatprep.subr.bf16.mxu0 %v4125
    %4244 = vmatpush1.bf16.msra.mxu0 %v4124
    %4245 = vmatprep.subr.bf16.mxu0 0
    %4246 = vmatpush2.bf16.msra.mxu0 0
    %4247 = vmatprep.subr.bf16.mxu0 0
    %4248 = vmatpush2.bf16.msra.mxu0 0
    %4249 = vmatprep.subr.bf16.mxu0 0
    %4250 = vmatpush2.bf16.msra.mxu0 0
    %4251 = vmatprep.subr.bf16.mxu0 0
    %4252 = vmatpush2.bf16.msra.mxu0 0
    %4253 = vmatprep.subr.bf16.mxu0 0
    %4254 = vmatpush2.bf16.msra.mxu0 0
    %4255 = vmatprep.subr.bf16.mxu0 0
    %4256 = vmatpush2.bf16.msra.mxu0 0
    %4257 = vmatprep.subr.bf16.mxu0 0
    %4258 = vmatpush2.bf16.msra.mxu0 0
    %4259 = vmatprep.subr.bf16.mxu0 0
    %4260 = vmatpush2.bf16.msra.mxu0 0
    %4261 = vmatprep.mubr.bf16.mxu0 0
    %4262 = vmatmul.mubr.bf16.gmra.mxu0 0
    %v4263 = vpop.f32.mrf.mxu0
    %v4264 = vadd.f32 0.0, %v4263
    %v4265 = vpop.f32.mrf.mxu0
    %v4266 = vadd.f32 0.0, %v4265
    %v4267 = vpop.f32.mrf.mxu0
    %v4268 = vadd.f32 0.0, %v4267
    %v4269 = vpop.f32.mrf.mxu0
    %v4270 = vadd.f32 0.0, %v4269
    %4271 = vdwg.mxu0
    %v4272 = vadd.f32 %v3986, %v4221
    %v4273 = vadd.f32 %v3987, %v4223
    %v4274 = vadd.f32 %v3988, %v4264
    %v4275 = vadd.f32 %v3989, %v4266
    %v4276 = vadd.f32 %v3990, %v4225
    %v4277 = vadd.f32 %v3991, %v4227
    %v4278 = vadd.f32 %v3992, %v4268
    %v4279 = vadd.f32 %v3993, %v4270
    %v4280 = vmul.f32 %v4272, 0.5
    %v4281 = vmul.f32 %v4276, 0.5
    %v4282 = vtanh.pop %v4280
    %v4283 = vtanh.pop %v4281
    %v4284 = vmul.f32 %v4282, 0.5
    %v4285 = vmul.f32 %v4283, 0.5
    %v4286 = vadd.f32 %v4284, 0.5
    %v4287 = vadd.f32 %v4285, 0.5
    %v4288 = vmul.f32 %v4273, 0.5
    %v4289 = vmul.f32 %v4277, 0.5
    %v4290 = vtanh.pop %v4288
    %v4291 = vtanh.pop %v4289
    %v4292 = vmul.f32 %v4290, 0.5
    %v4293 = vmul.f32 %v4291, 0.5
    %v4294 = vadd.f32 %v4292, 0.5
    %v4295 = vadd.f32 %v4293, 0.5
    %v4296 = vtanh.pop %v4274
    %v4297 = vtanh.pop %v4278
    %v4298 = vmul.f32 %v4275, 0.5
    %v4299 = vmul.f32 %v4279, 0.5
    %v4300 = vtanh.pop %v4298
    %v4301 = vtanh.pop %v4299
    %v4302 = vmul.f32 %v4300, 0.5
    %v4303 = vmul.f32 %v4301, 0.5
    %v4304 = vadd.f32 %v4302, 0.5
    %v4305 = vadd.f32 %v4303, 0.5
    %v4306 = vmul.f32 %v4294, 0.0
    %v4307 = vmul.f32 %v4295, 0.0
    %v4308 = vmul.f32 %v4286, %v4296
    %v4309 = vmul.f32 %v4287, %v4297
    %v4310 = vadd.f32 %v4306, %v4308
    %v4311 = vadd.f32 %v4307, %v4309
    %v4312 = vtanh.pop %v4310
    %v4313 = vtanh.pop %v4311
    %v4314 = vmul.f32 %v4304, %v4312
    %v4315 = vmul.f32 %v4305, %v4313
    %v4316 = vpack.c.bf16 %v4315, %v4314
    %v4318 = vunpack.c.l.b16 %v4316
    %v4319 = vunpack.c.h.b16 %v4316
    %v4320 = vpack.c.b16 %v4318, %v4318
    %v4321 = vpack.c.b16 %v4319, %v4319
    %4324 = vst [vmem:[#allocation2] sm:$0xf] %v4320
    %4325 = vst [vmem:[#allocation2 + $0x4] sm:$0xf] %v4321
    %v4326 = vld [vmem:[%s1024] sm:$0xff]
    %v4327 = vld [vmem:[%s1024 + $0x8] sm:$0xff]
    %v4328 = vld [vmem:[%s1024 + $0x10] sm:$0xff]
    %v4329 = vld [vmem:[%s1024 + $0x18] sm:$0xff]
    %v4330 = vld [vmem:[%s1024 + $0x20] sm:$0xff]
    %v4331 = vld [vmem:[%s1024 + $0x28] sm:$0xff]
    %v4332 = vld [vmem:[%s1024 + $0x30] sm:$0xff]
    %v4333 = vld [vmem:[%s1024 + $0x38] sm:$0xff]
    %v4334 = vld [vmem:[#allocation12] sm:$0xff]
    %v4335 = vld [vmem:[#allocation12 + $0x8] sm:$0xff]
    %v4336 = vld [vmem:[#allocation12 + $0x10] sm:$0xff]
    %v4337 = vld [vmem:[#allocation12 + $0x18] sm:$0xff]
    %v4338 = vld [vmem:[#allocation12 + $0x20] sm:$0xff]
    %v4339 = vld [vmem:[#allocation12 + $0x28] sm:$0xff]
    %v4340 = vld [vmem:[#allocation12 + $0x30] sm:$0xff]
    %v4341 = vld [vmem:[#allocation12 + $0x38] sm:$0xff]
    %v4342 = vld [vmem:[#allocation12 + $0x40] sm:$0xff]
    %v4343 = vld [vmem:[#allocation12 + $0x48] sm:$0xff]
    %v4344 = vld [vmem:[#allocation12 + $0x50] sm:$0xff]
    %v4345 = vld [vmem:[#allocation12 + $0x58] sm:$0xff]
    %v4346 = vld [vmem:[#allocation12 + $0x60] sm:$0xff]
    %v4347 = vld [vmem:[#allocation12 + $0x68] sm:$0xff]
    %v4348 = vld [vmem:[#allocation12 + $0x70] sm:$0xff]
    %v4349 = vld [vmem:[#allocation12 + $0x78] sm:$0xff]
    %v4350 = vld [vmem:[#allocation12 + $0x80] sm:$0xff]
    %v4351 = vld [vmem:[#allocation12 + $0x88] sm:$0xff]
    %v4352 = vld [vmem:[#allocation12 + $0x90] sm:$0xff]
    %v4353 = vld [vmem:[#allocation12 + $0x98] sm:$0xff]
    %v4354 = vld [vmem:[#allocation12 + $0xa0] sm:$0xff]
    %v4355 = vld [vmem:[#allocation12 + $0xa8] sm:$0xff]
    %v4356 = vld [vmem:[#allocation12 + $0xb0] sm:$0xff]
    %v4357 = vld [vmem:[#allocation12 + $0xb8] sm:$0xff]
    %v4358 = vld [vmem:[#allocation12 + $0xc0] sm:$0xff]
    %v4359 = vld [vmem:[#allocation12 + $0xc8] sm:$0xff]
    %v4360 = vld [vmem:[#allocation12 + $0xd0] sm:$0xff]
    %v4361 = vld [vmem:[#allocation12 + $0xd8] sm:$0xff]
    %v4362 = vld [vmem:[#allocation12 + $0xe0] sm:$0xff]
    %v4363 = vld [vmem:[#allocation12 + $0xe8] sm:$0xff]
    %v4364 = vld [vmem:[#allocation12 + $0xf0] sm:$0xff]
    %v4365 = vld [vmem:[#allocation12 + $0xf8] sm:$0xff]
    %v4398 = vunpack.c.l.b16 %v4334
    %v4399 = vunpack.c.h.b16 %v4334
    %v4400 = vunpack.c.l.b16 %v4335
    %v4401 = vunpack.c.h.b16 %v4335
    %v4402 = vunpack.c.l.b16 %v4336
    %v4403 = vunpack.c.h.b16 %v4336
    %v4404 = vunpack.c.l.b16 %v4337
    %v4405 = vunpack.c.h.b16 %v4337
    %v4406 = vunpack.c.l.b16 %v4338
    %v4407 = vunpack.c.h.b16 %v4338
    %v4408 = vunpack.c.l.b16 %v4339
    %v4409 = vunpack.c.h.b16 %v4339
    %v4410 = vunpack.c.l.b16 %v4340
    %v4411 = vunpack.c.h.b16 %v4340
    %v4412 = vunpack.c.l.b16 %v4341
    %v4413 = vunpack.c.h.b16 %v4341
    %v4414 = vunpack.c.l.b16 %v4342
    %v4415 = vunpack.c.h.b16 %v4342
    %v4416 = vunpack.c.l.b16 %v4343
    %v4417 = vunpack.c.h.b16 %v4343
    %v4418 = vunpack.c.l.b16 %v4344
    %v4419 = vunpack.c.h.b16 %v4344
    %v4420 = vunpack.c.l.b16 %v4345
    %v4421 = vunpack.c.h.b16 %v4345
    %v4422 = vunpack.c.l.b16 %v4346
    %v4423 = vunpack.c.h.b16 %v4346
    %v4424 = vunpack.c.l.b16 %v4347
    %v4425 = vunpack.c.h.b16 %v4347
    %v4426 = vunpack.c.l.b16 %v4348
    %v4427 = vunpack.c.h.b16 %v4348
    %v4428 = vunpack.c.l.b16 %v4349
    %v4429 = vunpack.c.h.b16 %v4349
    %v4430 = vunpack.c.l.b16 %v4350
    %v4431 = vunpack.c.h.b16 %v4350
    %v4432 = vunpack.c.l.b16 %v4351
    %v4433 = vunpack.c.h.b16 %v4351
    %v4434 = vunpack.c.l.b16 %v4352
    %v4435 = vunpack.c.h.b16 %v4352
    %v4436 = vunpack.c.l.b16 %v4353
    %v4437 = vunpack.c.h.b16 %v4353
    %v4438 = vunpack.c.l.b16 %v4354
    %v4439 = vunpack.c.h.b16 %v4354
    %v4440 = vunpack.c.l.b16 %v4355
    %v4441 = vunpack.c.h.b16 %v4355
    %v4442 = vunpack.c.l.b16 %v4356
    %v4443 = vunpack.c.h.b16 %v4356
    %v4444 = vunpack.c.l.b16 %v4357
    %v4445 = vunpack.c.h.b16 %v4357
    %v4446 = vunpack.c.l.b16 %v4358
    %v4447 = vunpack.c.h.b16 %v4358
    %v4448 = vunpack.c.l.b16 %v4359
    %v4449 = vunpack.c.h.b16 %v4359
    %v4450 = vunpack.c.l.b16 %v4360
    %v4451 = vunpack.c.h.b16 %v4360
    %v4452 = vunpack.c.l.b16 %v4361
    %v4453 = vunpack.c.h.b16 %v4361
    %v4454 = vunpack.c.l.b16 %v4362
    %v4455 = vunpack.c.h.b16 %v4362
    %v4456 = vunpack.c.l.b16 %v4363
    %v4457 = vunpack.c.h.b16 %v4363
    %v4458 = vunpack.c.l.b16 %v4364
    %v4459 = vunpack.c.h.b16 %v4364
    %v4460 = vunpack.c.l.b16 %v4365
    %v4461 = vunpack.c.h.b16 %v4365
    %v4462 = vpack.c.b16 %v4402, %v4398
    %v4463 = vpack.c.b16 %v4403, %v4399
    %v4464 = vpack.c.b16 %v4404, %v4400
    %v4465 = vpack.c.b16 %v4405, %v4401
    %v4466 = vpack.c.b16 %v4410, %v4406
    %v4467 = vpack.c.b16 %v4411, %v4407
    %v4468 = vpack.c.b16 %v4412, %v4408
    %v4469 = vpack.c.b16 %v4413, %v4409
    %v4470 = vpack.c.b16 %v4418, %v4414
    %v4471 = vpack.c.b16 %v4419, %v4415
    %v4472 = vpack.c.b16 %v4420, %v4416
    %v4473 = vpack.c.b16 %v4421, %v4417
    %v4474 = vpack.c.b16 %v4426, %v4422
    %v4475 = vpack.c.b16 %v4427, %v4423
    %v4476 = vpack.c.b16 %v4428, %v4424
    %v4477 = vpack.c.b16 %v4429, %v4425
    %v4478 = vpack.c.b16 %v4434, %v4430
    %v4479 = vpack.c.b16 %v4435, %v4431
    %v4480 = vpack.c.b16 %v4436, %v4432
    %v4481 = vpack.c.b16 %v4437, %v4433
    %v4482 = vpack.c.b16 %v4442, %v4438
    %v4483 = vpack.c.b16 %v4443, %v4439
    %v4484 = vpack.c.b16 %v4444, %v4440
    %v4485 = vpack.c.b16 %v4445, %v4441
    %v4486 = vpack.c.b16 %v4450, %v4446
    %v4487 = vpack.c.b16 %v4451, %v4447
    %v4488 = vpack.c.b16 %v4452, %v4448
    %v4489 = vpack.c.b16 %v4453, %v4449
    %v4490 = vpack.c.b16 %v4458, %v4454
    %v4491 = vpack.c.b16 %v4459, %v4455
    %v4492 = vpack.c.b16 %v4460, %v4456
    %v4493 = vpack.c.b16 %v4461, %v4457
    %4526 = vmatprep.subr.bf16.mxu0 %v4491
    %4527 = vmatpush1.bf16.msra.mxu0 %v4490
    %4528 = vmatprep.subr.bf16.mxu0 %v4487
    %4529 = vmatpush1.bf16.msra.mxu0 %v4486
    %4530 = vmatprep.subr.bf16.mxu0 %v4483
    %4531 = vmatpush1.bf16.msra.mxu0 %v4482
    %4532 = vmatprep.subr.bf16.mxu0 %v4479
    %4533 = vmatpush1.bf16.msra.mxu0 %v4478
    %4534 = vmatprep.subr.bf16.mxu0 %v4475
    %4535 = vmatpush1.bf16.msra.mxu0 %v4474
    %4536 = vmatprep.subr.bf16.mxu0 %v4471
    %4537 = vmatpush1.bf16.msra.mxu0 %v4470
    %4538 = vmatprep.subr.bf16.mxu0 %v4467
    %4539 = vmatpush1.bf16.msra.mxu0 %v4466
    %4540 = vmatprep.subr.bf16.mxu0 %v4463
    %4541 = vmatpush1.bf16.msra.mxu0 %v4462
    %4542 = vmatprep.subr.bf16.mxu0 0
    %4543 = vmatpush2.bf16.msra.mxu0 0
    %4544 = vmatprep.subr.bf16.mxu0 0
    %4545 = vmatpush2.bf16.msra.mxu0 0
    %4546 = vmatprep.subr.bf16.mxu0 0
    %4547 = vmatpush2.bf16.msra.mxu0 0
    %4548 = vmatprep.subr.bf16.mxu0 0
    %4549 = vmatpush2.bf16.msra.mxu0 0
    %4550 = vmatprep.subr.bf16.mxu0 0
    %4551 = vmatpush2.bf16.msra.mxu0 0
    %4552 = vmatprep.subr.bf16.mxu0 0
    %4553 = vmatpush2.bf16.msra.mxu0 0
    %4554 = vmatprep.subr.bf16.mxu0 0
    %4555 = vmatpush2.bf16.msra.mxu0 0
    %4556 = vmatprep.subr.bf16.mxu0 0
    %4557 = vmatpush2.bf16.msra.mxu0 0
    %4558 = vmatprep.mubr.bf16.mxu0 0
    %4559 = vmatmul.mubr.bf16.gmra.mxu0 %v4316
    %v4560 = vpop.f32.mrf.mxu0
    %v4561 = vadd.f32 0.0, %v4560
    %v4562 = vpop.f32.mrf.mxu0
    %v4563 = vadd.f32 0.0, %v4562
    %v4564 = vpop.f32.mrf.mxu0
    %v4565 = vadd.f32 0.0, %v4564
    %v4566 = vpop.f32.mrf.mxu0
    %v4567 = vadd.f32 0.0, %v4566
    %4568 = vdwg.mxu0
    %4569 = vmatprep.subr.bf16.mxu0 %v4493
    %4570 = vmatpush1.bf16.msra.mxu0 %v4492
    %4571 = vmatprep.subr.bf16.mxu0 %v4489
    %4572 = vmatpush1.bf16.msra.mxu0 %v4488
    %4573 = vmatprep.subr.bf16.mxu0 %v4485
    %4574 = vmatpush1.bf16.msra.mxu0 %v4484
    %4575 = vmatprep.subr.bf16.mxu0 %v4481
    %4576 = vmatpush1.bf16.msra.mxu0 %v4480
    %4577 = vmatprep.subr.bf16.mxu0 %v4477
    %4578 = vmatpush1.bf16.msra.mxu0 %v4476
    %4579 = vmatprep.subr.bf16.mxu0 %v4473
    %4580 = vmatpush1.bf16.msra.mxu0 %v4472
    %4581 = vmatprep.subr.bf16.mxu0 %v4469
    %4582 = vmatpush1.bf16.msra.mxu0 %v4468
    %4583 = vmatprep.subr.bf16.mxu0 %v4465
    %4584 = vmatpush1.bf16.msra.mxu0 %v4464
    %4585 = vmatprep.subr.bf16.mxu0 0
    %4586 = vmatpush2.bf16.msra.mxu0 0
    %4587 = vmatprep.subr.bf16.mxu0 0
    %4588 = vmatpush2.bf16.msra.mxu0 0
    %4589 = vmatprep.subr.bf16.mxu0 0
    %4590 = vmatpush2.bf16.msra.mxu0 0
    %4591 = vmatprep.subr.bf16.mxu0 0
    %4592 = vmatpush2.bf16.msra.mxu0 0
    %4593 = vmatprep.subr.bf16.mxu0 0
    %4594 = vmatpush2.bf16.msra.mxu0 0
    %4595 = vmatprep.subr.bf16.mxu0 0
    %4596 = vmatpush2.bf16.msra.mxu0 0
    %4597 = vmatprep.subr.bf16.mxu0 0
    %4598 = vmatpush2.bf16.msra.mxu0 0
    %4599 = vmatprep.subr.bf16.mxu0 0
    %4600 = vmatpush2.bf16.msra.mxu0 0
    %4601 = vmatprep.mubr.bf16.mxu0 0
    %4602 = vmatmul.mubr.bf16.gmra.mxu0 %v4316
    %v4603 = vpop.f32.mrf.mxu0
    %v4604 = vadd.f32 0.0, %v4603
    %v4605 = vpop.f32.mrf.mxu0
    %v4606 = vadd.f32 0.0, %v4605
    %v4607 = vpop.f32.mrf.mxu0
    %v4608 = vadd.f32 0.0, %v4607
    %v4609 = vpop.f32.mrf.mxu0
    %v4610 = vadd.f32 0.0, %v4609
    %4611 = vdwg.mxu0
    %v4612 = vadd.f32 %v4326, %v4561
    %v4613 = vadd.f32 %v4327, %v4563
    %v4614 = vadd.f32 %v4328, %v4604
    %v4615 = vadd.f32 %v4329, %v4606
    %v4616 = vadd.f32 %v4330, %v4565
    %v4617 = vadd.f32 %v4331, %v4567
    %v4618 = vadd.f32 %v4332, %v4608
    %v4619 = vadd.f32 %v4333, %v4610
    %v4620 = vmul.f32 %v4612, 0.5
    %v4621 = vmul.f32 %v4616, 0.5
    %v4622 = vtanh.pop %v4620
    %v4623 = vtanh.pop %v4621
    %v4624 = vmul.f32 %v4622, 0.5
    %v4625 = vmul.f32 %v4623, 0.5
    %v4626 = vadd.f32 %v4624, 0.5
    %v4627 = vadd.f32 %v4625, 0.5
    %v4628 = vmul.f32 %v4613, 0.5
    %v4629 = vmul.f32 %v4617, 0.5
    %v4630 = vtanh.pop %v4628
    %v4631 = vtanh.pop %v4629
    %v4632 = vmul.f32 %v4630, 0.5
    %v4633 = vmul.f32 %v4631, 0.5
    %v4634 = vadd.f32 %v4632, 0.5
    %v4635 = vadd.f32 %v4633, 0.5
    %v4636 = vtanh.pop %v4614
    %v4637 = vtanh.pop %v4618
    %v4638 = vmul.f32 %v4615, 0.5
    %v4639 = vmul.f32 %v4619, 0.5
    %v4640 = vtanh.pop %v4638
    %v4641 = vtanh.pop %v4639
    %v4642 = vmul.f32 %v4640, 0.5
    %v4643 = vmul.f32 %v4641, 0.5
    %v4644 = vadd.f32 %v4642, 0.5
    %v4645 = vadd.f32 %v4643, 0.5
    %v4646 = vmul.f32 %v4634, %v4310
    %v4647 = vmul.f32 %v4635, %v4311
    %v4648 = vmul.f32 %v4626, %v4636
    %v4649 = vmul.f32 %v4627, %v4637
    %v4650 = vadd.f32 %v4646, %v4648
    %v4651 = vadd.f32 %v4647, %v4649
    %v4652 = vtanh.pop %v4650
    %v4653 = vtanh.pop %v4651
    %v4654 = vmul.f32 %v4644, %v4652
    %v4655 = vmul.f32 %v4645, %v4653
    %v4656 = vpack.c.bf16 %v4655, %v4654
    %v4658 = vunpack.c.l.b16 %v4656
    %v4659 = vunpack.c.h.b16 %v4656
    %v4660 = vpack.c.b16 %v4658, %v4658
    %v4661 = vpack.c.b16 %v4659, %v4659
    %4664 = vst [vmem:[%s1363] sm:$0xf] %v4660
    %4665 = vst [vmem:[%s1363 + $0x4] sm:$0xf] %v4661
    %v4666 = vld [vmem:[%s1366] sm:$0xff]
    %v4667 = vld [vmem:[%s1366 + $0x8] sm:$0xff]
    %v4668 = vld [vmem:[%s1366 + $0x10] sm:$0xff]
    %v4669 = vld [vmem:[%s1366 + $0x18] sm:$0xff]
    %v4670 = vld [vmem:[%s1366 + $0x20] sm:$0xff]
    %v4671 = vld [vmem:[%s1366 + $0x28] sm:$0xff]
    %v4672 = vld [vmem:[%s1366 + $0x30] sm:$0xff]
    %v4673 = vld [vmem:[%s1366 + $0x38] sm:$0xff]
    %v4674 = vld [vmem:[#allocation12] sm:$0xff]
    %v4675 = vld [vmem:[#allocation12 + $0x8] sm:$0xff]
    %v4676 = vld [vmem:[#allocation12 + $0x10] sm:$0xff]
    %v4677 = vld [vmem:[#allocation12 + $0x18] sm:$0xff]
    %v4678 = vld [vmem:[#allocation12 + $0x20] sm:$0xff]
    %v4679 = vld [vmem:[#allocation12 + $0x28] sm:$0xff]
    %v4680 = vld [vmem:[#allocation12 + $0x30] sm:$0xff]
    %v4681 = vld [vmem:[#allocation12 + $0x38] sm:$0xff]
    %v4682 = vld [vmem:[#allocation12 + $0x40] sm:$0xff]
    %v4683 = vld [vmem:[#allocation12 + $0x48] sm:$0xff]
    %v4684 = vld [vmem:[#allocation12 + $0x50] sm:$0xff]
    %v4685 = vld [vmem:[#allocation12 + $0x58] sm:$0xff]
    %v4686 = vld [vmem:[#allocation12 + $0x60] sm:$0xff]
    %v4687 = vld [vmem:[#allocation12 + $0x68] sm:$0xff]
    %v4688 = vld [vmem:[#allocation12 + $0x70] sm:$0xff]
    %v4689 = vld [vmem:[#allocation12 + $0x78] sm:$0xff]
    %v4690 = vld [vmem:[#allocation12 + $0x80] sm:$0xff]
    %v4691 = vld [vmem:[#allocation12 + $0x88] sm:$0xff]
    %v4692 = vld [vmem:[#allocation12 + $0x90] sm:$0xff]
    %v4693 = vld [vmem:[#allocation12 + $0x98] sm:$0xff]
    %v4694 = vld [vmem:[#allocation12 + $0xa0] sm:$0xff]
    %v4695 = vld [vmem:[#allocation12 + $0xa8] sm:$0xff]
    %v4696 = vld [vmem:[#allocation12 + $0xb0] sm:$0xff]
    %v4697 = vld [vmem:[#allocation12 + $0xb8] sm:$0xff]
    %v4698 = vld [vmem:[#allocation12 + $0xc0] sm:$0xff]
    %v4699 = vld [vmem:[#allocation12 + $0xc8] sm:$0xff]
    %v4700 = vld [vmem:[#allocation12 + $0xd0] sm:$0xff]
    %v4701 = vld [vmem:[#allocation12 + $0xd8] sm:$0xff]
    %v4702 = vld [vmem:[#allocation12 + $0xe0] sm:$0xff]
    %v4703 = vld [vmem:[#allocation12 + $0xe8] sm:$0xff]
    %v4704 = vld [vmem:[#allocation12 + $0xf0] sm:$0xff]
    %v4705 = vld [vmem:[#allocation12 + $0xf8] sm:$0xff]
    %v4738 = vunpack.c.l.b16 %v4674
    %v4739 = vunpack.c.h.b16 %v4674
    %v4740 = vunpack.c.l.b16 %v4675
    %v4741 = vunpack.c.h.b16 %v4675
    %v4742 = vunpack.c.l.b16 %v4676
    %v4743 = vunpack.c.h.b16 %v4676
    %v4744 = vunpack.c.l.b16 %v4677
    %v4745 = vunpack.c.h.b16 %v4677
    %v4746 = vunpack.c.l.b16 %v4678
    %v4747 = vunpack.c.h.b16 %v4678
    %v4748 = vunpack.c.l.b16 %v4679
    %v4749 = vunpack.c.h.b16 %v4679
    %v4750 = vunpack.c.l.b16 %v4680
    %v4751 = vunpack.c.h.b16 %v4680
    %v4752 = vunpack.c.l.b16 %v4681
    %v4753 = vunpack.c.h.b16 %v4681
    %v4754 = vunpack.c.l.b16 %v4682
    %v4755 = vunpack.c.h.b16 %v4682
    %v4756 = vunpack.c.l.b16 %v4683
    %v4757 = vunpack.c.h.b16 %v4683
    %v4758 = vunpack.c.l.b16 %v4684
    %v4759 = vunpack.c.h.b16 %v4684
    %v4760 = vunpack.c.l.b16 %v4685
    %v4761 = vunpack.c.h.b16 %v4685
    %v4762 = vunpack.c.l.b16 %v4686
    %v4763 = vunpack.c.h.b16 %v4686
    %v4764 = vunpack.c.l.b16 %v4687
    %v4765 = vunpack.c.h.b16 %v4687
    %v4766 = vunpack.c.l.b16 %v4688
    %v4767 = vunpack.c.h.b16 %v4688
    %v4768 = vunpack.c.l.b16 %v4689
    %v4769 = vunpack.c.h.b16 %v4689
    %v4770 = vunpack.c.l.b16 %v4690
    %v4771 = vunpack.c.h.b16 %v4690
    %v4772 = vunpack.c.l.b16 %v4691
    %v4773 = vunpack.c.h.b16 %v4691
    %v4774 = vunpack.c.l.b16 %v4692
    %v4775 = vunpack.c.h.b16 %v4692
    %v4776 = vunpack.c.l.b16 %v4693
    %v4777 = vunpack.c.h.b16 %v4693
    %v4778 = vunpack.c.l.b16 %v4694
    %v4779 = vunpack.c.h.b16 %v4694
    %v4780 = vunpack.c.l.b16 %v4695
    %v4781 = vunpack.c.h.b16 %v4695
    %v4782 = vunpack.c.l.b16 %v4696
    %v4783 = vunpack.c.h.b16 %v4696
    %v4784 = vunpack.c.l.b16 %v4697
    %v4785 = vunpack.c.h.b16 %v4697
    %v4786 = vunpack.c.l.b16 %v4698
    %v4787 = vunpack.c.h.b16 %v4698
    %v4788 = vunpack.c.l.b16 %v4699
    %v4789 = vunpack.c.h.b16 %v4699
    %v4790 = vunpack.c.l.b16 %v4700
    %v4791 = vunpack.c.h.b16 %v4700
    %v4792 = vunpack.c.l.b16 %v4701
    %v4793 = vunpack.c.h.b16 %v4701
    %v4794 = vunpack.c.l.b16 %v4702
    %v4795 = vunpack.c.h.b16 %v4702
    %v4796 = vunpack.c.l.b16 %v4703
    %v4797 = vunpack.c.h.b16 %v4703
    %v4798 = vunpack.c.l.b16 %v4704
    %v4799 = vunpack.c.h.b16 %v4704
    %v4800 = vunpack.c.l.b16 %v4705
    %v4801 = vunpack.c.h.b16 %v4705
    %v4802 = vpack.c.b16 %v4742, %v4738
    %v4803 = vpack.c.b16 %v4743, %v4739
    %v4804 = vpack.c.b16 %v4744, %v4740
    %v4805 = vpack.c.b16 %v4745, %v4741
    %v4806 = vpack.c.b16 %v4750, %v4746
    %v4807 = vpack.c.b16 %v4751, %v4747
    %v4808 = vpack.c.b16 %v4752, %v4748
    %v4809 = vpack.c.b16 %v4753, %v4749
    %v4810 = vpack.c.b16 %v4758, %v4754
    %v4811 = vpack.c.b16 %v4759, %v4755
    %v4812 = vpack.c.b16 %v4760, %v4756
    %v4813 = vpack.c.b16 %v4761, %v4757
    %v4814 = vpack.c.b16 %v4766, %v4762
    %v4815 = vpack.c.b16 %v4767, %v4763
    %v4816 = vpack.c.b16 %v4768, %v4764
    %v4817 = vpack.c.b16 %v4769, %v4765
    %v4818 = vpack.c.b16 %v4774, %v4770
    %v4819 = vpack.c.b16 %v4775, %v4771
    %v4820 = vpack.c.b16 %v4776, %v4772
    %v4821 = vpack.c.b16 %v4777, %v4773
    %v4822 = vpack.c.b16 %v4782, %v4778
    %v4823 = vpack.c.b16 %v4783, %v4779
    %v4824 = vpack.c.b16 %v4784, %v4780
    %v4825 = vpack.c.b16 %v4785, %v4781
    %v4826 = vpack.c.b16 %v4790, %v4786
    %v4827 = vpack.c.b16 %v4791, %v4787
    %v4828 = vpack.c.b16 %v4792, %v4788
    %v4829 = vpack.c.b16 %v4793, %v4789
    %v4830 = vpack.c.b16 %v4798, %v4794
    %v4831 = vpack.c.b16 %v4799, %v4795
    %v4832 = vpack.c.b16 %v4800, %v4796
    %v4833 = vpack.c.b16 %v4801, %v4797
    %4866 = vmatprep.subr.bf16.mxu0 %v4831
    %4867 = vmatpush1.bf16.msra.mxu0 %v4830
    %4868 = vmatprep.subr.bf16.mxu0 %v4827
    %4869 = vmatpush1.bf16.msra.mxu0 %v4826
    %4870 = vmatprep.subr.bf16.mxu0 %v4823
    %4871 = vmatpush1.bf16.msra.mxu0 %v4822
    %4872 = vmatprep.subr.bf16.mxu0 %v4819
    %4873 = vmatpush1.bf16.msra.mxu0 %v4818
    %4874 = vmatprep.subr.bf16.mxu0 %v4815
    %4875 = vmatpush1.bf16.msra.mxu0 %v4814
    %4876 = vmatprep.subr.bf16.mxu0 %v4811
    %4877 = vmatpush1.bf16.msra.mxu0 %v4810
    %4878 = vmatprep.subr.bf16.mxu0 %v4807
    %4879 = vmatpush1.bf16.msra.mxu0 %v4806
    %4880 = vmatprep.subr.bf16.mxu0 %v4803
    %4881 = vmatpush1.bf16.msra.mxu0 %v4802
    %4882 = vmatprep.subr.bf16.mxu0 0
    %4883 = vmatpush2.bf16.msra.mxu0 0
    %4884 = vmatprep.subr.bf16.mxu0 0
    %4885 = vmatpush2.bf16.msra.mxu0 0
    %4886 = vmatprep.subr.bf16.mxu0 0
    %4887 = vmatpush2.bf16.msra.mxu0 0
    %4888 = vmatprep.subr.bf16.mxu0 0
    %4889 = vmatpush2.bf16.msra.mxu0 0
    %4890 = vmatprep.subr.bf16.mxu0 0
    %4891 = vmatpush2.bf16.msra.mxu0 0
    %4892 = vmatprep.subr.bf16.mxu0 0
    %4893 = vmatpush2.bf16.msra.mxu0 0
    %4894 = vmatprep.subr.bf16.mxu0 0
    %4895 = vmatpush2.bf16.msra.mxu0 0
    %4896 = vmatprep.subr.bf16.mxu0 0
    %4897 = vmatpush2.bf16.msra.mxu0 0
    %4898 = vmatprep.mubr.bf16.mxu0 0
    %4899 = vmatmul.mubr.bf16.gmra.mxu0 %v4656
    %v4900 = vpop.f32.mrf.mxu0
    %v4901 = vadd.f32 0.0, %v4900
    %v4902 = vpop.f32.mrf.mxu0
    %v4903 = vadd.f32 0.0, %v4902
    %v4904 = vpop.f32.mrf.mxu0
    %v4905 = vadd.f32 0.0, %v4904
    %v4906 = vpop.f32.mrf.mxu0
    %v4907 = vadd.f32 0.0, %v4906
    %4908 = vdwg.mxu0
    %4909 = vmatprep.subr.bf16.mxu0 %v4833
    %4910 = vmatpush1.bf16.msra.mxu0 %v4832
    %4911 = vmatprep.subr.bf16.mxu0 %v4829
    %4912 = vmatpush1.bf16.msra.mxu0 %v4828
    %4913 = vmatprep.subr.bf16.mxu0 %v4825
    %4914 = vmatpush1.bf16.msra.mxu0 %v4824
    %4915 = vmatprep.subr.bf16.mxu0 %v4821
    %4916 = vmatpush1.bf16.msra.mxu0 %v4820
    %4917 = vmatprep.subr.bf16.mxu0 %v4817
    %4918 = vmatpush1.bf16.msra.mxu0 %v4816
    %4919 = vmatprep.subr.bf16.mxu0 %v4813
    %4920 = vmatpush1.bf16.msra.mxu0 %v4812
    %4921 = vmatprep.subr.bf16.mxu0 %v4809
    %4922 = vmatpush1.bf16.msra.mxu0 %v4808
    %4923 = vmatprep.subr.bf16.mxu0 %v4805
    %4924 = vmatpush1.bf16.msra.mxu0 %v4804
    %4925 = vmatprep.subr.bf16.mxu0 0
    %4926 = vmatpush2.bf16.msra.mxu0 0
    %4927 = vmatprep.subr.bf16.mxu0 0
    %4928 = vmatpush2.bf16.msra.mxu0 0
    %4929 = vmatprep.subr.bf16.mxu0 0
    %4930 = vmatpush2.bf16.msra.mxu0 0
    %4931 = vmatprep.subr.bf16.mxu0 0
    %4932 = vmatpush2.bf16.msra.mxu0 0
    %4933 = vmatprep.subr.bf16.mxu0 0
    %4934 = vmatpush2.bf16.msra.mxu0 0
    %4935 = vmatprep.subr.bf16.mxu0 0
    %4936 = vmatpush2.bf16.msra.mxu0 0
    %4937 = vmatprep.subr.bf16.mxu0 0
    %4938 = vmatpush2.bf16.msra.mxu0 0
    %4939 = vmatprep.subr.bf16.mxu0 0
    %4940 = vmatpush2.bf16.msra.mxu0 0
    %4941 = vmatprep.mubr.bf16.mxu0 0
    %4942 = vmatmul.mubr.bf16.gmra.mxu0 %v4656
    %v4943 = vpop.f32.mrf.mxu0
    %v4944 = vadd.f32 0.0, %v4943
    %v4945 = vpop.f32.mrf.mxu0
    %v4946 = vadd.f32 0.0, %v4945
    %v4947 = vpop.f32.mrf.mxu0
    %v4948 = vadd.f32 0.0, %v4947
    %v4949 = vpop.f32.mrf.mxu0
    %v4950 = vadd.f32 0.0, %v4949
    %4951 = vdwg.mxu0
    %v4952 = vadd.f32 %v4666, %v4901
    %v4953 = vadd.f32 %v4667, %v4903
    %v4954 = vadd.f32 %v4668, %v4944
    %v4955 = vadd.f32 %v4669, %v4946
    %v4956 = vadd.f32 %v4670, %v4905
    %v4957 = vadd.f32 %v4671, %v4907
    %v4958 = vadd.f32 %v4672, %v4948
    %v4959 = vadd.f32 %v4673, %v4950
    %v4960 = vmul.f32 %v4952, 0.5
    %v4961 = vmul.f32 %v4956, 0.5
    %v4962 = vtanh.pop %v4960
    %v4963 = vtanh.pop %v4961
    %v4964 = vmul.f32 %v4962, 0.5
    %v4965 = vmul.f32 %v4963, 0.5
    %v4966 = vadd.f32 %v4964, 0.5
    %v4967 = vadd.f32 %v4965, 0.5
    %v4968 = vmul.f32 %v4953, 0.5
    %v4969 = vmul.f32 %v4957, 0.5
    %v4970 = vtanh.pop %v4968
    %v4971 = vtanh.pop %v4969
    %v4972 = vmul.f32 %v4970, 0.5
    %v4973 = vmul.f32 %v4971, 0.5
    %v4974 = vadd.f32 %v4972, 0.5
    %v4975 = vadd.f32 %v4973, 0.5
    %v4976 = vtanh.pop %v4954
    %v4977 = vtanh.pop %v4958
    %v4978 = vmul.f32 %v4955, 0.5
    %v4979 = vmul.f32 %v4959, 0.5
    %v4980 = vtanh.pop %v4978
    %v4981 = vtanh.pop %v4979
    %v4982 = vmul.f32 %v4980, 0.5
    %v4983 = vmul.f32 %v4981, 0.5
    %v4984 = vadd.f32 %v4982, 0.5
    %v4985 = vadd.f32 %v4983, 0.5
    %v4986 = vmul.f32 %v4974, %v4650
    %v4987 = vmul.f32 %v4975, %v4651
    %v4988 = vmul.f32 %v4966, %v4976
    %v4989 = vmul.f32 %v4967, %v4977
    %v4990 = vadd.f32 %v4986, %v4988
    %v4991 = vadd.f32 %v4987, %v4989
    %v4992 = vtanh.pop %v4990
    %v4993 = vtanh.pop %v4991
    %v4994 = vmul.f32 %v4984, %v4992
    %v4995 = vmul.f32 %v4985, %v4993
    %v4996 = vpack.c.bf16 %v4995, %v4994
    %v4998 = vunpack.c.l.b16 %v4996
    %v4999 = vunpack.c.h.b16 %v4996
    %v5000 = vpack.c.b16 %v4998, %v4998
    %v5001 = vpack.c.b16 %v4999, %v4999
    %5004 = vst [vmem:[%s1705] sm:$0xf] %v5000
    %5005 = vst [vmem:[%s1705 + $0x4] sm:$0xf] %v5001
    %v5006 = vld [vmem:[%s1708] sm:$0xff]
    %v5007 = vld [vmem:[%s1708 + $0x8] sm:$0xff]
    %v5008 = vld [vmem:[%s1708 + $0x10] sm:$0xff]
    %v5009 = vld [vmem:[%s1708 + $0x18] sm:$0xff]
    %v5010 = vld [vmem:[%s1708 + $0x20] sm:$0xff]
    %v5011 = vld [vmem:[%s1708 + $0x28] sm:$0xff]
    %v5012 = vld [vmem:[%s1708 + $0x30] sm:$0xff]
    %v5013 = vld [vmem:[%s1708 + $0x38] sm:$0xff]
    %v5014 = vld [vmem:[#allocation12] sm:$0xff]
    %v5015 = vld [vmem:[#allocation12 + $0x8] sm:$0xff]
    %v5016 = vld [vmem:[#allocation12 + $0x10] sm:$0xff]
    %v5017 = vld [vmem:[#allocation12 + $0x18] sm:$0xff]
    %v5018 = vld [vmem:[#allocation12 + $0x20] sm:$0xff]
    %v5019 = vld [vmem:[#allocation12 + $0x28] sm:$0xff]
    %v5020 = vld [vmem:[#allocation12 + $0x30] sm:$0xff]
    %v5021 = vld [vmem:[#allocation12 + $0x38] sm:$0xff]
    %v5022 = vld [vmem:[#allocation12 + $0x40] sm:$0xff]
    %v5023 = vld [vmem:[#allocation12 + $0x48] sm:$0xff]
    %v5024 = vld [vmem:[#allocation12 + $0x50] sm:$0xff]
    %v5025 = vld [vmem:[#allocation12 + $0x58] sm:$0xff]
    %v5026 = vld [vmem:[#allocation12 + $0x60] sm:$0xff]
    %v5027 = vld [vmem:[#allocation12 + $0x68] sm:$0xff]
    %v5028 = vld [vmem:[#allocation12 + $0x70] sm:$0xff]
    %v5029 = vld [vmem:[#allocation12 + $0x78] sm:$0xff]
    %v5030 = vld [vmem:[#allocation12 + $0x80] sm:$0xff]
    %v5031 = vld [vmem:[#allocation12 + $0x88] sm:$0xff]
    %v5032 = vld [vmem:[#allocation12 + $0x90] sm:$0xff]
    %v5033 = vld [vmem:[#allocation12 + $0x98] sm:$0xff]
    %v5034 = vld [vmem:[#allocation12 + $0xa0] sm:$0xff]
    %v5035 = vld [vmem:[#allocation12 + $0xa8] sm:$0xff]
    %v5036 = vld [vmem:[#allocation12 + $0xb0] sm:$0xff]
    %v5037 = vld [vmem:[#allocation12 + $0xb8] sm:$0xff]
    %v5038 = vld [vmem:[#allocation12 + $0xc0] sm:$0xff]
    %v5039 = vld [vmem:[#allocation12 + $0xc8] sm:$0xff]
    %v5040 = vld [vmem:[#allocation12 + $0xd0] sm:$0xff]
    %v5041 = vld [vmem:[#allocation12 + $0xd8] sm:$0xff]
    %v5042 = vld [vmem:[#allocation12 + $0xe0] sm:$0xff]
    %v5043 = vld [vmem:[#allocation12 + $0xe8] sm:$0xff]
    %v5044 = vld [vmem:[#allocation12 + $0xf0] sm:$0xff]
    %v5045 = vld [vmem:[#allocation12 + $0xf8] sm:$0xff]
    %v5078 = vunpack.c.l.b16 %v5014
    %v5079 = vunpack.c.h.b16 %v5014
    %v5080 = vunpack.c.l.b16 %v5015
    %v5081 = vunpack.c.h.b16 %v5015
    %v5082 = vunpack.c.l.b16 %v5016
    %v5083 = vunpack.c.h.b16 %v5016
    %v5084 = vunpack.c.l.b16 %v5017
    %v5085 = vunpack.c.h.b16 %v5017
    %v5086 = vunpack.c.l.b16 %v5018
    %v5087 = vunpack.c.h.b16 %v5018
    %v5088 = vunpack.c.l.b16 %v5019
    %v5089 = vunpack.c.h.b16 %v5019
    %v5090 = vunpack.c.l.b16 %v5020
    %v5091 = vunpack.c.h.b16 %v5020
    %v5092 = vunpack.c.l.b16 %v5021
    %v5093 = vunpack.c.h.b16 %v5021
    %v5094 = vunpack.c.l.b16 %v5022
    %v5095 = vunpack.c.h.b16 %v5022
    %v5096 = vunpack.c.l.b16 %v5023
    %v5097 = vunpack.c.h.b16 %v5023
    %v5098 = vunpack.c.l.b16 %v5024
    %v5099 = vunpack.c.h.b16 %v5024
    %v5100 = vunpack.c.l.b16 %v5025
    %v5101 = vunpack.c.h.b16 %v5025
    %v5102 = vunpack.c.l.b16 %v5026
    %v5103 = vunpack.c.h.b16 %v5026
    %v5104 = vunpack.c.l.b16 %v5027
    %v5105 = vunpack.c.h.b16 %v5027
    %v5106 = vunpack.c.l.b16 %v5028
    %v5107 = vunpack.c.h.b16 %v5028
    %v5108 = vunpack.c.l.b16 %v5029
    %v5109 = vunpack.c.h.b16 %v5029
    %v5110 = vunpack.c.l.b16 %v5030
    %v5111 = vunpack.c.h.b16 %v5030
    %v5112 = vunpack.c.l.b16 %v5031
    %v5113 = vunpack.c.h.b16 %v5031
    %v5114 = vunpack.c.l.b16 %v5032
    %v5115 = vunpack.c.h.b16 %v5032
    %v5116 = vunpack.c.l.b16 %v5033
    %v5117 = vunpack.c.h.b16 %v5033
    %v5118 = vunpack.c.l.b16 %v5034
    %v5119 = vunpack.c.h.b16 %v5034
    %v5120 = vunpack.c.l.b16 %v5035
    %v5121 = vunpack.c.h.b16 %v5035
    %v5122 = vunpack.c.l.b16 %v5036
    %v5123 = vunpack.c.h.b16 %v5036
    %v5124 = vunpack.c.l.b16 %v5037
    %v5125 = vunpack.c.h.b16 %v5037
    %v5126 = vunpack.c.l.b16 %v5038
    %v5127 = vunpack.c.h.b16 %v5038
    %v5128 = vunpack.c.l.b16 %v5039
    %v5129 = vunpack.c.h.b16 %v5039
    %v5130 = vunpack.c.l.b16 %v5040
    %v5131 = vunpack.c.h.b16 %v5040
    %v5132 = vunpack.c.l.b16 %v5041
    %v5133 = vunpack.c.h.b16 %v5041
    %v5134 = vunpack.c.l.b16 %v5042
    %v5135 = vunpack.c.h.b16 %v5042
    %v5136 = vunpack.c.l.b16 %v5043
    %v5137 = vunpack.c.h.b16 %v5043
    %v5138 = vunpack.c.l.b16 %v5044
    %v5139 = vunpack.c.h.b16 %v5044
    %v5140 = vunpack.c.l.b16 %v5045
    %v5141 = vunpack.c.h.b16 %v5045
    %v5142 = vpack.c.b16 %v5082, %v5078
    %v5143 = vpack.c.b16 %v5083, %v5079
    %v5144 = vpack.c.b16 %v5084, %v5080
    %v5145 = vpack.c.b16 %v5085, %v5081
    %v5146 = vpack.c.b16 %v5090, %v5086
    %v5147 = vpack.c.b16 %v5091, %v5087
    %v5148 = vpack.c.b16 %v5092, %v5088
    %v5149 = vpack.c.b16 %v5093, %v5089
    %v5150 = vpack.c.b16 %v5098, %v5094
    %v5151 = vpack.c.b16 %v5099, %v5095
    %v5152 = vpack.c.b16 %v5100, %v5096
    %v5153 = vpack.c.b16 %v5101, %v5097
    %v5154 = vpack.c.b16 %v5106, %v5102
    %v5155 = vpack.c.b16 %v5107, %v5103
    %v5156 = vpack.c.b16 %v5108, %v5104
    %v5157 = vpack.c.b16 %v5109, %v5105
    %v5158 = vpack.c.b16 %v5114, %v5110
    %v5159 = vpack.c.b16 %v5115, %v5111
    %v5160 = vpack.c.b16 %v5116, %v5112
    %v5161 = vpack.c.b16 %v5117, %v5113
    %v5162 = vpack.c.b16 %v5122, %v5118
    %v5163 = vpack.c.b16 %v5123, %v5119
    %v5164 = vpack.c.b16 %v5124, %v5120
    %v5165 = vpack.c.b16 %v5125, %v5121
    %v5166 = vpack.c.b16 %v5130, %v5126
    %v5167 = vpack.c.b16 %v5131, %v5127
    %v5168 = vpack.c.b16 %v5132, %v5128
    %v5169 = vpack.c.b16 %v5133, %v5129
    %v5170 = vpack.c.b16 %v5138, %v5134
    %v5171 = vpack.c.b16 %v5139, %v5135
    %v5172 = vpack.c.b16 %v5140, %v5136
    %v5173 = vpack.c.b16 %v5141, %v5137
    %5206 = vmatprep.subr.bf16.mxu0 %v5171
    %5207 = vmatpush1.bf16.msra.mxu0 %v5170
    %5208 = vmatprep.subr.bf16.mxu0 %v5167
    %5209 = vmatpush1.bf16.msra.mxu0 %v5166
    %5210 = vmatprep.subr.bf16.mxu0 %v5163
    %5211 = vmatpush1.bf16.msra.mxu0 %v5162
    %5212 = vmatprep.subr.bf16.mxu0 %v5159
    %5213 = vmatpush1.bf16.msra.mxu0 %v5158
    %5214 = vmatprep.subr.bf16.mxu0 %v5155
    %5215 = vmatpush1.bf16.msra.mxu0 %v5154
    %5216 = vmatprep.subr.bf16.mxu0 %v5151
    %5217 = vmatpush1.bf16.msra.mxu0 %v5150
    %5218 = vmatprep.subr.bf16.mxu0 %v5147
    %5219 = vmatpush1.bf16.msra.mxu0 %v5146
    %5220 = vmatprep.subr.bf16.mxu0 %v5143
    %5221 = vmatpush1.bf16.msra.mxu0 %v5142
    %5222 = vmatprep.subr.bf16.mxu0 0
    %5223 = vmatpush2.bf16.msra.mxu0 0
    %5224 = vmatprep.subr.bf16.mxu0 0
    %5225 = vmatpush2.bf16.msra.mxu0 0
    %5226 = vmatprep.subr.bf16.mxu0 0
    %5227 = vmatpush2.bf16.msra.mxu0 0
    %5228 = vmatprep.subr.bf16.mxu0 0
    %5229 = vmatpush2.bf16.msra.mxu0 0
    %5230 = vmatprep.subr.bf16.mxu0 0
    %5231 = vmatpush2.bf16.msra.mxu0 0
    %5232 = vmatprep.subr.bf16.mxu0 0
    %5233 = vmatpush2.bf16.msra.mxu0 0
    %5234 = vmatprep.subr.bf16.mxu0 0
    %5235 = vmatpush2.bf16.msra.mxu0 0
    %5236 = vmatprep.subr.bf16.mxu0 0
    %5237 = vmatpush2.bf16.msra.mxu0 0
    %5238 = vmatprep.mubr.bf16.mxu0 0
    %5239 = vmatmul.mubr.bf16.gmra.mxu0 %v4996
    %v5240 = vpop.f32.mrf.mxu0
    %v5241 = vadd.f32 0.0, %v5240
    %v5242 = vpop.f32.mrf.mxu0
    %v5243 = vadd.f32 0.0, %v5242
    %v5244 = vpop.f32.mrf.mxu0
    %v5245 = vadd.f32 0.0, %v5244
    %v5246 = vpop.f32.mrf.mxu0
    %v5247 = vadd.f32 0.0, %v5246
    %5248 = vdwg.mxu0
    %5249 = vmatprep.subr.bf16.mxu0 %v5173
    %5250 = vmatpush1.bf16.msra.mxu0 %v5172
    %5251 = vmatprep.subr.bf16.mxu0 %v5169
    %5252 = vmatpush1.bf16.msra.mxu0 %v5168
    %5253 = vmatprep.subr.bf16.mxu0 %v5165
    %5254 = vmatpush1.bf16.msra.mxu0 %v5164
    %5255 = vmatprep.subr.bf16.mxu0 %v5161
    %5256 = vmatpush1.bf16.msra.mxu0 %v5160
    %5257 = vmatprep.subr.bf16.mxu0 %v5157
    %5258 = vmatpush1.bf16.msra.mxu0 %v5156
    %5259 = vmatprep.subr.bf16.mxu0 %v5153
    %5260 = vmatpush1.bf16.msra.mxu0 %v5152
    %5261 = vmatprep.subr.bf16.mxu0 %v5149
    %5262 = vmatpush1.bf16.msra.mxu0 %v5148
    %5263 = vmatprep.subr.bf16.mxu0 %v5145
    %5264 = vmatpush1.bf16.msra.mxu0 %v5144
    %5265 = vmatprep.subr.bf16.mxu0 0
    %5266 = vmatpush2.bf16.msra.mxu0 0
    %5267 = vmatprep.subr.bf16.mxu0 0
    %5268 = vmatpush2.bf16.msra.mxu0 0
    %5269 = vmatprep.subr.bf16.mxu0 0
    %5270 = vmatpush2.bf16.msra.mxu0 0
    %5271 = vmatprep.subr.bf16.mxu0 0
    %5272 = vmatpush2.bf16.msra.mxu0 0
    %5273 = vmatprep.subr.bf16.mxu0 0
    %5274 = vmatpush2.bf16.msra.mxu0 0
    %5275 = vmatprep.subr.bf16.mxu0 0
    %5276 = vmatpush2.bf16.msra.mxu0 0
    %5277 = vmatprep.subr.bf16.mxu0 0
    %5278 = vmatpush2.bf16.msra.mxu0 0
    %5279 = vmatprep.subr.bf16.mxu0 0
    %5280 = vmatpush2.bf16.msra.mxu0 0
    %5281 = vmatprep.mubr.bf16.mxu0 0
    %5282 = vmatmul.mubr.bf16.gmra.mxu0 %v4996
    %v5283 = vpop.f32.mrf.mxu0
    %v5284 = vadd.f32 0.0, %v5283
    %v5285 = vpop.f32.mrf.mxu0
    %v5286 = vadd.f32 0.0, %v5285
    %v5287 = vpop.f32.mrf.mxu0
    %v5288 = vadd.f32 0.0, %v5287
    %v5289 = vpop.f32.mrf.mxu0
    %v5290 = vadd.f32 0.0, %v5289
    %5291 = vdwg.mxu0
    %v5292 = vadd.f32 %v5006, %v5241
    %v5293 = vadd.f32 %v5007, %v5243
    %v5294 = vadd.f32 %v5008, %v5284
    %v5295 = vadd.f32 %v5009, %v5286
    %v5296 = vadd.f32 %v5010, %v5245
    %v5297 = vadd.f32 %v5011, %v5247
    %v5298 = vadd.f32 %v5012, %v5288
    %v5299 = vadd.f32 %v5013, %v5290
    %v5300 = vmul.f32 %v5292, 0.5
    %v5301 = vmul.f32 %v5296, 0.5
    %v5302 = vtanh.pop %v5300
    %v5303 = vtanh.pop %v5301
    %v5304 = vmul.f32 %v5302, 0.5
    %v5305 = vmul.f32 %v5303, 0.5
    %v5306 = vadd.f32 %v5304, 0.5
    %v5307 = vadd.f32 %v5305, 0.5
    %v5308 = vmul.f32 %v5293, 0.5
    %v5309 = vmul.f32 %v5297, 0.5
    %v5310 = vtanh.pop %v5308
    %v5311 = vtanh.pop %v5309
    %v5312 = vmul.f32 %v5310, 0.5
    %v5313 = vmul.f32 %v5311, 0.5
    %v5314 = vadd.f32 %v5312, 0.5
    %v5315 = vadd.f32 %v5313, 0.5
    %v5316 = vtanh.pop %v5294
    %v5317 = vtanh.pop %v5298
    %v5318 = vmul.f32 %v5295, 0.5
    %v5319 = vmul.f32 %v5299, 0.5
    %v5320 = vtanh.pop %v5318
    %v5321 = vtanh.pop %v5319
    %v5322 = vmul.f32 %v5320, 0.5
    %v5323 = vmul.f32 %v5321, 0.5
    %v5324 = vadd.f32 %v5322, 0.5
    %v5325 = vadd.f32 %v5323, 0.5
    %v5326 = vmul.f32 %v5314, %v4990
    %v5327 = vmul.f32 %v5315, %v4991
    %v5328 = vmul.f32 %v5306, %v5316
    %v5329 = vmul.f32 %v5307, %v5317
    %v5330 = vadd.f32 %v5326, %v5328
    %v5331 = vadd.f32 %v5327, %v5329
    %v5332 = vtanh.pop %v5330
    %v5333 = vtanh.pop %v5331
    %v5334 = vmul.f32 %v5324, %v5332
    %v5335 = vmul.f32 %v5325, %v5333
    %v5336 = vpack.c.bf16 %v5335, %v5334
    %v5338 = vunpack.c.l.b16 %v5336
    %v5339 = vunpack.c.h.b16 %v5336
    %v5340 = vpack.c.b16 %v5338, %v5338
    %v5341 = vpack.c.b16 %v5339, %v5339
    %5344 = vst [vmem:[%s2047] sm:$0xf] %v5340
    %5345 = vst [vmem:[%s2047 + $0x4] sm:$0xf] %v5341
    %v5346 = vld [vmem:[%s2050] sm:$0xff]
    %v5347 = vld [vmem:[%s2050 + $0x8] sm:$0xff]
    %v5348 = vld [vmem:[%s2050 + $0x10] sm:$0xff]
    %v5349 = vld [vmem:[%s2050 + $0x18] sm:$0xff]
    %v5350 = vld [vmem:[%s2050 + $0x20] sm:$0xff]
    %v5351 = vld [vmem:[%s2050 + $0x28] sm:$0xff]
    %v5352 = vld [vmem:[%s2050 + $0x30] sm:$0xff]
    %v5353 = vld [vmem:[%s2050 + $0x38] sm:$0xff]
    %v5354 = vld [vmem:[#allocation12] sm:$0xff]
    %v5355 = vld [vmem:[#allocation12 + $0x8] sm:$0xff]
    %v5356 = vld [vmem:[#allocation12 + $0x10] sm:$0xff]
    %v5357 = vld [vmem:[#allocation12 + $0x18] sm:$0xff]
    %v5358 = vld [vmem:[#allocation12 + $0x20] sm:$0xff]
    %v5359 = vld [vmem:[#allocation12 + $0x28] sm:$0xff]
    %v5360 = vld [vmem:[#allocation12 + $0x30] sm:$0xff]
    %v5361 = vld [vmem:[#allocation12 + $0x38] sm:$0xff]
    %v5362 = vld [vmem:[#allocation12 + $0x40] sm:$0xff]
    %v5363 = vld [vmem:[#allocation12 + $0x48] sm:$0xff]
    %v5364 = vld [vmem:[#allocation12 + $0x50] sm:$0xff]
    %v5365 = vld [vmem:[#allocation12 + $0x58] sm:$0xff]
    %v5366 = vld [vmem:[#allocation12 + $0x60] sm:$0xff]
    %v5367 = vld [vmem:[#allocation12 + $0x68] sm:$0xff]
    %v5368 = vld [vmem:[#allocation12 + $0x70] sm:$0xff]
    %v5369 = vld [vmem:[#allocation12 + $0x78] sm:$0xff]
    %v5370 = vld [vmem:[#allocation12 + $0x80] sm:$0xff]
    %v5371 = vld [vmem:[#allocation12 + $0x88] sm:$0xff]
    %v5372 = vld [vmem:[#allocation12 + $0x90] sm:$0xff]
    %v5373 = vld [vmem:[#allocation12 + $0x98] sm:$0xff]
    %v5374 = vld [vmem:[#allocation12 + $0xa0] sm:$0xff]
    %v5375 = vld [vmem:[#allocation12 + $0xa8] sm:$0xff]
    %v5376 = vld [vmem:[#allocation12 + $0xb0] sm:$0xff]
    %v5377 = vld [vmem:[#allocation12 + $0xb8] sm:$0xff]
    %v5378 = vld [vmem:[#allocation12 + $0xc0] sm:$0xff]
    %v5379 = vld [vmem:[#allocation12 + $0xc8] sm:$0xff]
    %v5380 = vld [vmem:[#allocation12 + $0xd0] sm:$0xff]
    %v5381 = vld [vmem:[#allocation12 + $0xd8] sm:$0xff]
    %v5382 = vld [vmem:[#allocation12 + $0xe0] sm:$0xff]
    %v5383 = vld [vmem:[#allocation12 + $0xe8] sm:$0xff]
    %v5384 = vld [vmem:[#allocation12 + $0xf0] sm:$0xff]
    %v5385 = vld [vmem:[#allocation12 + $0xf8] sm:$0xff]
    %v5418 = vunpack.c.l.b16 %v5354
    %v5419 = vunpack.c.h.b16 %v5354
    %v5420 = vunpack.c.l.b16 %v5355
    %v5421 = vunpack.c.h.b16 %v5355
    %v5422 = vunpack.c.l.b16 %v5356
    %v5423 = vunpack.c.h.b16 %v5356
    %v5424 = vunpack.c.l.b16 %v5357
    %v5425 = vunpack.c.h.b16 %v5357
    %v5426 = vunpack.c.l.b16 %v5358
    %v5427 = vunpack.c.h.b16 %v5358
    %v5428 = vunpack.c.l.b16 %v5359
    %v5429 = vunpack.c.h.b16 %v5359
    %v5430 = vunpack.c.l.b16 %v5360
    %v5431 = vunpack.c.h.b16 %v5360
    %v5432 = vunpack.c.l.b16 %v5361
    %v5433 = vunpack.c.h.b16 %v5361
    %v5434 = vunpack.c.l.b16 %v5362
    %v5435 = vunpack.c.h.b16 %v5362
    %v5436 = vunpack.c.l.b16 %v5363
    %v5437 = vunpack.c.h.b16 %v5363
    %v5438 = vunpack.c.l.b16 %v5364
    %v5439 = vunpack.c.h.b16 %v5364
    %v5440 = vunpack.c.l.b16 %v5365
    %v5441 = vunpack.c.h.b16 %v5365
    %v5442 = vunpack.c.l.b16 %v5366
    %v5443 = vunpack.c.h.b16 %v5366
    %v5444 = vunpack.c.l.b16 %v5367
    %v5445 = vunpack.c.h.b16 %v5367
    %v5446 = vunpack.c.l.b16 %v5368
    %v5447 = vunpack.c.h.b16 %v5368
    %v5448 = vunpack.c.l.b16 %v5369
    %v5449 = vunpack.c.h.b16 %v5369
    %v5450 = vunpack.c.l.b16 %v5370
    %v5451 = vunpack.c.h.b16 %v5370
    %v5452 = vunpack.c.l.b16 %v5371
    %v5453 = vunpack.c.h.b16 %v5371
    %v5454 = vunpack.c.l.b16 %v5372
    %v5455 = vunpack.c.h.b16 %v5372
    %v5456 = vunpack.c.l.b16 %v5373
    %v5457 = vunpack.c.h.b16 %v5373
    %v5458 = vunpack.c.l.b16 %v5374
    %v5459 = vunpack.c.h.b16 %v5374
    %v5460 = vunpack.c.l.b16 %v5375
    %v5461 = vunpack.c.h.b16 %v5375
    %v5462 = vunpack.c.l.b16 %v5376
    %v5463 = vunpack.c.h.b16 %v5376
    %v5464 = vunpack.c.l.b16 %v5377
    %v5465 = vunpack.c.h.b16 %v5377
    %v5466 = vunpack.c.l.b16 %v5378
    %v5467 = vunpack.c.h.b16 %v5378
    %v5468 = vunpack.c.l.b16 %v5379
    %v5469 = vunpack.c.h.b16 %v5379
    %v5470 = vunpack.c.l.b16 %v5380
    %v5471 = vunpack.c.h.b16 %v5380
    %v5472 = vunpack.c.l.b16 %v5381
    %v5473 = vunpack.c.h.b16 %v5381
    %v5474 = vunpack.c.l.b16 %v5382
    %v5475 = vunpack.c.h.b16 %v5382
    %v5476 = vunpack.c.l.b16 %v5383
    %v5477 = vunpack.c.h.b16 %v5383
    %v5478 = vunpack.c.l.b16 %v5384
    %v5479 = vunpack.c.h.b16 %v5384
    %v5480 = vunpack.c.l.b16 %v5385
    %v5481 = vunpack.c.h.b16 %v5385
    %v5482 = vpack.c.b16 %v5422, %v5418
    %v5483 = vpack.c.b16 %v5423, %v5419
    %v5484 = vpack.c.b16 %v5424, %v5420
    %v5485 = vpack.c.b16 %v5425, %v5421
    %v5486 = vpack.c.b16 %v5430, %v5426
    %v5487 = vpack.c.b16 %v5431, %v5427
    %v5488 = vpack.c.b16 %v5432, %v5428
    %v5489 = vpack.c.b16 %v5433, %v5429
    %v5490 = vpack.c.b16 %v5438, %v5434
    %v5491 = vpack.c.b16 %v5439, %v5435
    %v5492 = vpack.c.b16 %v5440, %v5436
    %v5493 = vpack.c.b16 %v5441, %v5437
    %v5494 = vpack.c.b16 %v5446, %v5442
    %v5495 = vpack.c.b16 %v5447, %v5443
    %v5496 = vpack.c.b16 %v5448, %v5444
    %v5497 = vpack.c.b16 %v5449, %v5445
    %v5498 = vpack.c.b16 %v5454, %v5450
    %v5499 = vpack.c.b16 %v5455, %v5451
    %v5500 = vpack.c.b16 %v5456, %v5452
    %v5501 = vpack.c.b16 %v5457, %v5453
    %v5502 = vpack.c.b16 %v5462, %v5458
    %v5503 = vpack.c.b16 %v5463, %v5459
    %v5504 = vpack.c.b16 %v5464, %v5460
    %v5505 = vpack.c.b16 %v5465, %v5461
    %v5506 = vpack.c.b16 %v5470, %v5466
    %v5507 = vpack.c.b16 %v5471, %v5467
    %v5508 = vpack.c.b16 %v5472, %v5468
    %v5509 = vpack.c.b16 %v5473, %v5469
    %v5510 = vpack.c.b16 %v5478, %v5474
    %v5511 = vpack.c.b16 %v5479, %v5475
    %v5512 = vpack.c.b16 %v5480, %v5476
    %v5513 = vpack.c.b16 %v5481, %v5477
    %5546 = vmatprep.subr.bf16.mxu0 %v5511
    %5547 = vmatpush1.bf16.msra.mxu0 %v5510
    %5548 = vmatprep.subr.bf16.mxu0 %v5507
    %5549 = vmatpush1.bf16.msra.mxu0 %v5506
    %5550 = vmatprep.subr.bf16.mxu0 %v5503
    %5551 = vmatpush1.bf16.msra.mxu0 %v5502
    %5552 = vmatprep.subr.bf16.mxu0 %v5499
    %5553 = vmatpush1.bf16.msra.mxu0 %v5498
    %5554 = vmatprep.subr.bf16.mxu0 %v5495
    %5555 = vmatpush1.bf16.msra.mxu0 %v5494
    %5556 = vmatprep.subr.bf16.mxu0 %v5491
    %5557 = vmatpush1.bf16.msra.mxu0 %v5490
    %5558 = vmatprep.subr.bf16.mxu0 %v5487
    %5559 = vmatpush1.bf16.msra.mxu0 %v5486
    %5560 = vmatprep.subr.bf16.mxu0 %v5483
    %5561 = vmatpush1.bf16.msra.mxu0 %v5482
    %5562 = vmatprep.subr.bf16.mxu0 0
    %5563 = vmatpush2.bf16.msra.mxu0 0
    %5564 = vmatprep.subr.bf16.mxu0 0
    %5565 = vmatpush2.bf16.msra.mxu0 0
    %5566 = vmatprep.subr.bf16.mxu0 0
    %5567 = vmatpush2.bf16.msra.mxu0 0
    %5568 = vmatprep.subr.bf16.mxu0 0
    %5569 = vmatpush2.bf16.msra.mxu0 0
    %5570 = vmatprep.subr.bf16.mxu0 0
    %5571 = vmatpush2.bf16.msra.mxu0 0
    %5572 = vmatprep.subr.bf16.mxu0 0
    %5573 = vmatpush2.bf16.msra.mxu0 0
    %5574 = vmatprep.subr.bf16.mxu0 0
    %5575 = vmatpush2.bf16.msra.mxu0 0
    %5576 = vmatprep.subr.bf16.mxu0 0
    %5577 = vmatpush2.bf16.msra.mxu0 0
    %5578 = vmatprep.mubr.bf16.mxu0 0
    %5579 = vmatmul.mubr.bf16.gmra.mxu0 %v5336
    %v5580 = vpop.f32.mrf.mxu0
    %v5581 = vadd.f32 0.0, %v5580
    %v5582 = vpop.f32.mrf.mxu0
    %v5583 = vadd.f32 0.0, %v5582
    %v5584 = vpop.f32.mrf.mxu0
    %v5585 = vadd.f32 0.0, %v5584
    %v5586 = vpop.f32.mrf.mxu0
    %v5587 = vadd.f32 0.0, %v5586
    %5588 = vdwg.mxu0
    %5589 = vmatprep.subr.bf16.mxu0 %v5513
    %5590 = vmatpush1.bf16.msra.mxu0 %v5512
    %5591 = vmatprep.subr.bf16.mxu0 %v5509
    %5592 = vmatpush1.bf16.msra.mxu0 %v5508
    %5593 = vmatprep.subr.bf16.mxu0 %v5505
    %5594 = vmatpush1.bf16.msra.mxu0 %v5504
    %5595 = vmatprep.subr.bf16.mxu0 %v5501
    %5596 = vmatpush1.bf16.msra.mxu0 %v5500
    %5597 = vmatprep.subr.bf16.mxu0 %v5497
    %5598 = vmatpush1.bf16.msra.mxu0 %v5496
    %5599 = vmatprep.subr.bf16.mxu0 %v5493
    %5600 = vmatpush1.bf16.msra.mxu0 %v5492
    %5601 = vmatprep.subr.bf16.mxu0 %v5489
    %5602 = vmatpush1.bf16.msra.mxu0 %v5488
    %5603 = vmatprep.subr.bf16.mxu0 %v5485
    %5604 = vmatpush1.bf16.msra.mxu0 %v5484
    %5605 = vmatprep.subr.bf16.mxu0 0
    %5606 = vmatpush2.bf16.msra.mxu0 0
    %5607 = vmatprep.subr.bf16.mxu0 0
    %5608 = vmatpush2.bf16.msra.mxu0 0
    %5609 = vmatprep.subr.bf16.mxu0 0
    %5610 = vmatpush2.bf16.msra.mxu0 0
    %5611 = vmatprep.subr.bf16.mxu0 0
    %5612 = vmatpush2.bf16.msra.mxu0 0
    %5613 = vmatprep.subr.bf16.mxu0 0
    %5614 = vmatpush2.bf16.msra.mxu0 0
    %5615 = vmatprep.subr.bf16.mxu0 0
    %5616 = vmatpush2.bf16.msra.mxu0 0
    %5617 = vmatprep.subr.bf16.mxu0 0
    %5618 = vmatpush2.bf16.msra.mxu0 0
    %5619 = vmatprep.subr.bf16.mxu0 0
    %5620 = vmatpush2.bf16.msra.mxu0 0
    %5621 = vmatprep.mubr.bf16.mxu0 0
    %5622 = vmatmul.mubr.bf16.gmra.mxu0 %v5336
    %v5623 = vpop.f32.mrf.mxu0
    %v5624 = vadd.f32 0.0, %v5623
    %v5625 = vpop.f32.mrf.mxu0
    %v5626 = vadd.f32 0.0, %v5625
    %v5627 = vpop.f32.mrf.mxu0
    %v5628 = vadd.f32 0.0, %v5627
    %v5629 = vpop.f32.mrf.mxu0
    %v5630 = vadd.f32 0.0, %v5629
    %5631 = vdwg.mxu0
    %v5632 = vadd.f32 %v5346, %v5581
    %v5633 = vadd.f32 %v5347, %v5583
    %v5634 = vadd.f32 %v5348, %v5624
    %v5635 = vadd.f32 %v5349, %v5626
    %v5636 = vadd.f32 %v5350, %v5585
    %v5637 = vadd.f32 %v5351, %v5587
    %v5638 = vadd.f32 %v5352, %v5628
    %v5639 = vadd.f32 %v5353, %v5630
    %v5640 = vmul.f32 %v5632, 0.5
    %v5641 = vmul.f32 %v5636, 0.5
    %v5642 = vtanh.pop %v5640
    %v5643 = vtanh.pop %v5641
    %v5644 = vmul.f32 %v5642, 0.5
    %v5645 = vmul.f32 %v5643, 0.5
    %v5646 = vadd.f32 %v5644, 0.5
    %v5647 = vadd.f32 %v5645, 0.5
    %v5648 = vmul.f32 %v5633, 0.5
    %v5649 = vmul.f32 %v5637, 0.5
    %v5650 = vtanh.pop %v5648
    %v5651 = vtanh.pop %v5649
    %v5652 = vmul.f32 %v5650, 0.5
    %v5653 = vmul.f32 %v5651, 0.5
    %v5654 = vadd.f32 %v5652, 0.5
    %v5655 = vadd.f32 %v5653, 0.5
    %v5656 = vtanh.pop %v5634
    %v5657 = vtanh.pop %v5638
    %v5658 = vmul.f32 %v5635, 0.5
    %v5659 = vmul.f32 %v5639, 0.5
    %v5660 = vtanh.pop %v5658
    %v5661 = vtanh.pop %v5659
    %v5662 = vmul.f32 %v5660, 0.5
    %v5663 = vmul.f32 %v5661, 0.5
    %v5664 = vadd.f32 %v5662, 0.5
    %v5665 = vadd.f32 %v5663, 0.5
    %v5666 = vmul.f32 %v5654, %v5330
    %v5667 = vmul.f32 %v5655, %v5331
    %v5668 = vmul.f32 %v5646, %v5656
    %v5669 = vmul.f32 %v5647, %v5657
    %v5670 = vadd.f32 %v5666, %v5668
    %v5671 = vadd.f32 %v5667, %v5669
    %v5672 = vtanh.pop %v5670
    %v5673 = vtanh.pop %v5671
    %v5674 = vmul.f32 %v5664, %v5672
    %v5675 = vmul.f32 %v5665, %v5673
    %v5676 = vpack.c.bf16 %v5675, %v5674
    %v5678 = vunpack.c.l.b16 %v5676
    %v5679 = vunpack.c.h.b16 %v5676
    %v5680 = vpack.c.b16 %v5678, %v5678
    %v5681 = vpack.c.b16 %v5679, %v5679
    %5684 = vst [vmem:[%s2389] sm:$0xf] %v5680
    %5685 = vst [vmem:[%s2389 + $0x4] sm:$0xf] %v5681
    %v5686 = vld [vmem:[%s2392] sm:$0xff]
    %v5687 = vld [vmem:[%s2392 + $0x8] sm:$0xff]
    %v5688 = vld [vmem:[%s2392 + $0x10] sm:$0xff]
    %v5689 = vld [vmem:[%s2392 + $0x18] sm:$0xff]
    %v5690 = vld [vmem:[%s2392 + $0x20] sm:$0xff]
    %v5691 = vld [vmem:[%s2392 + $0x28] sm:$0xff]
    %v5692 = vld [vmem:[%s2392 + $0x30] sm:$0xff]
    %v5693 = vld [vmem:[%s2392 + $0x38] sm:$0xff]
    %v5694 = vld [vmem:[#allocation12] sm:$0xff]
    %v5695 = vld [vmem:[#allocation12 + $0x8] sm:$0xff]
    %v5696 = vld [vmem:[#allocation12 + $0x10] sm:$0xff]
    %v5697 = vld [vmem:[#allocation12 + $0x18] sm:$0xff]
    %v5698 = vld [vmem:[#allocation12 + $0x20] sm:$0xff]
    %v5699 = vld [vmem:[#allocation12 + $0x28] sm:$0xff]
    %v5700 = vld [vmem:[#allocation12 + $0x30] sm:$0xff]
    %v5701 = vld [vmem:[#allocation12 + $0x38] sm:$0xff]
    %v5702 = vld [vmem:[#allocation12 + $0x40] sm:$0xff]
    %v5703 = vld [vmem:[#allocation12 + $0x48] sm:$0xff]
    %v5704 = vld [vmem:[#allocation12 + $0x50] sm:$0xff]
    %v5705 = vld [vmem:[#allocation12 + $0x58] sm:$0xff]
    %v5706 = vld [vmem:[#allocation12 + $0x60] sm:$0xff]
    %v5707 = vld [vmem:[#allocation12 + $0x68] sm:$0xff]
    %v5708 = vld [vmem:[#allocation12 + $0x70] sm:$0xff]
    %v5709 = vld [vmem:[#allocation12 + $0x78] sm:$0xff]
    %v5710 = vld [vmem:[#allocation12 + $0x80] sm:$0xff]
    %v5711 = vld [vmem:[#allocation12 + $0x88] sm:$0xff]
    %v5712 = vld [vmem:[#allocation12 + $0x90] sm:$0xff]
    %v5713 = vld [vmem:[#allocation12 + $0x98] sm:$0xff]
    %v5714 = vld [vmem:[#allocation12 + $0xa0] sm:$0xff]
    %v5715 = vld [vmem:[#allocation12 + $0xa8] sm:$0xff]
    %v5716 = vld [vmem:[#allocation12 + $0xb0] sm:$0xff]
    %v5717 = vld [vmem:[#allocation12 + $0xb8] sm:$0xff]
    %v5718 = vld [vmem:[#allocation12 + $0xc0] sm:$0xff]
    %v5719 = vld [vmem:[#allocation12 + $0xc8] sm:$0xff]
    %v5720 = vld [vmem:[#allocation12 + $0xd0] sm:$0xff]
    %v5721 = vld [vmem:[#allocation12 + $0xd8] sm:$0xff]
    %v5722 = vld [vmem:[#allocation12 + $0xe0] sm:$0xff]
    %v5723 = vld [vmem:[#allocation12 + $0xe8] sm:$0xff]
    %v5724 = vld [vmem:[#allocation12 + $0xf0] sm:$0xff]
    %v5725 = vld [vmem:[#allocation12 + $0xf8] sm:$0xff]
    %v5758 = vunpack.c.l.b16 %v5694
    %v5759 = vunpack.c.h.b16 %v5694
    %v5760 = vunpack.c.l.b16 %v5695
    %v5761 = vunpack.c.h.b16 %v5695
    %v5762 = vunpack.c.l.b16 %v5696
    %v5763 = vunpack.c.h.b16 %v5696
    %v5764 = vunpack.c.l.b16 %v5697
    %v5765 = vunpack.c.h.b16 %v5697
    %v5766 = vunpack.c.l.b16 %v5698
    %v5767 = vunpack.c.h.b16 %v5698
    %v5768 = vunpack.c.l.b16 %v5699
    %v5769 = vunpack.c.h.b16 %v5699
    %v5770 = vunpack.c.l.b16 %v5700
    %v5771 = vunpack.c.h.b16 %v5700
    %v5772 = vunpack.c.l.b16 %v5701
    %v5773 = vunpack.c.h.b16 %v5701
    %v5774 = vunpack.c.l.b16 %v5702
    %v5775 = vunpack.c.h.b16 %v5702
    %v5776 = vunpack.c.l.b16 %v5703
    %v5777 = vunpack.c.h.b16 %v5703
    %v5778 = vunpack.c.l.b16 %v5704
    %v5779 = vunpack.c.h.b16 %v5704
    %v5780 = vunpack.c.l.b16 %v5705
    %v5781 = vunpack.c.h.b16 %v5705
    %v5782 = vunpack.c.l.b16 %v5706
    %v5783 = vunpack.c.h.b16 %v5706
    %v5784 = vunpack.c.l.b16 %v5707
    %v5785 = vunpack.c.h.b16 %v5707
    %v5786 = vunpack.c.l.b16 %v5708
    %v5787 = vunpack.c.h.b16 %v5708
    %v5788 = vunpack.c.l.b16 %v5709
    %v5789 = vunpack.c.h.b16 %v5709
    %v5790 = vunpack.c.l.b16 %v5710
    %v5791 = vunpack.c.h.b16 %v5710
    %v5792 = vunpack.c.l.b16 %v5711
    %v5793 = vunpack.c.h.b16 %v5711
    %v5794 = vunpack.c.l.b16 %v5712
    %v5795 = vunpack.c.h.b16 %v5712
    %v5796 = vunpack.c.l.b16 %v5713
    %v5797 = vunpack.c.h.b16 %v5713
    %v5798 = vunpack.c.l.b16 %v5714
    %v5799 = vunpack.c.h.b16 %v5714
    %v5800 = vunpack.c.l.b16 %v5715
    %v5801 = vunpack.c.h.b16 %v5715
    %v5802 = vunpack.c.l.b16 %v5716
    %v5803 = vunpack.c.h.b16 %v5716
    %v5804 = vunpack.c.l.b16 %v5717
    %v5805 = vunpack.c.h.b16 %v5717
    %v5806 = vunpack.c.l.b16 %v5718
    %v5807 = vunpack.c.h.b16 %v5718
    %v5808 = vunpack.c.l.b16 %v5719
    %v5809 = vunpack.c.h.b16 %v5719
    %v5810 = vunpack.c.l.b16 %v5720
    %v5811 = vunpack.c.h.b16 %v5720
    %v5812 = vunpack.c.l.b16 %v5721
    %v5813 = vunpack.c.h.b16 %v5721
    %v5814 = vunpack.c.l.b16 %v5722
    %v5815 = vunpack.c.h.b16 %v5722
    %v5816 = vunpack.c.l.b16 %v5723
    %v5817 = vunpack.c.h.b16 %v5723
    %v5818 = vunpack.c.l.b16 %v5724
    %v5819 = vunpack.c.h.b16 %v5724
    %v5820 = vunpack.c.l.b16 %v5725
    %v5821 = vunpack.c.h.b16 %v5725
    %v5822 = vpack.c.b16 %v5762, %v5758
    %v5823 = vpack.c.b16 %v5763, %v5759
    %v5824 = vpack.c.b16 %v5764, %v5760
    %v5825 = vpack.c.b16 %v5765, %v5761
    %v5826 = vpack.c.b16 %v5770, %v5766
    %v5827 = vpack.c.b16 %v5771, %v5767
    %v5828 = vpack.c.b16 %v5772, %v5768
    %v5829 = vpack.c.b16 %v5773, %v5769
    %v5830 = vpack.c.b16 %v5778, %v5774
    %v5831 = vpack.c.b16 %v5779, %v5775
    %v5832 = vpack.c.b16 %v5780, %v5776
    %v5833 = vpack.c.b16 %v5781, %v5777
    %v5834 = vpack.c.b16 %v5786, %v5782
    %v5835 = vpack.c.b16 %v5787, %v5783
    %v5836 = vpack.c.b16 %v5788, %v5784
    %v5837 = vpack.c.b16 %v5789, %v5785
    %v5838 = vpack.c.b16 %v5794, %v5790
    %v5839 = vpack.c.b16 %v5795, %v5791
    %v5840 = vpack.c.b16 %v5796, %v5792
    %v5841 = vpack.c.b16 %v5797, %v5793
    %v5842 = vpack.c.b16 %v5802, %v5798
    %v5843 = vpack.c.b16 %v5803, %v5799
    %v5844 = vpack.c.b16 %v5804, %v5800
    %v5845 = vpack.c.b16 %v5805, %v5801
    %v5846 = vpack.c.b16 %v5810, %v5806
    %v5847 = vpack.c.b16 %v5811, %v5807
    %v5848 = vpack.c.b16 %v5812, %v5808
    %v5849 = vpack.c.b16 %v5813, %v5809
    %v5850 = vpack.c.b16 %v5818, %v5814
    %v5851 = vpack.c.b16 %v5819, %v5815
    %v5852 = vpack.c.b16 %v5820, %v5816
    %v5853 = vpack.c.b16 %v5821, %v5817
    %5886 = vmatprep.subr.bf16.mxu0 %v5851
    %5887 = vmatpush1.bf16.msra.mxu0 %v5850
    %5888 = vmatprep.subr.bf16.mxu0 %v5847
    %5889 = vmatpush1.bf16.msra.mxu0 %v5846
    %5890 = vmatprep.subr.bf16.mxu0 %v5843
    %5891 = vmatpush1.bf16.msra.mxu0 %v5842
    %5892 = vmatprep.subr.bf16.mxu0 %v5839
    %5893 = vmatpush1.bf16.msra.mxu0 %v5838
    %5894 = vmatprep.subr.bf16.mxu0 %v5835
    %5895 = vmatpush1.bf16.msra.mxu0 %v5834
    %5896 = vmatprep.subr.bf16.mxu0 %v5831
    %5897 = vmatpush1.bf16.msra.mxu0 %v5830
    %5898 = vmatprep.subr.bf16.mxu0 %v5827
    %5899 = vmatpush1.bf16.msra.mxu0 %v5826
    %5900 = vmatprep.subr.bf16.mxu0 %v5823
    %5901 = vmatpush1.bf16.msra.mxu0 %v5822
    %5902 = vmatprep.subr.bf16.mxu0 0
    %5903 = vmatpush2.bf16.msra.mxu0 0
    %5904 = vmatprep.subr.bf16.mxu0 0
    %5905 = vmatpush2.bf16.msra.mxu0 0
    %5906 = vmatprep.subr.bf16.mxu0 0
    %5907 = vmatpush2.bf16.msra.mxu0 0
    %5908 = vmatprep.subr.bf16.mxu0 0
    %5909 = vmatpush2.bf16.msra.mxu0 0
    %5910 = vmatprep.subr.bf16.mxu0 0
    %5911 = vmatpush2.bf16.msra.mxu0 0
    %5912 = vmatprep.subr.bf16.mxu0 0
    %5913 = vmatpush2.bf16.msra.mxu0 0
    %5914 = vmatprep.subr.bf16.mxu0 0
    %5915 = vmatpush2.bf16.msra.mxu0 0
    %5916 = vmatprep.subr.bf16.mxu0 0
    %5917 = vmatpush2.bf16.msra.mxu0 0
    %5918 = vmatprep.mubr.bf16.mxu0 0
    %5919 = vmatmul.mubr.bf16.gmra.mxu0 %v5676
    %v5920 = vpop.f32.mrf.mxu0
    %v5921 = vadd.f32 0.0, %v5920
    %v5922 = vpop.f32.mrf.mxu0
    %v5923 = vadd.f32 0.0, %v5922
    %v5924 = vpop.f32.mrf.mxu0
    %v5925 = vadd.f32 0.0, %v5924
    %v5926 = vpop.f32.mrf.mxu0
    %v5927 = vadd.f32 0.0, %v5926
    %5928 = vdwg.mxu0
    %5929 = vmatprep.subr.bf16.mxu0 %v5853
    %5930 = vmatpush1.bf16.msra.mxu0 %v5852
    %5931 = vmatprep.subr.bf16.mxu0 %v5849
    %5932 = vmatpush1.bf16.msra.mxu0 %v5848
    %5933 = vmatprep.subr.bf16.mxu0 %v5845
    %5934 = vmatpush1.bf16.msra.mxu0 %v5844
    %5935 = vmatprep.subr.bf16.mxu0 %v5841
    %5936 = vmatpush1.bf16.msra.mxu0 %v5840
    %5937 = vmatprep.subr.bf16.mxu0 %v5837
    %5938 = vmatpush1.bf16.msra.mxu0 %v5836
    %5939 = vmatprep.subr.bf16.mxu0 %v5833
    %5940 = vmatpush1.bf16.msra.mxu0 %v5832
    %5941 = vmatprep.subr.bf16.mxu0 %v5829
    %5942 = vmatpush1.bf16.msra.mxu0 %v5828
    %5943 = vmatprep.subr.bf16.mxu0 %v5825
    %5944 = vmatpush1.bf16.msra.mxu0 %v5824
    %5945 = vmatprep.subr.bf16.mxu0 0
    %5946 = vmatpush2.bf16.msra.mxu0 0
    %5947 = vmatprep.subr.bf16.mxu0 0
    %5948 = vmatpush2.bf16.msra.mxu0 0
    %5949 = vmatprep.subr.bf16.mxu0 0
    %5950 = vmatpush2.bf16.msra.mxu0 0
    %5951 = vmatprep.subr.bf16.mxu0 0
    %5952 = vmatpush2.bf16.msra.mxu0 0
    %5953 = vmatprep.subr.bf16.mxu0 0
    %5954 = vmatpush2.bf16.msra.mxu0 0
    %5955 = vmatprep.subr.bf16.mxu0 0
    %5956 = vmatpush2.bf16.msra.mxu0 0
    %5957 = vmatprep.subr.bf16.mxu0 0
    %5958 = vmatpush2.bf16.msra.mxu0 0
    %5959 = vmatprep.subr.bf16.mxu0 0
    %5960 = vmatpush2.bf16.msra.mxu0 0
    %5961 = vmatprep.mubr.bf16.mxu0 0
    %5962 = vmatmul.mubr.bf16.gmra.mxu0 %v5676
    %v5963 = vpop.f32.mrf.mxu0
    %v5964 = vadd.f32 0.0, %v5963
    %v5965 = vpop.f32.mrf.mxu0
    %v5966 = vadd.f32 0.0, %v5965
    %v5967 = vpop.f32.mrf.mxu0
    %v5968 = vadd.f32 0.0, %v5967
    %v5969 = vpop.f32.mrf.mxu0
    %v5970 = vadd.f32 0.0, %v5969
    %5971 = vdwg.mxu0
    %v5972 = vadd.f32 %v5686, %v5921
    %v5973 = vadd.f32 %v5687, %v5923
    %v5974 = vadd.f32 %v5688, %v5964
    %v5975 = vadd.f32 %v5689, %v5966
    %v5976 = vadd.f32 %v5690, %v5925
    %v5977 = vadd.f32 %v5691, %v5927
    %v5978 = vadd.f32 %v5692, %v5968
    %v5979 = vadd.f32 %v5693, %v5970
    %v5980 = vmul.f32 %v5972, 0.5
    %v5981 = vmul.f32 %v5976, 0.5
    %v5982 = vtanh.pop %v5980
    %v5983 = vtanh.pop %v5981
    %v5984 = vmul.f32 %v5982, 0.5
    %v5985 = vmul.f32 %v5983, 0.5
    %v5986 = vadd.f32 %v5984, 0.5
    %v5987 = vadd.f32 %v5985, 0.5
    %v5988 = vmul.f32 %v5973, 0.5
    %v5989 = vmul.f32 %v5977, 0.5
    %v5990 = vtanh.pop %v5988
    %v5991 = vtanh.pop %v5989
    %v5992 = vmul.f32 %v5990, 0.5
    %v5993 = vmul.f32 %v5991, 0.5
    %v5994 = vadd.f32 %v5992, 0.5
    %v5995 = vadd.f32 %v5993, 0.5
    %v5996 = vtanh.pop %v5974
    %v5997 = vtanh.pop %v5978
    %v5998 = vmul.f32 %v5975, 0.5
    %v5999 = vmul.f32 %v5979, 0.5
    %v6000 = vtanh.pop %v5998
    %v6001 = vtanh.pop %v5999
    %v6002 = vmul.f32 %v6000, 0.5
    %v6003 = vmul.f32 %v6001, 0.5
    %v6004 = vadd.f32 %v6002, 0.5
    %v6005 = vadd.f32 %v6003, 0.5
    %v6006 = vmul.f32 %v5994, %v5670
    %v6007 = vmul.f32 %v5995, %v5671
    %v6008 = vmul.f32 %v5986, %v5996
    %v6009 = vmul.f32 %v5987, %v5997
    %v6010 = vadd.f32 %v6006, %v6008
    %v6011 = vadd.f32 %v6007, %v6009
    %v6012 = vtanh.pop %v6010
    %v6013 = vtanh.pop %v6011
    %v6014 = vmul.f32 %v6004, %v6012
    %v6015 = vmul.f32 %v6005, %v6013
    %v6016 = vpack.c.bf16 %v6015, %v6014
    %v6018 = vunpack.c.l.b16 %v6016
    %v6019 = vunpack.c.h.b16 %v6016
    %v6020 = vpack.c.b16 %v6018, %v6018
    %v6021 = vpack.c.b16 %v6019, %v6019
    %6024 = vst [vmem:[%s2731] sm:$0xf] %v6020
    %6025 = vst [vmem:[%s2731 + $0x4] sm:$0xf] %v6021
    %v6026 = vld [vmem:[%s2734] sm:$0xff]
    %v6027 = vld [vmem:[%s2734 + $0x8] sm:$0xff]
    %v6028 = vld [vmem:[%s2734 + $0x10] sm:$0xff]
    %v6029 = vld [vmem:[%s2734 + $0x18] sm:$0xff]
    %v6030 = vld [vmem:[%s2734 + $0x20] sm:$0xff]
    %v6031 = vld [vmem:[%s2734 + $0x28] sm:$0xff]
    %v6032 = vld [vmem:[%s2734 + $0x30] sm:$0xff]
    %v6033 = vld [vmem:[%s2734 + $0x38] sm:$0xff]
    %v6034 = vld [vmem:[#allocation12] sm:$0xff]
    %v6035 = vld [vmem:[#allocation12 + $0x8] sm:$0xff]
    %v6036 = vld [vmem:[#allocation12 + $0x10] sm:$0xff]
    %v6037 = vld [vmem:[#allocation12 + $0x18] sm:$0xff]
    %v6038 = vld [vmem:[#allocation12 + $0x20] sm:$0xff]
    %v6039 = vld [vmem:[#allocation12 + $0x28] sm:$0xff]
    %v6040 = vld [vmem:[#allocation12 + $0x30] sm:$0xff]
    %v6041 = vld [vmem:[#allocation12 + $0x38] sm:$0xff]
    %v6042 = vld [vmem:[#allocation12 + $0x40] sm:$0xff]
    %v6043 = vld [vmem:[#allocation12 + $0x48] sm:$0xff]
    %v6044 = vld [vmem:[#allocation12 + $0x50] sm:$0xff]
    %v6045 = vld [vmem:[#allocation12 + $0x58] sm:$0xff]
    %v6046 = vld [vmem:[#allocation12 + $0x60] sm:$0xff]
    %v6047 = vld [vmem:[#allocation12 + $0x68] sm:$0xff]
    %v6048 = vld [vmem:[#allocation12 + $0x70] sm:$0xff]
    %v6049 = vld [vmem:[#allocation12 + $0x78] sm:$0xff]
    %v6050 = vld [vmem:[#allocation12 + $0x80] sm:$0xff]
    %v6051 = vld [vmem:[#allocation12 + $0x88] sm:$0xff]
    %v6052 = vld [vmem:[#allocation12 + $0x90] sm:$0xff]
    %v6053 = vld [vmem:[#allocation12 + $0x98] sm:$0xff]
    %v6054 = vld [vmem:[#allocation12 + $0xa0] sm:$0xff]
    %v6055 = vld [vmem:[#allocation12 + $0xa8] sm:$0xff]
    %v6056 = vld [vmem:[#allocation12 + $0xb0] sm:$0xff]
    %v6057 = vld [vmem:[#allocation12 + $0xb8] sm:$0xff]
    %v6058 = vld [vmem:[#allocation12 + $0xc0] sm:$0xff]
    %v6059 = vld [vmem:[#allocation12 + $0xc8] sm:$0xff]
    %v6060 = vld [vmem:[#allocation12 + $0xd0] sm:$0xff]
    %v6061 = vld [vmem:[#allocation12 + $0xd8] sm:$0xff]
    %v6062 = vld [vmem:[#allocation12 + $0xe0] sm:$0xff]
    %v6063 = vld [vmem:[#allocation12 + $0xe8] sm:$0xff]
    %v6064 = vld [vmem:[#allocation12 + $0xf0] sm:$0xff]
    %v6065 = vld [vmem:[#allocation12 + $0xf8] sm:$0xff]
    %v6098 = vunpack.c.l.b16 %v6034
    %v6099 = vunpack.c.h.b16 %v6034
    %v6100 = vunpack.c.l.b16 %v6035
    %v6101 = vunpack.c.h.b16 %v6035
    %v6102 = vunpack.c.l.b16 %v6036
    %v6103 = vunpack.c.h.b16 %v6036
    %v6104 = vunpack.c.l.b16 %v6037
    %v6105 = vunpack.c.h.b16 %v6037
    %v6106 = vunpack.c.l.b16 %v6038
    %v6107 = vunpack.c.h.b16 %v6038
    %v6108 = vunpack.c.l.b16 %v6039
    %v6109 = vunpack.c.h.b16 %v6039
    %v6110 = vunpack.c.l.b16 %v6040
    %v6111 = vunpack.c.h.b16 %v6040
    %v6112 = vunpack.c.l.b16 %v6041
    %v6113 = vunpack.c.h.b16 %v6041
    %v6114 = vunpack.c.l.b16 %v6042
    %v6115 = vunpack.c.h.b16 %v6042
    %v6116 = vunpack.c.l.b16 %v6043
    %v6117 = vunpack.c.h.b16 %v6043
    %v6118 = vunpack.c.l.b16 %v6044
    %v6119 = vunpack.c.h.b16 %v6044
    %v6120 = vunpack.c.l.b16 %v6045
    %v6121 = vunpack.c.h.b16 %v6045
    %v6122 = vunpack.c.l.b16 %v6046
    %v6123 = vunpack.c.h.b16 %v6046
    %v6124 = vunpack.c.l.b16 %v6047
    %v6125 = vunpack.c.h.b16 %v6047
    %v6126 = vunpack.c.l.b16 %v6048
    %v6127 = vunpack.c.h.b16 %v6048
    %v6128 = vunpack.c.l.b16 %v6049
    %v6129 = vunpack.c.h.b16 %v6049
    %v6130 = vunpack.c.l.b16 %v6050
    %v6131 = vunpack.c.h.b16 %v6050
    %v6132 = vunpack.c.l.b16 %v6051
    %v6133 = vunpack.c.h.b16 %v6051
    %v6134 = vunpack.c.l.b16 %v6052
    %v6135 = vunpack.c.h.b16 %v6052
    %v6136 = vunpack.c.l.b16 %v6053
    %v6137 = vunpack.c.h.b16 %v6053
    %v6138 = vunpack.c.l.b16 %v6054
    %v6139 = vunpack.c.h.b16 %v6054
    %v6140 = vunpack.c.l.b16 %v6055
    %v6141 = vunpack.c.h.b16 %v6055
    %v6142 = vunpack.c.l.b16 %v6056
    %v6143 = vunpack.c.h.b16 %v6056
    %v6144 = vunpack.c.l.b16 %v6057
    %v6145 = vunpack.c.h.b16 %v6057
    %v6146 = vunpack.c.l.b16 %v6058
    %v6147 = vunpack.c.h.b16 %v6058
    %v6148 = vunpack.c.l.b16 %v6059
    %v6149 = vunpack.c.h.b16 %v6059
    %v6150 = vunpack.c.l.b16 %v6060
    %v6151 = vunpack.c.h.b16 %v6060
    %v6152 = vunpack.c.l.b16 %v6061
    %v6153 = vunpack.c.h.b16 %v6061
    %v6154 = vunpack.c.l.b16 %v6062
    %v6155 = vunpack.c.h.b16 %v6062
    %v6156 = vunpack.c.l.b16 %v6063
    %v6157 = vunpack.c.h.b16 %v6063
    %v6158 = vunpack.c.l.b16 %v6064
    %v6159 = vunpack.c.h.b16 %v6064
    %v6160 = vunpack.c.l.b16 %v6065
    %v6161 = vunpack.c.h.b16 %v6065
    %v6162 = vpack.c.b16 %v6102, %v6098
    %v6163 = vpack.c.b16 %v6103, %v6099
    %v6164 = vpack.c.b16 %v6104, %v6100
    %v6165 = vpack.c.b16 %v6105, %v6101
    %v6166 = vpack.c.b16 %v6110, %v6106
    %v6167 = vpack.c.b16 %v6111, %v6107
    %v6168 = vpack.c.b16 %v6112, %v6108
    %v6169 = vpack.c.b16 %v6113, %v6109
    %v6170 = vpack.c.b16 %v6118, %v6114
    %v6171 = vpack.c.b16 %v6119, %v6115
    %v6172 = vpack.c.b16 %v6120, %v6116
    %v6173 = vpack.c.b16 %v6121, %v6117
    %v6174 = vpack.c.b16 %v6126, %v6122
    %v6175 = vpack.c.b16 %v6127, %v6123
    %v6176 = vpack.c.b16 %v6128, %v6124
    %v6177 = vpack.c.b16 %v6129, %v6125
    %v6178 = vpack.c.b16 %v6134, %v6130
    %v6179 = vpack.c.b16 %v6135, %v6131
    %v6180 = vpack.c.b16 %v6136, %v6132
    %v6181 = vpack.c.b16 %v6137, %v6133
    %v6182 = vpack.c.b16 %v6142, %v6138
    %v6183 = vpack.c.b16 %v6143, %v6139
    %v6184 = vpack.c.b16 %v6144, %v6140
    %v6185 = vpack.c.b16 %v6145, %v6141
    %v6186 = vpack.c.b16 %v6150, %v6146
    %v6187 = vpack.c.b16 %v6151, %v6147
    %v6188 = vpack.c.b16 %v6152, %v6148
    %v6189 = vpack.c.b16 %v6153, %v6149
    %v6190 = vpack.c.b16 %v6158, %v6154
    %v6191 = vpack.c.b16 %v6159, %v6155
    %v6192 = vpack.c.b16 %v6160, %v6156
    %v6193 = vpack.c.b16 %v6161, %v6157
    %6226 = vmatprep.subr.bf16.mxu0 %v6191
    %6227 = vmatpush1.bf16.msra.mxu0 %v6190
    %6228 = vmatprep.subr.bf16.mxu0 %v6187
    %6229 = vmatpush1.bf16.msra.mxu0 %v6186
    %6230 = vmatprep.subr.bf16.mxu0 %v6183
    %6231 = vmatpush1.bf16.msra.mxu0 %v6182
    %6232 = vmatprep.subr.bf16.mxu0 %v6179
    %6233 = vmatpush1.bf16.msra.mxu0 %v6178
    %6234 = vmatprep.subr.bf16.mxu0 %v6175
    %6235 = vmatpush1.bf16.msra.mxu0 %v6174
    %6236 = vmatprep.subr.bf16.mxu0 %v6171
    %6237 = vmatpush1.bf16.msra.mxu0 %v6170
    %6238 = vmatprep.subr.bf16.mxu0 %v6167
    %6239 = vmatpush1.bf16.msra.mxu0 %v6166
    %6240 = vmatprep.subr.bf16.mxu0 %v6163
    %6241 = vmatpush1.bf16.msra.mxu0 %v6162
    %6242 = vmatprep.subr.bf16.mxu0 0
    %6243 = vmatpush2.bf16.msra.mxu0 0
    %6244 = vmatprep.subr.bf16.mxu0 0
    %6245 = vmatpush2.bf16.msra.mxu0 0
    %6246 = vmatprep.subr.bf16.mxu0 0
    %6247 = vmatpush2.bf16.msra.mxu0 0
    %6248 = vmatprep.subr.bf16.mxu0 0
    %6249 = vmatpush2.bf16.msra.mxu0 0
    %6250 = vmatprep.subr.bf16.mxu0 0
    %6251 = vmatpush2.bf16.msra.mxu0 0
    %6252 = vmatprep.subr.bf16.mxu0 0
    %6253 = vmatpush2.bf16.msra.mxu0 0
    %6254 = vmatprep.subr.bf16.mxu0 0
    %6255 = vmatpush2.bf16.msra.mxu0 0
    %6256 = vmatprep.subr.bf16.mxu0 0
    %6257 = vmatpush2.bf16.msra.mxu0 0
    %6258 = vmatprep.mubr.bf16.mxu0 0
    %6259 = vmatmul.mubr.bf16.gmra.mxu0 %v6016
    %v6260 = vpop.f32.mrf.mxu0
    %v6261 = vadd.f32 0.0, %v6260
    %v6262 = vpop.f32.mrf.mxu0
    %v6263 = vadd.f32 0.0, %v6262
    %v6264 = vpop.f32.mrf.mxu0
    %v6265 = vadd.f32 0.0, %v6264
    %v6266 = vpop.f32.mrf.mxu0
    %v6267 = vadd.f32 0.0, %v6266
    %6268 = vdwg.mxu0
    %6269 = vmatprep.subr.bf16.mxu0 %v6193
    %6270 = vmatpush1.bf16.msra.mxu0 %v6192
    %6271 = vmatprep.subr.bf16.mxu0 %v6189
    %6272 = vmatpush1.bf16.msra.mxu0 %v6188
    %6273 = vmatprep.subr.bf16.mxu0 %v6185
    %6274 = vmatpush1.bf16.msra.mxu0 %v6184
    %6275 = vmatprep.subr.bf16.mxu0 %v6181
    %6276 = vmatpush1.bf16.msra.mxu0 %v6180
    %6277 = vmatprep.subr.bf16.mxu0 %v6177
    %6278 = vmatpush1.bf16.msra.mxu0 %v6176
    %6279 = vmatprep.subr.bf16.mxu0 %v6173
    %6280 = vmatpush1.bf16.msra.mxu0 %v6172
    %6281 = vmatprep.subr.bf16.mxu0 %v6169
    %6282 = vmatpush1.bf16.msra.mxu0 %v6168
    %6283 = vmatprep.subr.bf16.mxu0 %v6165
    %6284 = vmatpush1.bf16.msra.mxu0 %v6164
    %6285 = vmatprep.subr.bf16.mxu0 0
    %6286 = vmatpush2.bf16.msra.mxu0 0
    %6287 = vmatprep.subr.bf16.mxu0 0
    %6288 = vmatpush2.bf16.msra.mxu0 0
    %6289 = vmatprep.subr.bf16.mxu0 0
    %6290 = vmatpush2.bf16.msra.mxu0 0
    %6291 = vmatprep.subr.bf16.mxu0 0
    %6292 = vmatpush2.bf16.msra.mxu0 0
    %6293 = vmatprep.subr.bf16.mxu0 0
    %6294 = vmatpush2.bf16.msra.mxu0 0
    %6295 = vmatprep.subr.bf16.mxu0 0
    %6296 = vmatpush2.bf16.msra.mxu0 0
    %6297 = vmatprep.subr.bf16.mxu0 0
    %6298 = vmatpush2.bf16.msra.mxu0 0
    %6299 = vmatprep.subr.bf16.mxu0 0
    %6300 = vmatpush2.bf16.msra.mxu0 0
    %6301 = vmatprep.mubr.bf16.mxu0 0
    %6302 = vmatmul.mubr.bf16.gmra.mxu0 %v6016
    %v6303 = vpop.f32.mrf.mxu0
    %v6304 = vadd.f32 0.0, %v6303
    %v6305 = vpop.f32.mrf.mxu0
    %v6306 = vadd.f32 0.0, %v6305
    %v6307 = vpop.f32.mrf.mxu0
    %v6308 = vadd.f32 0.0, %v6307
    %v6309 = vpop.f32.mrf.mxu0
    %v6310 = vadd.f32 0.0, %v6309
    %6311 = vdwg.mxu0
    %v6312 = vadd.f32 %v6026, %v6261
    %v6313 = vadd.f32 %v6027, %v6263
    %v6314 = vadd.f32 %v6028, %v6304
    %v6315 = vadd.f32 %v6029, %v6306
    %v6316 = vadd.f32 %v6030, %v6265
    %v6317 = vadd.f32 %v6031, %v6267
    %v6318 = vadd.f32 %v6032, %v6308
    %v6319 = vadd.f32 %v6033, %v6310
    %v6320 = vmul.f32 %v6312, 0.5
    %v6321 = vmul.f32 %v6316, 0.5
    %v6322 = vtanh.pop %v6320
    %v6323 = vtanh.pop %v6321
    %v6324 = vmul.f32 %v6322, 0.5
    %v6325 = vmul.f32 %v6323, 0.5
    %v6326 = vadd.f32 %v6324, 0.5
    %v6327 = vadd.f32 %v6325, 0.5
    %v6328 = vmul.f32 %v6313, 0.5
    %v6329 = vmul.f32 %v6317, 0.5
    %v6330 = vtanh.pop %v6328
    %v6331 = vtanh.pop %v6329
    %v6332 = vmul.f32 %v6330, 0.5
    %v6333 = vmul.f32 %v6331, 0.5
    %v6334 = vadd.f32 %v6332, 0.5
    %v6335 = vadd.f32 %v6333, 0.5
    %v6336 = vtanh.pop %v6314
    %v6337 = vtanh.pop %v6318
    %v6338 = vmul.f32 %v6315, 0.5
    %v6339 = vmul.f32 %v6319, 0.5
    %v6340 = vtanh.pop %v6338
    %v6341 = vtanh.pop %v6339
    %v6342 = vmul.f32 %v6340, 0.5
    %v6343 = vmul.f32 %v6341, 0.5
    %v6344 = vadd.f32 %v6342, 0.5
    %v6345 = vadd.f32 %v6343, 0.5
    %v6346 = vmul.f32 %v6334, %v6010
    %v6347 = vmul.f32 %v6335, %v6011
    %v6348 = vmul.f32 %v6326, %v6336
    %v6349 = vmul.f32 %v6327, %v6337
    %v6350 = vadd.f32 %v6346, %v6348
    %v6351 = vadd.f32 %v6347, %v6349
    %v6352 = vtanh.pop %v6350
    %v6353 = vtanh.pop %v6351
    %v6354 = vmul.f32 %v6344, %v6352
    %v6355 = vmul.f32 %v6345, %v6353
    %v6356 = vpack.c.bf16 %v6355, %v6354
    %v6358 = vunpack.c.l.b16 %v6356
    %v6359 = vunpack.c.h.b16 %v6356
    %v6360 = vpack.c.b16 %v6358, %v6358
    %v6361 = vpack.c.b16 %v6359, %v6359
    %6364 = vst [vmem:[%s3073] sm:$0xf] %v6360
    %6365 = vst [vmem:[%s3073 + $0x4] sm:$0xf] %v6361
    %v6366 = vld [vmem:[%s3076] sm:$0xff]
    %v6367 = vld [vmem:[%s3076 + $0x8] sm:$0xff]
    %v6368 = vld [vmem:[%s3076 + $0x10] sm:$0xff]
    %v6369 = vld [vmem:[%s3076 + $0x18] sm:$0xff]
    %v6370 = vld [vmem:[%s3076 + $0x20] sm:$0xff]
    %v6371 = vld [vmem:[%s3076 + $0x28] sm:$0xff]
    %v6372 = vld [vmem:[%s3076 + $0x30] sm:$0xff]
    %v6373 = vld [vmem:[%s3076 + $0x38] sm:$0xff]
    %v6374 = vld [vmem:[#allocation12] sm:$0xff]
    %v6375 = vld [vmem:[#allocation12 + $0x8] sm:$0xff]
    %v6376 = vld [vmem:[#allocation12 + $0x10] sm:$0xff]
    %v6377 = vld [vmem:[#allocation12 + $0x18] sm:$0xff]
    %v6378 = vld [vmem:[#allocation12 + $0x20] sm:$0xff]
    %v6379 = vld [vmem:[#allocation12 + $0x28] sm:$0xff]
    %v6380 = vld [vmem:[#allocation12 + $0x30] sm:$0xff]
    %v6381 = vld [vmem:[#allocation12 + $0x38] sm:$0xff]
    %v6382 = vld [vmem:[#allocation12 + $0x40] sm:$0xff]
    %v6383 = vld [vmem:[#allocation12 + $0x48] sm:$0xff]
    %v6384 = vld [vmem:[#allocation12 + $0x50] sm:$0xff]
    %v6385 = vld [vmem:[#allocation12 + $0x58] sm:$0xff]
    %v6386 = vld [vmem:[#allocation12 + $0x60] sm:$0xff]
    %v6387 = vld [vmem:[#allocation12 + $0x68] sm:$0xff]
    %v6388 = vld [vmem:[#allocation12 + $0x70] sm:$0xff]
    %v6389 = vld [vmem:[#allocation12 + $0x78] sm:$0xff]
    %v6390 = vld [vmem:[#allocation12 + $0x80] sm:$0xff]
    %v6391 = vld [vmem:[#allocation12 + $0x88] sm:$0xff]
    %v6392 = vld [vmem:[#allocation12 + $0x90] sm:$0xff]
    %v6393 = vld [vmem:[#allocation12 + $0x98] sm:$0xff]
    %v6394 = vld [vmem:[#allocation12 + $0xa0] sm:$0xff]
    %v6395 = vld [vmem:[#allocation12 + $0xa8] sm:$0xff]
    %v6396 = vld [vmem:[#allocation12 + $0xb0] sm:$0xff]
    %v6397 = vld [vmem:[#allocation12 + $0xb8] sm:$0xff]
    %v6398 = vld [vmem:[#allocation12 + $0xc0] sm:$0xff]
    %v6399 = vld [vmem:[#allocation12 + $0xc8] sm:$0xff]
    %v6400 = vld [vmem:[#allocation12 + $0xd0] sm:$0xff]
    %v6401 = vld [vmem:[#allocation12 + $0xd8] sm:$0xff]
    %v6402 = vld [vmem:[#allocation12 + $0xe0] sm:$0xff]
    %v6403 = vld [vmem:[#allocation12 + $0xe8] sm:$0xff]
    %v6404 = vld [vmem:[#allocation12 + $0xf0] sm:$0xff]
    %v6405 = vld [vmem:[#allocation12 + $0xf8] sm:$0xff]
    %v6438 = vunpack.c.l.b16 %v6374
    %v6439 = vunpack.c.h.b16 %v6374
    %v6440 = vunpack.c.l.b16 %v6375
    %v6441 = vunpack.c.h.b16 %v6375
    %v6442 = vunpack.c.l.b16 %v6376
    %v6443 = vunpack.c.h.b16 %v6376
    %v6444 = vunpack.c.l.b16 %v6377
    %v6445 = vunpack.c.h.b16 %v6377
    %v6446 = vunpack.c.l.b16 %v6378
    %v6447 = vunpack.c.h.b16 %v6378
    %v6448 = vunpack.c.l.b16 %v6379
    %v6449 = vunpack.c.h.b16 %v6379
    %v6450 = vunpack.c.l.b16 %v6380
    %v6451 = vunpack.c.h.b16 %v6380
    %v6452 = vunpack.c.l.b16 %v6381
    %v6453 = vunpack.c.h.b16 %v6381
    %v6454 = vunpack.c.l.b16 %v6382
    %v6455 = vunpack.c.h.b16 %v6382
    %v6456 = vunpack.c.l.b16 %v6383
    %v6457 = vunpack.c.h.b16 %v6383
    %v6458 = vunpack.c.l.b16 %v6384
    %v6459 = vunpack.c.h.b16 %v6384
    %v6460 = vunpack.c.l.b16 %v6385
    %v6461 = vunpack.c.h.b16 %v6385
    %v6462 = vunpack.c.l.b16 %v6386
    %v6463 = vunpack.c.h.b16 %v6386
    %v6464 = vunpack.c.l.b16 %v6387
    %v6465 = vunpack.c.h.b16 %v6387
    %v6466 = vunpack.c.l.b16 %v6388
    %v6467 = vunpack.c.h.b16 %v6388
    %v6468 = vunpack.c.l.b16 %v6389
    %v6469 = vunpack.c.h.b16 %v6389
    %v6470 = vunpack.c.l.b16 %v6390
    %v6471 = vunpack.c.h.b16 %v6390
    %v6472 = vunpack.c.l.b16 %v6391
    %v6473 = vunpack.c.h.b16 %v6391
    %v6474 = vunpack.c.l.b16 %v6392
    %v6475 = vunpack.c.h.b16 %v6392
    %v6476 = vunpack.c.l.b16 %v6393
    %v6477 = vunpack.c.h.b16 %v6393
    %v6478 = vunpack.c.l.b16 %v6394
    %v6479 = vunpack.c.h.b16 %v6394
    %v6480 = vunpack.c.l.b16 %v6395
    %v6481 = vunpack.c.h.b16 %v6395
    %v6482 = vunpack.c.l.b16 %v6396
    %v6483 = vunpack.c.h.b16 %v6396
    %v6484 = vunpack.c.l.b16 %v6397
    %v6485 = vunpack.c.h.b16 %v6397
    %v6486 = vunpack.c.l.b16 %v6398
    %v6487 = vunpack.c.h.b16 %v6398
    %v6488 = vunpack.c.l.b16 %v6399
    %v6489 = vunpack.c.h.b16 %v6399
    %v6490 = vunpack.c.l.b16 %v6400
    %v6491 = vunpack.c.h.b16 %v6400
    %v6492 = vunpack.c.l.b16 %v6401
    %v6493 = vunpack.c.h.b16 %v6401
    %v6494 = vunpack.c.l.b16 %v6402
    %v6495 = vunpack.c.h.b16 %v6402
    %v6496 = vunpack.c.l.b16 %v6403
    %v6497 = vunpack.c.h.b16 %v6403
    %v6498 = vunpack.c.l.b16 %v6404
    %v6499 = vunpack.c.h.b16 %v6404
    %v6500 = vunpack.c.l.b16 %v6405
    %v6501 = vunpack.c.h.b16 %v6405
    %v6502 = vpack.c.b16 %v6442, %v6438
    %v6503 = vpack.c.b16 %v6443, %v6439
    %v6504 = vpack.c.b16 %v6444, %v6440
    %v6505 = vpack.c.b16 %v6445, %v6441
    %v6506 = vpack.c.b16 %v6450, %v6446
    %v6507 = vpack.c.b16 %v6451, %v6447
    %v6508 = vpack.c.b16 %v6452, %v6448
    %v6509 = vpack.c.b16 %v6453, %v6449
    %v6510 = vpack.c.b16 %v6458, %v6454
    %v6511 = vpack.c.b16 %v6459, %v6455
    %v6512 = vpack.c.b16 %v6460, %v6456
    %v6513 = vpack.c.b16 %v6461, %v6457
    %v6514 = vpack.c.b16 %v6466, %v6462
    %v6515 = vpack.c.b16 %v6467, %v6463
    %v6516 = vpack.c.b16 %v6468, %v6464
    %v6517 = vpack.c.b16 %v6469, %v6465
    %v6518 = vpack.c.b16 %v6474, %v6470
    %v6519 = vpack.c.b16 %v6475, %v6471
    %v6520 = vpack.c.b16 %v6476, %v6472
    %v6521 = vpack.c.b16 %v6477, %v6473
    %v6522 = vpack.c.b16 %v6482, %v6478
    %v6523 = vpack.c.b16 %v6483, %v6479
    %v6524 = vpack.c.b16 %v6484, %v6480
    %v6525 = vpack.c.b16 %v6485, %v6481
    %v6526 = vpack.c.b16 %v6490, %v6486
    %v6527 = vpack.c.b16 %v6491, %v6487
    %v6528 = vpack.c.b16 %v6492, %v6488
    %v6529 = vpack.c.b16 %v6493, %v6489
    %v6530 = vpack.c.b16 %v6498, %v6494
    %v6531 = vpack.c.b16 %v6499, %v6495
    %v6532 = vpack.c.b16 %v6500, %v6496
    %v6533 = vpack.c.b16 %v6501, %v6497
    %6566 = vmatprep.subr.bf16.mxu0 %v6531
    %6567 = vmatpush1.bf16.msra.mxu0 %v6530
    %6568 = vmatprep.subr.bf16.mxu0 %v6527
    %6569 = vmatpush1.bf16.msra.mxu0 %v6526
    %6570 = vmatprep.subr.bf16.mxu0 %v6523
    %6571 = vmatpush1.bf16.msra.mxu0 %v6522
    %6572 = vmatprep.subr.bf16.mxu0 %v6519
    %6573 = vmatpush1.bf16.msra.mxu0 %v6518
    %6574 = vmatprep.subr.bf16.mxu0 %v6515
    %6575 = vmatpush1.bf16.msra.mxu0 %v6514
    %6576 = vmatprep.subr.bf16.mxu0 %v6511
    %6577 = vmatpush1.bf16.msra.mxu0 %v6510
    %6578 = vmatprep.subr.bf16.mxu0 %v6507
    %6579 = vmatpush1.bf16.msra.mxu0 %v6506
    %6580 = vmatprep.subr.bf16.mxu0 %v6503
    %6581 = vmatpush1.bf16.msra.mxu0 %v6502
    %6582 = vmatprep.subr.bf16.mxu0 0
    %6583 = vmatpush2.bf16.msra.mxu0 0
    %6584 = vmatprep.subr.bf16.mxu0 0
    %6585 = vmatpush2.bf16.msra.mxu0 0
    %6586 = vmatprep.subr.bf16.mxu0 0
    %6587 = vmatpush2.bf16.msra.mxu0 0
    %6588 = vmatprep.subr.bf16.mxu0 0
    %6589 = vmatpush2.bf16.msra.mxu0 0
    %6590 = vmatprep.subr.bf16.mxu0 0
    %6591 = vmatpush2.bf16.msra.mxu0 0
    %6592 = vmatprep.subr.bf16.mxu0 0
    %6593 = vmatpush2.bf16.msra.mxu0 0
    %6594 = vmatprep.subr.bf16.mxu0 0
    %6595 = vmatpush2.bf16.msra.mxu0 0
    %6596 = vmatprep.subr.bf16.mxu0 0
    %6597 = vmatpush2.bf16.msra.mxu0 0
    %6598 = vmatprep.mubr.bf16.mxu0 0
    %6599 = vmatmul.mubr.bf16.gmra.mxu0 %v6356
    %v6600 = vpop.f32.mrf.mxu0
    %v6601 = vadd.f32 0.0, %v6600
    %v6602 = vpop.f32.mrf.mxu0
    %v6603 = vadd.f32 0.0, %v6602
    %v6604 = vpop.f32.mrf.mxu0
    %v6605 = vadd.f32 0.0, %v6604
    %v6606 = vpop.f32.mrf.mxu0
    %v6607 = vadd.f32 0.0, %v6606
    %6608 = vdwg.mxu0
    %6609 = vmatprep.subr.bf16.mxu0 %v6533
    %6610 = vmatpush1.bf16.msra.mxu0 %v6532
    %6611 = vmatprep.subr.bf16.mxu0 %v6529
    %6612 = vmatpush1.bf16.msra.mxu0 %v6528
    %6613 = vmatprep.subr.bf16.mxu0 %v6525
    %6614 = vmatpush1.bf16.msra.mxu0 %v6524
    %6615 = vmatprep.subr.bf16.mxu0 %v6521
    %6616 = vmatpush1.bf16.msra.mxu0 %v6520
    %6617 = vmatprep.subr.bf16.mxu0 %v6517
    %6618 = vmatpush1.bf16.msra.mxu0 %v6516
    %6619 = vmatprep.subr.bf16.mxu0 %v6513
    %6620 = vmatpush1.bf16.msra.mxu0 %v6512
    %6621 = vmatprep.subr.bf16.mxu0 %v6509
    %6622 = vmatpush1.bf16.msra.mxu0 %v6508
    %6623 = vmatprep.subr.bf16.mxu0 %v6505
    %6624 = vmatpush1.bf16.msra.mxu0 %v6504
    %6625 = vmatprep.subr.bf16.mxu0 0
    %6626 = vmatpush2.bf16.msra.mxu0 0
    %6627 = vmatprep.subr.bf16.mxu0 0
    %6628 = vmatpush2.bf16.msra.mxu0 0
    %6629 = vmatprep.subr.bf16.mxu0 0
    %6630 = vmatpush2.bf16.msra.mxu0 0
    %6631 = vmatprep.subr.bf16.mxu0 0
    %6632 = vmatpush2.bf16.msra.mxu0 0
    %6633 = vmatprep.subr.bf16.mxu0 0
    %6634 = vmatpush2.bf16.msra.mxu0 0
    %6635 = vmatprep.subr.bf16.mxu0 0
    %6636 = vmatpush2.bf16.msra.mxu0 0
    %6637 = vmatprep.subr.bf16.mxu0 0
    %6638 = vmatpush2.bf16.msra.mxu0 0
    %6639 = vmatprep.subr.bf16.mxu0 0
    %6640 = vmatpush2.bf16.msra.mxu0 0
    %6641 = vmatprep.mubr.bf16.mxu0 0
    %6642 = vmatmul.mubr.bf16.gmra.mxu0 %v6356
    %v6643 = vpop.f32.mrf.mxu0
    %v6644 = vadd.f32 0.0, %v6643
    %v6645 = vpop.f32.mrf.mxu0
    %v6646 = vadd.f32 0.0, %v6645
    %v6647 = vpop.f32.mrf.mxu0
    %v6648 = vadd.f32 0.0, %v6647
    %v6649 = vpop.f32.mrf.mxu0
    %v6650 = vadd.f32 0.0, %v6649
    %6651 = vdwg.mxu0
    %v6652 = vadd.f32 %v6366, %v6601
    %v6653 = vadd.f32 %v6367, %v6603
    %v6654 = vadd.f32 %v6368, %v6644
    %v6655 = vadd.f32 %v6369, %v6646
    %v6656 = vadd.f32 %v6370, %v6605
    %v6657 = vadd.f32 %v6371, %v6607
    %v6658 = vadd.f32 %v6372, %v6648
    %v6659 = vadd.f32 %v6373, %v6650
    %v6660 = vmul.f32 %v6652, 0.5
    %v6661 = vmul.f32 %v6656, 0.5
    %v6662 = vtanh.pop %v6660
    %v6663 = vtanh.pop %v6661
    %v6664 = vmul.f32 %v6662, 0.5
    %v6665 = vmul.f32 %v6663, 0.5
    %v6666 = vadd.f32 %v6664, 0.5
    %v6667 = vadd.f32 %v6665, 0.5
    %v6668 = vmul.f32 %v6653, 0.5
    %v6669 = vmul.f32 %v6657, 0.5
    %v6670 = vtanh.pop %v6668
    %v6671 = vtanh.pop %v6669
    %v6672 = vmul.f32 %v6670, 0.5
    %v6673 = vmul.f32 %v6671, 0.5
    %v6674 = vadd.f32 %v6672, 0.5
    %v6675 = vadd.f32 %v6673, 0.5
    %v6676 = vtanh.pop %v6654
    %v6677 = vtanh.pop %v6658
    %v6678 = vmul.f32 %v6655, 0.5
    %v6679 = vmul.f32 %v6659, 0.5
    %v6680 = vtanh.pop %v6678
    %v6681 = vtanh.pop %v6679
    %v6682 = vmul.f32 %v6680, 0.5
    %v6683 = vmul.f32 %v6681, 0.5
    %v6684 = vadd.f32 %v6682, 0.5
    %v6685 = vadd.f32 %v6683, 0.5
    %v6686 = vmul.f32 %v6674, %v6350
    %v6687 = vmul.f32 %v6675, %v6351
    %v6688 = vmul.f32 %v6666, %v6676
    %v6689 = vmul.f32 %v6667, %v6677
    %v6690 = vadd.f32 %v6686, %v6688
    %v6691 = vadd.f32 %v6687, %v6689
    %v6692 = vtanh.pop %v6690
    %v6693 = vtanh.pop %v6691
    %v6694 = vmul.f32 %v6684, %v6692
    %v6695 = vmul.f32 %v6685, %v6693
    %v6696 = vpack.c.bf16 %v6695, %v6694
    %v6698 = vunpack.c.l.b16 %v6696
    %v6699 = vunpack.c.h.b16 %v6696
    %v6700 = vpack.c.b16 %v6698, %v6698
    %v6701 = vpack.c.b16 %v6699, %v6699
    %6704 = vst [vmem:[%s3415] sm:$0xf] %v6700
    %6705 = vst [vmem:[%s3415 + $0x4] sm:$0xf] %v6701
    %v6706 = vld [vmem:[#allocation13] sm:$0xf]
    %v6707 = vld [vmem:[#allocation13 + $0x4] sm:$0xf]
    %v6708 = vld [vmem:[#allocation13 + $0x8] sm:$0xf]
    %v6709 = vld [vmem:[#allocation13 + $0xc] sm:$0xf]
    %v6710 = vld [vmem:[#allocation13 + $0x10] sm:$0xf]
    %v6711 = vld [vmem:[#allocation13 + $0x14] sm:$0xf]
    %v6712 = vld [vmem:[#allocation13 + $0x18] sm:$0xf]
    %v6713 = vld [vmem:[#allocation13 + $0x1c] sm:$0xf]
    %v6714 = vld [vmem:[#allocation13 + $0x20] sm:$0xf]
    %v6715 = vld [vmem:[#allocation13 + $0x24] sm:$0xf]
    %v6716 = vld [vmem:[#allocation13 + $0x28] sm:$0xf]
    %v6717 = vld [vmem:[#allocation13 + $0x2c] sm:$0xf]
    %v6718 = vld [vmem:[#allocation13 + $0x30] sm:$0xf]
    %v6719 = vld [vmem:[#allocation13 + $0x34] sm:$0xf]
    %v6720 = vld [vmem:[#allocation13 + $0x38] sm:$0xf]
    %v6721 = vld [vmem:[#allocation13 + $0x3c] sm:$0xf]
    %v6722 = vld [vmem:[%s8] sm:$0x1]
    %v6724 = vlaneseq
    %v6725 = vshrl.u32 %v6724, 7
    %v6726 = vsub.s32 0, %v6725
    %v6727 = vrot.slane %v6722, %v6726
    %v6745 = vunpack.c.l.b16 %v6706
    %v6746 = vunpack.c.l.b16 %v6707
    %v6747 = vunpack.c.l.b16 %v6708
    %v6748 = vunpack.c.l.b16 %v6709
    %v6749 = vunpack.c.l.b16 %v6710
    %v6750 = vunpack.c.l.b16 %v6711
    %v6751 = vunpack.c.l.b16 %v6712
    %v6752 = vunpack.c.l.b16 %v6713
    %v6753 = vunpack.c.l.b16 %v6714
    %v6754 = vunpack.c.l.b16 %v6715
    %v6755 = vunpack.c.l.b16 %v6716
    %v6756 = vunpack.c.l.b16 %v6717
    %v6757 = vunpack.c.l.b16 %v6718
    %v6758 = vunpack.c.l.b16 %v6719
    %v6759 = vunpack.c.l.b16 %v6720
    %v6760 = vunpack.c.l.b16 %v6721
    %v6761 = vpack.c.b16 %v6746, %v6745
    %v6762 = vpack.c.b16 %v6748, %v6747
    %v6763 = vpack.c.b16 %v6750, %v6749
    %v6764 = vpack.c.b16 %v6752, %v6751
    %v6765 = vpack.c.b16 %v6754, %v6753
    %v6766 = vpack.c.b16 %v6756, %v6755
    %v6767 = vpack.c.b16 %v6758, %v6757
    %v6768 = vpack.c.b16 %v6760, %v6759
    %6777 = vmatprep.subr.bf16.mxu0 0
    %6778 = vmatpush1.bf16.msra.mxu0 %v6768
    %6779 = vmatprep.subr.bf16.mxu0 0
    %6780 = vmatpush1.bf16.msra.mxu0 %v6767
    %6781 = vmatprep.subr.bf16.mxu0 0
    %6782 = vmatpush1.bf16.msra.mxu0 %v6766
    %6783 = vmatprep.subr.bf16.mxu0 0
    %6784 = vmatpush1.bf16.msra.mxu0 %v6765
    %6785 = vmatprep.subr.bf16.mxu0 0
    %6786 = vmatpush1.bf16.msra.mxu0 %v6764
    %6787 = vmatprep.subr.bf16.mxu0 0
    %6788 = vmatpush1.bf16.msra.mxu0 %v6763
    %6789 = vmatprep.subr.bf16.mxu0 0
    %6790 = vmatpush1.bf16.msra.mxu0 %v6762
    %6791 = vmatprep.subr.bf16.mxu0 0
    %6792 = vmatpush1.bf16.msra.mxu0 %v6761
    %6793 = vmatprep.subr.bf16.mxu0 0
    %6794 = vmatpush2.bf16.msra.mxu0 0
    %6795 = vmatprep.subr.bf16.mxu0 0
    %6796 = vmatpush2.bf16.msra.mxu0 0
    %6797 = vmatprep.subr.bf16.mxu0 0
    %6798 = vmatpush2.bf16.msra.mxu0 0
    %6799 = vmatprep.subr.bf16.mxu0 0
    %6800 = vmatpush2.bf16.msra.mxu0 0
    %6801 = vmatprep.subr.bf16.mxu0 0
    %6802 = vmatpush2.bf16.msra.mxu0 0
    %6803 = vmatprep.subr.bf16.mxu0 0
    %6804 = vmatpush2.bf16.msra.mxu0 0
    %6805 = vmatprep.subr.bf16.mxu0 0
    %6806 = vmatpush2.bf16.msra.mxu0 0
    %6807 = vmatprep.subr.bf16.mxu0 0
    %6808 = vmatpush2.bf16.msra.mxu0 0
    %6809 = vmatprep.mubr.bf16.mxu0 0
    %6810 = vmatmul.mubr.bf16.gmra.mxu0 %v6696
    %v6811 = vpop.f32.mrf.mxu0
    %v6812 = vadd.f32 %v6727, %v6811
    %v6813 = vpop.f32.mrf.mxu0
    %v6814 = vpop.f32.mrf.mxu0
    %v6815 = vadd.f32 %v6727, %v6814
    %v6816 = vpop.f32.mrf.mxu0
    %6817 = vdwg.mxu0
    %6818 = vst [vmem:[#allocation15] sm:$0xff] %v6812
    %6819 = vst [vmem:[#allocation15 + $0x8] sm:$0xff] %v6815
    // Predicated region
    $region62: #{tpu_custom_call.1} parent=1 // pred_check
      _
    $region63: #{tpu_custom_call.1} parent=1 // pred_check_branch
      %6821 = sbr.rel (0) target = $region65
    $region64: #{tpu_custom_call.1} parent=1 // pred_region
      %s6823 = ssub.s32 256, 256
      %6824 = vsyncadd [#allocation6], %s6823
      %s6825 = sshll.u32 [#allocation15], 4
      %s6826 = int_to_ptr.vmem [resolvable:$true] %s6825
      %6831 = dma.vmem_to_hbm [thread:$0]  %s6826, 256, %s9, [#allocation6], 128, 128, 8
    $region65: #{tpu_custom_call.1} parent=1 // pred_fallthru
      _
    // Predicated region
    $region66: #{tpu_custom_call.1} parent=1 // pred_check
      _
    $region67: #{tpu_custom_call.1} parent=1 // pred_check_branch
      %6833 = sbr.rel (0) target = $region69
    $region68: #{tpu_custom_call.1} parent=1 // pred_region
      %6834 = dma.done [#allocation6], 256
    $region69: #{tpu_custom_call.1} parent=1 // pred_fallthru
      _
    %6835 = vsyncpa [#allocation5], 1
    %6836 = vsyncpa [#allocation8], 1
    %6837 = vsyncpa [#allocation11], 1
    %6838 = vsyncpa [#allocation14], 1
    %6839 = vsyncpa [#allocation6], 1

</llo_original>
